<compile_context>
chip_gen: v7x
topology: tpu7x:2x2x1
jax: 0.10.0
libtpu: 0.0.40
codegen_flags: <defaults>
</compile_context>

<pallas_src>
import math
import functools

import jax
import jax.numpy as jnp
from jax import lax
from jax.experimental import pallas as pl
from jax.experimental.pallas import tpu as pltpu

# ----------------------------- configuration -------------------------------
D_MODEL = 32
NHEAD = 4
DH = D_MODEL // NHEAD
DFF = 64
NUM_LAYERS = 2
EPS = 1e-5


# ------------------------- in-kernel math helpers ---------------------------
def _layernorm(x, w, b):
    mu = jnp.mean(x, axis=-1, keepdims=True)
    var = jnp.mean((x - mu) ** 2, axis=-1, keepdims=True)
    return (x - mu) * lax.rsqrt(var + EPS) * w + b


def _attention(q_in, k_in, v_in, qk_w, qk_b, vo_w, ob, l):
    """Multi-head attention with pre-transposed / pre-fused per-head weights.

    q_in: (Tq, D), k_in/v_in: (Tk, D)
    qk_w: Ref (L, 2, H, D, DH)  [:,0]=Wq^T * 1/sqrt(dh), [:,1]=Wk^T
    qk_b: Ref (L, 2, H, 1, DH)  matching (pre-scaled) biases
    vo_w: Ref (L, H, D, D)      Wv_h^T @ Wout_h^T (V-proj fused with out-proj)
    ob:   Ref (L, 1, D)         out_b + bv @ Wout^T (combined output bias)
    """
    out = None
    for h in range(NHEAD):  # static unroll; no in-kernel lane slicing / concat
        qh = jnp.dot(q_in, qk_w[l, 0, h],
                     preferred_element_type=jnp.float32) + qk_b[l, 0, h]
        kh = jnp.dot(k_in, qk_w[l, 1, h],
                     preferred_element_type=jnp.float32) + qk_b[l, 1, h]
        # scores: contract over the head dim of both operands (no explicit .T)
        s = lax.dot_general(qh, kh, (((1,), (1,)), ((), ())),
                            preferred_element_type=jnp.float32)      # (Tq, Tk)
        s = s - jnp.max(s, axis=-1, keepdims=True)
        p = jnp.exp(s)
        # reciprocal (EUP) + multiply instead of a per-element divide on the VALU
        # (approx=True would be even cheaper at slightly reduced precision).
        p = p * pl.reciprocal(jnp.sum(p, axis=-1, keepdims=True), approx=False)
        vo = jnp.dot(v_in, vo_w[l, h], preferred_element_type=jnp.float32)  # (Tk, D)
        contrib = jnp.dot(p, vo, preferred_element_type=jnp.float32)        # (Tq, D)
        out = contrib if out is None else out + contrib
    return out + ob[l]


# ------------------------------ fused kernel ---------------------------------
def fused_decoder_kernel(tgt_ref, mem_ref, qpos_ref, pos_ref,
                         sa_qk_w, sa_qk_b, sa_vo_w, sa_ob,
                         ca_qk_w, ca_qk_b, ca_vo_w, ca_ob,
                         ff1_w, ff1_b, ff2_w, ff2_b,
                         ln_ref, fnorm_ref,
                         out_ref, *, apply_final_norm):
    x = tgt_ref[0]          # (Tq, D)
    mem = mem_ref[0]        # (Tk, D)
    qpos = qpos_ref[0]      # (Tq, D)
    kmem = mem + pos_ref[0]  # hoisted once: cross-attn keys are the same every layer

    for l in range(NUM_LAYERS):          # all layers fused in one kernel
        ln = ln_ref[l]                   # (6, D): n1_w,n1_b,n2_w,n2_b,n3_w,n3_b

        # ---- self-attention (q = k = x + query_pos, v = x) ----
        q = x + qpos
        sa = _attention(q, q, x, sa_qk_w, sa_qk_b, sa_vo_w, sa_ob, l)
        x = _layernorm(x + sa, ln[0:1], ln[1:2])

        # ---- cross-attention (q = x + query_pos, k = memory + pos, v = memory) ----
        ca = _attention(x + qpos, kmem, mem, ca_qk_w, ca_qk_b, ca_vo_w, ca_ob, l)
        x = _layernorm(x + ca, ln[2:3], ln[3:4])

        # ---- feed-forward (relu) ----
        h = jnp.dot(x, ff1_w[l], preferred_element_type=jnp.float32) + ff1_b[l]
        h = jnp.maximum(h, 0.0)
        ff = jnp.dot(h, ff2_w[l], preferred_element_type=jnp.float32) + ff2_b[l]
        x = _layernorm(x + ff, ln[4:5], ln[5:6])

    if apply_final_norm:
        fn = fnorm_ref[...]              # (2, D)
        x = _layernorm(x, fn[0:1], fn[1:2])
    out_ref[0] = x


# --------------------------- wrapper / weight packing ------------------------
def _bcast_spec(shape):
    nd = len(shape)
    return pl.BlockSpec(shape, lambda b, _nd=nd: (0,) * _nd)


def pack_decoder_params(layer_params, norm_params):
    """Trace-time repack (free): transpose, pre-scale, fuse V+out projections,
    stack across layers, pack small vectors."""
    D = D_MODEL
    scale = 1.0 / math.sqrt(DH)

    def pack_attn(prefix):
        qk_w, qk_b, vo_w, ob = [], [], [], []
        for p in layer_params:
            in_w, in_b = p[prefix + "_in_w"], p[prefix + "_in_b"]
            out_w, out_b = p[prefix + "_out_w"], p[prefix + "_out_b"]
            Wq, Wk, Wv = in_w[:D], in_w[D:2 * D], in_w[2 * D:]
            bq, bk, bv = in_b[:, :D], in_b[:, D:2 * D], in_b[:, 2 * D:]
            WoT = out_w.T                                                  # (D, D)
            qw = jnp.stack([Wq[h * DH:(h + 1) * DH].T * scale for h in range(NHEAD)])
            kw = jnp.stack([Wk[h * DH:(h + 1) * DH].T for h in range(NHEAD)])
            qb = jnp.stack([bq[:, h * DH:(h + 1) * DH] * scale for h in range(NHEAD)])
            kb = jnp.stack([bk[:, h * DH:(h + 1) * DH] for h in range(NHEAD)])
            vo = jnp.stack([Wv[h * DH:(h + 1) * DH].T @ WoT[h * DH:(h + 1) * DH]
                            for h in range(NHEAD)])                        # (H, D, D)
            qk_w.append(jnp.stack([qw, kw]))                               # (2,H,D,DH)
            qk_b.append(jnp.stack([qb, kb]))                               # (2,H,1,DH)
            vo_w.append(vo)
            ob.append(out_b + bv @ WoT)                                    # (1, D)
        return [jnp.stack(qk_w), jnp.stack(qk_b), jnp.stack(vo_w), jnp.stack(ob)]

    sa = pack_attn("sa")
    ca = pack_attn("ca")
    ff1_w = jnp.stack([p["l1_w"].T for p in layer_params])                 # (L, D, F)
    ff1_b = jnp.stack([p["l1_b"] for p in layer_params])                   # (L, 1, F)
    ff2_w = jnp.stack([p["l2_w"].T for p in layer_params])                 # (L, F, D)
    ff2_b = jnp.stack([p["l2_b"] for p in layer_params])                   # (L, 1, D)
    ln = jnp.stack([jnp.concatenate([p["n1_w"], p["n1_b"], p["n2_w"], p["n2_b"],
                                     p["n3_w"], p["n3_b"]], axis=0)
                    for p in layer_params])                                # (L, 6, D)
    if norm_params is not None:
        fnorm = jnp.concatenate([norm_params["w"], norm_params["b"]], axis=0)
    else:
        fnorm = jnp.zeros((2, D), jnp.float32)                             # unused
    return sa + ca + [ff1_w, ff1_b, ff2_w, ff2_b, ln, fnorm]


def transformer_decoder(tgt, memory, query_pos, pos, layer_params, norm_params):
    """return_intermediate=False path: all layers + final norm in one pallas_call."""
    B, Tq, D = tgt.shape
    _, Tk, _ = memory.shape
    weights = pack_decoder_params(layer_params, norm_params)

    seq_specs = [
        pl.BlockSpec((1, Tq, D), lambda b: (b, 0, 0)),
        pl.BlockSpec((1, Tk, D), lambda b: (b, 0, 0)),
        pl.BlockSpec((1, Tq, D), lambda b: (b, 0, 0)),
        pl.BlockSpec((1, Tk, D), lambda b: (b, 0, 0)),
    ]
    kernel = functools.partial(fused_decoder_kernel,
                               apply_final_norm=norm_params is not None)
    out = pl.pallas_call(
        kernel,
        out_shape=jax.ShapeDtypeStruct((B, Tq, D), jnp.float32),
        grid=(B,),
        in_specs=seq_specs + [_bcast_spec(w.shape) for w in weights],
        out_specs=pl.BlockSpec((1, Tq, D), lambda b: (b, 0, 0)),
        compiler_params=pltpu.CompilerParams(dimension_semantics=("parallel",)),
    )(tgt, memory, query_pos, pos, *weights)
    return out[None]  # (1, B, Tq, D)


# -------------------------- parameter initialization ------------------------
def init_layer_params(key, d_model, dff):
    ks = jax.random.split(key, 12)

    def mat(k, o, i, scale=0.05):
        return jax.random.normal(k, (o, i), jnp.float32) * scale

    def vec(k, n, scale=0.02):
        return jax.random.normal(k, (1, n), jnp.float32) * scale

    return {
        "sa_in_w": mat(ks[0], 3 * d_model, d_model),
        "sa_in_b": vec(ks[1], 3 * d_model),
        "sa_out_w": mat(ks[2], d_model, d_model),
        "sa_out_b": vec(ks[3], d_model),
        "ca_in_w": mat(ks[4], 3 * d_model, d_model),
        "ca_in_b": vec(ks[5], 3 * d_model),
        "ca_out_w": mat(ks[6], d_model, d_model),
        "ca_out_b": vec(ks[7], d_model),
        "l1_w": mat(ks[8], dff, d_model),
        "l1_b": vec(ks[9], dff),
        "l2_w": mat(ks[10], d_model, dff),
        "l2_b": vec(ks[11], d_model),
        "n1_w": jnp.ones((1, d_model), jnp.float32),
        "n1_b": jnp.zeros((1, d_model), jnp.float32),
        "n2_w": jnp.ones((1, d_model), jnp.float32),
        "n2_b": jnp.zeros((1, d_model), jnp.float32),
        "n3_w": jnp.ones((1, d_model), jnp.float32),
        "n3_b": jnp.zeros((1, d_model), jnp.float32),
    }


# ------------------------------ pure-JAX reference ---------------------------
def _ref_mha(q_in, k_in, v_in, in_w, in_b, out_w, out_b, nhead):
    D = q_in.shape[-1]
    dh = D // nhead
    Q = q_in @ in_w[:D].T + in_b[:, :D]
    K = k_in @ in_w[D:2 * D].T + in_b[:, D:2 * D]
    V = v_in @ in_w[2 * D:].T + in_b[:, 2 * D:]
    outs = []
    for h in range(nhead):
        s = (Q[:, h * dh:(h + 1) * dh] / math.sqrt(dh)) @ K[:, h * dh:(h + 1) * dh].T
        p = jax.nn.softmax(s, axis=-1)
        outs.append(p @ V[:, h * dh:(h + 1) * dh])
    return jnp.concatenate(outs, axis=-1) @ out_w.T + out_b


def _ref_layer_1b(tgt, mem, qpos, pos, p):
    qk = tgt + qpos
    sa = _ref_mha(qk, qk, tgt, p["sa_in_w"], p["sa_in_b"], p["sa_out_w"], p["sa_out_b"], NHEAD)
    tgt = _layernorm(tgt + sa, p["n1_w"], p["n1_b"])
    ca = _ref_mha(tgt + qpos, mem + pos, mem,
                  p["ca_in_w"], p["ca_in_b"], p["ca_out_w"], p["ca_out_b"], NHEAD)
    tgt = _layernorm(tgt + ca, p["n2_w"], p["n2_b"])
    ff = jnp.maximum(tgt @ p["l1_w"].T + p["l1_b"], 0.0) @ p["l2_w"].T + p["l2_b"]
    return _layernorm(tgt + ff, p["n3_w"], p["n3_b"])


def reference_decoder(tgt, memory, query_pos, pos, layer_params, norm_params):
    out = tgt
    for p in layer_params:
        out = jax.vmap(lambda t, m, qp, pe: _ref_layer_1b(t, m, qp, pe, p))(
            out, memory, query_pos, pos)
    if norm_params is not None:
        out = jax.vmap(lambda t: _layernorm(t, norm_params["w"], norm_params["b"]))(out)
    return out[None]


# ----------------------------------- main ------------------------------------
if __name__ == "__main__":
    B, Tq, Tk = 2, 8, 16  # batch, num queries, memory length (e.g. HW)

    key = jax.random.PRNGKey(0)
    k_in, k_param = jax.random.split(key)
    k_tgt, k_mem, k_qpos, k_pos = jax.random.split(k_in, 4)

    tgt = jax.random.normal(k_tgt, (B, Tq, D_MODEL), jnp.float32)
    memory = jax.random.normal(k_mem, (B, Tk, D_MODEL), jnp.float32)
    query_pos = jax.random.normal(k_qpos, (B, Tq, D_MODEL), jnp.float32)
    pos = jax.random.normal(k_pos, (B, Tk, D_MODEL), jnp.float32)

    layer_keys = jax.random.split(k_param, NUM_LAYERS)
    layer_params = [init_layer_params(k, D_MODEL, DFF) for k in layer_keys]
    norm_params = {"w": jnp.ones((1, D_MODEL), jnp.float32),
                   "b": jnp.zeros((1, D_MODEL), jnp.float32)}

    out = transformer_decoder(tgt, memory, query_pos, pos, layer_params, norm_params)
    out = jax.block_until_ready(out)

    ref = reference_decoder(tgt, memory, query_pos, pos, layer_params, norm_params)
    ref = jax.block_until_ready(ref)

    assert out.shape == (1, B, Tq, D_MODEL), out.shape
    assert jnp.all(jnp.isfinite(out))
    assert jnp.allclose(out, ref, rtol=1e-4, atol=1e-4)

    print("KERNEL_OK")
</pallas_src>

<mosaic_0001>
module attributes {stable_mosaic.version = 11 : i64} {
  func.func @fused_decoder_kernel(%arg0: i32, %arg1: memref<1x8x32xf32, #tpu.memory_space<vmem>>, %arg2: memref<1x16x32xf32, #tpu.memory_space<vmem>>, %arg3: memref<1x8x32xf32, #tpu.memory_space<vmem>>, %arg4: memref<1x16x32xf32, #tpu.memory_space<vmem>>, %arg5: memref<2x2x4x32x8xf32, #tpu.memory_space<vmem>>, %arg6: memref<2x2x4x1x8xf32, #tpu.memory_space<vmem>>, %arg7: memref<2x4x32x32xf32, #tpu.memory_space<vmem>>, %arg8: memref<2x1x32xf32, #tpu.memory_space<vmem>>, %arg9: memref<2x2x4x32x8xf32, #tpu.memory_space<vmem>>, %arg10: memref<2x2x4x1x8xf32, #tpu.memory_space<vmem>>, %arg11: memref<2x4x32x32xf32, #tpu.memory_space<vmem>>, %arg12: memref<2x1x32xf32, #tpu.memory_space<vmem>>, %arg13: memref<2x32x64xf32, #tpu.memory_space<vmem>>, %arg14: memref<2x1x64xf32, #tpu.memory_space<vmem>>, %arg15: memref<2x64x32xf32, #tpu.memory_space<vmem>>, %arg16: memref<2x1x32xf32, #tpu.memory_space<vmem>>, %arg17: memref<2x6x32xf32, #tpu.memory_space<vmem>>, %arg18: memref<2x32xf32, #tpu.memory_space<vmem>>, %arg19: memref<1x8x32xf32, #tpu.memory_space<vmem>>) attributes {dimension_semantics = [#tpu.dimension_semantics<parallel>], iteration_bounds = array<i64: 2>, scalar_prefetch = 0 : i64, scratch_operands = 0 : i64, tpu.core_type = #tpu.core_type<tc>, window_params = [{transform_indices = @transform_0, window_bounds = array<i64: 1, 8, 32>}, {transform_indices = @transform_1, window_bounds = array<i64: 1, 16, 32>}, {transform_indices = @transform_2, window_bounds = array<i64: 1, 8, 32>}, {transform_indices = @transform_3, window_bounds = array<i64: 1, 16, 32>}, {pipeline_mode = #tpu.pipeline_mode<synchronous>, transform_indices = @transform_4, window_bounds = array<i64: 2, 2, 4, 32, 8>}, {pipeline_mode = #tpu.pipeline_mode<synchronous>, transform_indices = @transform_5, window_bounds = array<i64: 2, 2, 4, 1, 8>}, {pipeline_mode = #tpu.pipeline_mode<synchronous>, transform_indices = @transform_6, window_bounds = array<i64: 2, 4, 32, 32>}, {pipeline_mode = #tpu.pipeline_mode<synchronous>, transform_indices = @transform_7, window_bounds = array<i64: 2, 1, 32>}, {pipeline_mode = #tpu.pipeline_mode<synchronous>, transform_indices = @transform_8, window_bounds = array<i64: 2, 2, 4, 32, 8>}, {pipeline_mode = #tpu.pipeline_mode<synchronous>, transform_indices = @transform_9, window_bounds = array<i64: 2, 2, 4, 1, 8>}, {pipeline_mode = #tpu.pipeline_mode<synchronous>, transform_indices = @transform_10, window_bounds = array<i64: 2, 4, 32, 32>}, {pipeline_mode = #tpu.pipeline_mode<synchronous>, transform_indices = @transform_11, window_bounds = array<i64: 2, 1, 32>}, {pipeline_mode = #tpu.pipeline_mode<synchronous>, transform_indices = @transform_12, window_bounds = array<i64: 2, 32, 64>}, {pipeline_mode = #tpu.pipeline_mode<synchronous>, transform_indices = @transform_13, window_bounds = array<i64: 2, 1, 64>}, {pipeline_mode = #tpu.pipeline_mode<synchronous>, transform_indices = @transform_14, window_bounds = array<i64: 2, 64, 32>}, {pipeline_mode = #tpu.pipeline_mode<synchronous>, transform_indices = @transform_15, window_bounds = array<i64: 2, 1, 32>}, {pipeline_mode = #tpu.pipeline_mode<synchronous>, transform_indices = @transform_16, window_bounds = array<i64: 2, 6, 32>}, {pipeline_mode = #tpu.pipeline_mode<synchronous>, transform_indices = @transform_17, window_bounds = array<i64: 2, 32>}, {transform_indices = @transform_18, window_bounds = array<i64: 1, 8, 32>}]} {
    %c0 = arith.constant 0 : index
    %c0_0 = arith.constant 0 : index
    %c0_1 = arith.constant 0 : index
    %0 = vector.load %arg1[%c0, %c0_0, %c0_1] : memref<1x8x32xf32, #tpu.memory_space<vmem>>, vector<1x8x32xf32>
    %1 = vector.shape_cast %0 : vector<1x8x32xf32> to vector<8x32xf32>
    %c0_2 = arith.constant 0 : index
    %c0_3 = arith.constant 0 : index
    %c0_4 = arith.constant 0 : index
    %2 = vector.load %arg2[%c0_2, %c0_3, %c0_4] : memref<1x16x32xf32, #tpu.memory_space<vmem>>, vector<1x16x32xf32>
    %3 = vector.shape_cast %2 : vector<1x16x32xf32> to vector<16x32xf32>
    %c0_5 = arith.constant 0 : index
    %c0_6 = arith.constant 0 : index
    %c0_7 = arith.constant 0 : index
    %4 = vector.load %arg3[%c0_5, %c0_6, %c0_7] : memref<1x8x32xf32, #tpu.memory_space<vmem>>, vector<1x8x32xf32>
    %5 = vector.shape_cast %4 : vector<1x8x32xf32> to vector<8x32xf32>
    %c0_8 = arith.constant 0 : index
    %c0_9 = arith.constant 0 : index
    %c0_10 = arith.constant 0 : index
    %6 = vector.load %arg4[%c0_8, %c0_9, %c0_10] : memref<1x16x32xf32, #tpu.memory_space<vmem>>, vector<1x16x32xf32>
    %7 = vector.shape_cast %6 : vector<1x16x32xf32> to vector<16x32xf32>
    %8 = arith.addf %3, %7 : vector<16x32xf32>
    %c0_11 = arith.constant 0 : index
    %c0_12 = arith.constant 0 : index
    %c0_13 = arith.constant 0 : index
    %9 = vector.load %arg17[%c0_11, %c0_12, %c0_13] : memref<2x6x32xf32, #tpu.memory_space<vmem>>, vector<1x6x32xf32>
    %10 = vector.shape_cast %9 : vector<1x6x32xf32> to vector<6x32xf32>
    %11 = arith.addf %1, %5 : vector<8x32xf32>
    %c0_14 = arith.constant 0 : index
    %c0_15 = arith.constant 0 : index
    %c0_16 = arith.constant 0 : index
    %c0_17 = arith.constant 0 : index
    %c0_18 = arith.constant 0 : index
    %12 = vector.load %arg5[%c0_14, %c0_15, %c0_16, %c0_17, %c0_18] : memref<2x2x4x32x8xf32, #tpu.memory_space<vmem>>, vector<1x1x1x32x8xf32>
    %13 = vector.shape_cast %12 : vector<1x1x1x32x8xf32> to vector<32x8xf32>
    %cst = arith.constant dense<0.000000e+00> : vector<8x8xf32>
    %14 = tpu.matmul %11, %13, %cst {dimension_numbers = #tpu.dot_dimension_numbers<[1], [0], [0], [1], [0, 0, 1, 1], [], []>} : vector<8x32xf32>, vector<32x8xf32>, vector<8x8xf32> -> vector<8x8xf32>
    %c0_19 = arith.constant 0 : index
    %c0_20 = arith.constant 0 : index
    %c0_21 = arith.constant 0 : index
    %c0_22 = arith.constant 0 : index
    %c0_23 = arith.constant 0 : index
    %15 = vector.load %arg6[%c0_19, %c0_20, %c0_21, %c0_22, %c0_23] : memref<2x2x4x1x8xf32, #tpu.memory_space<vmem>>, vector<1x1x1x1x8xf32>
    %16 = vector.shape_cast %15 : vector<1x1x1x1x8xf32> to vector<1x8xf32>
    %17 = vector.broadcast %16 : vector<1x8xf32> to vector<8x8xf32>
    %18 = arith.addf %14, %17 : vector<8x8xf32>
    %c0_24 = arith.constant 0 : index
    %c1 = arith.constant 1 : index
    %c0_25 = arith.constant 0 : index
    %c0_26 = arith.constant 0 : index
    %c0_27 = arith.constant 0 : index
    %19 = vector.load %arg5[%c0_24, %c1, %c0_25, %c0_26, %c0_27] : memref<2x2x4x32x8xf32, #tpu.memory_space<vmem>>, vector<1x1x1x32x8xf32>
    %20 = vector.shape_cast %19 : vector<1x1x1x32x8xf32> to vector<32x8xf32>
    %cst_28 = arith.constant dense<0.000000e+00> : vector<8x8xf32>
    %21 = tpu.matmul %11, %20, %cst_28 {dimension_numbers = #tpu.dot_dimension_numbers<[1], [0], [0], [1], [0, 0, 1, 1], [], []>} : vector<8x32xf32>, vector<32x8xf32>, vector<8x8xf32> -> vector<8x8xf32>
    %c0_29 = arith.constant 0 : index
    %c1_30 = arith.constant 1 : index
    %c0_31 = arith.constant 0 : index
    %c0_32 = arith.constant 0 : index
    %c0_33 = arith.constant 0 : index
    %22 = vector.load %arg6[%c0_29, %c1_30, %c0_31, %c0_32, %c0_33] : memref<2x2x4x1x8xf32, #tpu.memory_space<vmem>>, vector<1x1x1x1x8xf32>
    %23 = vector.shape_cast %22 : vector<1x1x1x1x8xf32> to vector<1x8xf32>
    %24 = vector.broadcast %23 : vector<1x8xf32> to vector<8x8xf32>
    %25 = arith.addf %21, %24 : vector<8x8xf32>
    %cst_34 = arith.constant dense<0.000000e+00> : vector<8x8xf32>
    %26 = tpu.matmul %18, %25, %cst_34 {dimension_numbers = #tpu.dot_dimension_numbers<[1], [1], [0], [0], [0, 0, 1, 0], [], []>} : vector<8x8xf32>, vector<8x8xf32>, vector<8x8xf32> -> vector<8x8xf32>
    %cst_35 = arith.constant dense<0xFF800000> : vector<8xf32>
    %27 = vector.multi_reduction <maximumf>, %26, %cst_35 [1] : vector<8x8xf32> to vector<8xf32>
    %28 = vector.shape_cast %27 : vector<8xf32> to vector<8x1xf32>
    %29 = vector.broadcast %28 : vector<8x1xf32> to vector<8x8xf32>
    %30 = arith.subf %26, %29 : vector<8x8xf32>
    %31 = math.exp %30 : vector<8x8xf32>
    %cst_36 = arith.constant dense<0.000000e+00> : vector<8xf32>
    %32 = vector.multi_reduction <add>, %31, %cst_36 [1] : vector<8x8xf32> to vector<8xf32>
    %33 = vector.shape_cast %32 : vector<8xf32> to vector<8x1xf32>
    %34 = tpu.reciprocal %33 : vector<8x1xf32> -> vector<8x1xf32>
    %35 = vector.broadcast %34 : vector<8x1xf32> to vector<8x8xf32>
    %36 = arith.mulf %31, %35 : vector<8x8xf32>
    %c0_37 = arith.constant 0 : index
    %c0_38 = arith.constant 0 : index
    %c0_39 = arith.constant 0 : index
    %c0_40 = arith.constant 0 : index
    %37 = vector.load %arg7[%c0_37, %c0_38, %c0_39, %c0_40] : memref<2x4x32x32xf32, #tpu.memory_space<vmem>>, vector<1x1x32x32xf32>
    %38 = vector.shape_cast %37 : vector<1x1x32x32xf32> to vector<32x32xf32>
    %cst_41 = arith.constant dense<0.000000e+00> : vector<8x32xf32>
    %39 = tpu.matmul %1, %38, %cst_41 {dimension_numbers = #tpu.dot_dimension_numbers<[1], [0], [0], [1], [0, 0, 1, 1], [], []>} : vector<8x32xf32>, vector<32x32xf32>, vector<8x32xf32> -> vector<8x32xf32>
    %cst_42 = arith.constant dense<0.000000e+00> : vector<8x32xf32>
    %40 = tpu.matmul %36, %39, %cst_42 {dimension_numbers = #tpu.dot_dimension_numbers<[1], [0], [0], [1], [0, 0, 1, 1], [], []>} : vector<8x8xf32>, vector<8x32xf32>, vector<8x32xf32> -> vector<8x32xf32>
    %c0_43 = arith.constant 0 : index
    %c0_44 = arith.constant 0 : index
    %c1_45 = arith.constant 1 : index
    %c0_46 = arith.constant 0 : index
    %c0_47 = arith.constant 0 : index
    %41 = vector.load %arg5[%c0_43, %c0_44, %c1_45, %c0_46, %c0_47] : memref<2x2x4x32x8xf32, #tpu.memory_space<vmem>>, vector<1x1x1x32x8xf32>
    %42 = vector.shape_cast %41 : vector<1x1x1x32x8xf32> to vector<32x8xf32>
    %cst_48 = arith.constant dense<0.000000e+00> : vector<8x8xf32>
    %43 = tpu.matmul %11, %42, %cst_48 {dimension_numbers = #tpu.dot_dimension_numbers<[1], [0], [0], [1], [0, 0, 1, 1], [], []>} : vector<8x32xf32>, vector<32x8xf32>, vector<8x8xf32> -> vector<8x8xf32>
    %c0_49 = arith.constant 0 : index
    %c0_50 = arith.constant 0 : index
    %c1_51 = arith.constant 1 : index
    %c0_52 = arith.constant 0 : index
    %c0_53 = arith.constant 0 : index
    %44 = vector.load %arg6[%c0_49, %c0_50, %c1_51, %c0_52, %c0_53] : memref<2x2x4x1x8xf32, #tpu.memory_space<vmem>>, vector<1x1x1x1x8xf32>
    %45 = vector.shape_cast %44 : vector<1x1x1x1x8xf32> to vector<1x8xf32>
    %46 = vector.broadcast %45 : vector<1x8xf32> to vector<8x8xf32>
    %47 = arith.addf %43, %46 : vector<8x8xf32>
    %c0_54 = arith.constant 0 : index
    %c1_55 = arith.constant 1 : index
    %c1_56 = arith.constant 1 : index
    %c0_57 = arith.constant 0 : index
    %c0_58 = arith.constant 0 : index
    %48 = vector.load %arg5[%c0_54, %c1_55, %c1_56, %c0_57, %c0_58] : memref<2x2x4x32x8xf32, #tpu.memory_space<vmem>>, vector<1x1x1x32x8xf32>
    %49 = vector.shape_cast %48 : vector<1x1x1x32x8xf32> to vector<32x8xf32>
    %cst_59 = arith.constant dense<0.000000e+00> : vector<8x8xf32>
    %50 = tpu.matmul %11, %49, %cst_59 {dimension_numbers = #tpu.dot_dimension_numbers<[1], [0], [0], [1], [0, 0, 1, 1], [], []>} : vector<8x32xf32>, vector<32x8xf32>, vector<8x8xf32> -> vector<8x8xf32>
    %c0_60 = arith.constant 0 : index
    %c1_61 = arith.constant 1 : index
    %c1_62 = arith.constant 1 : index
    %c0_63 = arith.constant 0 : index
    %c0_64 = arith.constant 0 : index
    %51 = vector.load %arg6[%c0_60, %c1_61, %c1_62, %c0_63, %c0_64] : memref<2x2x4x1x8xf32, #tpu.memory_space<vmem>>, vector<1x1x1x1x8xf32>
    %52 = vector.shape_cast %51 : vector<1x1x1x1x8xf32> to vector<1x8xf32>
    %53 = vector.broadcast %52 : vector<1x8xf32> to vector<8x8xf32>
    %54 = arith.addf %50, %53 : vector<8x8xf32>
    %cst_65 = arith.constant dense<0.000000e+00> : vector<8x8xf32>
    %55 = tpu.matmul %47, %54, %cst_65 {dimension_numbers = #tpu.dot_dimension_numbers<[1], [1], [0], [0], [0, 0, 1, 0], [], []>} : vector<8x8xf32>, vector<8x8xf32>, vector<8x8xf32> -> vector<8x8xf32>
    %cst_66 = arith.constant dense<0xFF800000> : vector<8xf32>
    %56 = vector.multi_reduction <maximumf>, %55, %cst_66 [1] : vector<8x8xf32> to vector<8xf32>
    %57 = vector.shape_cast %56 : vector<8xf32> to vector<8x1xf32>
    %58 = vector.broadcast %57 : vector<8x1xf32> to vector<8x8xf32>
    %59 = arith.subf %55, %58 : vector<8x8xf32>
    %60 = math.exp %59 : vector<8x8xf32>
    %cst_67 = arith.constant dense<0.000000e+00> : vector<8xf32>
    %61 = vector.multi_reduction <add>, %60, %cst_67 [1] : vector<8x8xf32> to vector<8xf32>
    %62 = vector.shape_cast %61 : vector<8xf32> to vector<8x1xf32>
    %63 = tpu.reciprocal %62 : vector<8x1xf32> -> vector<8x1xf32>
    %64 = vector.broadcast %63 : vector<8x1xf32> to vector<8x8xf32>
    %65 = arith.mulf %60, %64 : vector<8x8xf32>
    %c0_68 = arith.constant 0 : index
    %c1_69 = arith.constant 1 : index
    %c0_70 = arith.constant 0 : index
    %c0_71 = arith.constant 0 : index
    %66 = vector.load %arg7[%c0_68, %c1_69, %c0_70, %c0_71] : memref<2x4x32x32xf32, #tpu.memory_space<vmem>>, vector<1x1x32x32xf32>
    %67 = vector.shape_cast %66 : vector<1x1x32x32xf32> to vector<32x32xf32>
    %cst_72 = arith.constant dense<0.000000e+00> : vector<8x32xf32>
    %68 = tpu.matmul %1, %67, %cst_72 {dimension_numbers = #tpu.dot_dimension_numbers<[1], [0], [0], [1], [0, 0, 1, 1], [], []>} : vector<8x32xf32>, vector<32x32xf32>, vector<8x32xf32> -> vector<8x32xf32>
    %cst_73 = arith.constant dense<0.000000e+00> : vector<8x32xf32>
    %69 = tpu.matmul %65, %68, %cst_73 {dimension_numbers = #tpu.dot_dimension_numbers<[1], [0], [0], [1], [0, 0, 1, 1], [], []>} : vector<8x8xf32>, vector<8x32xf32>, vector<8x32xf32> -> vector<8x32xf32>
    %70 = arith.addf %40, %69 : vector<8x32xf32>
    %c0_74 = arith.constant 0 : index
    %c0_75 = arith.constant 0 : index
    %c2 = arith.constant 2 : index
    %c0_76 = arith.constant 0 : index
    %c0_77 = arith.constant 0 : index
    %71 = vector.load %arg5[%c0_74, %c0_75, %c2, %c0_76, %c0_77] : memref<2x2x4x32x8xf32, #tpu.memory_space<vmem>>, vector<1x1x1x32x8xf32>
    %72 = vector.shape_cast %71 : vector<1x1x1x32x8xf32> to vector<32x8xf32>
    %cst_78 = arith.constant dense<0.000000e+00> : vector<8x8xf32>
    %73 = tpu.matmul %11, %72, %cst_78 {dimension_numbers = #tpu.dot_dimension_numbers<[1], [0], [0], [1], [0, 0, 1, 1], [], []>} : vector<8x32xf32>, vector<32x8xf32>, vector<8x8xf32> -> vector<8x8xf32>
    %c0_79 = arith.constant 0 : index
    %c0_80 = arith.constant 0 : index
    %c2_81 = arith.constant 2 : index
    %c0_82 = arith.constant 0 : index
    %c0_83 = arith.constant 0 : index
    %74 = vector.load %arg6[%c0_79, %c0_80, %c2_81, %c0_82, %c0_83] : memref<2x2x4x1x8xf32, #tpu.memory_space<vmem>>, vector<1x1x1x1x8xf32>
    %75 = vector.shape_cast %74 : vector<1x1x1x1x8xf32> to vector<1x8xf32>
    %76 = vector.broadcast %75 : vector<1x8xf32> to vector<8x8xf32>
    %77 = arith.addf %73, %76 : vector<8x8xf32>
    %c0_84 = arith.constant 0 : index
    %c1_85 = arith.constant 1 : index
    %c2_86 = arith.constant 2 : index
    %c0_87 = arith.constant 0 : index
    %c0_88 = arith.constant 0 : index
    %78 = vector.load %arg5[%c0_84, %c1_85, %c2_86, %c0_87, %c0_88] : memref<2x2x4x32x8xf32, #tpu.memory_space<vmem>>, vector<1x1x1x32x8xf32>
    %79 = vector.shape_cast %78 : vector<1x1x1x32x8xf32> to vector<32x8xf32>
    %cst_89 = arith.constant dense<0.000000e+00> : vector<8x8xf32>
    %80 = tpu.matmul %11, %79, %cst_89 {dimension_numbers = #tpu.dot_dimension_numbers<[1], [0], [0], [1], [0, 0, 1, 1], [], []>} : vector<8x32xf32>, vector<32x8xf32>, vector<8x8xf32> -> vector<8x8xf32>
    %c0_90 = arith.constant 0 : index
    %c1_91 = arith.constant 1 : index
    %c2_92 = arith.constant 2 : index
    %c0_93 = arith.constant 0 : index
    %c0_94 = arith.constant 0 : index
    %81 = vector.load %arg6[%c0_90, %c1_91, %c2_92, %c0_93, %c0_94] : memref<2x2x4x1x8xf32, #tpu.memory_space<vmem>>, vector<1x1x1x1x8xf32>
    %82 = vector.shape_cast %81 : vector<1x1x1x1x8xf32> to vector<1x8xf32>
    %83 = vector.broadcast %82 : vector<1x8xf32> to vector<8x8xf32>
    %84 = arith.addf %80, %83 : vector<8x8xf32>
    %cst_95 = arith.constant dense<0.000000e+00> : vector<8x8xf32>
    %85 = tpu.matmul %77, %84, %cst_95 {dimension_numbers = #tpu.dot_dimension_numbers<[1], [1], [0], [0], [0, 0, 1, 0], [], []>} : vector<8x8xf32>, vector<8x8xf32>, vector<8x8xf32> -> vector<8x8xf32>
    %cst_96 = arith.constant dense<0xFF800000> : vector<8xf32>
    %86 = vector.multi_reduction <maximumf>, %85, %cst_96 [1] : vector<8x8xf32> to vector<8xf32>
    %87 = vector.shape_cast %86 : vector<8xf32> to vector<8x1xf32>
    %88 = vector.broadcast %87 : vector<8x1xf32> to vector<8x8xf32>
    %89 = arith.subf %85, %88 : vector<8x8xf32>
    %90 = math.exp %89 : vector<8x8xf32>
    %cst_97 = arith.constant dense<0.000000e+00> : vector<8xf32>
    %91 = vector.multi_reduction <add>, %90, %cst_97 [1] : vector<8x8xf32> to vector<8xf32>
    %92 = vector.shape_cast %91 : vector<8xf32> to vector<8x1xf32>
    %93 = tpu.reciprocal %92 : vector<8x1xf32> -> vector<8x1xf32>
    %94 = vector.broadcast %93 : vector<8x1xf32> to vector<8x8xf32>
    %95 = arith.mulf %90, %94 : vector<8x8xf32>
    %c0_98 = arith.constant 0 : index
    %c2_99 = arith.constant 2 : index
    %c0_100 = arith.constant 0 : index
    %c0_101 = arith.constant 0 : index
    %96 = vector.load %arg7[%c0_98, %c2_99, %c0_100, %c0_101] : memref<2x4x32x32xf32, #tpu.memory_space<vmem>>, vector<1x1x32x32xf32>
    %97 = vector.shape_cast %96 : vector<1x1x32x32xf32> to vector<32x32xf32>
    %cst_102 = arith.constant dense<0.000000e+00> : vector<8x32xf32>
    %98 = tpu.matmul %1, %97, %cst_102 {dimension_numbers = #tpu.dot_dimension_numbers<[1], [0], [0], [1], [0, 0, 1, 1], [], []>} : vector<8x32xf32>, vector<32x32xf32>, vector<8x32xf32> -> vector<8x32xf32>
    %cst_103 = arith.constant dense<0.000000e+00> : vector<8x32xf32>
    %99 = tpu.matmul %95, %98, %cst_103 {dimension_numbers = #tpu.dot_dimension_numbers<[1], [0], [0], [1], [0, 0, 1, 1], [], []>} : vector<8x8xf32>, vector<8x32xf32>, vector<8x32xf32> -> vector<8x32xf32>
    %100 = arith.addf %70, %99 : vector<8x32xf32>
    %c0_104 = arith.constant 0 : index
    %c0_105 = arith.constant 0 : index
    %c3 = arith.constant 3 : index
    %c0_106 = arith.constant 0 : index
    %c0_107 = arith.constant 0 : index
    %101 = vector.load %arg5[%c0_104, %c0_105, %c3, %c0_106, %c0_107] : memref<2x2x4x32x8xf32, #tpu.memory_space<vmem>>, vector<1x1x1x32x8xf32>
    %102 = vector.shape_cast %101 : vector<1x1x1x32x8xf32> to vector<32x8xf32>
    %cst_108 = arith.constant dense<0.000000e+00> : vector<8x8xf32>
    %103 = tpu.matmul %11, %102, %cst_108 {dimension_numbers = #tpu.dot_dimension_numbers<[1], [0], [0], [1], [0, 0, 1, 1], [], []>} : vector<8x32xf32>, vector<32x8xf32>, vector<8x8xf32> -> vector<8x8xf32>
    %c0_109 = arith.constant 0 : index
    %c0_110 = arith.constant 0 : index
    %c3_111 = arith.constant 3 : index
    %c0_112 = arith.constant 0 : index
    %c0_113 = arith.constant 0 : index
    %104 = vector.load %arg6[%c0_109, %c0_110, %c3_111, %c0_112, %c0_113] : memref<2x2x4x1x8xf32, #tpu.memory_space<vmem>>, vector<1x1x1x1x8xf32>
    %105 = vector.shape_cast %104 : vector<1x1x1x1x8xf32> to vector<1x8xf32>
    %106 = vector.broadcast %105 : vector<1x8xf32> to vector<8x8xf32>
    %107 = arith.addf %103, %106 : vector<8x8xf32>
    %c0_114 = arith.constant 0 : index
    %c1_115 = arith.constant 1 : index
    %c3_116 = arith.constant 3 : index
    %c0_117 = arith.constant 0 : index
    %c0_118 = arith.constant 0 : index
    %108 = vector.load %arg5[%c0_114, %c1_115, %c3_116, %c0_117, %c0_118] : memref<2x2x4x32x8xf32, #tpu.memory_space<vmem>>, vector<1x1x1x32x8xf32>
    %109 = vector.shape_cast %108 : vector<1x1x1x32x8xf32> to vector<32x8xf32>
    %cst_119 = arith.constant dense<0.000000e+00> : vector<8x8xf32>
    %110 = tpu.matmul %11, %109, %cst_119 {dimension_numbers = #tpu.dot_dimension_numbers<[1], [0], [0], [1], [0, 0, 1, 1], [], []>} : vector<8x32xf32>, vector<32x8xf32>, vector<8x8xf32> -> vector<8x8xf32>
    %c0_120 = arith.constant 0 : index
    %c1_121 = arith.constant 1 : index
    %c3_122 = arith.constant 3 : index
    %c0_123 = arith.constant 0 : index
    %c0_124 = arith.constant 0 : index
    %111 = vector.load %arg6[%c0_120, %c1_121, %c3_122, %c0_123, %c0_124] : memref<2x2x4x1x8xf32, #tpu.memory_space<vmem>>, vector<1x1x1x1x8xf32>
    %112 = vector.shape_cast %111 : vector<1x1x1x1x8xf32> to vector<1x8xf32>
    %113 = vector.broadcast %112 : vector<1x8xf32> to vector<8x8xf32>
    %114 = arith.addf %110, %113 : vector<8x8xf32>
    %cst_125 = arith.constant dense<0.000000e+00> : vector<8x8xf32>
    %115 = tpu.matmul %107, %114, %cst_125 {dimension_numbers = #tpu.dot_dimension_numbers<[1], [1], [0], [0], [0, 0, 1, 0], [], []>} : vector<8x8xf32>, vector<8x8xf32>, vector<8x8xf32> -> vector<8x8xf32>
    %cst_126 = arith.constant dense<0xFF800000> : vector<8xf32>
    %116 = vector.multi_reduction <maximumf>, %115, %cst_126 [1] : vector<8x8xf32> to vector<8xf32>
    %117 = vector.shape_cast %116 : vector<8xf32> to vector<8x1xf32>
    %118 = vector.broadcast %117 : vector<8x1xf32> to vector<8x8xf32>
    %119 = arith.subf %115, %118 : vector<8x8xf32>
    %120 = math.exp %119 : vector<8x8xf32>
    %cst_127 = arith.constant dense<0.000000e+00> : vector<8xf32>
    %121 = vector.multi_reduction <add>, %120, %cst_127 [1] : vector<8x8xf32> to vector<8xf32>
    %122 = vector.shape_cast %121 : vector<8xf32> to vector<8x1xf32>
    %123 = tpu.reciprocal %122 : vector<8x1xf32> -> vector<8x1xf32>
    %124 = vector.broadcast %123 : vector<8x1xf32> to vector<8x8xf32>
    %125 = arith.mulf %120, %124 : vector<8x8xf32>
    %c0_128 = arith.constant 0 : index
    %c3_129 = arith.constant 3 : index
    %c0_130 = arith.constant 0 : index
    %c0_131 = arith.constant 0 : index
    %126 = vector.load %arg7[%c0_128, %c3_129, %c0_130, %c0_131] : memref<2x4x32x32xf32, #tpu.memory_space<vmem>>, vector<1x1x32x32xf32>
    %127 = vector.shape_cast %126 : vector<1x1x32x32xf32> to vector<32x32xf32>
    %cst_132 = arith.constant dense<0.000000e+00> : vector<8x32xf32>
    %128 = tpu.matmul %1, %127, %cst_132 {dimension_numbers = #tpu.dot_dimension_numbers<[1], [0], [0], [1], [0, 0, 1, 1], [], []>} : vector<8x32xf32>, vector<32x32xf32>, vector<8x32xf32> -> vector<8x32xf32>
    %cst_133 = arith.constant dense<0.000000e+00> : vector<8x32xf32>
    %129 = tpu.matmul %125, %128, %cst_133 {dimension_numbers = #tpu.dot_dimension_numbers<[1], [0], [0], [1], [0, 0, 1, 1], [], []>} : vector<8x8xf32>, vector<8x32xf32>, vector<8x32xf32> -> vector<8x32xf32>
    %130 = arith.addf %100, %129 : vector<8x32xf32>
    %c0_134 = arith.constant 0 : index
    %c0_135 = arith.constant 0 : index
    %c0_136 = arith.constant 0 : index
    %131 = vector.load %arg8[%c0_134, %c0_135, %c0_136] : memref<2x1x32xf32, #tpu.memory_space<vmem>>, vector<1x1x32xf32>
    %132 = vector.shape_cast %131 : vector<1x1x32xf32> to vector<1x32xf32>
    %133 = vector.broadcast %132 : vector<1x32xf32> to vector<8x32xf32>
    %134 = arith.addf %130, %133 : vector<8x32xf32>
    %135 = arith.addf %1, %134 : vector<8x32xf32>
    %136 = vector.extract_strided_slice %10 {offsets = [0, 0], sizes = [1, 32], strides = [1, 1]} : vector<6x32xf32> to vector<1x32xf32>
    %137 = vector.extract_strided_slice %10 {offsets = [1, 0], sizes = [1, 32], strides = [1, 1]} : vector<6x32xf32> to vector<1x32xf32>
    %cst_137 = arith.constant dense<0.000000e+00> : vector<8xf32>
    %138 = vector.multi_reduction <add>, %135, %cst_137 [1] : vector<8x32xf32> to vector<8xf32>
    %139 = vector.shape_cast %138 : vector<8xf32> to vector<8x1xf32>
    %cst_138 = arith.constant 3.200000e+01 : f32
    %140 = vector.broadcast %cst_138 : f32 to vector<8x1xf32>
    %141 = arith.divf %139, %140 : vector<8x1xf32>
    %142 = vector.broadcast %141 : vector<8x1xf32> to vector<8x32xf32>
    %143 = arith.subf %135, %142 : vector<8x32xf32>
    %144 = arith.mulf %143, %143 : vector<8x32xf32>
    %cst_139 = arith.constant dense<0.000000e+00> : vector<8xf32>
    %145 = vector.multi_reduction <add>, %144, %cst_139 [1] : vector<8x32xf32> to vector<8xf32>
    %146 = vector.shape_cast %145 : vector<8xf32> to vector<8x1xf32>
    %cst_140 = arith.constant 3.200000e+01 : f32
    %147 = vector.broadcast %cst_140 : f32 to vector<8x1xf32>
    %148 = arith.divf %146, %147 : vector<8x1xf32>
    %149 = vector.broadcast %141 : vector<8x1xf32> to vector<8x32xf32>
    %150 = arith.subf %135, %149 : vector<8x32xf32>
    %cst_141 = arith.constant 9.99999974E-6 : f32
    %151 = vector.broadcast %cst_141 : f32 to vector<8x1xf32>
    %152 = arith.addf %148, %151 : vector<8x1xf32>
    %153 = math.rsqrt %152 : vector<8x1xf32>
    %154 = vector.broadcast %153 : vector<8x1xf32> to vector<8x32xf32>
    %155 = arith.mulf %150, %154 : vector<8x32xf32>
    %156 = vector.broadcast %136 : vector<1x32xf32> to vector<8x32xf32>
    %157 = arith.mulf %155, %156 : vector<8x32xf32>
    %158 = vector.broadcast %137 : vector<1x32xf32> to vector<8x32xf32>
    %159 = arith.addf %157, %158 : vector<8x32xf32>
    %160 = arith.addf %159, %5 : vector<8x32xf32>
    %c0_142 = arith.constant 0 : index
    %c0_143 = arith.constant 0 : index
    %c0_144 = arith.constant 0 : index
    %c0_145 = arith.constant 0 : index
    %c0_146 = arith.constant 0 : index
    %161 = vector.load %arg9[%c0_142, %c0_143, %c0_144, %c0_145, %c0_146] : memref<2x2x4x32x8xf32, #tpu.memory_space<vmem>>, vector<1x1x1x32x8xf32>
    %162 = vector.shape_cast %161 : vector<1x1x1x32x8xf32> to vector<32x8xf32>
    %cst_147 = arith.constant dense<0.000000e+00> : vector<8x8xf32>
    %163 = tpu.matmul %160, %162, %cst_147 {dimension_numbers = #tpu.dot_dimension_numbers<[1], [0], [0], [1], [0, 0, 1, 1], [], []>} : vector<8x32xf32>, vector<32x8xf32>, vector<8x8xf32> -> vector<8x8xf32>
    %c0_148 = arith.constant 0 : index
    %c0_149 = arith.constant 0 : index
    %c0_150 = arith.constant 0 : index
    %c0_151 = arith.constant 0 : index
    %c0_152 = arith.constant 0 : index
    %164 = vector.load %arg10[%c0_148, %c0_149, %c0_150, %c0_151, %c0_152] : memref<2x2x4x1x8xf32, #tpu.memory_space<vmem>>, vector<1x1x1x1x8xf32>
    %165 = vector.shape_cast %164 : vector<1x1x1x1x8xf32> to vector<1x8xf32>
    %166 = vector.broadcast %165 : vector<1x8xf32> to vector<8x8xf32>
    %167 = arith.addf %163, %166 : vector<8x8xf32>
    %c0_153 = arith.constant 0 : index
    %c1_154 = arith.constant 1 : index
    %c0_155 = arith.constant 0 : index
    %c0_156 = arith.constant 0 : index
    %c0_157 = arith.constant 0 : index
    %168 = vector.load %arg9[%c0_153, %c1_154, %c0_155, %c0_156, %c0_157] : memref<2x2x4x32x8xf32, #tpu.memory_space<vmem>>, vector<1x1x1x32x8xf32>
    %169 = vector.shape_cast %168 : vector<1x1x1x32x8xf32> to vector<32x8xf32>
    %cst_158 = arith.constant dense<0.000000e+00> : vector<16x8xf32>
    %170 = tpu.matmul %8, %169, %cst_158 {dimension_numbers = #tpu.dot_dimension_numbers<[1], [0], [0], [1], [0, 0, 1, 1], [], []>} : vector<16x32xf32>, vector<32x8xf32>, vector<16x8xf32> -> vector<16x8xf32>
    %c0_159 = arith.constant 0 : index
    %c1_160 = arith.constant 1 : index
    %c0_161 = arith.constant 0 : index
    %c0_162 = arith.constant 0 : index
    %c0_163 = arith.constant 0 : index
    %171 = vector.load %arg10[%c0_159, %c1_160, %c0_161, %c0_162, %c0_163] : memref<2x2x4x1x8xf32, #tpu.memory_space<vmem>>, vector<1x1x1x1x8xf32>
    %172 = vector.shape_cast %171 : vector<1x1x1x1x8xf32> to vector<1x8xf32>
    %173 = vector.broadcast %172 : vector<1x8xf32> to vector<16x8xf32>
    %174 = arith.addf %170, %173 : vector<16x8xf32>
    %cst_164 = arith.constant dense<0.000000e+00> : vector<8x16xf32>
    %175 = tpu.matmul %167, %174, %cst_164 {dimension_numbers = #tpu.dot_dimension_numbers<[1], [1], [0], [0], [0, 0, 1, 0], [], []>} : vector<8x8xf32>, vector<16x8xf32>, vector<8x16xf32> -> vector<8x16xf32>
    %cst_165 = arith.constant dense<0xFF800000> : vector<8xf32>
    %176 = vector.multi_reduction <maximumf>, %175, %cst_165 [1] : vector<8x16xf32> to vector<8xf32>
    %177 = vector.shape_cast %176 : vector<8xf32> to vector<8x1xf32>
    %178 = vector.broadcast %177 : vector<8x1xf32> to vector<8x16xf32>
    %179 = arith.subf %175, %178 : vector<8x16xf32>
    %180 = math.exp %179 : vector<8x16xf32>
    %cst_166 = arith.constant dense<0.000000e+00> : vector<8xf32>
    %181 = vector.multi_reduction <add>, %180, %cst_166 [1] : vector<8x16xf32> to vector<8xf32>
    %182 = vector.shape_cast %181 : vector<8xf32> to vector<8x1xf32>
    %183 = tpu.reciprocal %182 : vector<8x1xf32> -> vector<8x1xf32>
    %184 = vector.broadcast %183 : vector<8x1xf32> to vector<8x16xf32>
    %185 = arith.mulf %180, %184 : vector<8x16xf32>
    %c0_167 = arith.constant 0 : index
    %c0_168 = arith.constant 0 : index
    %c0_169 = arith.constant 0 : index
    %c0_170 = arith.constant 0 : index
    %186 = vector.load %arg11[%c0_167, %c0_168, %c0_169, %c0_170] : memref<2x4x32x32xf32, #tpu.memory_space<vmem>>, vector<1x1x32x32xf32>
    %187 = vector.shape_cast %186 : vector<1x1x32x32xf32> to vector<32x32xf32>
    %cst_171 = arith.constant dense<0.000000e+00> : vector<16x32xf32>
    %188 = tpu.matmul %3, %187, %cst_171 {dimension_numbers = #tpu.dot_dimension_numbers<[1], [0], [0], [1], [0, 0, 1, 1], [], []>} : vector<16x32xf32>, vector<32x32xf32>, vector<16x32xf32> -> vector<16x32xf32>
    %cst_172 = arith.constant dense<0.000000e+00> : vector<8x32xf32>
    %189 = tpu.matmul %185, %188, %cst_172 {dimension_numbers = #tpu.dot_dimension_numbers<[1], [0], [0], [1], [0, 0, 1, 1], [], []>} : vector<8x16xf32>, vector<16x32xf32>, vector<8x32xf32> -> vector<8x32xf32>
    %c0_173 = arith.constant 0 : index
    %c0_174 = arith.constant 0 : index
    %c1_175 = arith.constant 1 : index
    %c0_176 = arith.constant 0 : index
    %c0_177 = arith.constant 0 : index
    %190 = vector.load %arg9[%c0_173, %c0_174, %c1_175, %c0_176, %c0_177] : memref<2x2x4x32x8xf32, #tpu.memory_space<vmem>>, vector<1x1x1x32x8xf32>
    %191 = vector.shape_cast %190 : vector<1x1x1x32x8xf32> to vector<32x8xf32>
    %cst_178 = arith.constant dense<0.000000e+00> : vector<8x8xf32>
    %192 = tpu.matmul %160, %191, %cst_178 {dimension_numbers = #tpu.dot_dimension_numbers<[1], [0], [0], [1], [0, 0, 1, 1], [], []>} : vector<8x32xf32>, vector<32x8xf32>, vector<8x8xf32> -> vector<8x8xf32>
    %c0_179 = arith.constant 0 : index
    %c0_180 = arith.constant 0 : index
    %c1_181 = arith.constant 1 : index
    %c0_182 = arith.constant 0 : index
    %c0_183 = arith.constant 0 : index
    %193 = vector.load %arg10[%c0_179, %c0_180, %c1_181, %c0_182, %c0_183] : memref<2x2x4x1x8xf32, #tpu.memory_space<vmem>>, vector<1x1x1x1x8xf32>
    %194 = vector.shape_cast %193 : vector<1x1x1x1x8xf32> to vector<1x8xf32>
    %195 = vector.broadcast %194 : vector<1x8xf32> to vector<8x8xf32>
    %196 = arith.addf %192, %195 : vector<8x8xf32>
    %c0_184 = arith.constant 0 : index
    %c1_185 = arith.constant 1 : index
    %c1_186 = arith.constant 1 : index
    %c0_187 = arith.constant 0 : index
    %c0_188 = arith.constant 0 : index
    %197 = vector.load %arg9[%c0_184, %c1_185, %c1_186, %c0_187, %c0_188] : memref<2x2x4x32x8xf32, #tpu.memory_space<vmem>>, vector<1x1x1x32x8xf32>
    %198 = vector.shape_cast %197 : vector<1x1x1x32x8xf32> to vector<32x8xf32>
    %cst_189 = arith.constant dense<0.000000e+00> : vector<16x8xf32>
    %199 = tpu.matmul %8, %198, %cst_189 {dimension_numbers = #tpu.dot_dimension_numbers<[1], [0], [0], [1], [0, 0, 1, 1], [], []>} : vector<16x32xf32>, vector<32x8xf32>, vector<16x8xf32> -> vector<16x8xf32>
    %c0_190 = arith.constant 0 : index
    %c1_191 = arith.constant 1 : index
    %c1_192 = arith.constant 1 : index
    %c0_193 = arith.constant 0 : index
    %c0_194 = arith.constant 0 : index
    %200 = vector.load %arg10[%c0_190, %c1_191, %c1_192, %c0_193, %c0_194] : memref<2x2x4x1x8xf32, #tpu.memory_space<vmem>>, vector<1x1x1x1x8xf32>
    %201 = vector.shape_cast %200 : vector<1x1x1x1x8xf32> to vector<1x8xf32>
    %202 = vector.broadcast %201 : vector<1x8xf32> to vector<16x8xf32>
    %203 = arith.addf %199, %202 : vector<16x8xf32>
    %cst_195 = arith.constant dense<0.000000e+00> : vector<8x16xf32>
    %204 = tpu.matmul %196, %203, %cst_195 {dimension_numbers = #tpu.dot_dimension_numbers<[1], [1], [0], [0], [0, 0, 1, 0], [], []>} : vector<8x8xf32>, vector<16x8xf32>, vector<8x16xf32> -> vector<8x16xf32>
    %cst_196 = arith.constant dense<0xFF800000> : vector<8xf32>
    %205 = vector.multi_reduction <maximumf>, %204, %cst_196 [1] : vector<8x16xf32> to vector<8xf32>
    %206 = vector.shape_cast %205 : vector<8xf32> to vector<8x1xf32>
    %207 = vector.broadcast %206 : vector<8x1xf32> to vector<8x16xf32>
    %208 = arith.subf %204, %207 : vector<8x16xf32>
    %209 = math.exp %208 : vector<8x16xf32>
    %cst_197 = arith.constant dense<0.000000e+00> : vector<8xf32>
    %210 = vector.multi_reduction <add>, %209, %cst_197 [1] : vector<8x16xf32> to vector<8xf32>
    %211 = vector.shape_cast %210 : vector<8xf32> to vector<8x1xf32>
    %212 = tpu.reciprocal %211 : vector<8x1xf32> -> vector<8x1xf32>
    %213 = vector.broadcast %212 : vector<8x1xf32> to vector<8x16xf32>
    %214 = arith.mulf %209, %213 : vector<8x16xf32>
    %c0_198 = arith.constant 0 : index
    %c1_199 = arith.constant 1 : index
    %c0_200 = arith.constant 0 : index
    %c0_201 = arith.constant 0 : index
    %215 = vector.load %arg11[%c0_198, %c1_199, %c0_200, %c0_201] : memref<2x4x32x32xf32, #tpu.memory_space<vmem>>, vector<1x1x32x32xf32>
    %216 = vector.shape_cast %215 : vector<1x1x32x32xf32> to vector<32x32xf32>
    %cst_202 = arith.constant dense<0.000000e+00> : vector<16x32xf32>
    %217 = tpu.matmul %3, %216, %cst_202 {dimension_numbers = #tpu.dot_dimension_numbers<[1], [0], [0], [1], [0, 0, 1, 1], [], []>} : vector<16x32xf32>, vector<32x32xf32>, vector<16x32xf32> -> vector<16x32xf32>
    %cst_203 = arith.constant dense<0.000000e+00> : vector<8x32xf32>
    %218 = tpu.matmul %214, %217, %cst_203 {dimension_numbers = #tpu.dot_dimension_numbers<[1], [0], [0], [1], [0, 0, 1, 1], [], []>} : vector<8x16xf32>, vector<16x32xf32>, vector<8x32xf32> -> vector<8x32xf32>
    %219 = arith.addf %189, %218 : vector<8x32xf32>
    %c0_204 = arith.constant 0 : index
    %c0_205 = arith.constant 0 : index
    %c2_206 = arith.constant 2 : index
    %c0_207 = arith.constant 0 : index
    %c0_208 = arith.constant 0 : index
    %220 = vector.load %arg9[%c0_204, %c0_205, %c2_206, %c0_207, %c0_208] : memref<2x2x4x32x8xf32, #tpu.memory_space<vmem>>, vector<1x1x1x32x8xf32>
    %221 = vector.shape_cast %220 : vector<1x1x1x32x8xf32> to vector<32x8xf32>
    %cst_209 = arith.constant dense<0.000000e+00> : vector<8x8xf32>
    %222 = tpu.matmul %160, %221, %cst_209 {dimension_numbers = #tpu.dot_dimension_numbers<[1], [0], [0], [1], [0, 0, 1, 1], [], []>} : vector<8x32xf32>, vector<32x8xf32>, vector<8x8xf32> -> vector<8x8xf32>
    %c0_210 = arith.constant 0 : index
    %c0_211 = arith.constant 0 : index
    %c2_212 = arith.constant 2 : index
    %c0_213 = arith.constant 0 : index
    %c0_214 = arith.constant 0 : index
    %223 = vector.load %arg10[%c0_210, %c0_211, %c2_212, %c0_213, %c0_214] : memref<2x2x4x1x8xf32, #tpu.memory_space<vmem>>, vector<1x1x1x1x8xf32>
    %224 = vector.shape_cast %223 : vector<1x1x1x1x8xf32> to vector<1x8xf32>
    %225 = vector.broadcast %224 : vector<1x8xf32> to vector<8x8xf32>
    %226 = arith.addf %222, %225 : vector<8x8xf32>
    %c0_215 = arith.constant 0 : index
    %c1_216 = arith.constant 1 : index
    %c2_217 = arith.constant 2 : index
    %c0_218 = arith.constant 0 : index
    %c0_219 = arith.constant 0 : index
    %227 = vector.load %arg9[%c0_215, %c1_216, %c2_217, %c0_218, %c0_219] : memref<2x2x4x32x8xf32, #tpu.memory_space<vmem>>, vector<1x1x1x32x8xf32>
    %228 = vector.shape_cast %227 : vector<1x1x1x32x8xf32> to vector<32x8xf32>
    %cst_220 = arith.constant dense<0.000000e+00> : vector<16x8xf32>
    %229 = tpu.matmul %8, %228, %cst_220 {dimension_numbers = #tpu.dot_dimension_numbers<[1], [0], [0], [1], [0, 0, 1, 1], [], []>} : vector<16x32xf32>, vector<32x8xf32>, vector<16x8xf32> -> vector<16x8xf32>
    %c0_221 = arith.constant 0 : index
    %c1_222 = arith.constant 1 : index
    %c2_223 = arith.constant 2 : index
    %c0_224 = arith.constant 0 : index
    %c0_225 = arith.constant 0 : index
    %230 = vector.load %arg10[%c0_221, %c1_222, %c2_223, %c0_224, %c0_225] : memref<2x2x4x1x8xf32, #tpu.memory_space<vmem>>, vector<1x1x1x1x8xf32>
    %231 = vector.shape_cast %230 : vector<1x1x1x1x8xf32> to vector<1x8xf32>
    %232 = vector.broadcast %231 : vector<1x8xf32> to vector<16x8xf32>
    %233 = arith.addf %229, %232 : vector<16x8xf32>
    %cst_226 = arith.constant dense<0.000000e+00> : vector<8x16xf32>
    %234 = tpu.matmul %226, %233, %cst_226 {dimension_numbers = #tpu.dot_dimension_numbers<[1], [1], [0], [0], [0, 0, 1, 0], [], []>} : vector<8x8xf32>, vector<16x8xf32>, vector<8x16xf32> -> vector<8x16xf32>
    %cst_227 = arith.constant dense<0xFF800000> : vector<8xf32>
    %235 = vector.multi_reduction <maximumf>, %234, %cst_227 [1] : vector<8x16xf32> to vector<8xf32>
    %236 = vector.shape_cast %235 : vector<8xf32> to vector<8x1xf32>
    %237 = vector.broadcast %236 : vector<8x1xf32> to vector<8x16xf32>
    %238 = arith.subf %234, %237 : vector<8x16xf32>
    %239 = math.exp %238 : vector<8x16xf32>
    %cst_228 = arith.constant dense<0.000000e+00> : vector<8xf32>
    %240 = vector.multi_reduction <add>, %239, %cst_228 [1] : vector<8x16xf32> to vector<8xf32>
    %241 = vector.shape_cast %240 : vector<8xf32> to vector<8x1xf32>
    %242 = tpu.reciprocal %241 : vector<8x1xf32> -> vector<8x1xf32>
    %243 = vector.broadcast %242 : vector<8x1xf32> to vector<8x16xf32>
    %244 = arith.mulf %239, %243 : vector<8x16xf32>
    %c0_229 = arith.constant 0 : index
    %c2_230 = arith.constant 2 : index
    %c0_231 = arith.constant 0 : index
    %c0_232 = arith.constant 0 : index
    %245 = vector.load %arg11[%c0_229, %c2_230, %c0_231, %c0_232] : memref<2x4x32x32xf32, #tpu.memory_space<vmem>>, vector<1x1x32x32xf32>
    %246 = vector.shape_cast %245 : vector<1x1x32x32xf32> to vector<32x32xf32>
    %cst_233 = arith.constant dense<0.000000e+00> : vector<16x32xf32>
    %247 = tpu.matmul %3, %246, %cst_233 {dimension_numbers = #tpu.dot_dimension_numbers<[1], [0], [0], [1], [0, 0, 1, 1], [], []>} : vector<16x32xf32>, vector<32x32xf32>, vector<16x32xf32> -> vector<16x32xf32>
    %cst_234 = arith.constant dense<0.000000e+00> : vector<8x32xf32>
    %248 = tpu.matmul %244, %247, %cst_234 {dimension_numbers = #tpu.dot_dimension_numbers<[1], [0], [0], [1], [0, 0, 1, 1], [], []>} : vector<8x16xf32>, vector<16x32xf32>, vector<8x32xf32> -> vector<8x32xf32>
    %249 = arith.addf %219, %248 : vector<8x32xf32>
    %c0_235 = arith.constant 0 : index
    %c0_236 = arith.constant 0 : index
    %c3_237 = arith.constant 3 : index
    %c0_238 = arith.constant 0 : index
    %c0_239 = arith.constant 0 : index
    %250 = vector.load %arg9[%c0_235, %c0_236, %c3_237, %c0_238, %c0_239] : memref<2x2x4x32x8xf32, #tpu.memory_space<vmem>>, vector<1x1x1x32x8xf32>
    %251 = vector.shape_cast %250 : vector<1x1x1x32x8xf32> to vector<32x8xf32>
    %cst_240 = arith.constant dense<0.000000e+00> : vector<8x8xf32>
    %252 = tpu.matmul %160, %251, %cst_240 {dimension_numbers = #tpu.dot_dimension_numbers<[1], [0], [0], [1], [0, 0, 1, 1], [], []>} : vector<8x32xf32>, vector<32x8xf32>, vector<8x8xf32> -> vector<8x8xf32>
    %c0_241 = arith.constant 0 : index
    %c0_242 = arith.constant 0 : index
    %c3_243 = arith.constant 3 : index
    %c0_244 = arith.constant 0 : index
    %c0_245 = arith.constant 0 : index
    %253 = vector.load %arg10[%c0_241, %c0_242, %c3_243, %c0_244, %c0_245] : memref<2x2x4x1x8xf32, #tpu.memory_space<vmem>>, vector<1x1x1x1x8xf32>
    %254 = vector.shape_cast %253 : vector<1x1x1x1x8xf32> to vector<1x8xf32>
    %255 = vector.broadcast %254 : vector<1x8xf32> to vector<8x8xf32>
    %256 = arith.addf %252, %255 : vector<8x8xf32>
    %c0_246 = arith.constant 0 : index
    %c1_247 = arith.constant 1 : index
    %c3_248 = arith.constant 3 : index
    %c0_249 = arith.constant 0 : index
    %c0_250 = arith.constant 0 : index
    %257 = vector.load %arg9[%c0_246, %c1_247, %c3_248, %c0_249, %c0_250] : memref<2x2x4x32x8xf32, #tpu.memory_space<vmem>>, vector<1x1x1x32x8xf32>
    %258 = vector.shape_cast %257 : vector<1x1x1x32x8xf32> to vector<32x8xf32>
    %cst_251 = arith.constant dense<0.000000e+00> : vector<16x8xf32>
    %259 = tpu.matmul %8, %258, %cst_251 {dimension_numbers = #tpu.dot_dimension_numbers<[1], [0], [0], [1], [0, 0, 1, 1], [], []>} : vector<16x32xf32>, vector<32x8xf32>, vector<16x8xf32> -> vector<16x8xf32>
    %c0_252 = arith.constant 0 : index
    %c1_253 = arith.constant 1 : index
    %c3_254 = arith.constant 3 : index
    %c0_255 = arith.constant 0 : index
    %c0_256 = arith.constant 0 : index
    %260 = vector.load %arg10[%c0_252, %c1_253, %c3_254, %c0_255, %c0_256] : memref<2x2x4x1x8xf32, #tpu.memory_space<vmem>>, vector<1x1x1x1x8xf32>
    %261 = vector.shape_cast %260 : vector<1x1x1x1x8xf32> to vector<1x8xf32>
    %262 = vector.broadcast %261 : vector<1x8xf32> to vector<16x8xf32>
    %263 = arith.addf %259, %262 : vector<16x8xf32>
    %cst_257 = arith.constant dense<0.000000e+00> : vector<8x16xf32>
    %264 = tpu.matmul %256, %263, %cst_257 {dimension_numbers = #tpu.dot_dimension_numbers<[1], [1], [0], [0], [0, 0, 1, 0], [], []>} : vector<8x8xf32>, vector<16x8xf32>, vector<8x16xf32> -> vector<8x16xf32>
    %cst_258 = arith.constant dense<0xFF800000> : vector<8xf32>
    %265 = vector.multi_reduction <maximumf>, %264, %cst_258 [1] : vector<8x16xf32> to vector<8xf32>
    %266 = vector.shape_cast %265 : vector<8xf32> to vector<8x1xf32>
    %267 = vector.broadcast %266 : vector<8x1xf32> to vector<8x16xf32>
    %268 = arith.subf %264, %267 : vector<8x16xf32>
    %269 = math.exp %268 : vector<8x16xf32>
    %cst_259 = arith.constant dense<0.000000e+00> : vector<8xf32>
    %270 = vector.multi_reduction <add>, %269, %cst_259 [1] : vector<8x16xf32> to vector<8xf32>
    %271 = vector.shape_cast %270 : vector<8xf32> to vector<8x1xf32>
    %272 = tpu.reciprocal %271 : vector<8x1xf32> -> vector<8x1xf32>
    %273 = vector.broadcast %272 : vector<8x1xf32> to vector<8x16xf32>
    %274 = arith.mulf %269, %273 : vector<8x16xf32>
    %c0_260 = arith.constant 0 : index
    %c3_261 = arith.constant 3 : index
    %c0_262 = arith.constant 0 : index
    %c0_263 = arith.constant 0 : index
    %275 = vector.load %arg11[%c0_260, %c3_261, %c0_262, %c0_263] : memref<2x4x32x32xf32, #tpu.memory_space<vmem>>, vector<1x1x32x32xf32>
    %276 = vector.shape_cast %275 : vector<1x1x32x32xf32> to vector<32x32xf32>
    %cst_264 = arith.constant dense<0.000000e+00> : vector<16x32xf32>
    %277 = tpu.matmul %3, %276, %cst_264 {dimension_numbers = #tpu.dot_dimension_numbers<[1], [0], [0], [1], [0, 0, 1, 1], [], []>} : vector<16x32xf32>, vector<32x32xf32>, vector<16x32xf32> -> vector<16x32xf32>
    %cst_265 = arith.constant dense<0.000000e+00> : vector<8x32xf32>
    %278 = tpu.matmul %274, %277, %cst_265 {dimension_numbers = #tpu.dot_dimension_numbers<[1], [0], [0], [1], [0, 0, 1, 1], [], []>} : vector<8x16xf32>, vector<16x32xf32>, vector<8x32xf32> -> vector<8x32xf32>
    %279 = arith.addf %249, %278 : vector<8x32xf32>
    %c0_266 = arith.constant 0 : index
    %c0_267 = arith.constant 0 : index
    %c0_268 = arith.constant 0 : index
    %280 = vector.load %arg12[%c0_266, %c0_267, %c0_268] : memref<2x1x32xf32, #tpu.memory_space<vmem>>, vector<1x1x32xf32>
    %281 = vector.shape_cast %280 : vector<1x1x32xf32> to vector<1x32xf32>
    %282 = vector.broadcast %281 : vector<1x32xf32> to vector<8x32xf32>
    %283 = arith.addf %279, %282 : vector<8x32xf32>
    %284 = arith.addf %159, %283 : vector<8x32xf32>
    %285 = vector.extract_strided_slice %10 {offsets = [2, 0], sizes = [1, 32], strides = [1, 1]} : vector<6x32xf32> to vector<1x32xf32>
    %286 = vector.extract_strided_slice %10 {offsets = [3, 0], sizes = [1, 32], strides = [1, 1]} : vector<6x32xf32> to vector<1x32xf32>
    %cst_269 = arith.constant dense<0.000000e+00> : vector<8xf32>
    %287 = vector.multi_reduction <add>, %284, %cst_269 [1] : vector<8x32xf32> to vector<8xf32>
    %288 = vector.shape_cast %287 : vector<8xf32> to vector<8x1xf32>
    %cst_270 = arith.constant 3.200000e+01 : f32
    %289 = vector.broadcast %cst_270 : f32 to vector<8x1xf32>
    %290 = arith.divf %288, %289 : vector<8x1xf32>
    %291 = vector.broadcast %290 : vector<8x1xf32> to vector<8x32xf32>
    %292 = arith.subf %284, %291 : vector<8x32xf32>
    %293 = arith.mulf %292, %292 : vector<8x32xf32>
    %cst_271 = arith.constant dense<0.000000e+00> : vector<8xf32>
    %294 = vector.multi_reduction <add>, %293, %cst_271 [1] : vector<8x32xf32> to vector<8xf32>
    %295 = vector.shape_cast %294 : vector<8xf32> to vector<8x1xf32>
    %cst_272 = arith.constant 3.200000e+01 : f32
    %296 = vector.broadcast %cst_272 : f32 to vector<8x1xf32>
    %297 = arith.divf %295, %296 : vector<8x1xf32>
    %298 = vector.broadcast %290 : vector<8x1xf32> to vector<8x32xf32>
    %299 = arith.subf %284, %298 : vector<8x32xf32>
    %cst_273 = arith.constant 9.99999974E-6 : f32
    %300 = vector.broadcast %cst_273 : f32 to vector<8x1xf32>
    %301 = arith.addf %297, %300 : vector<8x1xf32>
    %302 = math.rsqrt %301 : vector<8x1xf32>
    %303 = vector.broadcast %302 : vector<8x1xf32> to vector<8x32xf32>
    %304 = arith.mulf %299, %303 : vector<8x32xf32>
    %305 = vector.broadcast %285 : vector<1x32xf32> to vector<8x32xf32>
    %306 = arith.mulf %304, %305 : vector<8x32xf32>
    %307 = vector.broadcast %286 : vector<1x32xf32> to vector<8x32xf32>
    %308 = arith.addf %306, %307 : vector<8x32xf32>
    %c0_274 = arith.constant 0 : index
    %c0_275 = arith.constant 0 : index
    %c0_276 = arith.constant 0 : index
    %309 = vector.load %arg13[%c0_274, %c0_275, %c0_276] : memref<2x32x64xf32, #tpu.memory_space<vmem>>, vector<1x32x64xf32>
    %310 = vector.shape_cast %309 : vector<1x32x64xf32> to vector<32x64xf32>
    %cst_277 = arith.constant dense<0.000000e+00> : vector<8x64xf32>
    %311 = tpu.matmul %308, %310, %cst_277 {dimension_numbers = #tpu.dot_dimension_numbers<[1], [0], [0], [1], [0, 0, 1, 1], [], []>} : vector<8x32xf32>, vector<32x64xf32>, vector<8x64xf32> -> vector<8x64xf32>
    %c0_278 = arith.constant 0 : index
    %c0_279 = arith.constant 0 : index
    %c0_280 = arith.constant 0 : index
    %312 = vector.load %arg14[%c0_278, %c0_279, %c0_280] : memref<2x1x64xf32, #tpu.memory_space<vmem>>, vector<1x1x64xf32>
    %313 = vector.shape_cast %312 : vector<1x1x64xf32> to vector<1x64xf32>
    %314 = vector.broadcast %313 : vector<1x64xf32> to vector<8x64xf32>
    %315 = arith.addf %311, %314 : vector<8x64xf32>
    %cst_281 = arith.constant 0.000000e+00 : f32
    %316 = vector.broadcast %cst_281 : f32 to vector<8x64xf32>
    %317 = arith.maximumf %315, %316 : vector<8x64xf32>
    %c0_282 = arith.constant 0 : index
    %c0_283 = arith.constant 0 : index
    %c0_284 = arith.constant 0 : index
    %318 = vector.load %arg15[%c0_282, %c0_283, %c0_284] : memref<2x64x32xf32, #tpu.memory_space<vmem>>, vector<1x64x32xf32>
    %319 = vector.shape_cast %318 : vector<1x64x32xf32> to vector<64x32xf32>
    %cst_285 = arith.constant dense<0.000000e+00> : vector<8x32xf32>
    %320 = tpu.matmul %317, %319, %cst_285 {dimension_numbers = #tpu.dot_dimension_numbers<[1], [0], [0], [1], [0, 0, 1, 1], [], []>} : vector<8x64xf32>, vector<64x32xf32>, vector<8x32xf32> -> vector<8x32xf32>
    %c0_286 = arith.constant 0 : index
    %c0_287 = arith.constant 0 : index
    %c0_288 = arith.constant 0 : index
    %321 = vector.load %arg16[%c0_286, %c0_287, %c0_288] : memref<2x1x32xf32, #tpu.memory_space<vmem>>, vector<1x1x32xf32>
    %322 = vector.shape_cast %321 : vector<1x1x32xf32> to vector<1x32xf32>
    %323 = vector.broadcast %322 : vector<1x32xf32> to vector<8x32xf32>
    %324 = arith.addf %320, %323 : vector<8x32xf32>
    %325 = arith.addf %308, %324 : vector<8x32xf32>
    %326 = vector.extract_strided_slice %10 {offsets = [4, 0], sizes = [1, 32], strides = [1, 1]} : vector<6x32xf32> to vector<1x32xf32>
    %327 = vector.extract_strided_slice %10 {offsets = [5, 0], sizes = [1, 32], strides = [1, 1]} : vector<6x32xf32> to vector<1x32xf32>
    %cst_289 = arith.constant dense<0.000000e+00> : vector<8xf32>
    %328 = vector.multi_reduction <add>, %325, %cst_289 [1] : vector<8x32xf32> to vector<8xf32>
    %329 = vector.shape_cast %328 : vector<8xf32> to vector<8x1xf32>
    %cst_290 = arith.constant 3.200000e+01 : f32
    %330 = vector.broadcast %cst_290 : f32 to vector<8x1xf32>
    %331 = arith.divf %329, %330 : vector<8x1xf32>
    %332 = vector.broadcast %331 : vector<8x1xf32> to vector<8x32xf32>
    %333 = arith.subf %325, %332 : vector<8x32xf32>
    %334 = arith.mulf %333, %333 : vector<8x32xf32>
    %cst_291 = arith.constant dense<0.000000e+00> : vector<8xf32>
    %335 = vector.multi_reduction <add>, %334, %cst_291 [1] : vector<8x32xf32> to vector<8xf32>
    %336 = vector.shape_cast %335 : vector<8xf32> to vector<8x1xf32>
    %cst_292 = arith.constant 3.200000e+01 : f32
    %337 = vector.broadcast %cst_292 : f32 to vector<8x1xf32>
    %338 = arith.divf %336, %337 : vector<8x1xf32>
    %339 = vector.broadcast %331 : vector<8x1xf32> to vector<8x32xf32>
    %340 = arith.subf %325, %339 : vector<8x32xf32>
    %cst_293 = arith.constant 9.99999974E-6 : f32
    %341 = vector.broadcast %cst_293 : f32 to vector<8x1xf32>
    %342 = arith.addf %338, %341 : vector<8x1xf32>
    %343 = math.rsqrt %342 : vector<8x1xf32>
    %344 = vector.broadcast %343 : vector<8x1xf32> to vector<8x32xf32>
    %345 = arith.mulf %340, %344 : vector<8x32xf32>
    %346 = vector.broadcast %326 : vector<1x32xf32> to vector<8x32xf32>
    %347 = arith.mulf %345, %346 : vector<8x32xf32>
    %348 = vector.broadcast %327 : vector<1x32xf32> to vector<8x32xf32>
    %349 = arith.addf %347, %348 : vector<8x32xf32>
    %c1_294 = arith.constant 1 : index
    %c0_295 = arith.constant 0 : index
    %c0_296 = arith.constant 0 : index
    %350 = vector.load %arg17[%c1_294, %c0_295, %c0_296] : memref<2x6x32xf32, #tpu.memory_space<vmem>>, vector<1x6x32xf32>
    %351 = vector.shape_cast %350 : vector<1x6x32xf32> to vector<6x32xf32>
    %352 = arith.addf %349, %5 : vector<8x32xf32>
    %c1_297 = arith.constant 1 : index
    %c0_298 = arith.constant 0 : index
    %c0_299 = arith.constant 0 : index
    %c0_300 = arith.constant 0 : index
    %c0_301 = arith.constant 0 : index
    %353 = vector.load %arg5[%c1_297, %c0_298, %c0_299, %c0_300, %c0_301] : memref<2x2x4x32x8xf32, #tpu.memory_space<vmem>>, vector<1x1x1x32x8xf32>
    %354 = vector.shape_cast %353 : vector<1x1x1x32x8xf32> to vector<32x8xf32>
    %cst_302 = arith.constant dense<0.000000e+00> : vector<8x8xf32>
    %355 = tpu.matmul %352, %354, %cst_302 {dimension_numbers = #tpu.dot_dimension_numbers<[1], [0], [0], [1], [0, 0, 1, 1], [], []>} : vector<8x32xf32>, vector<32x8xf32>, vector<8x8xf32> -> vector<8x8xf32>
    %c1_303 = arith.constant 1 : index
    %c0_304 = arith.constant 0 : index
    %c0_305 = arith.constant 0 : index
    %c0_306 = arith.constant 0 : index
    %c0_307 = arith.constant 0 : index
    %356 = vector.load %arg6[%c1_303, %c0_304, %c0_305, %c0_306, %c0_307] : memref<2x2x4x1x8xf32, #tpu.memory_space<vmem>>, vector<1x1x1x1x8xf32>
    %357 = vector.shape_cast %356 : vector<1x1x1x1x8xf32> to vector<1x8xf32>
    %358 = vector.broadcast %357 : vector<1x8xf32> to vector<8x8xf32>
    %359 = arith.addf %355, %358 : vector<8x8xf32>
    %c1_308 = arith.constant 1 : index
    %c1_309 = arith.constant 1 : index
    %c0_310 = arith.constant 0 : index
    %c0_311 = arith.constant 0 : index
    %c0_312 = arith.constant 0 : index
    %360 = vector.load %arg5[%c1_308, %c1_309, %c0_310, %c0_311, %c0_312] : memref<2x2x4x32x8xf32, #tpu.memory_space<vmem>>, vector<1x1x1x32x8xf32>
    %361 = vector.shape_cast %360 : vector<1x1x1x32x8xf32> to vector<32x8xf32>
    %cst_313 = arith.constant dense<0.000000e+00> : vector<8x8xf32>
    %362 = tpu.matmul %352, %361, %cst_313 {dimension_numbers = #tpu.dot_dimension_numbers<[1], [0], [0], [1], [0, 0, 1, 1], [], []>} : vector<8x32xf32>, vector<32x8xf32>, vector<8x8xf32> -> vector<8x8xf32>
    %c1_314 = arith.constant 1 : index
    %c1_315 = arith.constant 1 : index
    %c0_316 = arith.constant 0 : index
    %c0_317 = arith.constant 0 : index
    %c0_318 = arith.constant 0 : index
    %363 = vector.load %arg6[%c1_314, %c1_315, %c0_316, %c0_317, %c0_318] : memref<2x2x4x1x8xf32, #tpu.memory_space<vmem>>, vector<1x1x1x1x8xf32>
    %364 = vector.shape_cast %363 : vector<1x1x1x1x8xf32> to vector<1x8xf32>
    %365 = vector.broadcast %364 : vector<1x8xf32> to vector<8x8xf32>
    %366 = arith.addf %362, %365 : vector<8x8xf32>
    %cst_319 = arith.constant dense<0.000000e+00> : vector<8x8xf32>
    %367 = tpu.matmul %359, %366, %cst_319 {dimension_numbers = #tpu.dot_dimension_numbers<[1], [1], [0], [0], [0, 0, 1, 0], [], []>} : vector<8x8xf32>, vector<8x8xf32>, vector<8x8xf32> -> vector<8x8xf32>
    %cst_320 = arith.constant dense<0xFF800000> : vector<8xf32>
    %368 = vector.multi_reduction <maximumf>, %367, %cst_320 [1] : vector<8x8xf32> to vector<8xf32>
    %369 = vector.shape_cast %368 : vector<8xf32> to vector<8x1xf32>
    %370 = vector.broadcast %369 : vector<8x1xf32> to vector<8x8xf32>
    %371 = arith.subf %367, %370 : vector<8x8xf32>
    %372 = math.exp %371 : vector<8x8xf32>
    %cst_321 = arith.constant dense<0.000000e+00> : vector<8xf32>
    %373 = vector.multi_reduction <add>, %372, %cst_321 [1] : vector<8x8xf32> to vector<8xf32>
    %374 = vector.shape_cast %373 : vector<8xf32> to vector<8x1xf32>
    %375 = tpu.reciprocal %374 : vector<8x1xf32> -> vector<8x1xf32>
    %376 = vector.broadcast %375 : vector<8x1xf32> to vector<8x8xf32>
    %377 = arith.mulf %372, %376 : vector<8x8xf32>
    %c1_322 = arith.constant 1 : index
    %c0_323 = arith.constant 0 : index
    %c0_324 = arith.constant 0 : index
    %c0_325 = arith.constant 0 : index
    %378 = vector.load %arg7[%c1_322, %c0_323, %c0_324, %c0_325] : memref<2x4x32x32xf32, #tpu.memory_space<vmem>>, vector<1x1x32x32xf32>
    %379 = vector.shape_cast %378 : vector<1x1x32x32xf32> to vector<32x32xf32>
    %cst_326 = arith.constant dense<0.000000e+00> : vector<8x32xf32>
    %380 = tpu.matmul %349, %379, %cst_326 {dimension_numbers = #tpu.dot_dimension_numbers<[1], [0], [0], [1], [0, 0, 1, 1], [], []>} : vector<8x32xf32>, vector<32x32xf32>, vector<8x32xf32> -> vector<8x32xf32>
    %cst_327 = arith.constant dense<0.000000e+00> : vector<8x32xf32>
    %381 = tpu.matmul %377, %380, %cst_327 {dimension_numbers = #tpu.dot_dimension_numbers<[1], [0], [0], [1], [0, 0, 1, 1], [], []>} : vector<8x8xf32>, vector<8x32xf32>, vector<8x32xf32> -> vector<8x32xf32>
    %c1_328 = arith.constant 1 : index
    %c0_329 = arith.constant 0 : index
    %c1_330 = arith.constant 1 : index
    %c0_331 = arith.constant 0 : index
    %c0_332 = arith.constant 0 : index
    %382 = vector.load %arg5[%c1_328, %c0_329, %c1_330, %c0_331, %c0_332] : memref<2x2x4x32x8xf32, #tpu.memory_space<vmem>>, vector<1x1x1x32x8xf32>
    %383 = vector.shape_cast %382 : vector<1x1x1x32x8xf32> to vector<32x8xf32>
    %cst_333 = arith.constant dense<0.000000e+00> : vector<8x8xf32>
    %384 = tpu.matmul %352, %383, %cst_333 {dimension_numbers = #tpu.dot_dimension_numbers<[1], [0], [0], [1], [0, 0, 1, 1], [], []>} : vector<8x32xf32>, vector<32x8xf32>, vector<8x8xf32> -> vector<8x8xf32>
    %c1_334 = arith.constant 1 : index
    %c0_335 = arith.constant 0 : index
    %c1_336 = arith.constant 1 : index
    %c0_337 = arith.constant 0 : index
    %c0_338 = arith.constant 0 : index
    %385 = vector.load %arg6[%c1_334, %c0_335, %c1_336, %c0_337, %c0_338] : memref<2x2x4x1x8xf32, #tpu.memory_space<vmem>>, vector<1x1x1x1x8xf32>
    %386 = vector.shape_cast %385 : vector<1x1x1x1x8xf32> to vector<1x8xf32>
    %387 = vector.broadcast %386 : vector<1x8xf32> to vector<8x8xf32>
    %388 = arith.addf %384, %387 : vector<8x8xf32>
    %c1_339 = arith.constant 1 : index
    %c1_340 = arith.constant 1 : index
    %c1_341 = arith.constant 1 : index
    %c0_342 = arith.constant 0 : index
    %c0_343 = arith.constant 0 : index
    %389 = vector.load %arg5[%c1_339, %c1_340, %c1_341, %c0_342, %c0_343] : memref<2x2x4x32x8xf32, #tpu.memory_space<vmem>>, vector<1x1x1x32x8xf32>
    %390 = vector.shape_cast %389 : vector<1x1x1x32x8xf32> to vector<32x8xf32>
    %cst_344 = arith.constant dense<0.000000e+00> : vector<8x8xf32>
    %391 = tpu.matmul %352, %390, %cst_344 {dimension_numbers = #tpu.dot_dimension_numbers<[1], [0], [0], [1], [0, 0, 1, 1], [], []>} : vector<8x32xf32>, vector<32x8xf32>, vector<8x8xf32> -> vector<8x8xf32>
    %c1_345 = arith.constant 1 : index
    %c1_346 = arith.constant 1 : index
    %c1_347 = arith.constant 1 : index
    %c0_348 = arith.constant 0 : index
    %c0_349 = arith.constant 0 : index
    %392 = vector.load %arg6[%c1_345, %c1_346, %c1_347, %c0_348, %c0_349] : memref<2x2x4x1x8xf32, #tpu.memory_space<vmem>>, vector<1x1x1x1x8xf32>
    %393 = vector.shape_cast %392 : vector<1x1x1x1x8xf32> to vector<1x8xf32>
    %394 = vector.broadcast %393 : vector<1x8xf32> to vector<8x8xf32>
    %395 = arith.addf %391, %394 : vector<8x8xf32>
    %cst_350 = arith.constant dense<0.000000e+00> : vector<8x8xf32>
    %396 = tpu.matmul %388, %395, %cst_350 {dimension_numbers = #tpu.dot_dimension_numbers<[1], [1], [0], [0], [0, 0, 1, 0], [], []>} : vector<8x8xf32>, vector<8x8xf32>, vector<8x8xf32> -> vector<8x8xf32>
    %cst_351 = arith.constant dense<0xFF800000> : vector<8xf32>
    %397 = vector.multi_reduction <maximumf>, %396, %cst_351 [1] : vector<8x8xf32> to vector<8xf32>
    %398 = vector.shape_cast %397 : vector<8xf32> to vector<8x1xf32>
    %399 = vector.broadcast %398 : vector<8x1xf32> to vector<8x8xf32>
    %400 = arith.subf %396, %399 : vector<8x8xf32>
    %401 = math.exp %400 : vector<8x8xf32>
    %cst_352 = arith.constant dense<0.000000e+00> : vector<8xf32>
    %402 = vector.multi_reduction <add>, %401, %cst_352 [1] : vector<8x8xf32> to vector<8xf32>
    %403 = vector.shape_cast %402 : vector<8xf32> to vector<8x1xf32>
    %404 = tpu.reciprocal %403 : vector<8x1xf32> -> vector<8x1xf32>
    %405 = vector.broadcast %404 : vector<8x1xf32> to vector<8x8xf32>
    %406 = arith.mulf %401, %405 : vector<8x8xf32>
    %c1_353 = arith.constant 1 : index
    %c1_354 = arith.constant 1 : index
    %c0_355 = arith.constant 0 : index
    %c0_356 = arith.constant 0 : index
    %407 = vector.load %arg7[%c1_353, %c1_354, %c0_355, %c0_356] : memref<2x4x32x32xf32, #tpu.memory_space<vmem>>, vector<1x1x32x32xf32>
    %408 = vector.shape_cast %407 : vector<1x1x32x32xf32> to vector<32x32xf32>
    %cst_357 = arith.constant dense<0.000000e+00> : vector<8x32xf32>
    %409 = tpu.matmul %349, %408, %cst_357 {dimension_numbers = #tpu.dot_dimension_numbers<[1], [0], [0], [1], [0, 0, 1, 1], [], []>} : vector<8x32xf32>, vector<32x32xf32>, vector<8x32xf32> -> vector<8x32xf32>
    %cst_358 = arith.constant dense<0.000000e+00> : vector<8x32xf32>
    %410 = tpu.matmul %406, %409, %cst_358 {dimension_numbers = #tpu.dot_dimension_numbers<[1], [0], [0], [1], [0, 0, 1, 1], [], []>} : vector<8x8xf32>, vector<8x32xf32>, vector<8x32xf32> -> vector<8x32xf32>
    %411 = arith.addf %381, %410 : vector<8x32xf32>
    %c1_359 = arith.constant 1 : index
    %c0_360 = arith.constant 0 : index
    %c2_361 = arith.constant 2 : index
    %c0_362 = arith.constant 0 : index
    %c0_363 = arith.constant 0 : index
    %412 = vector.load %arg5[%c1_359, %c0_360, %c2_361, %c0_362, %c0_363] : memref<2x2x4x32x8xf32, #tpu.memory_space<vmem>>, vector<1x1x1x32x8xf32>
    %413 = vector.shape_cast %412 : vector<1x1x1x32x8xf32> to vector<32x8xf32>
    %cst_364 = arith.constant dense<0.000000e+00> : vector<8x8xf32>
    %414 = tpu.matmul %352, %413, %cst_364 {dimension_numbers = #tpu.dot_dimension_numbers<[1], [0], [0], [1], [0, 0, 1, 1], [], []>} : vector<8x32xf32>, vector<32x8xf32>, vector<8x8xf32> -> vector<8x8xf32>
    %c1_365 = arith.constant 1 : index
    %c0_366 = arith.constant 0 : index
    %c2_367 = arith.constant 2 : index
    %c0_368 = arith.constant 0 : index
    %c0_369 = arith.constant 0 : index
    %415 = vector.load %arg6[%c1_365, %c0_366, %c2_367, %c0_368, %c0_369] : memref<2x2x4x1x8xf32, #tpu.memory_space<vmem>>, vector<1x1x1x1x8xf32>
    %416 = vector.shape_cast %415 : vector<1x1x1x1x8xf32> to vector<1x8xf32>
    %417 = vector.broadcast %416 : vector<1x8xf32> to vector<8x8xf32>
    %418 = arith.addf %414, %417 : vector<8x8xf32>
    %c1_370 = arith.constant 1 : index
    %c1_371 = arith.constant 1 : index
    %c2_372 = arith.constant 2 : index
    %c0_373 = arith.constant 0 : index
    %c0_374 = arith.constant 0 : index
    %419 = vector.load %arg5[%c1_370, %c1_371, %c2_372, %c0_373, %c0_374] : memref<2x2x4x32x8xf32, #tpu.memory_space<vmem>>, vector<1x1x1x32x8xf32>
    %420 = vector.shape_cast %419 : vector<1x1x1x32x8xf32> to vector<32x8xf32>
    %cst_375 = arith.constant dense<0.000000e+00> : vector<8x8xf32>
    %421 = tpu.matmul %352, %420, %cst_375 {dimension_numbers = #tpu.dot_dimension_numbers<[1], [0], [0], [1], [0, 0, 1, 1], [], []>} : vector<8x32xf32>, vector<32x8xf32>, vector<8x8xf32> -> vector<8x8xf32>
    %c1_376 = arith.constant 1 : index
    %c1_377 = arith.constant 1 : index
    %c2_378 = arith.constant 2 : index
    %c0_379 = arith.constant 0 : index
    %c0_380 = arith.constant 0 : index
    %422 = vector.load %arg6[%c1_376, %c1_377, %c2_378, %c0_379, %c0_380] : memref<2x2x4x1x8xf32, #tpu.memory_space<vmem>>, vector<1x1x1x1x8xf32>
    %423 = vector.shape_cast %422 : vector<1x1x1x1x8xf32> to vector<1x8xf32>
    %424 = vector.broadcast %423 : vector<1x8xf32> to vector<8x8xf32>
    %425 = arith.addf %421, %424 : vector<8x8xf32>
    %cst_381 = arith.constant dense<0.000000e+00> : vector<8x8xf32>
    %426 = tpu.matmul %418, %425, %cst_381 {dimension_numbers = #tpu.dot_dimension_numbers<[1], [1], [0], [0], [0, 0, 1, 0], [], []>} : vector<8x8xf32>, vector<8x8xf32>, vector<8x8xf32> -> vector<8x8xf32>
    %cst_382 = arith.constant dense<0xFF800000> : vector<8xf32>
    %427 = vector.multi_reduction <maximumf>, %426, %cst_382 [1] : vector<8x8xf32> to vector<8xf32>
    %428 = vector.shape_cast %427 : vector<8xf32> to vector<8x1xf32>
    %429 = vector.broadcast %428 : vector<8x1xf32> to vector<8x8xf32>
    %430 = arith.subf %426, %429 : vector<8x8xf32>
    %431 = math.exp %430 : vector<8x8xf32>
    %cst_383 = arith.constant dense<0.000000e+00> : vector<8xf32>
    %432 = vector.multi_reduction <add>, %431, %cst_383 [1] : vector<8x8xf32> to vector<8xf32>
    %433 = vector.shape_cast %432 : vector<8xf32> to vector<8x1xf32>
    %434 = tpu.reciprocal %433 : vector<8x1xf32> -> vector<8x1xf32>
    %435 = vector.broadcast %434 : vector<8x1xf32> to vector<8x8xf32>
    %436 = arith.mulf %431, %435 : vector<8x8xf32>
    %c1_384 = arith.constant 1 : index
    %c2_385 = arith.constant 2 : index
    %c0_386 = arith.constant 0 : index
    %c0_387 = arith.constant 0 : index
    %437 = vector.load %arg7[%c1_384, %c2_385, %c0_386, %c0_387] : memref<2x4x32x32xf32, #tpu.memory_space<vmem>>, vector<1x1x32x32xf32>
    %438 = vector.shape_cast %437 : vector<1x1x32x32xf32> to vector<32x32xf32>
    %cst_388 = arith.constant dense<0.000000e+00> : vector<8x32xf32>
    %439 = tpu.matmul %349, %438, %cst_388 {dimension_numbers = #tpu.dot_dimension_numbers<[1], [0], [0], [1], [0, 0, 1, 1], [], []>} : vector<8x32xf32>, vector<32x32xf32>, vector<8x32xf32> -> vector<8x32xf32>
    %cst_389 = arith.constant dense<0.000000e+00> : vector<8x32xf32>
    %440 = tpu.matmul %436, %439, %cst_389 {dimension_numbers = #tpu.dot_dimension_numbers<[1], [0], [0], [1], [0, 0, 1, 1], [], []>} : vector<8x8xf32>, vector<8x32xf32>, vector<8x32xf32> -> vector<8x32xf32>
    %441 = arith.addf %411, %440 : vector<8x32xf32>
    %c1_390 = arith.constant 1 : index
    %c0_391 = arith.constant 0 : index
    %c3_392 = arith.constant 3 : index
    %c0_393 = arith.constant 0 : index
    %c0_394 = arith.constant 0 : index
    %442 = vector.load %arg5[%c1_390, %c0_391, %c3_392, %c0_393, %c0_394] : memref<2x2x4x32x8xf32, #tpu.memory_space<vmem>>, vector<1x1x1x32x8xf32>
    %443 = vector.shape_cast %442 : vector<1x1x1x32x8xf32> to vector<32x8xf32>
    %cst_395 = arith.constant dense<0.000000e+00> : vector<8x8xf32>
    %444 = tpu.matmul %352, %443, %cst_395 {dimension_numbers = #tpu.dot_dimension_numbers<[1], [0], [0], [1], [0, 0, 1, 1], [], []>} : vector<8x32xf32>, vector<32x8xf32>, vector<8x8xf32> -> vector<8x8xf32>
    %c1_396 = arith.constant 1 : index
    %c0_397 = arith.constant 0 : index
    %c3_398 = arith.constant 3 : index
    %c0_399 = arith.constant 0 : index
    %c0_400 = arith.constant 0 : index
    %445 = vector.load %arg6[%c1_396, %c0_397, %c3_398, %c0_399, %c0_400] : memref<2x2x4x1x8xf32, #tpu.memory_space<vmem>>, vector<1x1x1x1x8xf32>
    %446 = vector.shape_cast %445 : vector<1x1x1x1x8xf32> to vector<1x8xf32>
    %447 = vector.broadcast %446 : vector<1x8xf32> to vector<8x8xf32>
    %448 = arith.addf %444, %447 : vector<8x8xf32>
    %c1_401 = arith.constant 1 : index
    %c1_402 = arith.constant 1 : index
    %c3_403 = arith.constant 3 : index
    %c0_404 = arith.constant 0 : index
    %c0_405 = arith.constant 0 : index
    %449 = vector.load %arg5[%c1_401, %c1_402, %c3_403, %c0_404, %c0_405] : memref<2x2x4x32x8xf32, #tpu.memory_space<vmem>>, vector<1x1x1x32x8xf32>
    %450 = vector.shape_cast %449 : vector<1x1x1x32x8xf32> to vector<32x8xf32>
    %cst_406 = arith.constant dense<0.000000e+00> : vector<8x8xf32>
    %451 = tpu.matmul %352, %450, %cst_406 {dimension_numbers = #tpu.dot_dimension_numbers<[1], [0], [0], [1], [0, 0, 1, 1], [], []>} : vector<8x32xf32>, vector<32x8xf32>, vector<8x8xf32> -> vector<8x8xf32>
    %c1_407 = arith.constant 1 : index
    %c1_408 = arith.constant 1 : index
    %c3_409 = arith.constant 3 : index
    %c0_410 = arith.constant 0 : index
    %c0_411 = arith.constant 0 : index
    %452 = vector.load %arg6[%c1_407, %c1_408, %c3_409, %c0_410, %c0_411] : memref<2x2x4x1x8xf32, #tpu.memory_space<vmem>>, vector<1x1x1x1x8xf32>
    %453 = vector.shape_cast %452 : vector<1x1x1x1x8xf32> to vector<1x8xf32>
    %454 = vector.broadcast %453 : vector<1x8xf32> to vector<8x8xf32>
    %455 = arith.addf %451, %454 : vector<8x8xf32>
    %cst_412 = arith.constant dense<0.000000e+00> : vector<8x8xf32>
    %456 = tpu.matmul %448, %455, %cst_412 {dimension_numbers = #tpu.dot_dimension_numbers<[1], [1], [0], [0], [0, 0, 1, 0], [], []>} : vector<8x8xf32>, vector<8x8xf32>, vector<8x8xf32> -> vector<8x8xf32>
    %cst_413 = arith.constant dense<0xFF800000> : vector<8xf32>
    %457 = vector.multi_reduction <maximumf>, %456, %cst_413 [1] : vector<8x8xf32> to vector<8xf32>
    %458 = vector.shape_cast %457 : vector<8xf32> to vector<8x1xf32>
    %459 = vector.broadcast %458 : vector<8x1xf32> to vector<8x8xf32>
    %460 = arith.subf %456, %459 : vector<8x8xf32>
    %461 = math.exp %460 : vector<8x8xf32>
    %cst_414 = arith.constant dense<0.000000e+00> : vector<8xf32>
    %462 = vector.multi_reduction <add>, %461, %cst_414 [1] : vector<8x8xf32> to vector<8xf32>
    %463 = vector.shape_cast %462 : vector<8xf32> to vector<8x1xf32>
    %464 = tpu.reciprocal %463 : vector<8x1xf32> -> vector<8x1xf32>
    %465 = vector.broadcast %464 : vector<8x1xf32> to vector<8x8xf32>
    %466 = arith.mulf %461, %465 : vector<8x8xf32>
    %c1_415 = arith.constant 1 : index
    %c3_416 = arith.constant 3 : index
    %c0_417 = arith.constant 0 : index
    %c0_418 = arith.constant 0 : index
    %467 = vector.load %arg7[%c1_415, %c3_416, %c0_417, %c0_418] : memref<2x4x32x32xf32, #tpu.memory_space<vmem>>, vector<1x1x32x32xf32>
    %468 = vector.shape_cast %467 : vector<1x1x32x32xf32> to vector<32x32xf32>
    %cst_419 = arith.constant dense<0.000000e+00> : vector<8x32xf32>
    %469 = tpu.matmul %349, %468, %cst_419 {dimension_numbers = #tpu.dot_dimension_numbers<[1], [0], [0], [1], [0, 0, 1, 1], [], []>} : vector<8x32xf32>, vector<32x32xf32>, vector<8x32xf32> -> vector<8x32xf32>
    %cst_420 = arith.constant dense<0.000000e+00> : vector<8x32xf32>
    %470 = tpu.matmul %466, %469, %cst_420 {dimension_numbers = #tpu.dot_dimension_numbers<[1], [0], [0], [1], [0, 0, 1, 1], [], []>} : vector<8x8xf32>, vector<8x32xf32>, vector<8x32xf32> -> vector<8x32xf32>
    %471 = arith.addf %441, %470 : vector<8x32xf32>
    %c1_421 = arith.constant 1 : index
    %c0_422 = arith.constant 0 : index
    %c0_423 = arith.constant 0 : index
    %472 = vector.load %arg8[%c1_421, %c0_422, %c0_423] : memref<2x1x32xf32, #tpu.memory_space<vmem>>, vector<1x1x32xf32>
    %473 = vector.shape_cast %472 : vector<1x1x32xf32> to vector<1x32xf32>
    %474 = vector.broadcast %473 : vector<1x32xf32> to vector<8x32xf32>
    %475 = arith.addf %471, %474 : vector<8x32xf32>
    %476 = arith.addf %349, %475 : vector<8x32xf32>
    %477 = vector.extract_strided_slice %351 {offsets = [0, 0], sizes = [1, 32], strides = [1, 1]} : vector<6x32xf32> to vector<1x32xf32>
    %478 = vector.extract_strided_slice %351 {offsets = [1, 0], sizes = [1, 32], strides = [1, 1]} : vector<6x32xf32> to vector<1x32xf32>
    %cst_424 = arith.constant dense<0.000000e+00> : vector<8xf32>
    %479 = vector.multi_reduction <add>, %476, %cst_424 [1] : vector<8x32xf32> to vector<8xf32>
    %480 = vector.shape_cast %479 : vector<8xf32> to vector<8x1xf32>
    %cst_425 = arith.constant 3.200000e+01 : f32
    %481 = vector.broadcast %cst_425 : f32 to vector<8x1xf32>
    %482 = arith.divf %480, %481 : vector<8x1xf32>
    %483 = vector.broadcast %482 : vector<8x1xf32> to vector<8x32xf32>
    %484 = arith.subf %476, %483 : vector<8x32xf32>
    %485 = arith.mulf %484, %484 : vector<8x32xf32>
    %cst_426 = arith.constant dense<0.000000e+00> : vector<8xf32>
    %486 = vector.multi_reduction <add>, %485, %cst_426 [1] : vector<8x32xf32> to vector<8xf32>
    %487 = vector.shape_cast %486 : vector<8xf32> to vector<8x1xf32>
    %cst_427 = arith.constant 3.200000e+01 : f32
    %488 = vector.broadcast %cst_427 : f32 to vector<8x1xf32>
    %489 = arith.divf %487, %488 : vector<8x1xf32>
    %490 = vector.broadcast %482 : vector<8x1xf32> to vector<8x32xf32>
    %491 = arith.subf %476, %490 : vector<8x32xf32>
    %cst_428 = arith.constant 9.99999974E-6 : f32
    %492 = vector.broadcast %cst_428 : f32 to vector<8x1xf32>
    %493 = arith.addf %489, %492 : vector<8x1xf32>
    %494 = math.rsqrt %493 : vector<8x1xf32>
    %495 = vector.broadcast %494 : vector<8x1xf32> to vector<8x32xf32>
    %496 = arith.mulf %491, %495 : vector<8x32xf32>
    %497 = vector.broadcast %477 : vector<1x32xf32> to vector<8x32xf32>
    %498 = arith.mulf %496, %497 : vector<8x32xf32>
    %499 = vector.broadcast %478 : vector<1x32xf32> to vector<8x32xf32>
    %500 = arith.addf %498, %499 : vector<8x32xf32>
    %501 = arith.addf %500, %5 : vector<8x32xf32>
    %c1_429 = arith.constant 1 : index
    %c0_430 = arith.constant 0 : index
    %c0_431 = arith.constant 0 : index
    %c0_432 = arith.constant 0 : index
    %c0_433 = arith.constant 0 : index
    %502 = vector.load %arg9[%c1_429, %c0_430, %c0_431, %c0_432, %c0_433] : memref<2x2x4x32x8xf32, #tpu.memory_space<vmem>>, vector<1x1x1x32x8xf32>
    %503 = vector.shape_cast %502 : vector<1x1x1x32x8xf32> to vector<32x8xf32>
    %cst_434 = arith.constant dense<0.000000e+00> : vector<8x8xf32>
    %504 = tpu.matmul %501, %503, %cst_434 {dimension_numbers = #tpu.dot_dimension_numbers<[1], [0], [0], [1], [0, 0, 1, 1], [], []>} : vector<8x32xf32>, vector<32x8xf32>, vector<8x8xf32> -> vector<8x8xf32>
    %c1_435 = arith.constant 1 : index
    %c0_436 = arith.constant 0 : index
    %c0_437 = arith.constant 0 : index
    %c0_438 = arith.constant 0 : index
    %c0_439 = arith.constant 0 : index
    %505 = vector.load %arg10[%c1_435, %c0_436, %c0_437, %c0_438, %c0_439] : memref<2x2x4x1x8xf32, #tpu.memory_space<vmem>>, vector<1x1x1x1x8xf32>
    %506 = vector.shape_cast %505 : vector<1x1x1x1x8xf32> to vector<1x8xf32>
    %507 = vector.broadcast %506 : vector<1x8xf32> to vector<8x8xf32>
    %508 = arith.addf %504, %507 : vector<8x8xf32>
    %c1_440 = arith.constant 1 : index
    %c1_441 = arith.constant 1 : index
    %c0_442 = arith.constant 0 : index
    %c0_443 = arith.constant 0 : index
    %c0_444 = arith.constant 0 : index
    %509 = vector.load %arg9[%c1_440, %c1_441, %c0_442, %c0_443, %c0_444] : memref<2x2x4x32x8xf32, #tpu.memory_space<vmem>>, vector<1x1x1x32x8xf32>
    %510 = vector.shape_cast %509 : vector<1x1x1x32x8xf32> to vector<32x8xf32>
    %cst_445 = arith.constant dense<0.000000e+00> : vector<16x8xf32>
    %511 = tpu.matmul %8, %510, %cst_445 {dimension_numbers = #tpu.dot_dimension_numbers<[1], [0], [0], [1], [0, 0, 1, 1], [], []>} : vector<16x32xf32>, vector<32x8xf32>, vector<16x8xf32> -> vector<16x8xf32>
    %c1_446 = arith.constant 1 : index
    %c1_447 = arith.constant 1 : index
    %c0_448 = arith.constant 0 : index
    %c0_449 = arith.constant 0 : index
    %c0_450 = arith.constant 0 : index
    %512 = vector.load %arg10[%c1_446, %c1_447, %c0_448, %c0_449, %c0_450] : memref<2x2x4x1x8xf32, #tpu.memory_space<vmem>>, vector<1x1x1x1x8xf32>
    %513 = vector.shape_cast %512 : vector<1x1x1x1x8xf32> to vector<1x8xf32>
    %514 = vector.broadcast %513 : vector<1x8xf32> to vector<16x8xf32>
    %515 = arith.addf %511, %514 : vector<16x8xf32>
    %cst_451 = arith.constant dense<0.000000e+00> : vector<8x16xf32>
    %516 = tpu.matmul %508, %515, %cst_451 {dimension_numbers = #tpu.dot_dimension_numbers<[1], [1], [0], [0], [0, 0, 1, 0], [], []>} : vector<8x8xf32>, vector<16x8xf32>, vector<8x16xf32> -> vector<8x16xf32>
    %cst_452 = arith.constant dense<0xFF800000> : vector<8xf32>
    %517 = vector.multi_reduction <maximumf>, %516, %cst_452 [1] : vector<8x16xf32> to vector<8xf32>
    %518 = vector.shape_cast %517 : vector<8xf32> to vector<8x1xf32>
    %519 = vector.broadcast %518 : vector<8x1xf32> to vector<8x16xf32>
    %520 = arith.subf %516, %519 : vector<8x16xf32>
    %521 = math.exp %520 : vector<8x16xf32>
    %cst_453 = arith.constant dense<0.000000e+00> : vector<8xf32>
    %522 = vector.multi_reduction <add>, %521, %cst_453 [1] : vector<8x16xf32> to vector<8xf32>
    %523 = vector.shape_cast %522 : vector<8xf32> to vector<8x1xf32>
    %524 = tpu.reciprocal %523 : vector<8x1xf32> -> vector<8x1xf32>
    %525 = vector.broadcast %524 : vector<8x1xf32> to vector<8x16xf32>
    %526 = arith.mulf %521, %525 : vector<8x16xf32>
    %c1_454 = arith.constant 1 : index
    %c0_455 = arith.constant 0 : index
    %c0_456 = arith.constant 0 : index
    %c0_457 = arith.constant 0 : index
    %527 = vector.load %arg11[%c1_454, %c0_455, %c0_456, %c0_457] : memref<2x4x32x32xf32, #tpu.memory_space<vmem>>, vector<1x1x32x32xf32>
    %528 = vector.shape_cast %527 : vector<1x1x32x32xf32> to vector<32x32xf32>
    %cst_458 = arith.constant dense<0.000000e+00> : vector<16x32xf32>
    %529 = tpu.matmul %3, %528, %cst_458 {dimension_numbers = #tpu.dot_dimension_numbers<[1], [0], [0], [1], [0, 0, 1, 1], [], []>} : vector<16x32xf32>, vector<32x32xf32>, vector<16x32xf32> -> vector<16x32xf32>
    %cst_459 = arith.constant dense<0.000000e+00> : vector<8x32xf32>
    %530 = tpu.matmul %526, %529, %cst_459 {dimension_numbers = #tpu.dot_dimension_numbers<[1], [0], [0], [1], [0, 0, 1, 1], [], []>} : vector<8x16xf32>, vector<16x32xf32>, vector<8x32xf32> -> vector<8x32xf32>
    %c1_460 = arith.constant 1 : index
    %c0_461 = arith.constant 0 : index
    %c1_462 = arith.constant 1 : index
    %c0_463 = arith.constant 0 : index
    %c0_464 = arith.constant 0 : index
    %531 = vector.load %arg9[%c1_460, %c0_461, %c1_462, %c0_463, %c0_464] : memref<2x2x4x32x8xf32, #tpu.memory_space<vmem>>, vector<1x1x1x32x8xf32>
    %532 = vector.shape_cast %531 : vector<1x1x1x32x8xf32> to vector<32x8xf32>
    %cst_465 = arith.constant dense<0.000000e+00> : vector<8x8xf32>
    %533 = tpu.matmul %501, %532, %cst_465 {dimension_numbers = #tpu.dot_dimension_numbers<[1], [0], [0], [1], [0, 0, 1, 1], [], []>} : vector<8x32xf32>, vector<32x8xf32>, vector<8x8xf32> -> vector<8x8xf32>
    %c1_466 = arith.constant 1 : index
    %c0_467 = arith.constant 0 : index
    %c1_468 = arith.constant 1 : index
    %c0_469 = arith.constant 0 : index
    %c0_470 = arith.constant 0 : index
    %534 = vector.load %arg10[%c1_466, %c0_467, %c1_468, %c0_469, %c0_470] : memref<2x2x4x1x8xf32, #tpu.memory_space<vmem>>, vector<1x1x1x1x8xf32>
    %535 = vector.shape_cast %534 : vector<1x1x1x1x8xf32> to vector<1x8xf32>
    %536 = vector.broadcast %535 : vector<1x8xf32> to vector<8x8xf32>
    %537 = arith.addf %533, %536 : vector<8x8xf32>
    %c1_471 = arith.constant 1 : index
    %c1_472 = arith.constant 1 : index
    %c1_473 = arith.constant 1 : index
    %c0_474 = arith.constant 0 : index
    %c0_475 = arith.constant 0 : index
    %538 = vector.load %arg9[%c1_471, %c1_472, %c1_473, %c0_474, %c0_475] : memref<2x2x4x32x8xf32, #tpu.memory_space<vmem>>, vector<1x1x1x32x8xf32>
    %539 = vector.shape_cast %538 : vector<1x1x1x32x8xf32> to vector<32x8xf32>
    %cst_476 = arith.constant dense<0.000000e+00> : vector<16x8xf32>
    %540 = tpu.matmul %8, %539, %cst_476 {dimension_numbers = #tpu.dot_dimension_numbers<[1], [0], [0], [1], [0, 0, 1, 1], [], []>} : vector<16x32xf32>, vector<32x8xf32>, vector<16x8xf32> -> vector<16x8xf32>
    %c1_477 = arith.constant 1 : index
    %c1_478 = arith.constant 1 : index
    %c1_479 = arith.constant 1 : index
    %c0_480 = arith.constant 0 : index
    %c0_481 = arith.constant 0 : index
    %541 = vector.load %arg10[%c1_477, %c1_478, %c1_479, %c0_480, %c0_481] : memref<2x2x4x1x8xf32, #tpu.memory_space<vmem>>, vector<1x1x1x1x8xf32>
    %542 = vector.shape_cast %541 : vector<1x1x1x1x8xf32> to vector<1x8xf32>
    %543 = vector.broadcast %542 : vector<1x8xf32> to vector<16x8xf32>
    %544 = arith.addf %540, %543 : vector<16x8xf32>
    %cst_482 = arith.constant dense<0.000000e+00> : vector<8x16xf32>
    %545 = tpu.matmul %537, %544, %cst_482 {dimension_numbers = #tpu.dot_dimension_numbers<[1], [1], [0], [0], [0, 0, 1, 0], [], []>} : vector<8x8xf32>, vector<16x8xf32>, vector<8x16xf32> -> vector<8x16xf32>
    %cst_483 = arith.constant dense<0xFF800000> : vector<8xf32>
    %546 = vector.multi_reduction <maximumf>, %545, %cst_483 [1] : vector<8x16xf32> to vector<8xf32>
    %547 = vector.shape_cast %546 : vector<8xf32> to vector<8x1xf32>
    %548 = vector.broadcast %547 : vector<8x1xf32> to vector<8x16xf32>
    %549 = arith.subf %545, %548 : vector<8x16xf32>
    %550 = math.exp %549 : vector<8x16xf32>
    %cst_484 = arith.constant dense<0.000000e+00> : vector<8xf32>
    %551 = vector.multi_reduction <add>, %550, %cst_484 [1] : vector<8x16xf32> to vector<8xf32>
    %552 = vector.shape_cast %551 : vector<8xf32> to vector<8x1xf32>
    %553 = tpu.reciprocal %552 : vector<8x1xf32> -> vector<8x1xf32>
    %554 = vector.broadcast %553 : vector<8x1xf32> to vector<8x16xf32>
    %555 = arith.mulf %550, %554 : vector<8x16xf32>
    %c1_485 = arith.constant 1 : index
    %c1_486 = arith.constant 1 : index
    %c0_487 = arith.constant 0 : index
    %c0_488 = arith.constant 0 : index
    %556 = vector.load %arg11[%c1_485, %c1_486, %c0_487, %c0_488] : memref<2x4x32x32xf32, #tpu.memory_space<vmem>>, vector<1x1x32x32xf32>
    %557 = vector.shape_cast %556 : vector<1x1x32x32xf32> to vector<32x32xf32>
    %cst_489 = arith.constant dense<0.000000e+00> : vector<16x32xf32>
    %558 = tpu.matmul %3, %557, %cst_489 {dimension_numbers = #tpu.dot_dimension_numbers<[1], [0], [0], [1], [0, 0, 1, 1], [], []>} : vector<16x32xf32>, vector<32x32xf32>, vector<16x32xf32> -> vector<16x32xf32>
    %cst_490 = arith.constant dense<0.000000e+00> : vector<8x32xf32>
    %559 = tpu.matmul %555, %558, %cst_490 {dimension_numbers = #tpu.dot_dimension_numbers<[1], [0], [0], [1], [0, 0, 1, 1], [], []>} : vector<8x16xf32>, vector<16x32xf32>, vector<8x32xf32> -> vector<8x32xf32>
    %560 = arith.addf %530, %559 : vector<8x32xf32>
    %c1_491 = arith.constant 1 : index
    %c0_492 = arith.constant 0 : index
    %c2_493 = arith.constant 2 : index
    %c0_494 = arith.constant 0 : index
    %c0_495 = arith.constant 0 : index
    %561 = vector.load %arg9[%c1_491, %c0_492, %c2_493, %c0_494, %c0_495] : memref<2x2x4x32x8xf32, #tpu.memory_space<vmem>>, vector<1x1x1x32x8xf32>
    %562 = vector.shape_cast %561 : vector<1x1x1x32x8xf32> to vector<32x8xf32>
    %cst_496 = arith.constant dense<0.000000e+00> : vector<8x8xf32>
    %563 = tpu.matmul %501, %562, %cst_496 {dimension_numbers = #tpu.dot_dimension_numbers<[1], [0], [0], [1], [0, 0, 1, 1], [], []>} : vector<8x32xf32>, vector<32x8xf32>, vector<8x8xf32> -> vector<8x8xf32>
    %c1_497 = arith.constant 1 : index
    %c0_498 = arith.constant 0 : index
    %c2_499 = arith.constant 2 : index
    %c0_500 = arith.constant 0 : index
    %c0_501 = arith.constant 0 : index
    %564 = vector.load %arg10[%c1_497, %c0_498, %c2_499, %c0_500, %c0_501] : memref<2x2x4x1x8xf32, #tpu.memory_space<vmem>>, vector<1x1x1x1x8xf32>
    %565 = vector.shape_cast %564 : vector<1x1x1x1x8xf32> to vector<1x8xf32>
    %566 = vector.broadcast %565 : vector<1x8xf32> to vector<8x8xf32>
    %567 = arith.addf %563, %566 : vector<8x8xf32>
    %c1_502 = arith.constant 1 : index
    %c1_503 = arith.constant 1 : index
    %c2_504 = arith.constant 2 : index
    %c0_505 = arith.constant 0 : index
    %c0_506 = arith.constant 0 : index
    %568 = vector.load %arg9[%c1_502, %c1_503, %c2_504, %c0_505, %c0_506] : memref<2x2x4x32x8xf32, #tpu.memory_space<vmem>>, vector<1x1x1x32x8xf32>
    %569 = vector.shape_cast %568 : vector<1x1x1x32x8xf32> to vector<32x8xf32>
    %cst_507 = arith.constant dense<0.000000e+00> : vector<16x8xf32>
    %570 = tpu.matmul %8, %569, %cst_507 {dimension_numbers = #tpu.dot_dimension_numbers<[1], [0], [0], [1], [0, 0, 1, 1], [], []>} : vector<16x32xf32>, vector<32x8xf32>, vector<16x8xf32> -> vector<16x8xf32>
    %c1_508 = arith.constant 1 : index
    %c1_509 = arith.constant 1 : index
    %c2_510 = arith.constant 2 : index
    %c0_511 = arith.constant 0 : index
    %c0_512 = arith.constant 0 : index
    %571 = vector.load %arg10[%c1_508, %c1_509, %c2_510, %c0_511, %c0_512] : memref<2x2x4x1x8xf32, #tpu.memory_space<vmem>>, vector<1x1x1x1x8xf32>
    %572 = vector.shape_cast %571 : vector<1x1x1x1x8xf32> to vector<1x8xf32>
    %573 = vector.broadcast %572 : vector<1x8xf32> to vector<16x8xf32>
    %574 = arith.addf %570, %573 : vector<16x8xf32>
    %cst_513 = arith.constant dense<0.000000e+00> : vector<8x16xf32>
    %575 = tpu.matmul %567, %574, %cst_513 {dimension_numbers = #tpu.dot_dimension_numbers<[1], [1], [0], [0], [0, 0, 1, 0], [], []>} : vector<8x8xf32>, vector<16x8xf32>, vector<8x16xf32> -> vector<8x16xf32>
    %cst_514 = arith.constant dense<0xFF800000> : vector<8xf32>
    %576 = vector.multi_reduction <maximumf>, %575, %cst_514 [1] : vector<8x16xf32> to vector<8xf32>
    %577 = vector.shape_cast %576 : vector<8xf32> to vector<8x1xf32>
    %578 = vector.broadcast %577 : vector<8x1xf32> to vector<8x16xf32>
    %579 = arith.subf %575, %578 : vector<8x16xf32>
    %580 = math.exp %579 : vector<8x16xf32>
    %cst_515 = arith.constant dense<0.000000e+00> : vector<8xf32>
    %581 = vector.multi_reduction <add>, %580, %cst_515 [1] : vector<8x16xf32> to vector<8xf32>
    %582 = vector.shape_cast %581 : vector<8xf32> to vector<8x1xf32>
    %583 = tpu.reciprocal %582 : vector<8x1xf32> -> vector<8x1xf32>
    %584 = vector.broadcast %583 : vector<8x1xf32> to vector<8x16xf32>
    %585 = arith.mulf %580, %584 : vector<8x16xf32>
    %c1_516 = arith.constant 1 : index
    %c2_517 = arith.constant 2 : index
    %c0_518 = arith.constant 0 : index
    %c0_519 = arith.constant 0 : index
    %586 = vector.load %arg11[%c1_516, %c2_517, %c0_518, %c0_519] : memref<2x4x32x32xf32, #tpu.memory_space<vmem>>, vector<1x1x32x32xf32>
    %587 = vector.shape_cast %586 : vector<1x1x32x32xf32> to vector<32x32xf32>
    %cst_520 = arith.constant dense<0.000000e+00> : vector<16x32xf32>
    %588 = tpu.matmul %3, %587, %cst_520 {dimension_numbers = #tpu.dot_dimension_numbers<[1], [0], [0], [1], [0, 0, 1, 1], [], []>} : vector<16x32xf32>, vector<32x32xf32>, vector<16x32xf32> -> vector<16x32xf32>
    %cst_521 = arith.constant dense<0.000000e+00> : vector<8x32xf32>
    %589 = tpu.matmul %585, %588, %cst_521 {dimension_numbers = #tpu.dot_dimension_numbers<[1], [0], [0], [1], [0, 0, 1, 1], [], []>} : vector<8x16xf32>, vector<16x32xf32>, vector<8x32xf32> -> vector<8x32xf32>
    %590 = arith.addf %560, %589 : vector<8x32xf32>
    %c1_522 = arith.constant 1 : index
    %c0_523 = arith.constant 0 : index
    %c3_524 = arith.constant 3 : index
    %c0_525 = arith.constant 0 : index
    %c0_526 = arith.constant 0 : index
    %591 = vector.load %arg9[%c1_522, %c0_523, %c3_524, %c0_525, %c0_526] : memref<2x2x4x32x8xf32, #tpu.memory_space<vmem>>, vector<1x1x1x32x8xf32>
    %592 = vector.shape_cast %591 : vector<1x1x1x32x8xf32> to vector<32x8xf32>
    %cst_527 = arith.constant dense<0.000000e+00> : vector<8x8xf32>
    %593 = tpu.matmul %501, %592, %cst_527 {dimension_numbers = #tpu.dot_dimension_numbers<[1], [0], [0], [1], [0, 0, 1, 1], [], []>} : vector<8x32xf32>, vector<32x8xf32>, vector<8x8xf32> -> vector<8x8xf32>
    %c1_528 = arith.constant 1 : index
    %c0_529 = arith.constant 0 : index
    %c3_530 = arith.constant 3 : index
    %c0_531 = arith.constant 0 : index
    %c0_532 = arith.constant 0 : index
    %594 = vector.load %arg10[%c1_528, %c0_529, %c3_530, %c0_531, %c0_532] : memref<2x2x4x1x8xf32, #tpu.memory_space<vmem>>, vector<1x1x1x1x8xf32>
    %595 = vector.shape_cast %594 : vector<1x1x1x1x8xf32> to vector<1x8xf32>
    %596 = vector.broadcast %595 : vector<1x8xf32> to vector<8x8xf32>
    %597 = arith.addf %593, %596 : vector<8x8xf32>
    %c1_533 = arith.constant 1 : index
    %c1_534 = arith.constant 1 : index
    %c3_535 = arith.constant 3 : index
    %c0_536 = arith.constant 0 : index
    %c0_537 = arith.constant 0 : index
    %598 = vector.load %arg9[%c1_533, %c1_534, %c3_535, %c0_536, %c0_537] : memref<2x2x4x32x8xf32, #tpu.memory_space<vmem>>, vector<1x1x1x32x8xf32>
    %599 = vector.shape_cast %598 : vector<1x1x1x32x8xf32> to vector<32x8xf32>
    %cst_538 = arith.constant dense<0.000000e+00> : vector<16x8xf32>
    %600 = tpu.matmul %8, %599, %cst_538 {dimension_numbers = #tpu.dot_dimension_numbers<[1], [0], [0], [1], [0, 0, 1, 1], [], []>} : vector<16x32xf32>, vector<32x8xf32>, vector<16x8xf32> -> vector<16x8xf32>
    %c1_539 = arith.constant 1 : index
    %c1_540 = arith.constant 1 : index
    %c3_541 = arith.constant 3 : index
    %c0_542 = arith.constant 0 : index
    %c0_543 = arith.constant 0 : index
    %601 = vector.load %arg10[%c1_539, %c1_540, %c3_541, %c0_542, %c0_543] : memref<2x2x4x1x8xf32, #tpu.memory_space<vmem>>, vector<1x1x1x1x8xf32>
    %602 = vector.shape_cast %601 : vector<1x1x1x1x8xf32> to vector<1x8xf32>
    %603 = vector.broadcast %602 : vector<1x8xf32> to vector<16x8xf32>
    %604 = arith.addf %600, %603 : vector<16x8xf32>
    %cst_544 = arith.constant dense<0.000000e+00> : vector<8x16xf32>
    %605 = tpu.matmul %597, %604, %cst_544 {dimension_numbers = #tpu.dot_dimension_numbers<[1], [1], [0], [0], [0, 0, 1, 0], [], []>} : vector<8x8xf32>, vector<16x8xf32>, vector<8x16xf32> -> vector<8x16xf32>
    %cst_545 = arith.constant dense<0xFF800000> : vector<8xf32>
    %606 = vector.multi_reduction <maximumf>, %605, %cst_545 [1] : vector<8x16xf32> to vector<8xf32>
    %607 = vector.shape_cast %606 : vector<8xf32> to vector<8x1xf32>
    %608 = vector.broadcast %607 : vector<8x1xf32> to vector<8x16xf32>
    %609 = arith.subf %605, %608 : vector<8x16xf32>
    %610 = math.exp %609 : vector<8x16xf32>
    %cst_546 = arith.constant dense<0.000000e+00> : vector<8xf32>
    %611 = vector.multi_reduction <add>, %610, %cst_546 [1] : vector<8x16xf32> to vector<8xf32>
    %612 = vector.shape_cast %611 : vector<8xf32> to vector<8x1xf32>
    %613 = tpu.reciprocal %612 : vector<8x1xf32> -> vector<8x1xf32>
    %614 = vector.broadcast %613 : vector<8x1xf32> to vector<8x16xf32>
    %615 = arith.mulf %610, %614 : vector<8x16xf32>
    %c1_547 = arith.constant 1 : index
    %c3_548 = arith.constant 3 : index
    %c0_549 = arith.constant 0 : index
    %c0_550 = arith.constant 0 : index
    %616 = vector.load %arg11[%c1_547, %c3_548, %c0_549, %c0_550] : memref<2x4x32x32xf32, #tpu.memory_space<vmem>>, vector<1x1x32x32xf32>
    %617 = vector.shape_cast %616 : vector<1x1x32x32xf32> to vector<32x32xf32>
    %cst_551 = arith.constant dense<0.000000e+00> : vector<16x32xf32>
    %618 = tpu.matmul %3, %617, %cst_551 {dimension_numbers = #tpu.dot_dimension_numbers<[1], [0], [0], [1], [0, 0, 1, 1], [], []>} : vector<16x32xf32>, vector<32x32xf32>, vector<16x32xf32> -> vector<16x32xf32>
    %cst_552 = arith.constant dense<0.000000e+00> : vector<8x32xf32>
    %619 = tpu.matmul %615, %618, %cst_552 {dimension_numbers = #tpu.dot_dimension_numbers<[1], [0], [0], [1], [0, 0, 1, 1], [], []>} : vector<8x16xf32>, vector<16x32xf32>, vector<8x32xf32> -> vector<8x32xf32>
    %620 = arith.addf %590, %619 : vector<8x32xf32>
    %c1_553 = arith.constant 1 : index
    %c0_554 = arith.constant 0 : index
    %c0_555 = arith.constant 0 : index
    %621 = vector.load %arg12[%c1_553, %c0_554, %c0_555] : memref<2x1x32xf32, #tpu.memory_space<vmem>>, vector<1x1x32xf32>
    %622 = vector.shape_cast %621 : vector<1x1x32xf32> to vector<1x32xf32>
    %623 = vector.broadcast %622 : vector<1x32xf32> to vector<8x32xf32>
    %624 = arith.addf %620, %623 : vector<8x32xf32>
    %625 = arith.addf %500, %624 : vector<8x32xf32>
    %626 = vector.extract_strided_slice %351 {offsets = [2, 0], sizes = [1, 32], strides = [1, 1]} : vector<6x32xf32> to vector<1x32xf32>
    %627 = vector.extract_strided_slice %351 {offsets = [3, 0], sizes = [1, 32], strides = [1, 1]} : vector<6x32xf32> to vector<1x32xf32>
    %cst_556 = arith.constant dense<0.000000e+00> : vector<8xf32>
    %628 = vector.multi_reduction <add>, %625, %cst_556 [1] : vector<8x32xf32> to vector<8xf32>
    %629 = vector.shape_cast %628 : vector<8xf32> to vector<8x1xf32>
    %cst_557 = arith.constant 3.200000e+01 : f32
    %630 = vector.broadcast %cst_557 : f32 to vector<8x1xf32>
    %631 = arith.divf %629, %630 : vector<8x1xf32>
    %632 = vector.broadcast %631 : vector<8x1xf32> to vector<8x32xf32>
    %633 = arith.subf %625, %632 : vector<8x32xf32>
    %634 = arith.mulf %633, %633 : vector<8x32xf32>
    %cst_558 = arith.constant dense<0.000000e+00> : vector<8xf32>
    %635 = vector.multi_reduction <add>, %634, %cst_558 [1] : vector<8x32xf32> to vector<8xf32>
    %636 = vector.shape_cast %635 : vector<8xf32> to vector<8x1xf32>
    %cst_559 = arith.constant 3.200000e+01 : f32
    %637 = vector.broadcast %cst_559 : f32 to vector<8x1xf32>
    %638 = arith.divf %636, %637 : vector<8x1xf32>
    %639 = vector.broadcast %631 : vector<8x1xf32> to vector<8x32xf32>
    %640 = arith.subf %625, %639 : vector<8x32xf32>
    %cst_560 = arith.constant 9.99999974E-6 : f32
    %641 = vector.broadcast %cst_560 : f32 to vector<8x1xf32>
    %642 = arith.addf %638, %641 : vector<8x1xf32>
    %643 = math.rsqrt %642 : vector<8x1xf32>
    %644 = vector.broadcast %643 : vector<8x1xf32> to vector<8x32xf32>
    %645 = arith.mulf %640, %644 : vector<8x32xf32>
    %646 = vector.broadcast %626 : vector<1x32xf32> to vector<8x32xf32>
    %647 = arith.mulf %645, %646 : vector<8x32xf32>
    %648 = vector.broadcast %627 : vector<1x32xf32> to vector<8x32xf32>
    %649 = arith.addf %647, %648 : vector<8x32xf32>
    %c1_561 = arith.constant 1 : index
    %c0_562 = arith.constant 0 : index
    %c0_563 = arith.constant 0 : index
    %650 = vector.load %arg13[%c1_561, %c0_562, %c0_563] : memref<2x32x64xf32, #tpu.memory_space<vmem>>, vector<1x32x64xf32>
    %651 = vector.shape_cast %650 : vector<1x32x64xf32> to vector<32x64xf32>
    %cst_564 = arith.constant dense<0.000000e+00> : vector<8x64xf32>
    %652 = tpu.matmul %649, %651, %cst_564 {dimension_numbers = #tpu.dot_dimension_numbers<[1], [0], [0], [1], [0, 0, 1, 1], [], []>} : vector<8x32xf32>, vector<32x64xf32>, vector<8x64xf32> -> vector<8x64xf32>
    %c1_565 = arith.constant 1 : index
    %c0_566 = arith.constant 0 : index
    %c0_567 = arith.constant 0 : index
    %653 = vector.load %arg14[%c1_565, %c0_566, %c0_567] : memref<2x1x64xf32, #tpu.memory_space<vmem>>, vector<1x1x64xf32>
    %654 = vector.shape_cast %653 : vector<1x1x64xf32> to vector<1x64xf32>
    %655 = vector.broadcast %654 : vector<1x64xf32> to vector<8x64xf32>
    %656 = arith.addf %652, %655 : vector<8x64xf32>
    %cst_568 = arith.constant 0.000000e+00 : f32
    %657 = vector.broadcast %cst_568 : f32 to vector<8x64xf32>
    %658 = arith.maximumf %656, %657 : vector<8x64xf32>
    %c1_569 = arith.constant 1 : index
    %c0_570 = arith.constant 0 : index
    %c0_571 = arith.constant 0 : index
    %659 = vector.load %arg15[%c1_569, %c0_570, %c0_571] : memref<2x64x32xf32, #tpu.memory_space<vmem>>, vector<1x64x32xf32>
    %660 = vector.shape_cast %659 : vector<1x64x32xf32> to vector<64x32xf32>
    %cst_572 = arith.constant dense<0.000000e+00> : vector<8x32xf32>
    %661 = tpu.matmul %658, %660, %cst_572 {dimension_numbers = #tpu.dot_dimension_numbers<[1], [0], [0], [1], [0, 0, 1, 1], [], []>} : vector<8x64xf32>, vector<64x32xf32>, vector<8x32xf32> -> vector<8x32xf32>
    %c1_573 = arith.constant 1 : index
    %c0_574 = arith.constant 0 : index
    %c0_575 = arith.constant 0 : index
    %662 = vector.load %arg16[%c1_573, %c0_574, %c0_575] : memref<2x1x32xf32, #tpu.memory_space<vmem>>, vector<1x1x32xf32>
    %663 = vector.shape_cast %662 : vector<1x1x32xf32> to vector<1x32xf32>
    %664 = vector.broadcast %663 : vector<1x32xf32> to vector<8x32xf32>
    %665 = arith.addf %661, %664 : vector<8x32xf32>
    %666 = arith.addf %649, %665 : vector<8x32xf32>
    %667 = vector.extract_strided_slice %351 {offsets = [4, 0], sizes = [1, 32], strides = [1, 1]} : vector<6x32xf32> to vector<1x32xf32>
    %668 = vector.extract_strided_slice %351 {offsets = [5, 0], sizes = [1, 32], strides = [1, 1]} : vector<6x32xf32> to vector<1x32xf32>
    %cst_576 = arith.constant dense<0.000000e+00> : vector<8xf32>
    %669 = vector.multi_reduction <add>, %666, %cst_576 [1] : vector<8x32xf32> to vector<8xf32>
    %670 = vector.shape_cast %669 : vector<8xf32> to vector<8x1xf32>
    %cst_577 = arith.constant 3.200000e+01 : f32
    %671 = vector.broadcast %cst_577 : f32 to vector<8x1xf32>
    %672 = arith.divf %670, %671 : vector<8x1xf32>
    %673 = vector.broadcast %672 : vector<8x1xf32> to vector<8x32xf32>
    %674 = arith.subf %666, %673 : vector<8x32xf32>
    %675 = arith.mulf %674, %674 : vector<8x32xf32>
    %cst_578 = arith.constant dense<0.000000e+00> : vector<8xf32>
    %676 = vector.multi_reduction <add>, %675, %cst_578 [1] : vector<8x32xf32> to vector<8xf32>
    %677 = vector.shape_cast %676 : vector<8xf32> to vector<8x1xf32>
    %cst_579 = arith.constant 3.200000e+01 : f32
    %678 = vector.broadcast %cst_579 : f32 to vector<8x1xf32>
    %679 = arith.divf %677, %678 : vector<8x1xf32>
    %680 = vector.broadcast %672 : vector<8x1xf32> to vector<8x32xf32>
    %681 = arith.subf %666, %680 : vector<8x32xf32>
    %cst_580 = arith.constant 9.99999974E-6 : f32
    %682 = vector.broadcast %cst_580 : f32 to vector<8x1xf32>
    %683 = arith.addf %679, %682 : vector<8x1xf32>
    %684 = math.rsqrt %683 : vector<8x1xf32>
    %685 = vector.broadcast %684 : vector<8x1xf32> to vector<8x32xf32>
    %686 = arith.mulf %681, %685 : vector<8x32xf32>
    %687 = vector.broadcast %667 : vector<1x32xf32> to vector<8x32xf32>
    %688 = arith.mulf %686, %687 : vector<8x32xf32>
    %689 = vector.broadcast %668 : vector<1x32xf32> to vector<8x32xf32>
    %690 = arith.addf %688, %689 : vector<8x32xf32>
    %c0_581 = arith.constant 0 : index
    %c0_582 = arith.constant 0 : index
    %691 = vector.load %arg18[%c0_581, %c0_582] : memref<2x32xf32, #tpu.memory_space<vmem>>, vector<2x32xf32>
    %692 = vector.extract_strided_slice %691 {offsets = [0, 0], sizes = [1, 32], strides = [1, 1]} : vector<2x32xf32> to vector<1x32xf32>
    %693 = vector.extract_strided_slice %691 {offsets = [1, 0], sizes = [1, 32], strides = [1, 1]} : vector<2x32xf32> to vector<1x32xf32>
    %cst_583 = arith.constant dense<0.000000e+00> : vector<8xf32>
    %694 = vector.multi_reduction <add>, %690, %cst_583 [1] : vector<8x32xf32> to vector<8xf32>
    %695 = vector.shape_cast %694 : vector<8xf32> to vector<8x1xf32>
    %cst_584 = arith.constant 3.200000e+01 : f32
    %696 = vector.broadcast %cst_584 : f32 to vector<8x1xf32>
    %697 = arith.divf %695, %696 : vector<8x1xf32>
    %698 = vector.broadcast %697 : vector<8x1xf32> to vector<8x32xf32>
    %699 = arith.subf %690, %698 : vector<8x32xf32>
    %700 = arith.mulf %699, %699 : vector<8x32xf32>
    %cst_585 = arith.constant dense<0.000000e+00> : vector<8xf32>
    %701 = vector.multi_reduction <add>, %700, %cst_585 [1] : vector<8x32xf32> to vector<8xf32>
    %702 = vector.shape_cast %701 : vector<8xf32> to vector<8x1xf32>
    %cst_586 = arith.constant 3.200000e+01 : f32
    %703 = vector.broadcast %cst_586 : f32 to vector<8x1xf32>
    %704 = arith.divf %702, %703 : vector<8x1xf32>
    %705 = vector.broadcast %697 : vector<8x1xf32> to vector<8x32xf32>
    %706 = arith.subf %690, %705 : vector<8x32xf32>
    %cst_587 = arith.constant 9.99999974E-6 : f32
    %707 = vector.broadcast %cst_587 : f32 to vector<8x1xf32>
    %708 = arith.addf %704, %707 : vector<8x1xf32>
    %709 = math.rsqrt %708 : vector<8x1xf32>
    %710 = vector.broadcast %709 : vector<8x1xf32> to vector<8x32xf32>
    %711 = arith.mulf %706, %710 : vector<8x32xf32>
    %712 = vector.broadcast %692 : vector<1x32xf32> to vector<8x32xf32>
    %713 = arith.mulf %711, %712 : vector<8x32xf32>
    %714 = vector.broadcast %693 : vector<1x32xf32> to vector<8x32xf32>
    %715 = arith.addf %713, %714 : vector<8x32xf32>
    %c0_588 = arith.constant 0 : index
    %c0_589 = arith.constant 0 : index
    %c0_590 = arith.constant 0 : index
    %716 = vector.load %arg19[%c0_588, %c0_589, %c0_590] : memref<1x8x32xf32, #tpu.memory_space<vmem>>, vector<1x8x32xf32>
    %717 = vector.shape_cast %716 : vector<1x8x32xf32> to vector<8x32xf32>
    %718 = vector.shape_cast %715 : vector<8x32xf32> to vector<1x8x32xf32>
    tpu.vector_store %arg19[%c0_588, %c0_589, %c0_590], %718 {strides = array<i32>} : memref<1x8x32xf32, #tpu.memory_space<vmem>>, vector<1x8x32xf32>,
    return
  }
  func.func @transform_0(%arg0: i32) -> (i32, i32, i32) {
    %c0_i32 = arith.constant 0 : i32
    %c0_i32_0 = arith.constant 0 : i32
    %c0_i32_1 = arith.constant 0 : i32
    return %arg0, %c0_i32, %c0_i32_0 : i32, i32, i32
  }
  func.func @transform_1(%arg0: i32) -> (i32, i32, i32) {
    %c0_i32 = arith.constant 0 : i32
    %c0_i32_0 = arith.constant 0 : i32
    %c0_i32_1 = arith.constant 0 : i32
    return %arg0, %c0_i32, %c0_i32_0 : i32, i32, i32
  }
  func.func @transform_2(%arg0: i32) -> (i32, i32, i32) {
    %c0_i32 = arith.constant 0 : i32
    %c0_i32_0 = arith.constant 0 : i32
    %c0_i32_1 = arith.constant 0 : i32
    return %arg0, %c0_i32, %c0_i32_0 : i32, i32, i32
  }
  func.func @transform_3(%arg0: i32) -> (i32, i32, i32) {
    %c0_i32 = arith.constant 0 : i32
    %c0_i32_0 = arith.constant 0 : i32
    %c0_i32_1 = arith.constant 0 : i32
    return %arg0, %c0_i32, %c0_i32_0 : i32, i32, i32
  }
  func.func @transform_4(%arg0: i32) -> (i32, i32, i32, i32, i32) {
    %c0_i32 = arith.constant 0 : i32
    %c0_i32_0 = arith.constant 0 : i32
    %c0_i32_1 = arith.constant 0 : i32
    %c0_i32_2 = arith.constant 0 : i32
    %c0_i32_3 = arith.constant 0 : i32
    %c0_i32_4 = arith.constant 0 : i32
    return %c0_i32, %c0_i32_0, %c0_i32_1, %c0_i32_2, %c0_i32_3 : i32, i32, i32, i32, i32
  }
  func.func @transform_5(%arg0: i32) -> (i32, i32, i32, i32, i32) {
    %c0_i32 = arith.constant 0 : i32
    %c0_i32_0 = arith.constant 0 : i32
    %c0_i32_1 = arith.constant 0 : i32
    %c0_i32_2 = arith.constant 0 : i32
    %c0_i32_3 = arith.constant 0 : i32
    %c0_i32_4 = arith.constant 0 : i32
    return %c0_i32, %c0_i32_0, %c0_i32_1, %c0_i32_2, %c0_i32_3 : i32, i32, i32, i32, i32
  }
  func.func @transform_6(%arg0: i32) -> (i32, i32, i32, i32) {
    %c0_i32 = arith.constant 0 : i32
    %c0_i32_0 = arith.constant 0 : i32
    %c0_i32_1 = arith.constant 0 : i32
    %c0_i32_2 = arith.constant 0 : i32
    %c0_i32_3 = arith.constant 0 : i32
    return %c0_i32, %c0_i32_0, %c0_i32_1, %c0_i32_2 : i32, i32, i32, i32
  }
  func.func @transform_7(%arg0: i32) -> (i32, i32, i32) {
    %c0_i32 = arith.constant 0 : i32
    %c0_i32_0 = arith.constant 0 : i32
    %c0_i32_1 = arith.constant 0 : i32
    %c0_i32_2 = arith.constant 0 : i32
    return %c0_i32, %c0_i32_0, %c0_i32_1 : i32, i32, i32
  }
  func.func @transform_8(%arg0: i32) -> (i32, i32, i32, i32, i32) {
    %c0_i32 = arith.constant 0 : i32
    %c0_i32_0 = arith.constant 0 : i32
    %c0_i32_1 = arith.constant 0 : i32
    %c0_i32_2 = arith.constant 0 : i32
    %c0_i32_3 = arith.constant 0 : i32
    %c0_i32_4 = arith.constant 0 : i32
    return %c0_i32, %c0_i32_0, %c0_i32_1, %c0_i32_2, %c0_i32_3 : i32, i32, i32, i32, i32
  }
  func.func @transform_9(%arg0: i32) -> (i32, i32, i32, i32, i32) {
    %c0_i32 = arith.constant 0 : i32
    %c0_i32_0 = arith.constant 0 : i32
    %c0_i32_1 = arith.constant 0 : i32
    %c0_i32_2 = arith.constant 0 : i32
    %c0_i32_3 = arith.constant 0 : i32
    %c0_i32_4 = arith.constant 0 : i32
    return %c0_i32, %c0_i32_0, %c0_i32_1, %c0_i32_2, %c0_i32_3 : i32, i32, i32, i32, i32
  }
  func.func @transform_10(%arg0: i32) -> (i32, i32, i32, i32) {
    %c0_i32 = arith.constant 0 : i32
    %c0_i32_0 = arith.constant 0 : i32
    %c0_i32_1 = arith.constant 0 : i32
    %c0_i32_2 = arith.constant 0 : i32
    %c0_i32_3 = arith.constant 0 : i32
    return %c0_i32, %c0_i32_0, %c0_i32_1, %c0_i32_2 : i32, i32, i32, i32
  }
  func.func @transform_11(%arg0: i32) -> (i32, i32, i32) {
    %c0_i32 = arith.constant 0 : i32
    %c0_i32_0 = arith.constant 0 : i32
    %c0_i32_1 = arith.constant 0 : i32
    %c0_i32_2 = arith.constant 0 : i32
    return %c0_i32, %c0_i32_0, %c0_i32_1 : i32, i32, i32
  }
  func.func @transform_12(%arg0: i32) -> (i32, i32, i32) {
    %c0_i32 = arith.constant 0 : i32
    %c0_i32_0 = arith.constant 0 : i32
    %c0_i32_1 = arith.constant 0 : i32
    %c0_i32_2 = arith.constant 0 : i32
    return %c0_i32, %c0_i32_0, %c0_i32_1 : i32, i32, i32
  }
  func.func @transform_13(%arg0: i32) -> (i32, i32, i32) {
    %c0_i32 = arith.constant 0 : i32
    %c0_i32_0 = arith.constant 0 : i32
    %c0_i32_1 = arith.constant 0 : i32
    %c0_i32_2 = arith.constant 0 : i32
    return %c0_i32, %c0_i32_0, %c0_i32_1 : i32, i32, i32
  }
  func.func @transform_14(%arg0: i32) -> (i32, i32, i32) {
    %c0_i32 = arith.constant 0 : i32
    %c0_i32_0 = arith.constant 0 : i32
    %c0_i32_1 = arith.constant 0 : i32
    %c0_i32_2 = arith.constant 0 : i32
    return %c0_i32, %c0_i32_0, %c0_i32_1 : i32, i32, i32
  }
  func.func @transform_15(%arg0: i32) -> (i32, i32, i32) {
    %c0_i32 = arith.constant 0 : i32
    %c0_i32_0 = arith.constant 0 : i32
    %c0_i32_1 = arith.constant 0 : i32
    %c0_i32_2 = arith.constant 0 : i32
    return %c0_i32, %c0_i32_0, %c0_i32_1 : i32, i32, i32
  }
  func.func @transform_16(%arg0: i32) -> (i32, i32, i32) {
    %c0_i32 = arith.constant 0 : i32
    %c0_i32_0 = arith.constant 0 : i32
    %c0_i32_1 = arith.constant 0 : i32
    %c0_i32_2 = arith.constant 0 : i32
    return %c0_i32, %c0_i32_0, %c0_i32_1 : i32, i32, i32
  }
  func.func @transform_17(%arg0: i32) -> (i32, i32) {
    %c0_i32 = arith.constant 0 : i32
    %c0_i32_0 = arith.constant 0 : i32
    %c0_i32_1 = arith.constant 0 : i32
    return %c0_i32, %c0_i32_0 : i32, i32
  }
  func.func @transform_18(%arg0: i32) -> (i32, i32, i32) {
    %c0_i32 = arith.constant 0 : i32
    %c0_i32_0 = arith.constant 0 : i32
    %c0_i32_1 = arith.constant 0 : i32
    return %arg0, %c0_i32, %c0_i32_0 : i32, i32, i32
  }
}

</mosaic_0001>

<llo_original>
// kernel: tpu_custom_call.1
$region0: #{tpu_custom_call.1}
  #allocation0 [shape = 'u32[]', space=smem, size = 0x4, offset = 0x4, fixed_abs, tag = 'smem constant byte address 0x4 - core index']
  #allocation1 [shape = 'u32[144,128]{1,0:T(1,128)}', space=vmem, size = 0x12000, scoped, tag = 'internal scratch']
  %s0 = inlined_call_operand.vmem [shape: f32[2,8,32], index: 0, kind: input, shape index: {}]
  %s1 = inlined_call_operand.vmem [shape: f32[2,16,32], index: 1, kind: input, shape index: {}]
  %s2 = inlined_call_operand.vmem [shape: f32[2,8,32], index: 2, kind: input, shape index: {}]
  %s3 = inlined_call_operand.vmem [shape: f32[2,16,32], index: 3, kind: input, shape index: {}]
  %s4 = inlined_call_operand.vmem [shape: f32[2,2,4,32,8], index: 4, kind: input, shape index: {}]
  %s5 = inlined_call_operand.vmem [shape: f32[2,2,4,1,8], index: 5, kind: input, shape index: {}]
  %s6 = inlined_call_operand.vmem [shape: f32[2,4,32,32], index: 6, kind: input, shape index: {}]
  %s7 = inlined_call_operand.vmem [shape: f32[2,1,32], index: 7, kind: input, shape index: {}]
  %s8 = inlined_call_operand.vmem [shape: f32[2,2,4,32,8], index: 8, kind: input, shape index: {}]
  %s9 = inlined_call_operand.vmem [shape: f32[2,2,4,1,8], index: 9, kind: input, shape index: {}]
  %s10 = inlined_call_operand.vmem [shape: f32[2,4,32,32], index: 10, kind: input, shape index: {}]
  %s11 = inlined_call_operand.vmem [shape: f32[2,1,32], index: 11, kind: input, shape index: {}]
  %s12 = inlined_call_operand.vmem [shape: f32[2,32,64], index: 12, kind: input, shape index: {}]
  %s13 = inlined_call_operand.vmem [shape: f32[2,1,64], index: 13, kind: input, shape index: {}]
  %s14 = inlined_call_operand.vmem [shape: f32[2,64,32], index: 14, kind: input, shape index: {}]
  %s15 = inlined_call_operand.vmem [shape: f32[2,1,32], index: 15, kind: input, shape index: {}]
  %s16 = inlined_call_operand.vmem [shape: f32[2,6,32], index: 16, kind: input, shape index: {}]
  %s17 = inlined_call_operand.vmem [shape: f32[2,32], index: 17, kind: input, shape index: {}]
  %s18 = inlined_call_operand.hbm [shape: f32[2,8,32], index: 18, kind: output, shape index: {}]
  %s19 = sld [smem:[#allocation0]]
  $region105: #{tpu_custom_call.1} parent=0
    _
  %s21 = ssub.s32 1, %s19
  %s22 = scalar_select 0, %s21, %s19
  $region1: #{tpu_custom_call.1} parent=0
    #allocation2 [shape = 'u8[8192]{0}', space=vmem, size = 0x2000, scoped, tag = 'output window, operand 0']
    #allocation3 [shape = 's32[2]{0}', space=sflag, size = 0x8, scoped, tag = 'scoped memory for tpu_custom_call.1']
    %23 = vsyncpa [#allocation3], 0
    %s24 = scalar_lea.sflag [#allocation3], 1
    %25 = vsyncpa %s24, 0
    loop: start=0, step=1, limit=4
    $region2: #{tpu_custom_call.1} parent=1 // loop_pre_header
      _
    $region3: #{tpu_custom_call.1} parent=1 // loop_header
      %s27 = sphi 0, %s31
      %p28 = scmp.ge.s32.totalorder %s27, 4
      %s37 = sphi 0, %s39
      %s40 = sphi 0, %s37
      %s41 = sphi 0, %s40
      %s57 = sphi 0, %s41
      %s63 = sphi 0, %s65
      %s66 = sphi 0, %s63
      %s67 = sphi 0, %s66
      %s83 = sphi 0, %s67
      %s89 = sphi 0, %s91
      %s92 = sphi 0, %s89
      %s93 = sphi 0, %s92
      %s109 = sphi 0, %s93
      %s115 = sphi 0, %s117
      %s118 = sphi 0, %s115
      %s119 = sphi 0, %s118
      %s135 = sphi 0, %s119
      %s139 = sphi 0, %s139
      %s141 = sphi 0, %s139
      %s142 = sphi 0, %s141
      %s156 = sphi 0, %s142
      %s160 = sphi 0, %s160
      %s162 = sphi 0, %s160
      %s163 = sphi 0, %s162
      %s177 = sphi 0, %s163
      %s181 = sphi 0, %s181
      %s183 = sphi 0, %s181
      %s184 = sphi 0, %s183
      %s198 = sphi 0, %s184
      %s202 = sphi 0, %s202
      %s204 = sphi 0, %s202
      %s205 = sphi 0, %s204
      %s219 = sphi 0, %s205
      %s223 = sphi 0, %s223
      %s225 = sphi 0, %s223
      %s226 = sphi 0, %s225
      %s240 = sphi 0, %s226
      %s244 = sphi 0, %s244
      %s246 = sphi 0, %s244
      %s247 = sphi 0, %s246
      %s261 = sphi 0, %s247
      %s265 = sphi 0, %s265
      %s267 = sphi 0, %s265
      %s268 = sphi 0, %s267
      %s282 = sphi 0, %s268
      %s286 = sphi 0, %s286
      %s288 = sphi 0, %s286
      %s289 = sphi 0, %s288
      %s303 = sphi 0, %s289
      %s307 = sphi 0, %s307
      %s309 = sphi 0, %s307
      %s310 = sphi 0, %s309
      %s324 = sphi 0, %s310
      %s328 = sphi 0, %s328
      %s330 = sphi 0, %s328
      %s331 = sphi 0, %s330
      %s345 = sphi 0, %s331
      %s349 = sphi 0, %s349
      %s351 = sphi 0, %s349
      %s352 = sphi 0, %s351
      %s366 = sphi 0, %s352
      %s370 = sphi 0, %s370
      %s372 = sphi 0, %s370
      %s373 = sphi 0, %s372
      %s387 = sphi 0, %s373
      %s391 = sphi 0, %s391
      %s393 = sphi 0, %s391
      %s394 = sphi 0, %s393
      %s408 = sphi 0, %s394
      %s412 = sphi 0, %s412
      %s414 = sphi 0, %s412
      %s415 = sphi 0, %s414
      %s429 = sphi 0, %s415
      %s435 = sphi 0, %s437
      %s438 = sphi 0, %s435
      %s439 = sphi 0, %s438
      %s455 = sphi 0, %s439
    $region4: #{tpu_custom_call.1} parent=1 // loop_header_branch
      %30 = sbr.rel (%p28) target = $region8
    $region5: #{tpu_custom_call.1} parent=1 // loop_body
      %s32 = ssub.s32 %s27, 1
      %s33 = ssub.s32 %s27, 2
      %s34 = sadd.s32 %s27, 1
      %s35 = ssub.s32 %s27, %s34
      %p36 = scmp.eq.s32.totalorder %s35, 0
      %s38 = sadd.s32 %s37, 1
      %s39 = scalar_select %p36, %s37, %s38
      %p42 = pneg %p36
      %p43 = scmp.eq.s32.totalorder %s27, 1
      %p44 = por %p42, %p43
      %p45 = scmp.ne.s32.totalorder %s37, %s40
      %p46 = scmp.eq.s32.totalorder %s27, 0
      %p47 = por %p45, %p46
      %p48 = scmp.ne.s32.totalorder %s37, %s40
      %p49 = scmp.eq.s32.totalorder %s32, 1
      %p50 = por %p48, %p49
      %p51 = scmp.ne.s32.totalorder %s40, %s41
      %p52 = scmp.eq.s32.totalorder %s32, 0
      %p53 = por %p51, %p52
      %p54 = scmp.ne.s32.totalorder %s40, %s41
      %p55 = scmp.eq.s32.totalorder %s33, 1
      %p56 = por %p54, %p55
      %p58 = scmp.ne.s32.totalorder %s41, %s57
      %p59 = scmp.eq.s32.totalorder %s33, 0
      %p60 = por %p58, %p59
      %s61 = ssub.s32 %s27, %s34
      %p62 = scmp.eq.s32.totalorder %s61, 0
      %s64 = sadd.s32 %s63, 1
      %s65 = scalar_select %p62, %s63, %s64
      %p68 = pneg %p62
      %p69 = scmp.eq.s32.totalorder %s27, 1
      %p70 = por %p68, %p69
      %p71 = scmp.ne.s32.totalorder %s63, %s66
      %p72 = scmp.eq.s32.totalorder %s27, 0
      %p73 = por %p71, %p72
      %p74 = scmp.ne.s32.totalorder %s63, %s66
      %p75 = scmp.eq.s32.totalorder %s32, 1
      %p76 = por %p74, %p75
      %p77 = scmp.ne.s32.totalorder %s66, %s67
      %p78 = scmp.eq.s32.totalorder %s32, 0
      %p79 = por %p77, %p78
      %p80 = scmp.ne.s32.totalorder %s66, %s67
      %p81 = scmp.eq.s32.totalorder %s33, 1
      %p82 = por %p80, %p81
      %p84 = scmp.ne.s32.totalorder %s67, %s83
      %p85 = scmp.eq.s32.totalorder %s33, 0
      %p86 = por %p84, %p85
      %s87 = ssub.s32 %s27, %s34
      %p88 = scmp.eq.s32.totalorder %s87, 0
      %s90 = sadd.s32 %s89, 1
      %s91 = scalar_select %p88, %s89, %s90
      %p94 = pneg %p88
      %p95 = scmp.eq.s32.totalorder %s27, 1
      %p96 = por %p94, %p95
      %p97 = scmp.ne.s32.totalorder %s89, %s92
      %p98 = scmp.eq.s32.totalorder %s27, 0
      %p99 = por %p97, %p98
      %p100 = scmp.ne.s32.totalorder %s89, %s92
      %p101 = scmp.eq.s32.totalorder %s32, 1
      %p102 = por %p100, %p101
      %p103 = scmp.ne.s32.totalorder %s92, %s93
      %p104 = scmp.eq.s32.totalorder %s32, 0
      %p105 = por %p103, %p104
      %p106 = scmp.ne.s32.totalorder %s92, %s93
      %p107 = scmp.eq.s32.totalorder %s33, 1
      %p108 = por %p106, %p107
      %p110 = scmp.ne.s32.totalorder %s93, %s109
      %p111 = scmp.eq.s32.totalorder %s33, 0
      %p112 = por %p110, %p111
      %s113 = ssub.s32 %s27, %s34
      %p114 = scmp.eq.s32.totalorder %s113, 0
      %s116 = sadd.s32 %s115, 1
      %s117 = scalar_select %p114, %s115, %s116
      %p120 = pneg %p114
      %p121 = scmp.eq.s32.totalorder %s27, 1
      %p122 = por %p120, %p121
      %p123 = scmp.ne.s32.totalorder %s115, %s118
      %p124 = scmp.eq.s32.totalorder %s27, 0
      %p125 = por %p123, %p124
      %p126 = scmp.ne.s32.totalorder %s115, %s118
      %p127 = scmp.eq.s32.totalorder %s32, 1
      %p128 = por %p126, %p127
      %p129 = scmp.ne.s32.totalorder %s118, %s119
      %p130 = scmp.eq.s32.totalorder %s32, 0
      %p131 = por %p129, %p130
      %p132 = scmp.ne.s32.totalorder %s118, %s119
      %p133 = scmp.eq.s32.totalorder %s33, 1
      %p134 = por %p132, %p133
      %p136 = scmp.ne.s32.totalorder %s119, %s135
      %p137 = scmp.eq.s32.totalorder %s33, 0
      %p138 = por %p136, %p137
      %s140 = sadd.s32 %s139, 1
      %p143 = scmp.eq.s32.totalorder %s27, 1
      %p144 = scmp.ne.s32.totalorder %s139, %s141
      %p145 = scmp.eq.s32.totalorder %s27, 0
      %p146 = por %p144, %p145
      %p147 = scmp.ne.s32.totalorder %s139, %s141
      %p148 = scmp.eq.s32.totalorder %s32, 1
      %p149 = por %p147, %p148
      %p150 = scmp.ne.s32.totalorder %s141, %s142
      %p151 = scmp.eq.s32.totalorder %s32, 0
      %p152 = por %p150, %p151
      %p153 = scmp.ne.s32.totalorder %s141, %s142
      %p154 = scmp.eq.s32.totalorder %s33, 1
      %p155 = por %p153, %p154
      %p157 = scmp.ne.s32.totalorder %s142, %s156
      %p158 = scmp.eq.s32.totalorder %s33, 0
      %p159 = por %p157, %p158
      %s161 = sadd.s32 %s160, 1
      %p164 = scmp.eq.s32.totalorder %s27, 1
      %p165 = scmp.ne.s32.totalorder %s160, %s162
      %p166 = scmp.eq.s32.totalorder %s27, 0
      %p167 = por %p165, %p166
      %p168 = scmp.ne.s32.totalorder %s160, %s162
      %p169 = scmp.eq.s32.totalorder %s32, 1
      %p170 = por %p168, %p169
      %p171 = scmp.ne.s32.totalorder %s162, %s163
      %p172 = scmp.eq.s32.totalorder %s32, 0
      %p173 = por %p171, %p172
      %p174 = scmp.ne.s32.totalorder %s162, %s163
      %p175 = scmp.eq.s32.totalorder %s33, 1
      %p176 = por %p174, %p175
      %p178 = scmp.ne.s32.totalorder %s163, %s177
      %p179 = scmp.eq.s32.totalorder %s33, 0
      %p180 = por %p178, %p179
      %s182 = sadd.s32 %s181, 1
      %p185 = scmp.eq.s32.totalorder %s27, 1
      %p186 = scmp.ne.s32.totalorder %s181, %s183
      %p187 = scmp.eq.s32.totalorder %s27, 0
      %p188 = por %p186, %p187
      %p189 = scmp.ne.s32.totalorder %s181, %s183
      %p190 = scmp.eq.s32.totalorder %s32, 1
      %p191 = por %p189, %p190
      %p192 = scmp.ne.s32.totalorder %s183, %s184
      %p193 = scmp.eq.s32.totalorder %s32, 0
      %p194 = por %p192, %p193
      %p195 = scmp.ne.s32.totalorder %s183, %s184
      %p196 = scmp.eq.s32.totalorder %s33, 1
      %p197 = por %p195, %p196
      %p199 = scmp.ne.s32.totalorder %s184, %s198
      %p200 = scmp.eq.s32.totalorder %s33, 0
      %p201 = por %p199, %p200
      %s203 = sadd.s32 %s202, 1
      %p206 = scmp.eq.s32.totalorder %s27, 1
      %p207 = scmp.ne.s32.totalorder %s202, %s204
      %p208 = scmp.eq.s32.totalorder %s27, 0
      %p209 = por %p207, %p208
      %p210 = scmp.ne.s32.totalorder %s202, %s204
      %p211 = scmp.eq.s32.totalorder %s32, 1
      %p212 = por %p210, %p211
      %p213 = scmp.ne.s32.totalorder %s204, %s205
      %p214 = scmp.eq.s32.totalorder %s32, 0
      %p215 = por %p213, %p214
      %p216 = scmp.ne.s32.totalorder %s204, %s205
      %p217 = scmp.eq.s32.totalorder %s33, 1
      %p218 = por %p216, %p217
      %p220 = scmp.ne.s32.totalorder %s205, %s219
      %p221 = scmp.eq.s32.totalorder %s33, 0
      %p222 = por %p220, %p221
      %s224 = sadd.s32 %s223, 1
      %p227 = scmp.eq.s32.totalorder %s27, 1
      %p228 = scmp.ne.s32.totalorder %s223, %s225
      %p229 = scmp.eq.s32.totalorder %s27, 0
      %p230 = por %p228, %p229
      %p231 = scmp.ne.s32.totalorder %s223, %s225
      %p232 = scmp.eq.s32.totalorder %s32, 1
      %p233 = por %p231, %p232
      %p234 = scmp.ne.s32.totalorder %s225, %s226
      %p235 = scmp.eq.s32.totalorder %s32, 0
      %p236 = por %p234, %p235
      %p237 = scmp.ne.s32.totalorder %s225, %s226
      %p238 = scmp.eq.s32.totalorder %s33, 1
      %p239 = por %p237, %p238
      %p241 = scmp.ne.s32.totalorder %s226, %s240
      %p242 = scmp.eq.s32.totalorder %s33, 0
      %p243 = por %p241, %p242
      %s245 = sadd.s32 %s244, 1
      %p248 = scmp.eq.s32.totalorder %s27, 1
      %p249 = scmp.ne.s32.totalorder %s244, %s246
      %p250 = scmp.eq.s32.totalorder %s27, 0
      %p251 = por %p249, %p250
      %p252 = scmp.ne.s32.totalorder %s244, %s246
      %p253 = scmp.eq.s32.totalorder %s32, 1
      %p254 = por %p252, %p253
      %p255 = scmp.ne.s32.totalorder %s246, %s247
      %p256 = scmp.eq.s32.totalorder %s32, 0
      %p257 = por %p255, %p256
      %p258 = scmp.ne.s32.totalorder %s246, %s247
      %p259 = scmp.eq.s32.totalorder %s33, 1
      %p260 = por %p258, %p259
      %p262 = scmp.ne.s32.totalorder %s247, %s261
      %p263 = scmp.eq.s32.totalorder %s33, 0
      %p264 = por %p262, %p263
      %s266 = sadd.s32 %s265, 1
      %p269 = scmp.eq.s32.totalorder %s27, 1
      %p270 = scmp.ne.s32.totalorder %s265, %s267
      %p271 = scmp.eq.s32.totalorder %s27, 0
      %p272 = por %p270, %p271
      %p273 = scmp.ne.s32.totalorder %s265, %s267
      %p274 = scmp.eq.s32.totalorder %s32, 1
      %p275 = por %p273, %p274
      %p276 = scmp.ne.s32.totalorder %s267, %s268
      %p277 = scmp.eq.s32.totalorder %s32, 0
      %p278 = por %p276, %p277
      %p279 = scmp.ne.s32.totalorder %s267, %s268
      %p280 = scmp.eq.s32.totalorder %s33, 1
      %p281 = por %p279, %p280
      %p283 = scmp.ne.s32.totalorder %s268, %s282
      %p284 = scmp.eq.s32.totalorder %s33, 0
      %p285 = por %p283, %p284
      %s287 = sadd.s32 %s286, 1
      %p290 = scmp.eq.s32.totalorder %s27, 1
      %p291 = scmp.ne.s32.totalorder %s286, %s288
      %p292 = scmp.eq.s32.totalorder %s27, 0
      %p293 = por %p291, %p292
      %p294 = scmp.ne.s32.totalorder %s286, %s288
      %p295 = scmp.eq.s32.totalorder %s32, 1
      %p296 = por %p294, %p295
      %p297 = scmp.ne.s32.totalorder %s288, %s289
      %p298 = scmp.eq.s32.totalorder %s32, 0
      %p299 = por %p297, %p298
      %p300 = scmp.ne.s32.totalorder %s288, %s289
      %p301 = scmp.eq.s32.totalorder %s33, 1
      %p302 = por %p300, %p301
      %p304 = scmp.ne.s32.totalorder %s289, %s303
      %p305 = scmp.eq.s32.totalorder %s33, 0
      %p306 = por %p304, %p305
      %s308 = sadd.s32 %s307, 1
      %p311 = scmp.eq.s32.totalorder %s27, 1
      %p312 = scmp.ne.s32.totalorder %s307, %s309
      %p313 = scmp.eq.s32.totalorder %s27, 0
      %p314 = por %p312, %p313
      %p315 = scmp.ne.s32.totalorder %s307, %s309
      %p316 = scmp.eq.s32.totalorder %s32, 1
      %p317 = por %p315, %p316
      %p318 = scmp.ne.s32.totalorder %s309, %s310
      %p319 = scmp.eq.s32.totalorder %s32, 0
      %p320 = por %p318, %p319
      %p321 = scmp.ne.s32.totalorder %s309, %s310
      %p322 = scmp.eq.s32.totalorder %s33, 1
      %p323 = por %p321, %p322
      %p325 = scmp.ne.s32.totalorder %s310, %s324
      %p326 = scmp.eq.s32.totalorder %s33, 0
      %p327 = por %p325, %p326
      %s329 = sadd.s32 %s328, 1
      %p332 = scmp.eq.s32.totalorder %s27, 1
      %p333 = scmp.ne.s32.totalorder %s328, %s330
      %p334 = scmp.eq.s32.totalorder %s27, 0
      %p335 = por %p333, %p334
      %p336 = scmp.ne.s32.totalorder %s328, %s330
      %p337 = scmp.eq.s32.totalorder %s32, 1
      %p338 = por %p336, %p337
      %p339 = scmp.ne.s32.totalorder %s330, %s331
      %p340 = scmp.eq.s32.totalorder %s32, 0
      %p341 = por %p339, %p340
      %p342 = scmp.ne.s32.totalorder %s330, %s331
      %p343 = scmp.eq.s32.totalorder %s33, 1
      %p344 = por %p342, %p343
      %p346 = scmp.ne.s32.totalorder %s331, %s345
      %p347 = scmp.eq.s32.totalorder %s33, 0
      %p348 = por %p346, %p347
      %s350 = sadd.s32 %s349, 1
      %p353 = scmp.eq.s32.totalorder %s27, 1
      %p354 = scmp.ne.s32.totalorder %s349, %s351
      %p355 = scmp.eq.s32.totalorder %s27, 0
      %p356 = por %p354, %p355
      %p357 = scmp.ne.s32.totalorder %s349, %s351
      %p358 = scmp.eq.s32.totalorder %s32, 1
      %p359 = por %p357, %p358
      %p360 = scmp.ne.s32.totalorder %s351, %s352
      %p361 = scmp.eq.s32.totalorder %s32, 0
      %p362 = por %p360, %p361
      %p363 = scmp.ne.s32.totalorder %s351, %s352
      %p364 = scmp.eq.s32.totalorder %s33, 1
      %p365 = por %p363, %p364
      %p367 = scmp.ne.s32.totalorder %s352, %s366
      %p368 = scmp.eq.s32.totalorder %s33, 0
      %p369 = por %p367, %p368
      %s371 = sadd.s32 %s370, 1
      %p374 = scmp.eq.s32.totalorder %s27, 1
      %p375 = scmp.ne.s32.totalorder %s370, %s372
      %p376 = scmp.eq.s32.totalorder %s27, 0
      %p377 = por %p375, %p376
      %p378 = scmp.ne.s32.totalorder %s370, %s372
      %p379 = scmp.eq.s32.totalorder %s32, 1
      %p380 = por %p378, %p379
      %p381 = scmp.ne.s32.totalorder %s372, %s373
      %p382 = scmp.eq.s32.totalorder %s32, 0
      %p383 = por %p381, %p382
      %p384 = scmp.ne.s32.totalorder %s372, %s373
      %p385 = scmp.eq.s32.totalorder %s33, 1
      %p386 = por %p384, %p385
      %p388 = scmp.ne.s32.totalorder %s373, %s387
      %p389 = scmp.eq.s32.totalorder %s33, 0
      %p390 = por %p388, %p389
      %s392 = sadd.s32 %s391, 1
      %p395 = scmp.eq.s32.totalorder %s27, 1
      %p396 = scmp.ne.s32.totalorder %s391, %s393
      %p397 = scmp.eq.s32.totalorder %s27, 0
      %p398 = por %p396, %p397
      %p399 = scmp.ne.s32.totalorder %s391, %s393
      %p400 = scmp.eq.s32.totalorder %s32, 1
      %p401 = por %p399, %p400
      %p402 = scmp.ne.s32.totalorder %s393, %s394
      %p403 = scmp.eq.s32.totalorder %s32, 0
      %p404 = por %p402, %p403
      %p405 = scmp.ne.s32.totalorder %s393, %s394
      %p406 = scmp.eq.s32.totalorder %s33, 1
      %p407 = por %p405, %p406
      %p409 = scmp.ne.s32.totalorder %s394, %s408
      %p410 = scmp.eq.s32.totalorder %s33, 0
      %p411 = por %p409, %p410
      %s413 = sadd.s32 %s412, 1
      %p416 = scmp.eq.s32.totalorder %s27, 1
      %p417 = scmp.ne.s32.totalorder %s412, %s414
      %p418 = scmp.eq.s32.totalorder %s27, 0
      %p419 = por %p417, %p418
      %p420 = scmp.ne.s32.totalorder %s412, %s414
      %p421 = scmp.eq.s32.totalorder %s32, 1
      %p422 = por %p420, %p421
      %p423 = scmp.ne.s32.totalorder %s414, %s415
      %p424 = scmp.eq.s32.totalorder %s32, 0
      %p425 = por %p423, %p424
      %p426 = scmp.ne.s32.totalorder %s414, %s415
      %p427 = scmp.eq.s32.totalorder %s33, 1
      %p428 = por %p426, %p427
      %p430 = scmp.ne.s32.totalorder %s415, %s429
      %p431 = scmp.eq.s32.totalorder %s33, 0
      %p432 = por %p430, %p431
      %s433 = ssub.s32 %s27, %s34
      %p434 = scmp.eq.s32.totalorder %s433, 0
      %s436 = sadd.s32 %s435, 1
      %s437 = scalar_select %p434, %s435, %s436
      %p440 = pneg %p434
      %p441 = scmp.eq.s32.totalorder %s27, 1
      %p442 = por %p440, %p441
      %p443 = scmp.ne.s32.totalorder %s435, %s438
      %p444 = scmp.eq.s32.totalorder %s27, 0
      %p445 = por %p443, %p444
      %p446 = scmp.ne.s32.totalorder %s435, %s438
      %p447 = scmp.eq.s32.totalorder %s32, 1
      %p448 = por %p446, %p447
      %p449 = scmp.ne.s32.totalorder %s438, %s439
      %p450 = scmp.eq.s32.totalorder %s32, 0
      %p451 = por %p449, %p450
      %p452 = scmp.ne.s32.totalorder %s438, %s439
      %p453 = scmp.eq.s32.totalorder %s33, 1
      %p454 = por %p452, %p453
      %p456 = scmp.ne.s32.totalorder %s439, %s455
      %p457 = scmp.eq.s32.totalorder %s33, 0
      %p458 = por %p456, %p457
      %p459 = scmp.le.s32.totalorder 1, %s27
      %p460 = scmp.lt.s32.totalorder %s27, 3
      %p461 = pnand %p459, %p460
      %p462 = pneg %p461
      // Predicated region
      $region9: #{tpu_custom_call.1} parent=5 // pred_check
        _
      $region10: #{tpu_custom_call.1} parent=5 // pred_check_branch
        %464 = sbr.rel (%p461) target = $region12
      $region11: #{tpu_custom_call.1} parent=5 // pred_region
        %s465 = ssub.s32 %s27, 1
        // Predicated region
        $region13: #{tpu_custom_call.1} parent=11 // pred_check
          %p466 = pneg %p152
        $region14: #{tpu_custom_call.1} parent=11 // pred_check_branch
          %468 = sbr.rel (%p466) target = $region16
        $region15: #{tpu_custom_call.1} parent=11 // pred_region
          _
        $region16: #{tpu_custom_call.1} parent=11 // pred_fallthru
          _
        // Predicated region
        $region17: #{tpu_custom_call.1} parent=11 // pred_check
          %p469 = pneg %p173
        $region18: #{tpu_custom_call.1} parent=11 // pred_check_branch
          %471 = sbr.rel (%p469) target = $region20
        $region19: #{tpu_custom_call.1} parent=11 // pred_region
          _
        $region20: #{tpu_custom_call.1} parent=11 // pred_fallthru
          _
        // Predicated region
        $region21: #{tpu_custom_call.1} parent=11 // pred_check
          %p472 = pneg %p194
        $region22: #{tpu_custom_call.1} parent=11 // pred_check_branch
          %474 = sbr.rel (%p472) target = $region24
        $region23: #{tpu_custom_call.1} parent=11 // pred_region
          _
        $region24: #{tpu_custom_call.1} parent=11 // pred_fallthru
          _
        // Predicated region
        $region25: #{tpu_custom_call.1} parent=11 // pred_check
          %p475 = pneg %p215
        $region26: #{tpu_custom_call.1} parent=11 // pred_check_branch
          %477 = sbr.rel (%p475) target = $region28
        $region27: #{tpu_custom_call.1} parent=11 // pred_region
          _
        $region28: #{tpu_custom_call.1} parent=11 // pred_fallthru
          _
        // Predicated region
        $region29: #{tpu_custom_call.1} parent=11 // pred_check
          %p478 = pneg %p236
        $region30: #{tpu_custom_call.1} parent=11 // pred_check_branch
          %480 = sbr.rel (%p478) target = $region32
        $region31: #{tpu_custom_call.1} parent=11 // pred_region
          _
        $region32: #{tpu_custom_call.1} parent=11 // pred_fallthru
          _
        // Predicated region
        $region33: #{tpu_custom_call.1} parent=11 // pred_check
          %p481 = pneg %p257
        $region34: #{tpu_custom_call.1} parent=11 // pred_check_branch
          %483 = sbr.rel (%p481) target = $region36
        $region35: #{tpu_custom_call.1} parent=11 // pred_region
          _
        $region36: #{tpu_custom_call.1} parent=11 // pred_fallthru
          _
        // Predicated region
        $region37: #{tpu_custom_call.1} parent=11 // pred_check
          %p484 = pneg %p278
        $region38: #{tpu_custom_call.1} parent=11 // pred_check_branch
          %486 = sbr.rel (%p484) target = $region40
        $region39: #{tpu_custom_call.1} parent=11 // pred_region
          _
        $region40: #{tpu_custom_call.1} parent=11 // pred_fallthru
          _
        // Predicated region
        $region41: #{tpu_custom_call.1} parent=11 // pred_check
          %p487 = pneg %p299
        $region42: #{tpu_custom_call.1} parent=11 // pred_check_branch
          %489 = sbr.rel (%p487) target = $region44
        $region43: #{tpu_custom_call.1} parent=11 // pred_region
          _
        $region44: #{tpu_custom_call.1} parent=11 // pred_fallthru
          _
        // Predicated region
        $region45: #{tpu_custom_call.1} parent=11 // pred_check
          %p490 = pneg %p320
        $region46: #{tpu_custom_call.1} parent=11 // pred_check_branch
          %492 = sbr.rel (%p490) target = $region48
        $region47: #{tpu_custom_call.1} parent=11 // pred_region
          _
        $region48: #{tpu_custom_call.1} parent=11 // pred_fallthru
          _
        // Predicated region
        $region49: #{tpu_custom_call.1} parent=11 // pred_check
          %p493 = pneg %p341
        $region50: #{tpu_custom_call.1} parent=11 // pred_check_branch
          %495 = sbr.rel (%p493) target = $region52
        $region51: #{tpu_custom_call.1} parent=11 // pred_region
          _
        $region52: #{tpu_custom_call.1} parent=11 // pred_fallthru
          _
        // Predicated region
        $region53: #{tpu_custom_call.1} parent=11 // pred_check
          %p496 = pneg %p362
        $region54: #{tpu_custom_call.1} parent=11 // pred_check_branch
          %498 = sbr.rel (%p496) target = $region56
        $region55: #{tpu_custom_call.1} parent=11 // pred_region
          _
        $region56: #{tpu_custom_call.1} parent=11 // pred_fallthru
          _
        // Predicated region
        $region57: #{tpu_custom_call.1} parent=11 // pred_check
          %p499 = pneg %p383
        $region58: #{tpu_custom_call.1} parent=11 // pred_check_branch
          %501 = sbr.rel (%p499) target = $region60
        $region59: #{tpu_custom_call.1} parent=11 // pred_region
          _
        $region60: #{tpu_custom_call.1} parent=11 // pred_fallthru
          _
        // Predicated region
        $region61: #{tpu_custom_call.1} parent=11 // pred_check
          %p502 = pneg %p404
        $region62: #{tpu_custom_call.1} parent=11 // pred_check_branch
          %504 = sbr.rel (%p502) target = $region64
        $region63: #{tpu_custom_call.1} parent=11 // pred_region
          _
        $region64: #{tpu_custom_call.1} parent=11 // pred_fallthru
          _
        // Predicated region
        $region65: #{tpu_custom_call.1} parent=11 // pred_check
          %p505 = pneg %p425
        $region66: #{tpu_custom_call.1} parent=11 // pred_check_branch
          %507 = sbr.rel (%p505) target = $region68
        $region67: #{tpu_custom_call.1} parent=11 // pred_region
          _
        $region68: #{tpu_custom_call.1} parent=11 // pred_fallthru
          _
      $region12: #{tpu_custom_call.1} parent=5 // pred_fallthru
        _
      %p508 = scmp.lt.s32.totalorder %s27, 2
      // Predicated region
      $region69: #{tpu_custom_call.1} parent=5 // pred_check
        %p509 = pneg %p508
      $region70: #{tpu_custom_call.1} parent=5 // pred_check_branch
        %511 = sbr.rel (%p509) target = $region72
      $region71: #{tpu_custom_call.1} parent=5 // pred_region
        // Predicated region
        $region73: #{tpu_custom_call.1} parent=71 // pred_check
          %p512 = pneg %p47
        $region74: #{tpu_custom_call.1} parent=71 // pred_check_branch
          %514 = sbr.rel (%p512) target = $region76
        $region75: #{tpu_custom_call.1} parent=71 // pred_region
          %p515 = scmp.lt.s32.totalorder %s27, 1
          %s516 = scalar_select %p515, %s27, 1
          %s517 = smul.addr %s516, 8
          %s518 = scalar_lea.vmem %s0, %s517
        $region76: #{tpu_custom_call.1} parent=71 // pred_fallthru
          _
        // Predicated region
        $region77: #{tpu_custom_call.1} parent=71 // pred_check
          %p519 = pneg %p73
        $region78: #{tpu_custom_call.1} parent=71 // pred_check_branch
          %521 = sbr.rel (%p519) target = $region80
        $region79: #{tpu_custom_call.1} parent=71 // pred_region
          %p522 = scmp.lt.s32.totalorder %s27, 1
          %s523 = scalar_select %p522, %s27, 1
          %s524 = smul.addr %s523, 2
          %s525 = smul.addr %s524, 8
          %s526 = scalar_lea.vmem %s1, %s525
        $region80: #{tpu_custom_call.1} parent=71 // pred_fallthru
          _
        // Predicated region
        $region81: #{tpu_custom_call.1} parent=71 // pred_check
          %p527 = pneg %p99
        $region82: #{tpu_custom_call.1} parent=71 // pred_check_branch
          %529 = sbr.rel (%p527) target = $region84
        $region83: #{tpu_custom_call.1} parent=71 // pred_region
          %p530 = scmp.lt.s32.totalorder %s27, 1
          %s531 = scalar_select %p530, %s27, 1
          %s532 = smul.addr %s531, 8
          %s533 = scalar_lea.vmem %s2, %s532
        $region84: #{tpu_custom_call.1} parent=71 // pred_fallthru
          _
        // Predicated region
        $region85: #{tpu_custom_call.1} parent=71 // pred_check
          %p534 = pneg %p125
        $region86: #{tpu_custom_call.1} parent=71 // pred_check_branch
          %536 = sbr.rel (%p534) target = $region88
        $region87: #{tpu_custom_call.1} parent=71 // pred_region
          %p537 = scmp.lt.s32.totalorder %s27, 1
          %s538 = scalar_select %p537, %s27, 1
          %s539 = smul.addr %s538, 2
          %s540 = smul.addr %s539, 8
          %s541 = scalar_lea.vmem %s3, %s540
        $region88: #{tpu_custom_call.1} parent=71 // pred_fallthru
          _
      $region72: #{tpu_custom_call.1} parent=5 // pred_fallthru
        _
      %p542 = scmp.le.s32.totalorder 1, %s27
      %p543 = scmp.lt.s32.totalorder %s27, 3
      %p544 = pnand %p542, %p543
      %p545 = pneg %p544
      // Predicated region
      $region89: #{tpu_custom_call.1} parent=5 // pred_check
        _
      $region90: #{tpu_custom_call.1} parent=5 // pred_check_branch
        %547 = sbr.rel (%p544) target = $region92
      $region91: #{tpu_custom_call.1} parent=5 // pred_region
        %s548 = ssub.s32 %s27, 1
        %p549 = scmp.lt.s32.totalorder %s32, 1
        %s550 = scalar_select %p549, %s32, 1
        %s551 = smul.addr %s550, 8
        %s552 = scalar_lea.vmem %s0, %s551
        %p553 = pneg %p53
        %p554 = pneg %p50
        %p555 = scmp.lt.s32.totalorder %s32, 1
        %s556 = scalar_select %p555, %s32, 1
        %s557 = smul.addr %s556, 2
        %s558 = smul.addr %s557, 8
        %s559 = scalar_lea.vmem %s1, %s558
        %p560 = pneg %p79
        %p561 = pneg %p76
        %p562 = scmp.lt.s32.totalorder %s32, 1
        %s563 = scalar_select %p562, %s32, 1
        %s564 = smul.addr %s563, 8
        %s565 = scalar_lea.vmem %s2, %s564
        %p566 = pneg %p105
        %p567 = pneg %p102
        %p568 = scmp.lt.s32.totalorder %s32, 1
        %s569 = scalar_select %p568, %s32, 1
        %s570 = smul.addr %s569, 2
        %s571 = smul.addr %s570, 8
        %s572 = scalar_lea.vmem %s3, %s571
        %p573 = pneg %p131
        %p574 = pneg %p128
        %p575 = pneg %p152
        %p576 = pneg %p149
        %p577 = pneg %p173
        %p578 = pneg %p170
        %p579 = pneg %p194
        %p580 = pneg %p191
        %p581 = pneg %p215
        %p582 = pneg %p212
        %p583 = pneg %p236
        %p584 = pneg %p233
        %p585 = pneg %p257
        %p586 = pneg %p254
        %p587 = pneg %p278
        %p588 = pneg %p275
        %p589 = pneg %p299
        %p590 = pneg %p296
        %p591 = pneg %p320
        %p592 = pneg %p317
        %p593 = pneg %p341
        %p594 = pneg %p338
        %p595 = pneg %p362
        %p596 = pneg %p359
        %p597 = pneg %p383
        %p598 = pneg %p380
        %p599 = pneg %p404
        %p600 = pneg %p401
        %p601 = pneg %p425
        %p602 = pneg %p422
        %p603 = pneg %p451
        %p604 = pneg %p448
        %s605 = sand.u32 %s438, 1
        %s606 = scalar_lea.sflag [#allocation3], %s605
        %s607 = sand.u32 %s438, 1
        %s608 = smul.addr %s607, 8
        %s609 = scalar_lea.vmem [#allocation2], %s608
        %p610 = scmp.lt.s32.totalorder %s32, 1
        %s611 = scalar_select %p610, %s32, 1
        %s612 = smul.addr %s611, 8
        %s613 = scalar_lea.vmem %s0, %s612
        %p614 = scmp.lt.s32.totalorder %s32, 1
        %s615 = scalar_select %p614, %s32, 1
        %s616 = smul.addr %s615, 2
        %s617 = smul.addr %s616, 8
        %s618 = scalar_lea.vmem %s1, %s617
        %p619 = scmp.lt.s32.totalorder %s32, 1
        %s620 = scalar_select %p619, %s32, 1
        %s621 = smul.addr %s620, 8
        %s622 = scalar_lea.vmem %s2, %s621
        %p623 = scmp.lt.s32.totalorder %s32, 1
        %s624 = scalar_select %p623, %s32, 1
        %s625 = smul.addr %s624, 2
        %s626 = smul.addr %s625, 8
        %s627 = scalar_lea.vmem %s3, %s626
        %v628 = vld [vmem:[%s613] sm:$0xff]
        %v629 = vld [vmem:[%s618] sm:$0xff]
        %v630 = vld [vmem:[%s618 + $0x8] sm:$0xff]
        %v631 = vld [vmem:[%s622] sm:$0xff]
        %v632 = vld [vmem:[%s627] sm:$0xff]
        %v633 = vld [vmem:[%s627 + $0x8] sm:$0xff]
        %v634 = vadd.f32 %v629, %v632
        %v635 = vadd.f32 %v630, %v633
        %v636 = vld [vmem:[%s16] sm:$0x3f]
        %v637 = vadd.f32 %v628, %v631
        %v638 = vld [vmem:[%s4] sm:$0xff]
        %v639 = vld [vmem:[%s4 + $0x8] sm:$0xff]
        %v640 = vld [vmem:[%s4 + $0x10] sm:$0xff]
        %v641 = vld [vmem:[%s4 + $0x18] sm:$0xff]
        %v642 = vld [vmem:[%s5] sm:$0x1]
        %v644 = vlaneseq
        %v645 = vshrl.u32 %v644, 7
        %v646 = vsub.s32 0, %v645
        %v647 = vrot.slane %v642, %v646
        %vm649 = vcmask 261120
        %v651 = vsel %vm649, %v637, 0
        %653 = vmatprep.subr.mxu0 0.0
        %654 = vmatpush1.msra.mxu0 %v638
        %655 = vmatprep.subr.mxu0 0.0
        %656 = vmatpush1.msra.mxu0 %v639
        %657 = vmatprep.subr.mxu0 0.0
        %658 = vmatpush1.msra.mxu0 %v640
        %659 = vmatprep.subr.mxu0 0.0
        %660 = vmatpush1.msra.mxu0 %v641
        %661 = vmatprep.subr.mxu0 0.0
        %662 = vmatpush1.msra.mxu0 0.0
        %663 = vmatprep.subr.mxu0 0.0
        %664 = vmatpush1.msra.mxu0 0.0
        %665 = vmatprep.subr.mxu0 0.0
        %666 = vmatpush1.msra.mxu0 0.0
        %667 = vmatprep.subr.mxu0 0.0
        %668 = vmatpush1.msra.mxu0 0.0
        %669 = vmatprep.subr.mxu0 0.0
        %670 = vmatpush1.msra.mxu0 0.0
        %671 = vmatprep.subr.mxu0 0.0
        %672 = vmatpush1.msra.mxu0 0.0
        %673 = vmatprep.subr.mxu0 0.0
        %674 = vmatpush1.msra.mxu0 0.0
        %675 = vmatprep.subr.mxu0 0.0
        %676 = vmatpush1.msra.mxu0 0.0
        %677 = vmatprep.subr.mxu0 0.0
        %678 = vmatpush1.msra.mxu0 0.0
        %679 = vmatprep.subr.mxu0 0.0
        %680 = vmatpush1.msra.mxu0 0.0
        %681 = vmatprep.subr.mxu0 0.0
        %682 = vmatpush1.msra.mxu0 0.0
        %683 = vmatprep.subr.mxu0 0.0
        %684 = vmatpush1.msra.mxu0 0.0
        %685 = vmatprep.subr.mxu0 0.0
        %686 = vmatpush1.msra.mxu0 0.0
        %687 = vmatprep.subr.mxu0 0.0
        %688 = vmatpush1.msra.mxu0 0.0
        %689 = vmatprep.subr.mxu0 0.0
        %690 = vmatpush1.msra.mxu0 0.0
        %691 = vmatprep.subr.mxu0 0.0
        %692 = vmatpush1.msra.mxu0 0.0
        %693 = vmatprep.subr.mxu0 0.0
        %694 = vmatpush1.msra.mxu0 0.0
        %695 = vmatprep.subr.mxu0 0.0
        %696 = vmatpush1.msra.mxu0 0.0
        %697 = vmatprep.subr.mxu0 0.0
        %698 = vmatpush1.msra.mxu0 0.0
        %699 = vmatprep.subr.mxu0 0.0
        %700 = vmatpush1.msra.mxu0 0.0
        %701 = vmatprep.subr.mxu0 0.0
        %702 = vmatpush1.msra.mxu0 0.0
        %703 = vmatprep.subr.mxu0 0.0
        %704 = vmatpush1.msra.mxu0 0.0
        %705 = vmatprep.subr.mxu0 0.0
        %706 = vmatpush1.msra.mxu0 0.0
        %707 = vmatprep.subr.mxu0 0.0
        %708 = vmatpush1.msra.mxu0 0.0
        %709 = vmatprep.subr.mxu0 0.0
        %710 = vmatpush1.msra.mxu0 0.0
        %711 = vmatprep.subr.mxu0 0.0
        %712 = vmatpush1.msra.mxu0 0.0
        %713 = vmatprep.subr.mxu0 0.0
        %714 = vmatpush1.msra.mxu0 0.0
        %715 = vmatprep.subr.mxu0 0.0
        %716 = vmatpush1.msra.mxu0 0.0
        %717 = vmatprep.mubr.f32.mxu0 0.0
        %718 = vmatmul.mubr.f32.gmra.mrb[0].mxu0 %v651
        %v719 = vpop.f32.mrb[0].mxu0
        %v720 = vadd.f32 %v647, %v719
        %v721 = vpop.f32.mrb[0].mxu0
        %722 = vdwg.mxu0
        %s723 = scalar_lea.vmem %s4, 128
        %v724 = vld [vmem:[%s723] sm:$0xff]
        %v725 = vld [vmem:[%s723 + $0x8] sm:$0xff]
        %v726 = vld [vmem:[%s723 + $0x10] sm:$0xff]
        %v727 = vld [vmem:[%s723 + $0x18] sm:$0xff]
        %s728 = scalar_lea.vmem %s5, 4
        %v729 = vld [vmem:[%s728] sm:$0x1]
        %v731 = vlaneseq
        %v732 = vshrl.u32 %v731, 7
        %v733 = vsub.s32 0, %v732
        %v734 = vrot.slane %v729, %v733
        %736 = vmatprep.subr.mxu0 0.0
        %737 = vmatpush1.msra.mxu0 %v724
        %738 = vmatprep.subr.mxu0 0.0
        %739 = vmatpush1.msra.mxu0 %v725
        %740 = vmatprep.subr.mxu0 0.0
        %741 = vmatpush1.msra.mxu0 %v726
        %742 = vmatprep.subr.mxu0 0.0
        %743 = vmatpush1.msra.mxu0 %v727
        %744 = vmatprep.subr.mxu0 0.0
        %745 = vmatpush1.msra.mxu0 0.0
        %746 = vmatprep.subr.mxu0 0.0
        %747 = vmatpush1.msra.mxu0 0.0
        %748 = vmatprep.subr.mxu0 0.0
        %749 = vmatpush1.msra.mxu0 0.0
        %750 = vmatprep.subr.mxu0 0.0
        %751 = vmatpush1.msra.mxu0 0.0
        %752 = vmatprep.subr.mxu0 0.0
        %753 = vmatpush1.msra.mxu0 0.0
        %754 = vmatprep.subr.mxu0 0.0
        %755 = vmatpush1.msra.mxu0 0.0
        %756 = vmatprep.subr.mxu0 0.0
        %757 = vmatpush1.msra.mxu0 0.0
        %758 = vmatprep.subr.mxu0 0.0
        %759 = vmatpush1.msra.mxu0 0.0
        %760 = vmatprep.subr.mxu0 0.0
        %761 = vmatpush1.msra.mxu0 0.0
        %762 = vmatprep.subr.mxu0 0.0
        %763 = vmatpush1.msra.mxu0 0.0
        %764 = vmatprep.subr.mxu0 0.0
        %765 = vmatpush1.msra.mxu0 0.0
        %766 = vmatprep.subr.mxu0 0.0
        %767 = vmatpush1.msra.mxu0 0.0
        %768 = vmatprep.subr.mxu0 0.0
        %769 = vmatpush1.msra.mxu0 0.0
        %770 = vmatprep.subr.mxu0 0.0
        %771 = vmatpush1.msra.mxu0 0.0
        %772 = vmatprep.subr.mxu0 0.0
        %773 = vmatpush1.msra.mxu0 0.0
        %774 = vmatprep.subr.mxu0 0.0
        %775 = vmatpush1.msra.mxu0 0.0
        %776 = vmatprep.subr.mxu0 0.0
        %777 = vmatpush1.msra.mxu0 0.0
        %778 = vmatprep.subr.mxu0 0.0
        %779 = vmatpush1.msra.mxu0 0.0
        %780 = vmatprep.subr.mxu0 0.0
        %781 = vmatpush1.msra.mxu0 0.0
        %782 = vmatprep.subr.mxu0 0.0
        %783 = vmatpush1.msra.mxu0 0.0
        %784 = vmatprep.subr.mxu0 0.0
        %785 = vmatpush1.msra.mxu0 0.0
        %786 = vmatprep.subr.mxu0 0.0
        %787 = vmatpush1.msra.mxu0 0.0
        %788 = vmatprep.subr.mxu0 0.0
        %789 = vmatpush1.msra.mxu0 0.0
        %790 = vmatprep.subr.mxu0 0.0
        %791 = vmatpush1.msra.mxu0 0.0
        %792 = vmatprep.subr.mxu0 0.0
        %793 = vmatpush1.msra.mxu0 0.0
        %794 = vmatprep.subr.mxu0 0.0
        %795 = vmatpush1.msra.mxu0 0.0
        %796 = vmatprep.subr.mxu0 0.0
        %797 = vmatpush1.msra.mxu0 0.0
        %798 = vmatprep.subr.mxu0 0.0
        %799 = vmatpush1.msra.mxu0 0.0
        %800 = vmatprep.mubr.f32.mxu0 0.0
        %801 = vmatmul.mubr.f32.gmra.mrb[0].mxu0 %v651
        %v802 = vpop.f32.mrb[0].mxu0
        %v803 = vadd.f32 %v734, %v802
        %v804 = vpop.f32.mrb[0].mxu0
        %805 = vdwg.mxu0
        %vm806 = vcmask 64512
        %v808 = vsel %vm806, %v720, 0
        %v811 = vsel %vm806, %v803, 0
        %813 = vmatprep.subr.mxu0 0.0
        %814 = vmatpush1.xpose.msra.mxu0 %v811
        %815 = vmatprep.subr.mxu0 0.0
        %816 = vmatpush1.xpose.msra.mxu0 0.0
        %817 = vmatprep.subr.mxu0 0.0
        %818 = vmatpush1.xpose.msra.mxu0 0.0
        %819 = vmatprep.subr.mxu0 0.0
        %820 = vmatpush1.xpose.msra.mxu0 0.0
        %821 = vmatprep.subr.mxu0 0.0
        %822 = vmatpush1.xpose.msra.mxu0 0.0
        %823 = vmatprep.subr.mxu0 0.0
        %824 = vmatpush1.xpose.msra.mxu0 0.0
        %825 = vmatprep.subr.mxu0 0.0
        %826 = vmatpush1.xpose.msra.mxu0 0.0
        %827 = vmatprep.subr.mxu0 0.0
        %828 = vmatpush1.xpose.msra.mxu0 0.0
        %829 = vmatprep.subr.mxu0 0.0
        %830 = vmatpush1.xpose.msra.mxu0 0.0
        %831 = vmatprep.subr.mxu0 0.0
        %832 = vmatpush1.xpose.msra.mxu0 0.0
        %833 = vmatprep.subr.mxu0 0.0
        %834 = vmatpush1.xpose.msra.mxu0 0.0
        %835 = vmatprep.subr.mxu0 0.0
        %836 = vmatpush1.xpose.msra.mxu0 0.0
        %837 = vmatprep.subr.mxu0 0.0
        %838 = vmatpush1.xpose.msra.mxu0 0.0
        %839 = vmatprep.subr.mxu0 0.0
        %840 = vmatpush1.xpose.msra.mxu0 0.0
        %841 = vmatprep.subr.mxu0 0.0
        %842 = vmatpush1.xpose.msra.mxu0 0.0
        %843 = vmatprep.subr.mxu0 0.0
        %844 = vmatpush1.xpose.msra.mxu0 0.0
        %845 = vmatprep.subr.mxu0 0.0
        %846 = vmatpush1.xpose.msra.mxu0 0.0
        %847 = vmatprep.subr.mxu0 0.0
        %848 = vmatpush1.xpose.msra.mxu0 0.0
        %849 = vmatprep.subr.mxu0 0.0
        %850 = vmatpush1.xpose.msra.mxu0 0.0
        %851 = vmatprep.subr.mxu0 0.0
        %852 = vmatpush1.xpose.msra.mxu0 0.0
        %853 = vmatprep.subr.mxu0 0.0
        %854 = vmatpush1.xpose.msra.mxu0 0.0
        %855 = vmatprep.subr.mxu0 0.0
        %856 = vmatpush1.xpose.msra.mxu0 0.0
        %857 = vmatprep.subr.mxu0 0.0
        %858 = vmatpush1.xpose.msra.mxu0 0.0
        %859 = vmatprep.subr.mxu0 0.0
        %860 = vmatpush1.xpose.msra.mxu0 0.0
        %861 = vmatprep.subr.mxu0 0.0
        %862 = vmatpush1.xpose.msra.mxu0 0.0
        %863 = vmatprep.subr.mxu0 0.0
        %864 = vmatpush1.xpose.msra.mxu0 0.0
        %865 = vmatprep.subr.mxu0 0.0
        %866 = vmatpush1.xpose.msra.mxu0 0.0
        %867 = vmatprep.subr.mxu0 0.0
        %868 = vmatpush1.xpose.msra.mxu0 0.0
        %869 = vmatprep.subr.mxu0 0.0
        %870 = vmatpush1.xpose.msra.mxu0 0.0
        %871 = vmatprep.subr.mxu0 0.0
        %872 = vmatpush1.xpose.msra.mxu0 0.0
        %873 = vmatprep.subr.mxu0 0.0
        %874 = vmatpush1.xpose.msra.mxu0 0.0
        %875 = vmatprep.subr.mxu0 0.0
        %876 = vmatpush1.xpose.msra.mxu0 0.0
        %877 = vmatprep.mubr.f32.mxu0 0.0
        %878 = vmatmul.mubr.f32.gmra.mrb[0].mxu0 %v808
        %v879 = vpop.f32.mrb[0].mxu0
        %v880 = vadd.f32 0.0, %v879
        %v881 = vpop.f32.mrb[0].mxu0
        %882 = vdwg.mxu0
        %v883 = vsel %vm806, %v880, -inf
        %884 = vmax.xlane.f32.xlu0 %v883
        %v885 = vpop.xlane.xlu0 %884
        %v886 = vsub.f32 %v880, %v885
        %v887 = vmul.f32 %v886, 1.442695
        %v888 = vpow.pop %v887
        %v889 = vsel %vm806, %v888, 0.0
        %890 = vadd.xlane.f32.xlu0 %v889
        %v891 = vpop.xlane.xlu0 %890
        %v892 = vrcp.pop %v891
        %v893 = vmul.f32 %v888, %v892
        %v894 = vld [vmem:[%s6] sm:$0xff]
        %v895 = vld [vmem:[%s6 + $0x8] sm:$0xff]
        %v896 = vld [vmem:[%s6 + $0x10] sm:$0xff]
        %v897 = vld [vmem:[%s6 + $0x18] sm:$0xff]
        %v899 = vsel %vm649, %v628, 0
        %901 = vmatprep.subr.mxu0 0.0
        %902 = vmatpush1.msra.mxu0 %v894
        %903 = vmatprep.subr.mxu0 0.0
        %904 = vmatpush1.msra.mxu0 %v895
        %905 = vmatprep.subr.mxu0 0.0
        %906 = vmatpush1.msra.mxu0 %v896
        %907 = vmatprep.subr.mxu0 0.0
        %908 = vmatpush1.msra.mxu0 %v897
        %909 = vmatprep.subr.mxu0 0.0
        %910 = vmatpush1.msra.mxu0 0.0
        %911 = vmatprep.subr.mxu0 0.0
        %912 = vmatpush1.msra.mxu0 0.0
        %913 = vmatprep.subr.mxu0 0.0
        %914 = vmatpush1.msra.mxu0 0.0
        %915 = vmatprep.subr.mxu0 0.0
        %916 = vmatpush1.msra.mxu0 0.0
        %917 = vmatprep.subr.mxu0 0.0
        %918 = vmatpush1.msra.mxu0 0.0
        %919 = vmatprep.subr.mxu0 0.0
        %920 = vmatpush1.msra.mxu0 0.0
        %921 = vmatprep.subr.mxu0 0.0
        %922 = vmatpush1.msra.mxu0 0.0
        %923 = vmatprep.subr.mxu0 0.0
        %924 = vmatpush1.msra.mxu0 0.0
        %925 = vmatprep.subr.mxu0 0.0
        %926 = vmatpush1.msra.mxu0 0.0
        %927 = vmatprep.subr.mxu0 0.0
        %928 = vmatpush1.msra.mxu0 0.0
        %929 = vmatprep.subr.mxu0 0.0
        %930 = vmatpush1.msra.mxu0 0.0
        %931 = vmatprep.subr.mxu0 0.0
        %932 = vmatpush1.msra.mxu0 0.0
        %933 = vmatprep.subr.mxu0 0.0
        %934 = vmatpush1.msra.mxu0 0.0
        %935 = vmatprep.subr.mxu0 0.0
        %936 = vmatpush1.msra.mxu0 0.0
        %937 = vmatprep.subr.mxu0 0.0
        %938 = vmatpush1.msra.mxu0 0.0
        %939 = vmatprep.subr.mxu0 0.0
        %940 = vmatpush1.msra.mxu0 0.0
        %941 = vmatprep.subr.mxu0 0.0
        %942 = vmatpush1.msra.mxu0 0.0
        %943 = vmatprep.subr.mxu0 0.0
        %944 = vmatpush1.msra.mxu0 0.0
        %945 = vmatprep.subr.mxu0 0.0
        %946 = vmatpush1.msra.mxu0 0.0
        %947 = vmatprep.subr.mxu0 0.0
        %948 = vmatpush1.msra.mxu0 0.0
        %949 = vmatprep.subr.mxu0 0.0
        %950 = vmatpush1.msra.mxu0 0.0
        %951 = vmatprep.subr.mxu0 0.0
        %952 = vmatpush1.msra.mxu0 0.0
        %953 = vmatprep.subr.mxu0 0.0
        %954 = vmatpush1.msra.mxu0 0.0
        %955 = vmatprep.subr.mxu0 0.0
        %956 = vmatpush1.msra.mxu0 0.0
        %957 = vmatprep.subr.mxu0 0.0
        %958 = vmatpush1.msra.mxu0 0.0
        %959 = vmatprep.subr.mxu0 0.0
        %960 = vmatpush1.msra.mxu0 0.0
        %961 = vmatprep.subr.mxu0 0.0
        %962 = vmatpush1.msra.mxu0 0.0
        %963 = vmatprep.subr.mxu0 0.0
        %964 = vmatpush1.msra.mxu0 0.0
        %965 = vmatprep.mubr.f32.mxu0 0.0
        %966 = vmatmul.mubr.f32.gmra.mrb[0].mxu0 %v899
        %v967 = vpop.f32.mrb[0].mxu0
        %v968 = vadd.f32 0.0, %v967
        %v969 = vpop.f32.mrb[0].mxu0
        %970 = vdwg.mxu0
        %s971 = scalar_lea.vmem %s4, 32
        %v972 = vld [vmem:[%s971] sm:$0xff]
        %v973 = vld [vmem:[%s971 + $0x8] sm:$0xff]
        %v974 = vld [vmem:[%s971 + $0x10] sm:$0xff]
        %v975 = vld [vmem:[%s971 + $0x18] sm:$0xff]
        %s976 = scalar_lea.vmem %s5, 1
        %v977 = vld [vmem:[%s976] sm:$0x1]
        %v979 = vlaneseq
        %v980 = vshrl.u32 %v979, 7
        %v981 = vsub.s32 0, %v980
        %v982 = vrot.slane %v977, %v981
        %984 = vmatprep.subr.mxu0 0.0
        %985 = vmatpush1.msra.mxu0 %v972
        %986 = vmatprep.subr.mxu0 0.0
        %987 = vmatpush1.msra.mxu0 %v973
        %988 = vmatprep.subr.mxu0 0.0
        %989 = vmatpush1.msra.mxu0 %v974
        %990 = vmatprep.subr.mxu0 0.0
        %991 = vmatpush1.msra.mxu0 %v975
        %992 = vmatprep.subr.mxu0 0.0
        %993 = vmatpush1.msra.mxu0 0.0
        %994 = vmatprep.subr.mxu0 0.0
        %995 = vmatpush1.msra.mxu0 0.0
        %996 = vmatprep.subr.mxu0 0.0
        %997 = vmatpush1.msra.mxu0 0.0
        %998 = vmatprep.subr.mxu0 0.0
        %999 = vmatpush1.msra.mxu0 0.0
        %1000 = vmatprep.subr.mxu0 0.0
        %1001 = vmatpush1.msra.mxu0 0.0
        %1002 = vmatprep.subr.mxu0 0.0
        %1003 = vmatpush1.msra.mxu0 0.0
        %1004 = vmatprep.subr.mxu0 0.0
        %1005 = vmatpush1.msra.mxu0 0.0
        %1006 = vmatprep.subr.mxu0 0.0
        %1007 = vmatpush1.msra.mxu0 0.0
        %1008 = vmatprep.subr.mxu0 0.0
        %1009 = vmatpush1.msra.mxu0 0.0
        %1010 = vmatprep.subr.mxu0 0.0
        %1011 = vmatpush1.msra.mxu0 0.0
        %1012 = vmatprep.subr.mxu0 0.0
        %1013 = vmatpush1.msra.mxu0 0.0
        %1014 = vmatprep.subr.mxu0 0.0
        %1015 = vmatpush1.msra.mxu0 0.0
        %1016 = vmatprep.subr.mxu0 0.0
        %1017 = vmatpush1.msra.mxu0 0.0
        %1018 = vmatprep.subr.mxu0 0.0
        %1019 = vmatpush1.msra.mxu0 0.0
        %1020 = vmatprep.subr.mxu0 0.0
        %1021 = vmatpush1.msra.mxu0 0.0
        %1022 = vmatprep.subr.mxu0 0.0
        %1023 = vmatpush1.msra.mxu0 0.0
        %1024 = vmatprep.subr.mxu0 0.0
        %1025 = vmatpush1.msra.mxu0 0.0
        %1026 = vmatprep.subr.mxu0 0.0
        %1027 = vmatpush1.msra.mxu0 0.0
        %1028 = vmatprep.subr.mxu0 0.0
        %1029 = vmatpush1.msra.mxu0 0.0
        %1030 = vmatprep.subr.mxu0 0.0
        %1031 = vmatpush1.msra.mxu0 0.0
        %1032 = vmatprep.subr.mxu0 0.0
        %1033 = vmatpush1.msra.mxu0 0.0
        %1034 = vmatprep.subr.mxu0 0.0
        %1035 = vmatpush1.msra.mxu0 0.0
        %1036 = vmatprep.subr.mxu0 0.0
        %1037 = vmatpush1.msra.mxu0 0.0
        %1038 = vmatprep.subr.mxu0 0.0
        %1039 = vmatpush1.msra.mxu0 0.0
        %1040 = vmatprep.subr.mxu0 0.0
        %1041 = vmatpush1.msra.mxu0 0.0
        %1042 = vmatprep.subr.mxu0 0.0
        %1043 = vmatpush1.msra.mxu0 0.0
        %1044 = vmatprep.subr.mxu0 0.0
        %1045 = vmatpush1.msra.mxu0 0.0
        %1046 = vmatprep.subr.mxu0 0.0
        %1047 = vmatpush1.msra.mxu0 0.0
        %1048 = vmatprep.mubr.f32.mxu0 0.0
        %1049 = vmatmul.mubr.f32.gmra.mrb[0].mxu0 %v651
        %v1050 = vpop.f32.mrb[0].mxu0
        %v1051 = vadd.f32 %v982, %v1050
        %v1052 = vpop.f32.mrb[0].mxu0
        %1053 = vdwg.mxu0
        %s1054 = scalar_lea.vmem %s4, 160
        %v1055 = vld [vmem:[%s1054] sm:$0xff]
        %v1056 = vld [vmem:[%s1054 + $0x8] sm:$0xff]
        %v1057 = vld [vmem:[%s1054 + $0x10] sm:$0xff]
        %v1058 = vld [vmem:[%s1054 + $0x18] sm:$0xff]
        %s1059 = scalar_lea.vmem %s5, 5
        %v1060 = vld [vmem:[%s1059] sm:$0x1]
        %v1062 = vlaneseq
        %v1063 = vshrl.u32 %v1062, 7
        %v1064 = vsub.s32 0, %v1063
        %v1065 = vrot.slane %v1060, %v1064
        %1067 = vmatprep.subr.mxu0 0.0
        %1068 = vmatpush1.msra.mxu0 %v1055
        %1069 = vmatprep.subr.mxu0 0.0
        %1070 = vmatpush1.msra.mxu0 %v1056
        %1071 = vmatprep.subr.mxu0 0.0
        %1072 = vmatpush1.msra.mxu0 %v1057
        %1073 = vmatprep.subr.mxu0 0.0
        %1074 = vmatpush1.msra.mxu0 %v1058
        %1075 = vmatprep.subr.mxu0 0.0
        %1076 = vmatpush1.msra.mxu0 0.0
        %1077 = vmatprep.subr.mxu0 0.0
        %1078 = vmatpush1.msra.mxu0 0.0
        %1079 = vmatprep.subr.mxu0 0.0
        %1080 = vmatpush1.msra.mxu0 0.0
        %1081 = vmatprep.subr.mxu0 0.0
        %1082 = vmatpush1.msra.mxu0 0.0
        %1083 = vmatprep.subr.mxu0 0.0
        %1084 = vmatpush1.msra.mxu0 0.0
        %1085 = vmatprep.subr.mxu0 0.0
        %1086 = vmatpush1.msra.mxu0 0.0
        %1087 = vmatprep.subr.mxu0 0.0
        %1088 = vmatpush1.msra.mxu0 0.0
        %1089 = vmatprep.subr.mxu0 0.0
        %1090 = vmatpush1.msra.mxu0 0.0
        %1091 = vmatprep.subr.mxu0 0.0
        %1092 = vmatpush1.msra.mxu0 0.0
        %1093 = vmatprep.subr.mxu0 0.0
        %1094 = vmatpush1.msra.mxu0 0.0
        %1095 = vmatprep.subr.mxu0 0.0
        %1096 = vmatpush1.msra.mxu0 0.0
        %1097 = vmatprep.subr.mxu0 0.0
        %1098 = vmatpush1.msra.mxu0 0.0
        %1099 = vmatprep.subr.mxu0 0.0
        %1100 = vmatpush1.msra.mxu0 0.0
        %1101 = vmatprep.subr.mxu0 0.0
        %1102 = vmatpush1.msra.mxu0 0.0
        %1103 = vmatprep.subr.mxu0 0.0
        %1104 = vmatpush1.msra.mxu0 0.0
        %1105 = vmatprep.subr.mxu0 0.0
        %1106 = vmatpush1.msra.mxu0 0.0
        %1107 = vmatprep.subr.mxu0 0.0
        %1108 = vmatpush1.msra.mxu0 0.0
        %1109 = vmatprep.subr.mxu0 0.0
        %1110 = vmatpush1.msra.mxu0 0.0
        %1111 = vmatprep.subr.mxu0 0.0
        %1112 = vmatpush1.msra.mxu0 0.0
        %1113 = vmatprep.subr.mxu0 0.0
        %1114 = vmatpush1.msra.mxu0 0.0
        %1115 = vmatprep.subr.mxu0 0.0
        %1116 = vmatpush1.msra.mxu0 0.0
        %1117 = vmatprep.subr.mxu0 0.0
        %1118 = vmatpush1.msra.mxu0 0.0
        %1119 = vmatprep.subr.mxu0 0.0
        %1120 = vmatpush1.msra.mxu0 0.0
        %1121 = vmatprep.subr.mxu0 0.0
        %1122 = vmatpush1.msra.mxu0 0.0
        %1123 = vmatprep.subr.mxu0 0.0
        %1124 = vmatpush1.msra.mxu0 0.0
        %1125 = vmatprep.subr.mxu0 0.0
        %1126 = vmatpush1.msra.mxu0 0.0
        %1127 = vmatprep.subr.mxu0 0.0
        %1128 = vmatpush1.msra.mxu0 0.0
        %1129 = vmatprep.subr.mxu0 0.0
        %1130 = vmatpush1.msra.mxu0 0.0
        %1131 = vmatprep.mubr.f32.mxu0 0.0
        %1132 = vmatmul.mubr.f32.gmra.mrb[0].mxu0 %v651
        %v1133 = vpop.f32.mrb[0].mxu0
        %v1134 = vadd.f32 %v1065, %v1133
        %v1135 = vpop.f32.mrb[0].mxu0
        %1136 = vdwg.mxu0
        %v1138 = vsel %vm806, %v1051, 0
        %v1141 = vsel %vm806, %v1134, 0
        %1143 = vmatprep.subr.mxu0 0.0
        %1144 = vmatpush1.xpose.msra.mxu0 %v1141
        %1145 = vmatprep.subr.mxu0 0.0
        %1146 = vmatpush1.xpose.msra.mxu0 0.0
        %1147 = vmatprep.subr.mxu0 0.0
        %1148 = vmatpush1.xpose.msra.mxu0 0.0
        %1149 = vmatprep.subr.mxu0 0.0
        %1150 = vmatpush1.xpose.msra.mxu0 0.0
        %1151 = vmatprep.subr.mxu0 0.0
        %1152 = vmatpush1.xpose.msra.mxu0 0.0
        %1153 = vmatprep.subr.mxu0 0.0
        %1154 = vmatpush1.xpose.msra.mxu0 0.0
        %1155 = vmatprep.subr.mxu0 0.0
        %1156 = vmatpush1.xpose.msra.mxu0 0.0
        %1157 = vmatprep.subr.mxu0 0.0
        %1158 = vmatpush1.xpose.msra.mxu0 0.0
        %1159 = vmatprep.subr.mxu0 0.0
        %1160 = vmatpush1.xpose.msra.mxu0 0.0
        %1161 = vmatprep.subr.mxu0 0.0
        %1162 = vmatpush1.xpose.msra.mxu0 0.0
        %1163 = vmatprep.subr.mxu0 0.0
        %1164 = vmatpush1.xpose.msra.mxu0 0.0
        %1165 = vmatprep.subr.mxu0 0.0
        %1166 = vmatpush1.xpose.msra.mxu0 0.0
        %1167 = vmatprep.subr.mxu0 0.0
        %1168 = vmatpush1.xpose.msra.mxu0 0.0
        %1169 = vmatprep.subr.mxu0 0.0
        %1170 = vmatpush1.xpose.msra.mxu0 0.0
        %1171 = vmatprep.subr.mxu0 0.0
        %1172 = vmatpush1.xpose.msra.mxu0 0.0
        %1173 = vmatprep.subr.mxu0 0.0
        %1174 = vmatpush1.xpose.msra.mxu0 0.0
        %1175 = vmatprep.subr.mxu0 0.0
        %1176 = vmatpush1.xpose.msra.mxu0 0.0
        %1177 = vmatprep.subr.mxu0 0.0
        %1178 = vmatpush1.xpose.msra.mxu0 0.0
        %1179 = vmatprep.subr.mxu0 0.0
        %1180 = vmatpush1.xpose.msra.mxu0 0.0
        %1181 = vmatprep.subr.mxu0 0.0
        %1182 = vmatpush1.xpose.msra.mxu0 0.0
        %1183 = vmatprep.subr.mxu0 0.0
        %1184 = vmatpush1.xpose.msra.mxu0 0.0
        %1185 = vmatprep.subr.mxu0 0.0
        %1186 = vmatpush1.xpose.msra.mxu0 0.0
        %1187 = vmatprep.subr.mxu0 0.0
        %1188 = vmatpush1.xpose.msra.mxu0 0.0
        %1189 = vmatprep.subr.mxu0 0.0
        %1190 = vmatpush1.xpose.msra.mxu0 0.0
        %1191 = vmatprep.subr.mxu0 0.0
        %1192 = vmatpush1.xpose.msra.mxu0 0.0
        %1193 = vmatprep.subr.mxu0 0.0
        %1194 = vmatpush1.xpose.msra.mxu0 0.0
        %1195 = vmatprep.subr.mxu0 0.0
        %1196 = vmatpush1.xpose.msra.mxu0 0.0
        %1197 = vmatprep.subr.mxu0 0.0
        %1198 = vmatpush1.xpose.msra.mxu0 0.0
        %1199 = vmatprep.subr.mxu0 0.0
        %1200 = vmatpush1.xpose.msra.mxu0 0.0
        %1201 = vmatprep.subr.mxu0 0.0
        %1202 = vmatpush1.xpose.msra.mxu0 0.0
        %1203 = vmatprep.subr.mxu0 0.0
        %1204 = vmatpush1.xpose.msra.mxu0 0.0
        %1205 = vmatprep.subr.mxu0 0.0
        %1206 = vmatpush1.xpose.msra.mxu0 0.0
        %1207 = vmatprep.mubr.f32.mxu0 0.0
        %1208 = vmatmul.mubr.f32.gmra.mrb[0].mxu0 %v1138
        %v1209 = vpop.f32.mrb[0].mxu0
        %v1210 = vadd.f32 0.0, %v1209
        %v1211 = vpop.f32.mrb[0].mxu0
        %1212 = vdwg.mxu0
        %v1213 = vsel %vm806, %v1210, -inf
        %1214 = vmax.xlane.f32.xlu0 %v1213
        %v1215 = vpop.xlane.xlu0 %1214
        %v1216 = vsub.f32 %v1210, %v1215
        %v1217 = vmul.f32 %v1216, 1.442695
        %v1218 = vpow.pop %v1217
        %v1219 = vsel %vm806, %v1218, 0.0
        %1220 = vadd.xlane.f32.xlu0 %v1219
        %v1221 = vpop.xlane.xlu0 %1220
        %v1222 = vrcp.pop %v1221
        %v1223 = vmul.f32 %v1218, %v1222
        %s1224 = scalar_lea.vmem %s6, 32
        %v1225 = vld [vmem:[%s1224] sm:$0xff]
        %v1226 = vld [vmem:[%s1224 + $0x8] sm:$0xff]
        %v1227 = vld [vmem:[%s1224 + $0x10] sm:$0xff]
        %v1228 = vld [vmem:[%s1224 + $0x18] sm:$0xff]
        %1229 = vmatprep.subr.mxu0 0.0
        %1230 = vmatpush1.msra.mxu0 %v1225
        %1231 = vmatprep.subr.mxu0 0.0
        %1232 = vmatpush1.msra.mxu0 %v1226
        %1233 = vmatprep.subr.mxu0 0.0
        %1234 = vmatpush1.msra.mxu0 %v1227
        %1235 = vmatprep.subr.mxu0 0.0
        %1236 = vmatpush1.msra.mxu0 %v1228
        %1237 = vmatprep.subr.mxu0 0.0
        %1238 = vmatpush1.msra.mxu0 0.0
        %1239 = vmatprep.subr.mxu0 0.0
        %1240 = vmatpush1.msra.mxu0 0.0
        %1241 = vmatprep.subr.mxu0 0.0
        %1242 = vmatpush1.msra.mxu0 0.0
        %1243 = vmatprep.subr.mxu0 0.0
        %1244 = vmatpush1.msra.mxu0 0.0
        %1245 = vmatprep.subr.mxu0 0.0
        %1246 = vmatpush1.msra.mxu0 0.0
        %1247 = vmatprep.subr.mxu0 0.0
        %1248 = vmatpush1.msra.mxu0 0.0
        %1249 = vmatprep.subr.mxu0 0.0
        %1250 = vmatpush1.msra.mxu0 0.0
        %1251 = vmatprep.subr.mxu0 0.0
        %1252 = vmatpush1.msra.mxu0 0.0
        %1253 = vmatprep.subr.mxu0 0.0
        %1254 = vmatpush1.msra.mxu0 0.0
        %1255 = vmatprep.subr.mxu0 0.0
        %1256 = vmatpush1.msra.mxu0 0.0
        %1257 = vmatprep.subr.mxu0 0.0
        %1258 = vmatpush1.msra.mxu0 0.0
        %1259 = vmatprep.subr.mxu0 0.0
        %1260 = vmatpush1.msra.mxu0 0.0
        %1261 = vmatprep.subr.mxu0 0.0
        %1262 = vmatpush1.msra.mxu0 0.0
        %1263 = vmatprep.subr.mxu0 0.0
        %1264 = vmatpush1.msra.mxu0 0.0
        %1265 = vmatprep.subr.mxu0 0.0
        %1266 = vmatpush1.msra.mxu0 0.0
        %1267 = vmatprep.subr.mxu0 0.0
        %1268 = vmatpush1.msra.mxu0 0.0
        %1269 = vmatprep.subr.mxu0 0.0
        %1270 = vmatpush1.msra.mxu0 0.0
        %1271 = vmatprep.subr.mxu0 0.0
        %1272 = vmatpush1.msra.mxu0 0.0
        %1273 = vmatprep.subr.mxu0 0.0
        %1274 = vmatpush1.msra.mxu0 0.0
        %1275 = vmatprep.subr.mxu0 0.0
        %1276 = vmatpush1.msra.mxu0 0.0
        %1277 = vmatprep.subr.mxu0 0.0
        %1278 = vmatpush1.msra.mxu0 0.0
        %1279 = vmatprep.subr.mxu0 0.0
        %1280 = vmatpush1.msra.mxu0 0.0
        %1281 = vmatprep.subr.mxu0 0.0
        %1282 = vmatpush1.msra.mxu0 0.0
        %1283 = vmatprep.subr.mxu0 0.0
        %1284 = vmatpush1.msra.mxu0 0.0
        %1285 = vmatprep.subr.mxu0 0.0
        %1286 = vmatpush1.msra.mxu0 0.0
        %1287 = vmatprep.subr.mxu0 0.0
        %1288 = vmatpush1.msra.mxu0 0.0
        %1289 = vmatprep.subr.mxu0 0.0
        %1290 = vmatpush1.msra.mxu0 0.0
        %1291 = vmatprep.subr.mxu0 0.0
        %1292 = vmatpush1.msra.mxu0 0.0
        %1293 = vmatprep.mubr.f32.mxu0 0.0
        %1294 = vmatmul.mubr.f32.gmra.mrb[0].mxu0 %v899
        %v1295 = vpop.f32.mrb[0].mxu0
        %v1296 = vadd.f32 0.0, %v1295
        %v1297 = vpop.f32.mrb[0].mxu0
        %1298 = vdwg.mxu0
        %v1300 = vsel %vm806, %v1223, 0
        %1302 = vmatprep.subr.mxu0 0.0
        %1303 = vmatpush1.msra.mxu0 %v1296
        %1304 = vmatprep.subr.mxu0 0.0
        %1305 = vmatpush1.msra.mxu0 0.0
        %1306 = vmatprep.subr.mxu0 0.0
        %1307 = vmatpush1.msra.mxu0 0.0
        %1308 = vmatprep.subr.mxu0 0.0
        %1309 = vmatpush1.msra.mxu0 0.0
        %1310 = vmatprep.subr.mxu0 0.0
        %1311 = vmatpush1.msra.mxu0 0.0
        %1312 = vmatprep.subr.mxu0 0.0
        %1313 = vmatpush1.msra.mxu0 0.0
        %1314 = vmatprep.subr.mxu0 0.0
        %1315 = vmatpush1.msra.mxu0 0.0
        %1316 = vmatprep.subr.mxu0 0.0
        %1317 = vmatpush1.msra.mxu0 0.0
        %1318 = vmatprep.subr.mxu0 0.0
        %1319 = vmatpush1.msra.mxu0 0.0
        %1320 = vmatprep.subr.mxu0 0.0
        %1321 = vmatpush1.msra.mxu0 0.0
        %1322 = vmatprep.subr.mxu0 0.0
        %1323 = vmatpush1.msra.mxu0 0.0
        %1324 = vmatprep.subr.mxu0 0.0
        %1325 = vmatpush1.msra.mxu0 0.0
        %1326 = vmatprep.subr.mxu0 0.0
        %1327 = vmatpush1.msra.mxu0 0.0
        %1328 = vmatprep.subr.mxu0 0.0
        %1329 = vmatpush1.msra.mxu0 0.0
        %1330 = vmatprep.subr.mxu0 0.0
        %1331 = vmatpush1.msra.mxu0 0.0
        %1332 = vmatprep.subr.mxu0 0.0
        %1333 = vmatpush1.msra.mxu0 0.0
        %1334 = vmatprep.subr.mxu0 0.0
        %1335 = vmatpush1.msra.mxu0 0.0
        %1336 = vmatprep.subr.mxu0 0.0
        %1337 = vmatpush1.msra.mxu0 0.0
        %1338 = vmatprep.subr.mxu0 0.0
        %1339 = vmatpush1.msra.mxu0 0.0
        %1340 = vmatprep.subr.mxu0 0.0
        %1341 = vmatpush1.msra.mxu0 0.0
        %1342 = vmatprep.subr.mxu0 0.0
        %1343 = vmatpush1.msra.mxu0 0.0
        %1344 = vmatprep.subr.mxu0 0.0
        %1345 = vmatpush1.msra.mxu0 0.0
        %1346 = vmatprep.subr.mxu0 0.0
        %1347 = vmatpush1.msra.mxu0 0.0
        %1348 = vmatprep.subr.mxu0 0.0
        %1349 = vmatpush1.msra.mxu0 0.0
        %1350 = vmatprep.subr.mxu0 0.0
        %1351 = vmatpush1.msra.mxu0 0.0
        %1352 = vmatprep.subr.mxu0 0.0
        %1353 = vmatpush1.msra.mxu0 0.0
        %1354 = vmatprep.subr.mxu0 0.0
        %1355 = vmatpush1.msra.mxu0 0.0
        %1356 = vmatprep.subr.mxu0 0.0
        %1357 = vmatpush1.msra.mxu0 0.0
        %1358 = vmatprep.subr.mxu0 0.0
        %1359 = vmatpush1.msra.mxu0 0.0
        %1360 = vmatprep.subr.mxu0 0.0
        %1361 = vmatpush1.msra.mxu0 0.0
        %1362 = vmatprep.subr.mxu0 0.0
        %1363 = vmatpush1.msra.mxu0 0.0
        %1364 = vmatprep.subr.mxu0 0.0
        %1365 = vmatpush1.msra.mxu0 0.0
        %1366 = vmatprep.mubr.f32.mxu0 0.0
        %1367 = vmatmul.mubr.f32.gmra.mrb[0].mxu0 %v1300
        %v1368 = vpop.f32.mrb[0].mxu0
        %v1369 = vadd.f32 0.0, %v1368
        %v1370 = vpop.f32.mrb[0].mxu0
        %1371 = vdwg.mxu0
        %v1373 = vsel %vm806, %v893, 0
        %1375 = vmatprep.subr.mxu0 0.0
        %1376 = vmatpush1.msra.mxu0 %v968
        %1377 = vmatprep.subr.mxu0 0.0
        %1378 = vmatpush1.msra.mxu0 0.0
        %1379 = vmatprep.subr.mxu0 0.0
        %1380 = vmatpush1.msra.mxu0 0.0
        %1381 = vmatprep.subr.mxu0 0.0
        %1382 = vmatpush1.msra.mxu0 0.0
        %1383 = vmatprep.subr.mxu0 0.0
        %1384 = vmatpush1.msra.mxu0 0.0
        %1385 = vmatprep.subr.mxu0 0.0
        %1386 = vmatpush1.msra.mxu0 0.0
        %1387 = vmatprep.subr.mxu0 0.0
        %1388 = vmatpush1.msra.mxu0 0.0
        %1389 = vmatprep.subr.mxu0 0.0
        %1390 = vmatpush1.msra.mxu0 0.0
        %1391 = vmatprep.subr.mxu0 0.0
        %1392 = vmatpush1.msra.mxu0 0.0
        %1393 = vmatprep.subr.mxu0 0.0
        %1394 = vmatpush1.msra.mxu0 0.0
        %1395 = vmatprep.subr.mxu0 0.0
        %1396 = vmatpush1.msra.mxu0 0.0
        %1397 = vmatprep.subr.mxu0 0.0
        %1398 = vmatpush1.msra.mxu0 0.0
        %1399 = vmatprep.subr.mxu0 0.0
        %1400 = vmatpush1.msra.mxu0 0.0
        %1401 = vmatprep.subr.mxu0 0.0
        %1402 = vmatpush1.msra.mxu0 0.0
        %1403 = vmatprep.subr.mxu0 0.0
        %1404 = vmatpush1.msra.mxu0 0.0
        %1405 = vmatprep.subr.mxu0 0.0
        %1406 = vmatpush1.msra.mxu0 0.0
        %1407 = vmatprep.subr.mxu0 0.0
        %1408 = vmatpush1.msra.mxu0 0.0
        %1409 = vmatprep.subr.mxu0 0.0
        %1410 = vmatpush1.msra.mxu0 0.0
        %1411 = vmatprep.subr.mxu0 0.0
        %1412 = vmatpush1.msra.mxu0 0.0
        %1413 = vmatprep.subr.mxu0 0.0
        %1414 = vmatpush1.msra.mxu0 0.0
        %1415 = vmatprep.subr.mxu0 0.0
        %1416 = vmatpush1.msra.mxu0 0.0
        %1417 = vmatprep.subr.mxu0 0.0
        %1418 = vmatpush1.msra.mxu0 0.0
        %1419 = vmatprep.subr.mxu0 0.0
        %1420 = vmatpush1.msra.mxu0 0.0
        %1421 = vmatprep.subr.mxu0 0.0
        %1422 = vmatpush1.msra.mxu0 0.0
        %1423 = vmatprep.subr.mxu0 0.0
        %1424 = vmatpush1.msra.mxu0 0.0
        %1425 = vmatprep.subr.mxu0 0.0
        %1426 = vmatpush1.msra.mxu0 0.0
        %1427 = vmatprep.subr.mxu0 0.0
        %1428 = vmatpush1.msra.mxu0 0.0
        %1429 = vmatprep.subr.mxu0 0.0
        %1430 = vmatpush1.msra.mxu0 0.0
        %1431 = vmatprep.subr.mxu0 0.0
        %1432 = vmatpush1.msra.mxu0 0.0
        %1433 = vmatprep.subr.mxu0 0.0
        %1434 = vmatpush1.msra.mxu0 0.0
        %1435 = vmatprep.subr.mxu0 0.0
        %1436 = vmatpush1.msra.mxu0 0.0
        %1437 = vmatprep.subr.mxu0 0.0
        %1438 = vmatpush1.msra.mxu0 0.0
        %1439 = vmatprep.mubr.f32.mxu0 0.0
        %1440 = vmatmul.mubr.f32.gmra.mrb[0].mxu0 %v1373
        %v1441 = vpop.f32.mrb[0].mxu0
        %v1442 = vadd.f32 %v1369, %v1441
        %v1443 = vpop.f32.mrb[0].mxu0
        %1444 = vdwg.mxu0
        %s1445 = scalar_lea.vmem %s4, 64
        %v1446 = vld [vmem:[%s1445] sm:$0xff]
        %v1447 = vld [vmem:[%s1445 + $0x8] sm:$0xff]
        %v1448 = vld [vmem:[%s1445 + $0x10] sm:$0xff]
        %v1449 = vld [vmem:[%s1445 + $0x18] sm:$0xff]
        %s1450 = scalar_lea.vmem %s5, 2
        %v1451 = vld [vmem:[%s1450] sm:$0x1]
        %v1453 = vlaneseq
        %v1454 = vshrl.u32 %v1453, 7
        %v1455 = vsub.s32 0, %v1454
        %v1456 = vrot.slane %v1451, %v1455
        %1458 = vmatprep.subr.mxu0 0.0
        %1459 = vmatpush1.msra.mxu0 %v1446
        %1460 = vmatprep.subr.mxu0 0.0
        %1461 = vmatpush1.msra.mxu0 %v1447
        %1462 = vmatprep.subr.mxu0 0.0
        %1463 = vmatpush1.msra.mxu0 %v1448
        %1464 = vmatprep.subr.mxu0 0.0
        %1465 = vmatpush1.msra.mxu0 %v1449
        %1466 = vmatprep.subr.mxu0 0.0
        %1467 = vmatpush1.msra.mxu0 0.0
        %1468 = vmatprep.subr.mxu0 0.0
        %1469 = vmatpush1.msra.mxu0 0.0
        %1470 = vmatprep.subr.mxu0 0.0
        %1471 = vmatpush1.msra.mxu0 0.0
        %1472 = vmatprep.subr.mxu0 0.0
        %1473 = vmatpush1.msra.mxu0 0.0
        %1474 = vmatprep.subr.mxu0 0.0
        %1475 = vmatpush1.msra.mxu0 0.0
        %1476 = vmatprep.subr.mxu0 0.0
        %1477 = vmatpush1.msra.mxu0 0.0
        %1478 = vmatprep.subr.mxu0 0.0
        %1479 = vmatpush1.msra.mxu0 0.0
        %1480 = vmatprep.subr.mxu0 0.0
        %1481 = vmatpush1.msra.mxu0 0.0
        %1482 = vmatprep.subr.mxu0 0.0
        %1483 = vmatpush1.msra.mxu0 0.0
        %1484 = vmatprep.subr.mxu0 0.0
        %1485 = vmatpush1.msra.mxu0 0.0
        %1486 = vmatprep.subr.mxu0 0.0
        %1487 = vmatpush1.msra.mxu0 0.0
        %1488 = vmatprep.subr.mxu0 0.0
        %1489 = vmatpush1.msra.mxu0 0.0
        %1490 = vmatprep.subr.mxu0 0.0
        %1491 = vmatpush1.msra.mxu0 0.0
        %1492 = vmatprep.subr.mxu0 0.0
        %1493 = vmatpush1.msra.mxu0 0.0
        %1494 = vmatprep.subr.mxu0 0.0
        %1495 = vmatpush1.msra.mxu0 0.0
        %1496 = vmatprep.subr.mxu0 0.0
        %1497 = vmatpush1.msra.mxu0 0.0
        %1498 = vmatprep.subr.mxu0 0.0
        %1499 = vmatpush1.msra.mxu0 0.0
        %1500 = vmatprep.subr.mxu0 0.0
        %1501 = vmatpush1.msra.mxu0 0.0
        %1502 = vmatprep.subr.mxu0 0.0
        %1503 = vmatpush1.msra.mxu0 0.0
        %1504 = vmatprep.subr.mxu0 0.0
        %1505 = vmatpush1.msra.mxu0 0.0
        %1506 = vmatprep.subr.mxu0 0.0
        %1507 = vmatpush1.msra.mxu0 0.0
        %1508 = vmatprep.subr.mxu0 0.0
        %1509 = vmatpush1.msra.mxu0 0.0
        %1510 = vmatprep.subr.mxu0 0.0
        %1511 = vmatpush1.msra.mxu0 0.0
        %1512 = vmatprep.subr.mxu0 0.0
        %1513 = vmatpush1.msra.mxu0 0.0
        %1514 = vmatprep.subr.mxu0 0.0
        %1515 = vmatpush1.msra.mxu0 0.0
        %1516 = vmatprep.subr.mxu0 0.0
        %1517 = vmatpush1.msra.mxu0 0.0
        %1518 = vmatprep.subr.mxu0 0.0
        %1519 = vmatpush1.msra.mxu0 0.0
        %1520 = vmatprep.subr.mxu0 0.0
        %1521 = vmatpush1.msra.mxu0 0.0
        %1522 = vmatprep.mubr.f32.mxu0 0.0
        %1523 = vmatmul.mubr.f32.gmra.mrb[0].mxu0 %v651
        %v1524 = vpop.f32.mrb[0].mxu0
        %v1525 = vadd.f32 %v1456, %v1524
        %v1526 = vpop.f32.mrb[0].mxu0
        %1527 = vdwg.mxu0
        %s1528 = scalar_lea.vmem %s4, 192
        %v1529 = vld [vmem:[%s1528] sm:$0xff]
        %v1530 = vld [vmem:[%s1528 + $0x8] sm:$0xff]
        %v1531 = vld [vmem:[%s1528 + $0x10] sm:$0xff]
        %v1532 = vld [vmem:[%s1528 + $0x18] sm:$0xff]
        %s1533 = scalar_lea.vmem %s5, 6
        %v1534 = vld [vmem:[%s1533] sm:$0x1]
        %v1536 = vlaneseq
        %v1537 = vshrl.u32 %v1536, 7
        %v1538 = vsub.s32 0, %v1537
        %v1539 = vrot.slane %v1534, %v1538
        %1541 = vmatprep.subr.mxu0 0.0
        %1542 = vmatpush1.msra.mxu0 %v1529
        %1543 = vmatprep.subr.mxu0 0.0
        %1544 = vmatpush1.msra.mxu0 %v1530
        %1545 = vmatprep.subr.mxu0 0.0
        %1546 = vmatpush1.msra.mxu0 %v1531
        %1547 = vmatprep.subr.mxu0 0.0
        %1548 = vmatpush1.msra.mxu0 %v1532
        %1549 = vmatprep.subr.mxu0 0.0
        %1550 = vmatpush1.msra.mxu0 0.0
        %1551 = vmatprep.subr.mxu0 0.0
        %1552 = vmatpush1.msra.mxu0 0.0
        %1553 = vmatprep.subr.mxu0 0.0
        %1554 = vmatpush1.msra.mxu0 0.0
        %1555 = vmatprep.subr.mxu0 0.0
        %1556 = vmatpush1.msra.mxu0 0.0
        %1557 = vmatprep.subr.mxu0 0.0
        %1558 = vmatpush1.msra.mxu0 0.0
        %1559 = vmatprep.subr.mxu0 0.0
        %1560 = vmatpush1.msra.mxu0 0.0
        %1561 = vmatprep.subr.mxu0 0.0
        %1562 = vmatpush1.msra.mxu0 0.0
        %1563 = vmatprep.subr.mxu0 0.0
        %1564 = vmatpush1.msra.mxu0 0.0
        %1565 = vmatprep.subr.mxu0 0.0
        %1566 = vmatpush1.msra.mxu0 0.0
        %1567 = vmatprep.subr.mxu0 0.0
        %1568 = vmatpush1.msra.mxu0 0.0
        %1569 = vmatprep.subr.mxu0 0.0
        %1570 = vmatpush1.msra.mxu0 0.0
        %1571 = vmatprep.subr.mxu0 0.0
        %1572 = vmatpush1.msra.mxu0 0.0
        %1573 = vmatprep.subr.mxu0 0.0
        %1574 = vmatpush1.msra.mxu0 0.0
        %1575 = vmatprep.subr.mxu0 0.0
        %1576 = vmatpush1.msra.mxu0 0.0
        %1577 = vmatprep.subr.mxu0 0.0
        %1578 = vmatpush1.msra.mxu0 0.0
        %1579 = vmatprep.subr.mxu0 0.0
        %1580 = vmatpush1.msra.mxu0 0.0
        %1581 = vmatprep.subr.mxu0 0.0
        %1582 = vmatpush1.msra.mxu0 0.0
        %1583 = vmatprep.subr.mxu0 0.0
        %1584 = vmatpush1.msra.mxu0 0.0
        %1585 = vmatprep.subr.mxu0 0.0
        %1586 = vmatpush1.msra.mxu0 0.0
        %1587 = vmatprep.subr.mxu0 0.0
        %1588 = vmatpush1.msra.mxu0 0.0
        %1589 = vmatprep.subr.mxu0 0.0
        %1590 = vmatpush1.msra.mxu0 0.0
        %1591 = vmatprep.subr.mxu0 0.0
        %1592 = vmatpush1.msra.mxu0 0.0
        %1593 = vmatprep.subr.mxu0 0.0
        %1594 = vmatpush1.msra.mxu0 0.0
        %1595 = vmatprep.subr.mxu0 0.0
        %1596 = vmatpush1.msra.mxu0 0.0
        %1597 = vmatprep.subr.mxu0 0.0
        %1598 = vmatpush1.msra.mxu0 0.0
        %1599 = vmatprep.subr.mxu0 0.0
        %1600 = vmatpush1.msra.mxu0 0.0
        %1601 = vmatprep.subr.mxu0 0.0
        %1602 = vmatpush1.msra.mxu0 0.0
        %1603 = vmatprep.subr.mxu0 0.0
        %1604 = vmatpush1.msra.mxu0 0.0
        %1605 = vmatprep.mubr.f32.mxu0 0.0
        %1606 = vmatmul.mubr.f32.gmra.mrb[0].mxu0 %v651
        %v1607 = vpop.f32.mrb[0].mxu0
        %v1608 = vadd.f32 %v1539, %v1607
        %v1609 = vpop.f32.mrb[0].mxu0
        %1610 = vdwg.mxu0
        %v1612 = vsel %vm806, %v1525, 0
        %v1615 = vsel %vm806, %v1608, 0
        %1617 = vmatprep.subr.mxu0 0.0
        %1618 = vmatpush1.xpose.msra.mxu0 %v1615
        %1619 = vmatprep.subr.mxu0 0.0
        %1620 = vmatpush1.xpose.msra.mxu0 0.0
        %1621 = vmatprep.subr.mxu0 0.0
        %1622 = vmatpush1.xpose.msra.mxu0 0.0
        %1623 = vmatprep.subr.mxu0 0.0
        %1624 = vmatpush1.xpose.msra.mxu0 0.0
        %1625 = vmatprep.subr.mxu0 0.0
        %1626 = vmatpush1.xpose.msra.mxu0 0.0
        %1627 = vmatprep.subr.mxu0 0.0
        %1628 = vmatpush1.xpose.msra.mxu0 0.0
        %1629 = vmatprep.subr.mxu0 0.0
        %1630 = vmatpush1.xpose.msra.mxu0 0.0
        %1631 = vmatprep.subr.mxu0 0.0
        %1632 = vmatpush1.xpose.msra.mxu0 0.0
        %1633 = vmatprep.subr.mxu0 0.0
        %1634 = vmatpush1.xpose.msra.mxu0 0.0
        %1635 = vmatprep.subr.mxu0 0.0
        %1636 = vmatpush1.xpose.msra.mxu0 0.0
        %1637 = vmatprep.subr.mxu0 0.0
        %1638 = vmatpush1.xpose.msra.mxu0 0.0
        %1639 = vmatprep.subr.mxu0 0.0
        %1640 = vmatpush1.xpose.msra.mxu0 0.0
        %1641 = vmatprep.subr.mxu0 0.0
        %1642 = vmatpush1.xpose.msra.mxu0 0.0
        %1643 = vmatprep.subr.mxu0 0.0
        %1644 = vmatpush1.xpose.msra.mxu0 0.0
        %1645 = vmatprep.subr.mxu0 0.0
        %1646 = vmatpush1.xpose.msra.mxu0 0.0
        %1647 = vmatprep.subr.mxu0 0.0
        %1648 = vmatpush1.xpose.msra.mxu0 0.0
        %1649 = vmatprep.subr.mxu0 0.0
        %1650 = vmatpush1.xpose.msra.mxu0 0.0
        %1651 = vmatprep.subr.mxu0 0.0
        %1652 = vmatpush1.xpose.msra.mxu0 0.0
        %1653 = vmatprep.subr.mxu0 0.0
        %1654 = vmatpush1.xpose.msra.mxu0 0.0
        %1655 = vmatprep.subr.mxu0 0.0
        %1656 = vmatpush1.xpose.msra.mxu0 0.0
        %1657 = vmatprep.subr.mxu0 0.0
        %1658 = vmatpush1.xpose.msra.mxu0 0.0
        %1659 = vmatprep.subr.mxu0 0.0
        %1660 = vmatpush1.xpose.msra.mxu0 0.0
        %1661 = vmatprep.subr.mxu0 0.0
        %1662 = vmatpush1.xpose.msra.mxu0 0.0
        %1663 = vmatprep.subr.mxu0 0.0
        %1664 = vmatpush1.xpose.msra.mxu0 0.0
        %1665 = vmatprep.subr.mxu0 0.0
        %1666 = vmatpush1.xpose.msra.mxu0 0.0
        %1667 = vmatprep.subr.mxu0 0.0
        %1668 = vmatpush1.xpose.msra.mxu0 0.0
        %1669 = vmatprep.subr.mxu0 0.0
        %1670 = vmatpush1.xpose.msra.mxu0 0.0
        %1671 = vmatprep.subr.mxu0 0.0
        %1672 = vmatpush1.xpose.msra.mxu0 0.0
        %1673 = vmatprep.subr.mxu0 0.0
        %1674 = vmatpush1.xpose.msra.mxu0 0.0
        %1675 = vmatprep.subr.mxu0 0.0
        %1676 = vmatpush1.xpose.msra.mxu0 0.0
        %1677 = vmatprep.subr.mxu0 0.0
        %1678 = vmatpush1.xpose.msra.mxu0 0.0
        %1679 = vmatprep.subr.mxu0 0.0
        %1680 = vmatpush1.xpose.msra.mxu0 0.0
        %1681 = vmatprep.mubr.f32.mxu0 0.0
        %1682 = vmatmul.mubr.f32.gmra.mrb[0].mxu0 %v1612
        %v1683 = vpop.f32.mrb[0].mxu0
        %v1684 = vadd.f32 0.0, %v1683
        %v1685 = vpop.f32.mrb[0].mxu0
        %1686 = vdwg.mxu0
        %v1687 = vsel %vm806, %v1684, -inf
        %1688 = vmax.xlane.f32.xlu0 %v1687
        %v1689 = vpop.xlane.xlu0 %1688
        %v1690 = vsub.f32 %v1684, %v1689
        %v1691 = vmul.f32 %v1690, 1.442695
        %v1692 = vpow.pop %v1691
        %v1693 = vsel %vm806, %v1692, 0.0
        %1694 = vadd.xlane.f32.xlu0 %v1693
        %v1695 = vpop.xlane.xlu0 %1694
        %v1696 = vrcp.pop %v1695
        %v1697 = vmul.f32 %v1692, %v1696
        %s1698 = scalar_lea.vmem %s6, 64
        %v1699 = vld [vmem:[%s1698] sm:$0xff]
        %v1700 = vld [vmem:[%s1698 + $0x8] sm:$0xff]
        %v1701 = vld [vmem:[%s1698 + $0x10] sm:$0xff]
        %v1702 = vld [vmem:[%s1698 + $0x18] sm:$0xff]
        %1703 = vmatprep.subr.mxu0 0.0
        %1704 = vmatpush1.msra.mxu0 %v1699
        %1705 = vmatprep.subr.mxu0 0.0
        %1706 = vmatpush1.msra.mxu0 %v1700
        %1707 = vmatprep.subr.mxu0 0.0
        %1708 = vmatpush1.msra.mxu0 %v1701
        %1709 = vmatprep.subr.mxu0 0.0
        %1710 = vmatpush1.msra.mxu0 %v1702
        %1711 = vmatprep.subr.mxu0 0.0
        %1712 = vmatpush1.msra.mxu0 0.0
        %1713 = vmatprep.subr.mxu0 0.0
        %1714 = vmatpush1.msra.mxu0 0.0
        %1715 = vmatprep.subr.mxu0 0.0
        %1716 = vmatpush1.msra.mxu0 0.0
        %1717 = vmatprep.subr.mxu0 0.0
        %1718 = vmatpush1.msra.mxu0 0.0
        %1719 = vmatprep.subr.mxu0 0.0
        %1720 = vmatpush1.msra.mxu0 0.0
        %1721 = vmatprep.subr.mxu0 0.0
        %1722 = vmatpush1.msra.mxu0 0.0
        %1723 = vmatprep.subr.mxu0 0.0
        %1724 = vmatpush1.msra.mxu0 0.0
        %1725 = vmatprep.subr.mxu0 0.0
        %1726 = vmatpush1.msra.mxu0 0.0
        %1727 = vmatprep.subr.mxu0 0.0
        %1728 = vmatpush1.msra.mxu0 0.0
        %1729 = vmatprep.subr.mxu0 0.0
        %1730 = vmatpush1.msra.mxu0 0.0
        %1731 = vmatprep.subr.mxu0 0.0
        %1732 = vmatpush1.msra.mxu0 0.0
        %1733 = vmatprep.subr.mxu0 0.0
        %1734 = vmatpush1.msra.mxu0 0.0
        %1735 = vmatprep.subr.mxu0 0.0
        %1736 = vmatpush1.msra.mxu0 0.0
        %1737 = vmatprep.subr.mxu0 0.0
        %1738 = vmatpush1.msra.mxu0 0.0
        %1739 = vmatprep.subr.mxu0 0.0
        %1740 = vmatpush1.msra.mxu0 0.0
        %1741 = vmatprep.subr.mxu0 0.0
        %1742 = vmatpush1.msra.mxu0 0.0
        %1743 = vmatprep.subr.mxu0 0.0
        %1744 = vmatpush1.msra.mxu0 0.0
        %1745 = vmatprep.subr.mxu0 0.0
        %1746 = vmatpush1.msra.mxu0 0.0
        %1747 = vmatprep.subr.mxu0 0.0
        %1748 = vmatpush1.msra.mxu0 0.0
        %1749 = vmatprep.subr.mxu0 0.0
        %1750 = vmatpush1.msra.mxu0 0.0
        %1751 = vmatprep.subr.mxu0 0.0
        %1752 = vmatpush1.msra.mxu0 0.0
        %1753 = vmatprep.subr.mxu0 0.0
        %1754 = vmatpush1.msra.mxu0 0.0
        %1755 = vmatprep.subr.mxu0 0.0
        %1756 = vmatpush1.msra.mxu0 0.0
        %1757 = vmatprep.subr.mxu0 0.0
        %1758 = vmatpush1.msra.mxu0 0.0
        %1759 = vmatprep.subr.mxu0 0.0
        %1760 = vmatpush1.msra.mxu0 0.0
        %1761 = vmatprep.subr.mxu0 0.0
        %1762 = vmatpush1.msra.mxu0 0.0
        %1763 = vmatprep.subr.mxu0 0.0
        %1764 = vmatpush1.msra.mxu0 0.0
        %1765 = vmatprep.subr.mxu0 0.0
        %1766 = vmatpush1.msra.mxu0 0.0
        %1767 = vmatprep.mubr.f32.mxu0 0.0
        %1768 = vmatmul.mubr.f32.gmra.mrb[0].mxu0 %v899
        %v1769 = vpop.f32.mrb[0].mxu0
        %v1770 = vadd.f32 0.0, %v1769
        %v1771 = vpop.f32.mrb[0].mxu0
        %1772 = vdwg.mxu0
        %v1774 = vsel %vm806, %v1697, 0
        %1776 = vmatprep.subr.mxu0 0.0
        %1777 = vmatpush1.msra.mxu0 %v1770
        %1778 = vmatprep.subr.mxu0 0.0
        %1779 = vmatpush1.msra.mxu0 0.0
        %1780 = vmatprep.subr.mxu0 0.0
        %1781 = vmatpush1.msra.mxu0 0.0
        %1782 = vmatprep.subr.mxu0 0.0
        %1783 = vmatpush1.msra.mxu0 0.0
        %1784 = vmatprep.subr.mxu0 0.0
        %1785 = vmatpush1.msra.mxu0 0.0
        %1786 = vmatprep.subr.mxu0 0.0
        %1787 = vmatpush1.msra.mxu0 0.0
        %1788 = vmatprep.subr.mxu0 0.0
        %1789 = vmatpush1.msra.mxu0 0.0
        %1790 = vmatprep.subr.mxu0 0.0
        %1791 = vmatpush1.msra.mxu0 0.0
        %1792 = vmatprep.subr.mxu0 0.0
        %1793 = vmatpush1.msra.mxu0 0.0
        %1794 = vmatprep.subr.mxu0 0.0
        %1795 = vmatpush1.msra.mxu0 0.0
        %1796 = vmatprep.subr.mxu0 0.0
        %1797 = vmatpush1.msra.mxu0 0.0
        %1798 = vmatprep.subr.mxu0 0.0
        %1799 = vmatpush1.msra.mxu0 0.0
        %1800 = vmatprep.subr.mxu0 0.0
        %1801 = vmatpush1.msra.mxu0 0.0
        %1802 = vmatprep.subr.mxu0 0.0
        %1803 = vmatpush1.msra.mxu0 0.0
        %1804 = vmatprep.subr.mxu0 0.0
        %1805 = vmatpush1.msra.mxu0 0.0
        %1806 = vmatprep.subr.mxu0 0.0
        %1807 = vmatpush1.msra.mxu0 0.0
        %1808 = vmatprep.subr.mxu0 0.0
        %1809 = vmatpush1.msra.mxu0 0.0
        %1810 = vmatprep.subr.mxu0 0.0
        %1811 = vmatpush1.msra.mxu0 0.0
        %1812 = vmatprep.subr.mxu0 0.0
        %1813 = vmatpush1.msra.mxu0 0.0
        %1814 = vmatprep.subr.mxu0 0.0
        %1815 = vmatpush1.msra.mxu0 0.0
        %1816 = vmatprep.subr.mxu0 0.0
        %1817 = vmatpush1.msra.mxu0 0.0
        %1818 = vmatprep.subr.mxu0 0.0
        %1819 = vmatpush1.msra.mxu0 0.0
        %1820 = vmatprep.subr.mxu0 0.0
        %1821 = vmatpush1.msra.mxu0 0.0
        %1822 = vmatprep.subr.mxu0 0.0
        %1823 = vmatpush1.msra.mxu0 0.0
        %1824 = vmatprep.subr.mxu0 0.0
        %1825 = vmatpush1.msra.mxu0 0.0
        %1826 = vmatprep.subr.mxu0 0.0
        %1827 = vmatpush1.msra.mxu0 0.0
        %1828 = vmatprep.subr.mxu0 0.0
        %1829 = vmatpush1.msra.mxu0 0.0
        %1830 = vmatprep.subr.mxu0 0.0
        %1831 = vmatpush1.msra.mxu0 0.0
        %1832 = vmatprep.subr.mxu0 0.0
        %1833 = vmatpush1.msra.mxu0 0.0
        %1834 = vmatprep.subr.mxu0 0.0
        %1835 = vmatpush1.msra.mxu0 0.0
        %1836 = vmatprep.subr.mxu0 0.0
        %1837 = vmatpush1.msra.mxu0 0.0
        %1838 = vmatprep.subr.mxu0 0.0
        %1839 = vmatpush1.msra.mxu0 0.0
        %1840 = vmatprep.mubr.f32.mxu0 0.0
        %1841 = vmatmul.mubr.f32.gmra.mrb[0].mxu0 %v1774
        %v1842 = vpop.f32.mrb[0].mxu0
        %v1843 = vadd.f32 0.0, %v1842
        %v1844 = vpop.f32.mrb[0].mxu0
        %1845 = vdwg.mxu0
        %v1846 = vadd.f32 %v1442, %v1843
        %s1847 = scalar_lea.vmem %s4, 96
        %v1848 = vld [vmem:[%s1847] sm:$0xff]
        %v1849 = vld [vmem:[%s1847 + $0x8] sm:$0xff]
        %v1850 = vld [vmem:[%s1847 + $0x10] sm:$0xff]
        %v1851 = vld [vmem:[%s1847 + $0x18] sm:$0xff]
        %s1852 = scalar_lea.vmem %s5, 3
        %v1853 = vld [vmem:[%s1852] sm:$0x1]
        %v1855 = vlaneseq
        %v1856 = vshrl.u32 %v1855, 7
        %v1857 = vsub.s32 0, %v1856
        %v1858 = vrot.slane %v1853, %v1857
        %1860 = vmatprep.subr.mxu0 0.0
        %1861 = vmatpush1.msra.mxu0 %v1848
        %1862 = vmatprep.subr.mxu0 0.0
        %1863 = vmatpush1.msra.mxu0 %v1849
        %1864 = vmatprep.subr.mxu0 0.0
        %1865 = vmatpush1.msra.mxu0 %v1850
        %1866 = vmatprep.subr.mxu0 0.0
        %1867 = vmatpush1.msra.mxu0 %v1851
        %1868 = vmatprep.subr.mxu0 0.0
        %1869 = vmatpush1.msra.mxu0 0.0
        %1870 = vmatprep.subr.mxu0 0.0
        %1871 = vmatpush1.msra.mxu0 0.0
        %1872 = vmatprep.subr.mxu0 0.0
        %1873 = vmatpush1.msra.mxu0 0.0
        %1874 = vmatprep.subr.mxu0 0.0
        %1875 = vmatpush1.msra.mxu0 0.0
        %1876 = vmatprep.subr.mxu0 0.0
        %1877 = vmatpush1.msra.mxu0 0.0
        %1878 = vmatprep.subr.mxu0 0.0
        %1879 = vmatpush1.msra.mxu0 0.0
        %1880 = vmatprep.subr.mxu0 0.0
        %1881 = vmatpush1.msra.mxu0 0.0
        %1882 = vmatprep.subr.mxu0 0.0
        %1883 = vmatpush1.msra.mxu0 0.0
        %1884 = vmatprep.subr.mxu0 0.0
        %1885 = vmatpush1.msra.mxu0 0.0
        %1886 = vmatprep.subr.mxu0 0.0
        %1887 = vmatpush1.msra.mxu0 0.0
        %1888 = vmatprep.subr.mxu0 0.0
        %1889 = vmatpush1.msra.mxu0 0.0
        %1890 = vmatprep.subr.mxu0 0.0
        %1891 = vmatpush1.msra.mxu0 0.0
        %1892 = vmatprep.subr.mxu0 0.0
        %1893 = vmatpush1.msra.mxu0 0.0
        %1894 = vmatprep.subr.mxu0 0.0
        %1895 = vmatpush1.msra.mxu0 0.0
        %1896 = vmatprep.subr.mxu0 0.0
        %1897 = vmatpush1.msra.mxu0 0.0
        %1898 = vmatprep.subr.mxu0 0.0
        %1899 = vmatpush1.msra.mxu0 0.0
        %1900 = vmatprep.subr.mxu0 0.0
        %1901 = vmatpush1.msra.mxu0 0.0
        %1902 = vmatprep.subr.mxu0 0.0
        %1903 = vmatpush1.msra.mxu0 0.0
        %1904 = vmatprep.subr.mxu0 0.0
        %1905 = vmatpush1.msra.mxu0 0.0
        %1906 = vmatprep.subr.mxu0 0.0
        %1907 = vmatpush1.msra.mxu0 0.0
        %1908 = vmatprep.subr.mxu0 0.0
        %1909 = vmatpush1.msra.mxu0 0.0
        %1910 = vmatprep.subr.mxu0 0.0
        %1911 = vmatpush1.msra.mxu0 0.0
        %1912 = vmatprep.subr.mxu0 0.0
        %1913 = vmatpush1.msra.mxu0 0.0
        %1914 = vmatprep.subr.mxu0 0.0
        %1915 = vmatpush1.msra.mxu0 0.0
        %1916 = vmatprep.subr.mxu0 0.0
        %1917 = vmatpush1.msra.mxu0 0.0
        %1918 = vmatprep.subr.mxu0 0.0
        %1919 = vmatpush1.msra.mxu0 0.0
        %1920 = vmatprep.subr.mxu0 0.0
        %1921 = vmatpush1.msra.mxu0 0.0
        %1922 = vmatprep.subr.mxu0 0.0
        %1923 = vmatpush1.msra.mxu0 0.0
        %1924 = vmatprep.mubr.f32.mxu0 0.0
        %1925 = vmatmul.mubr.f32.gmra.mrb[0].mxu0 %v651
        %v1926 = vpop.f32.mrb[0].mxu0
        %v1927 = vadd.f32 %v1858, %v1926
        %v1928 = vpop.f32.mrb[0].mxu0
        %1929 = vdwg.mxu0
        %s1930 = scalar_lea.vmem %s4, 224
        %v1931 = vld [vmem:[%s1930] sm:$0xff]
        %v1932 = vld [vmem:[%s1930 + $0x8] sm:$0xff]
        %v1933 = vld [vmem:[%s1930 + $0x10] sm:$0xff]
        %v1934 = vld [vmem:[%s1930 + $0x18] sm:$0xff]
        %s1935 = scalar_lea.vmem %s5, 7
        %v1936 = vld [vmem:[%s1935] sm:$0x1]
        %v1938 = vlaneseq
        %v1939 = vshrl.u32 %v1938, 7
        %v1940 = vsub.s32 0, %v1939
        %v1941 = vrot.slane %v1936, %v1940
        %1943 = vmatprep.subr.mxu0 0.0
        %1944 = vmatpush1.msra.mxu0 %v1931
        %1945 = vmatprep.subr.mxu0 0.0
        %1946 = vmatpush1.msra.mxu0 %v1932
        %1947 = vmatprep.subr.mxu0 0.0
        %1948 = vmatpush1.msra.mxu0 %v1933
        %1949 = vmatprep.subr.mxu0 0.0
        %1950 = vmatpush1.msra.mxu0 %v1934
        %1951 = vmatprep.subr.mxu0 0.0
        %1952 = vmatpush1.msra.mxu0 0.0
        %1953 = vmatprep.subr.mxu0 0.0
        %1954 = vmatpush1.msra.mxu0 0.0
        %1955 = vmatprep.subr.mxu0 0.0
        %1956 = vmatpush1.msra.mxu0 0.0
        %1957 = vmatprep.subr.mxu0 0.0
        %1958 = vmatpush1.msra.mxu0 0.0
        %1959 = vmatprep.subr.mxu0 0.0
        %1960 = vmatpush1.msra.mxu0 0.0
        %1961 = vmatprep.subr.mxu0 0.0
        %1962 = vmatpush1.msra.mxu0 0.0
        %1963 = vmatprep.subr.mxu0 0.0
        %1964 = vmatpush1.msra.mxu0 0.0
        %1965 = vmatprep.subr.mxu0 0.0
        %1966 = vmatpush1.msra.mxu0 0.0
        %1967 = vmatprep.subr.mxu0 0.0
        %1968 = vmatpush1.msra.mxu0 0.0
        %1969 = vmatprep.subr.mxu0 0.0
        %1970 = vmatpush1.msra.mxu0 0.0
        %1971 = vmatprep.subr.mxu0 0.0
        %1972 = vmatpush1.msra.mxu0 0.0
        %1973 = vmatprep.subr.mxu0 0.0
        %1974 = vmatpush1.msra.mxu0 0.0
        %1975 = vmatprep.subr.mxu0 0.0
        %1976 = vmatpush1.msra.mxu0 0.0
        %1977 = vmatprep.subr.mxu0 0.0
        %1978 = vmatpush1.msra.mxu0 0.0
        %1979 = vmatprep.subr.mxu0 0.0
        %1980 = vmatpush1.msra.mxu0 0.0
        %1981 = vmatprep.subr.mxu0 0.0
        %1982 = vmatpush1.msra.mxu0 0.0
        %1983 = vmatprep.subr.mxu0 0.0
        %1984 = vmatpush1.msra.mxu0 0.0
        %1985 = vmatprep.subr.mxu0 0.0
        %1986 = vmatpush1.msra.mxu0 0.0
        %1987 = vmatprep.subr.mxu0 0.0
        %1988 = vmatpush1.msra.mxu0 0.0
        %1989 = vmatprep.subr.mxu0 0.0
        %1990 = vmatpush1.msra.mxu0 0.0
        %1991 = vmatprep.subr.mxu0 0.0
        %1992 = vmatpush1.msra.mxu0 0.0
        %1993 = vmatprep.subr.mxu0 0.0
        %1994 = vmatpush1.msra.mxu0 0.0
        %1995 = vmatprep.subr.mxu0 0.0
        %1996 = vmatpush1.msra.mxu0 0.0
        %1997 = vmatprep.subr.mxu0 0.0
        %1998 = vmatpush1.msra.mxu0 0.0
        %1999 = vmatprep.subr.mxu0 0.0
        %2000 = vmatpush1.msra.mxu0 0.0
        %2001 = vmatprep.subr.mxu0 0.0
        %2002 = vmatpush1.msra.mxu0 0.0
        %2003 = vmatprep.subr.mxu0 0.0
        %2004 = vmatpush1.msra.mxu0 0.0
        %2005 = vmatprep.subr.mxu0 0.0
        %2006 = vmatpush1.msra.mxu0 0.0
        %2007 = vmatprep.mubr.f32.mxu0 0.0
        %2008 = vmatmul.mubr.f32.gmra.mrb[0].mxu0 %v651
        %v2009 = vpop.f32.mrb[0].mxu0
        %v2010 = vadd.f32 %v1941, %v2009
        %v2011 = vpop.f32.mrb[0].mxu0
        %2012 = vdwg.mxu0
        %v2014 = vsel %vm806, %v1927, 0
        %v2017 = vsel %vm806, %v2010, 0
        %2019 = vmatprep.subr.mxu0 0.0
        %2020 = vmatpush1.xpose.msra.mxu0 %v2017
        %2021 = vmatprep.subr.mxu0 0.0
        %2022 = vmatpush1.xpose.msra.mxu0 0.0
        %2023 = vmatprep.subr.mxu0 0.0
        %2024 = vmatpush1.xpose.msra.mxu0 0.0
        %2025 = vmatprep.subr.mxu0 0.0
        %2026 = vmatpush1.xpose.msra.mxu0 0.0
        %2027 = vmatprep.subr.mxu0 0.0
        %2028 = vmatpush1.xpose.msra.mxu0 0.0
        %2029 = vmatprep.subr.mxu0 0.0
        %2030 = vmatpush1.xpose.msra.mxu0 0.0
        %2031 = vmatprep.subr.mxu0 0.0
        %2032 = vmatpush1.xpose.msra.mxu0 0.0
        %2033 = vmatprep.subr.mxu0 0.0
        %2034 = vmatpush1.xpose.msra.mxu0 0.0
        %2035 = vmatprep.subr.mxu0 0.0
        %2036 = vmatpush1.xpose.msra.mxu0 0.0
        %2037 = vmatprep.subr.mxu0 0.0
        %2038 = vmatpush1.xpose.msra.mxu0 0.0
        %2039 = vmatprep.subr.mxu0 0.0
        %2040 = vmatpush1.xpose.msra.mxu0 0.0
        %2041 = vmatprep.subr.mxu0 0.0
        %2042 = vmatpush1.xpose.msra.mxu0 0.0
        %2043 = vmatprep.subr.mxu0 0.0
        %2044 = vmatpush1.xpose.msra.mxu0 0.0
        %2045 = vmatprep.subr.mxu0 0.0
        %2046 = vmatpush1.xpose.msra.mxu0 0.0
        %2047 = vmatprep.subr.mxu0 0.0
        %2048 = vmatpush1.xpose.msra.mxu0 0.0
        %2049 = vmatprep.subr.mxu0 0.0
        %2050 = vmatpush1.xpose.msra.mxu0 0.0
        %2051 = vmatprep.subr.mxu0 0.0
        %2052 = vmatpush1.xpose.msra.mxu0 0.0
        %2053 = vmatprep.subr.mxu0 0.0
        %2054 = vmatpush1.xpose.msra.mxu0 0.0
        %2055 = vmatprep.subr.mxu0 0.0
        %2056 = vmatpush1.xpose.msra.mxu0 0.0
        %2057 = vmatprep.subr.mxu0 0.0
        %2058 = vmatpush1.xpose.msra.mxu0 0.0
        %2059 = vmatprep.subr.mxu0 0.0
        %2060 = vmatpush1.xpose.msra.mxu0 0.0
        %2061 = vmatprep.subr.mxu0 0.0
        %2062 = vmatpush1.xpose.msra.mxu0 0.0
        %2063 = vmatprep.subr.mxu0 0.0
        %2064 = vmatpush1.xpose.msra.mxu0 0.0
        %2065 = vmatprep.subr.mxu0 0.0
        %2066 = vmatpush1.xpose.msra.mxu0 0.0
        %2067 = vmatprep.subr.mxu0 0.0
        %2068 = vmatpush1.xpose.msra.mxu0 0.0
        %2069 = vmatprep.subr.mxu0 0.0
        %2070 = vmatpush1.xpose.msra.mxu0 0.0
        %2071 = vmatprep.subr.mxu0 0.0
        %2072 = vmatpush1.xpose.msra.mxu0 0.0
        %2073 = vmatprep.subr.mxu0 0.0
        %2074 = vmatpush1.xpose.msra.mxu0 0.0
        %2075 = vmatprep.subr.mxu0 0.0
        %2076 = vmatpush1.xpose.msra.mxu0 0.0
        %2077 = vmatprep.subr.mxu0 0.0
        %2078 = vmatpush1.xpose.msra.mxu0 0.0
        %2079 = vmatprep.subr.mxu0 0.0
        %2080 = vmatpush1.xpose.msra.mxu0 0.0
        %2081 = vmatprep.subr.mxu0 0.0
        %2082 = vmatpush1.xpose.msra.mxu0 0.0
        %2083 = vmatprep.mubr.f32.mxu0 0.0
        %2084 = vmatmul.mubr.f32.gmra.mrb[0].mxu0 %v2014
        %v2085 = vpop.f32.mrb[0].mxu0
        %v2086 = vadd.f32 0.0, %v2085
        %v2087 = vpop.f32.mrb[0].mxu0
        %2088 = vdwg.mxu0
        %v2089 = vsel %vm806, %v2086, -inf
        %2090 = vmax.xlane.f32.xlu0 %v2089
        %v2091 = vpop.xlane.xlu0 %2090
        %v2092 = vsub.f32 %v2086, %v2091
        %v2093 = vmul.f32 %v2092, 1.442695
        %v2094 = vpow.pop %v2093
        %v2095 = vsel %vm806, %v2094, 0.0
        %2096 = vadd.xlane.f32.xlu0 %v2095
        %v2097 = vpop.xlane.xlu0 %2096
        %v2098 = vrcp.pop %v2097
        %v2099 = vmul.f32 %v2094, %v2098
        %s2100 = scalar_lea.vmem %s6, 96
        %v2101 = vld [vmem:[%s2100] sm:$0xff]
        %v2102 = vld [vmem:[%s2100 + $0x8] sm:$0xff]
        %v2103 = vld [vmem:[%s2100 + $0x10] sm:$0xff]
        %v2104 = vld [vmem:[%s2100 + $0x18] sm:$0xff]
        %2105 = vmatprep.subr.mxu0 0.0
        %2106 = vmatpush1.msra.mxu0 %v2101
        %2107 = vmatprep.subr.mxu0 0.0
        %2108 = vmatpush1.msra.mxu0 %v2102
        %2109 = vmatprep.subr.mxu0 0.0
        %2110 = vmatpush1.msra.mxu0 %v2103
        %2111 = vmatprep.subr.mxu0 0.0
        %2112 = vmatpush1.msra.mxu0 %v2104
        %2113 = vmatprep.subr.mxu0 0.0
        %2114 = vmatpush1.msra.mxu0 0.0
        %2115 = vmatprep.subr.mxu0 0.0
        %2116 = vmatpush1.msra.mxu0 0.0
        %2117 = vmatprep.subr.mxu0 0.0
        %2118 = vmatpush1.msra.mxu0 0.0
        %2119 = vmatprep.subr.mxu0 0.0
        %2120 = vmatpush1.msra.mxu0 0.0
        %2121 = vmatprep.subr.mxu0 0.0
        %2122 = vmatpush1.msra.mxu0 0.0
        %2123 = vmatprep.subr.mxu0 0.0
        %2124 = vmatpush1.msra.mxu0 0.0
        %2125 = vmatprep.subr.mxu0 0.0
        %2126 = vmatpush1.msra.mxu0 0.0
        %2127 = vmatprep.subr.mxu0 0.0
        %2128 = vmatpush1.msra.mxu0 0.0
        %2129 = vmatprep.subr.mxu0 0.0
        %2130 = vmatpush1.msra.mxu0 0.0
        %2131 = vmatprep.subr.mxu0 0.0
        %2132 = vmatpush1.msra.mxu0 0.0
        %2133 = vmatprep.subr.mxu0 0.0
        %2134 = vmatpush1.msra.mxu0 0.0
        %2135 = vmatprep.subr.mxu0 0.0
        %2136 = vmatpush1.msra.mxu0 0.0
        %2137 = vmatprep.subr.mxu0 0.0
        %2138 = vmatpush1.msra.mxu0 0.0
        %2139 = vmatprep.subr.mxu0 0.0
        %2140 = vmatpush1.msra.mxu0 0.0
        %2141 = vmatprep.subr.mxu0 0.0
        %2142 = vmatpush1.msra.mxu0 0.0
        %2143 = vmatprep.subr.mxu0 0.0
        %2144 = vmatpush1.msra.mxu0 0.0
        %2145 = vmatprep.subr.mxu0 0.0
        %2146 = vmatpush1.msra.mxu0 0.0
        %2147 = vmatprep.subr.mxu0 0.0
        %2148 = vmatpush1.msra.mxu0 0.0
        %2149 = vmatprep.subr.mxu0 0.0
        %2150 = vmatpush1.msra.mxu0 0.0
        %2151 = vmatprep.subr.mxu0 0.0
        %2152 = vmatpush1.msra.mxu0 0.0
        %2153 = vmatprep.subr.mxu0 0.0
        %2154 = vmatpush1.msra.mxu0 0.0
        %2155 = vmatprep.subr.mxu0 0.0
        %2156 = vmatpush1.msra.mxu0 0.0
        %2157 = vmatprep.subr.mxu0 0.0
        %2158 = vmatpush1.msra.mxu0 0.0
        %2159 = vmatprep.subr.mxu0 0.0
        %2160 = vmatpush1.msra.mxu0 0.0
        %2161 = vmatprep.subr.mxu0 0.0
        %2162 = vmatpush1.msra.mxu0 0.0
        %2163 = vmatprep.subr.mxu0 0.0
        %2164 = vmatpush1.msra.mxu0 0.0
        %2165 = vmatprep.subr.mxu0 0.0
        %2166 = vmatpush1.msra.mxu0 0.0
        %2167 = vmatprep.subr.mxu0 0.0
        %2168 = vmatpush1.msra.mxu0 0.0
        %2169 = vmatprep.mubr.f32.mxu0 0.0
        %2170 = vmatmul.mubr.f32.gmra.mrb[0].mxu0 %v899
        %v2171 = vpop.f32.mrb[0].mxu0
        %v2172 = vadd.f32 0.0, %v2171
        %v2173 = vpop.f32.mrb[0].mxu0
        %2174 = vdwg.mxu0
        %v2176 = vsel %vm806, %v2099, 0
        %2178 = vmatprep.subr.mxu0 0.0
        %2179 = vmatpush1.msra.mxu0 %v2172
        %2180 = vmatprep.subr.mxu0 0.0
        %2181 = vmatpush1.msra.mxu0 0.0
        %2182 = vmatprep.subr.mxu0 0.0
        %2183 = vmatpush1.msra.mxu0 0.0
        %2184 = vmatprep.subr.mxu0 0.0
        %2185 = vmatpush1.msra.mxu0 0.0
        %2186 = vmatprep.subr.mxu0 0.0
        %2187 = vmatpush1.msra.mxu0 0.0
        %2188 = vmatprep.subr.mxu0 0.0
        %2189 = vmatpush1.msra.mxu0 0.0
        %2190 = vmatprep.subr.mxu0 0.0
        %2191 = vmatpush1.msra.mxu0 0.0
        %2192 = vmatprep.subr.mxu0 0.0
        %2193 = vmatpush1.msra.mxu0 0.0
        %2194 = vmatprep.subr.mxu0 0.0
        %2195 = vmatpush1.msra.mxu0 0.0
        %2196 = vmatprep.subr.mxu0 0.0
        %2197 = vmatpush1.msra.mxu0 0.0
        %2198 = vmatprep.subr.mxu0 0.0
        %2199 = vmatpush1.msra.mxu0 0.0
        %2200 = vmatprep.subr.mxu0 0.0
        %2201 = vmatpush1.msra.mxu0 0.0
        %2202 = vmatprep.subr.mxu0 0.0
        %2203 = vmatpush1.msra.mxu0 0.0
        %2204 = vmatprep.subr.mxu0 0.0
        %2205 = vmatpush1.msra.mxu0 0.0
        %2206 = vmatprep.subr.mxu0 0.0
        %2207 = vmatpush1.msra.mxu0 0.0
        %2208 = vmatprep.subr.mxu0 0.0
        %2209 = vmatpush1.msra.mxu0 0.0
        %2210 = vmatprep.subr.mxu0 0.0
        %2211 = vmatpush1.msra.mxu0 0.0
        %2212 = vmatprep.subr.mxu0 0.0
        %2213 = vmatpush1.msra.mxu0 0.0
        %2214 = vmatprep.subr.mxu0 0.0
        %2215 = vmatpush1.msra.mxu0 0.0
        %2216 = vmatprep.subr.mxu0 0.0
        %2217 = vmatpush1.msra.mxu0 0.0
        %2218 = vmatprep.subr.mxu0 0.0
        %2219 = vmatpush1.msra.mxu0 0.0
        %2220 = vmatprep.subr.mxu0 0.0
        %2221 = vmatpush1.msra.mxu0 0.0
        %2222 = vmatprep.subr.mxu0 0.0
        %2223 = vmatpush1.msra.mxu0 0.0
        %2224 = vmatprep.subr.mxu0 0.0
        %2225 = vmatpush1.msra.mxu0 0.0
        %2226 = vmatprep.subr.mxu0 0.0
        %2227 = vmatpush1.msra.mxu0 0.0
        %2228 = vmatprep.subr.mxu0 0.0
        %2229 = vmatpush1.msra.mxu0 0.0
        %2230 = vmatprep.subr.mxu0 0.0
        %2231 = vmatpush1.msra.mxu0 0.0
        %2232 = vmatprep.subr.mxu0 0.0
        %2233 = vmatpush1.msra.mxu0 0.0
        %2234 = vmatprep.subr.mxu0 0.0
        %2235 = vmatpush1.msra.mxu0 0.0
        %2236 = vmatprep.subr.mxu0 0.0
        %2237 = vmatpush1.msra.mxu0 0.0
        %2238 = vmatprep.subr.mxu0 0.0
        %2239 = vmatpush1.msra.mxu0 0.0
        %2240 = vmatprep.subr.mxu0 0.0
        %2241 = vmatpush1.msra.mxu0 0.0
        %2242 = vmatprep.mubr.f32.mxu0 0.0
        %2243 = vmatmul.mubr.f32.gmra.mrb[0].mxu0 %v2176
        %v2244 = vpop.f32.mrb[0].mxu0
        %v2245 = vadd.f32 0.0, %v2244
        %v2246 = vpop.f32.mrb[0].mxu0
        %2247 = vdwg.mxu0
        %v2248 = vadd.f32 %v1846, %v2245
        %v2249 = vld [vmem:[%s7] sm:$0x1]
        %v2251 = vlaneseq
        %v2252 = vshrl.u32 %v2251, 7
        %v2253 = vsub.s32 0, %v2252
        %v2254 = vrot.slane %v2249, %v2253
        %v2256 = vadd.f32 %v2248, %v2254
        %v2257 = vadd.f32 %v628, %v2256
        %v2258 = vsel %vm649, %v2257, 0.0
        %2259 = vadd.xlane.f32.xlu0 %v2258
        %v2260 = vpop.xlane.xlu0 %2259
        %v2261 = vrcp.pop 32.0
        %v2262 = vmul.f32 %v2260, %v2261
        %v2263 = vsub.f32 %v2257, %v2262
        %v2264 = vmul.f32 %v2263, %v2263
        %v2265 = vsel %vm649, %v2264, 0.0
        %2266 = vadd.xlane.f32.xlu0 %v2265
        %v2267 = vpop.xlane.xlu0 %2266
        %v2268 = vmul.f32 %v2267, %v2261
        %v2269 = vadd.f32 %v2268, 1e-05
        %v2270 = vrsqrt.pop %v2269
        %v2271 = vmul.f32 %v2263, %v2270
        %v2272 = vlaneseq
        %v2273 = vshrl.u32 %v2272, 7
        %v2274 = vsub.s32 0, %v2273
        %v2275 = vrot.slane %v636, %v2274
        %v2276 = vmul.f32 %v2271, %v2275
        %v2277 = vlaneseq
        %v2278 = vshrl.u32 %v2277, 7
        %v2279 = vsub.s32 1, %v2278
        %v2280 = vrot.slane %v636, %v2279
        %v2281 = vadd.f32 %v2276, %v2280
        %v2282 = vadd.f32 %v2281, %v631
        %v2283 = vld [vmem:[%s8] sm:$0xff]
        %v2284 = vld [vmem:[%s8 + $0x8] sm:$0xff]
        %v2285 = vld [vmem:[%s8 + $0x10] sm:$0xff]
        %v2286 = vld [vmem:[%s8 + $0x18] sm:$0xff]
        %v2287 = vld [vmem:[%s9] sm:$0x1]
        %v2289 = vlaneseq
        %v2290 = vshrl.u32 %v2289, 7
        %v2291 = vsub.s32 0, %v2290
        %v2292 = vrot.slane %v2287, %v2291
        %v2295 = vsel %vm649, %v2282, 0
        %2297 = vmatprep.subr.mxu0 0.0
        %2298 = vmatpush1.msra.mxu0 %v2283
        %2299 = vmatprep.subr.mxu0 0.0
        %2300 = vmatpush1.msra.mxu0 %v2284
        %2301 = vmatprep.subr.mxu0 0.0
        %2302 = vmatpush1.msra.mxu0 %v2285
        %2303 = vmatprep.subr.mxu0 0.0
        %2304 = vmatpush1.msra.mxu0 %v2286
        %2305 = vmatprep.subr.mxu0 0.0
        %2306 = vmatpush1.msra.mxu0 0.0
        %2307 = vmatprep.subr.mxu0 0.0
        %2308 = vmatpush1.msra.mxu0 0.0
        %2309 = vmatprep.subr.mxu0 0.0
        %2310 = vmatpush1.msra.mxu0 0.0
        %2311 = vmatprep.subr.mxu0 0.0
        %2312 = vmatpush1.msra.mxu0 0.0
        %2313 = vmatprep.subr.mxu0 0.0
        %2314 = vmatpush1.msra.mxu0 0.0
        %2315 = vmatprep.subr.mxu0 0.0
        %2316 = vmatpush1.msra.mxu0 0.0
        %2317 = vmatprep.subr.mxu0 0.0
        %2318 = vmatpush1.msra.mxu0 0.0
        %2319 = vmatprep.subr.mxu0 0.0
        %2320 = vmatpush1.msra.mxu0 0.0
        %2321 = vmatprep.subr.mxu0 0.0
        %2322 = vmatpush1.msra.mxu0 0.0
        %2323 = vmatprep.subr.mxu0 0.0
        %2324 = vmatpush1.msra.mxu0 0.0
        %2325 = vmatprep.subr.mxu0 0.0
        %2326 = vmatpush1.msra.mxu0 0.0
        %2327 = vmatprep.subr.mxu0 0.0
        %2328 = vmatpush1.msra.mxu0 0.0
        %2329 = vmatprep.subr.mxu0 0.0
        %2330 = vmatpush1.msra.mxu0 0.0
        %2331 = vmatprep.subr.mxu0 0.0
        %2332 = vmatpush1.msra.mxu0 0.0
        %2333 = vmatprep.subr.mxu0 0.0
        %2334 = vmatpush1.msra.mxu0 0.0
        %2335 = vmatprep.subr.mxu0 0.0
        %2336 = vmatpush1.msra.mxu0 0.0
        %2337 = vmatprep.subr.mxu0 0.0
        %2338 = vmatpush1.msra.mxu0 0.0
        %2339 = vmatprep.subr.mxu0 0.0
        %2340 = vmatpush1.msra.mxu0 0.0
        %2341 = vmatprep.subr.mxu0 0.0
        %2342 = vmatpush1.msra.mxu0 0.0
        %2343 = vmatprep.subr.mxu0 0.0
        %2344 = vmatpush1.msra.mxu0 0.0
        %2345 = vmatprep.subr.mxu0 0.0
        %2346 = vmatpush1.msra.mxu0 0.0
        %2347 = vmatprep.subr.mxu0 0.0
        %2348 = vmatpush1.msra.mxu0 0.0
        %2349 = vmatprep.subr.mxu0 0.0
        %2350 = vmatpush1.msra.mxu0 0.0
        %2351 = vmatprep.subr.mxu0 0.0
        %2352 = vmatpush1.msra.mxu0 0.0
        %2353 = vmatprep.subr.mxu0 0.0
        %2354 = vmatpush1.msra.mxu0 0.0
        %2355 = vmatprep.subr.mxu0 0.0
        %2356 = vmatpush1.msra.mxu0 0.0
        %2357 = vmatprep.subr.mxu0 0.0
        %2358 = vmatpush1.msra.mxu0 0.0
        %2359 = vmatprep.subr.mxu0 0.0
        %2360 = vmatpush1.msra.mxu0 0.0
        %2361 = vmatprep.mubr.f32.mxu0 0.0
        %2362 = vmatmul.mubr.f32.gmra.mrb[0].mxu0 %v2295
        %v2363 = vpop.f32.mrb[0].mxu0
        %v2364 = vadd.f32 %v2292, %v2363
        %v2365 = vpop.f32.mrb[0].mxu0
        %2366 = vdwg.mxu0
        %s2367 = scalar_lea.vmem %s8, 128
        %v2368 = vld [vmem:[%s2367] sm:$0xff]
        %v2369 = vld [vmem:[%s2367 + $0x8] sm:$0xff]
        %v2370 = vld [vmem:[%s2367 + $0x10] sm:$0xff]
        %v2371 = vld [vmem:[%s2367 + $0x18] sm:$0xff]
        %s2372 = scalar_lea.vmem %s9, 4
        %v2373 = vld [vmem:[%s2372] sm:$0x1]
        %v2375 = vlaneseq
        %v2376 = vshrl.u32 %v2375, 7
        %v2377 = vsub.s32 0, %v2376
        %v2378 = vrot.slane %v2373, %v2377
        %v2381 = vsel %vm649, %v634, 0
        %v2384 = vsel %vm649, %v635, 0
        %2386 = vmatprep.subr.mxu0 0.0
        %2387 = vmatpush1.msra.mxu0 %v2368
        %2388 = vmatprep.subr.mxu0 0.0
        %2389 = vmatpush1.msra.mxu0 %v2369
        %2390 = vmatprep.subr.mxu0 0.0
        %2391 = vmatpush1.msra.mxu0 %v2370
        %2392 = vmatprep.subr.mxu0 0.0
        %2393 = vmatpush1.msra.mxu0 %v2371
        %2394 = vmatprep.subr.mxu0 0.0
        %2395 = vmatpush1.msra.mxu0 0.0
        %2396 = vmatprep.subr.mxu0 0.0
        %2397 = vmatpush1.msra.mxu0 0.0
        %2398 = vmatprep.subr.mxu0 0.0
        %2399 = vmatpush1.msra.mxu0 0.0
        %2400 = vmatprep.subr.mxu0 0.0
        %2401 = vmatpush1.msra.mxu0 0.0
        %2402 = vmatprep.subr.mxu0 0.0
        %2403 = vmatpush1.msra.mxu0 0.0
        %2404 = vmatprep.subr.mxu0 0.0
        %2405 = vmatpush1.msra.mxu0 0.0
        %2406 = vmatprep.subr.mxu0 0.0
        %2407 = vmatpush1.msra.mxu0 0.0
        %2408 = vmatprep.subr.mxu0 0.0
        %2409 = vmatpush1.msra.mxu0 0.0
        %2410 = vmatprep.subr.mxu0 0.0
        %2411 = vmatpush1.msra.mxu0 0.0
        %2412 = vmatprep.subr.mxu0 0.0
        %2413 = vmatpush1.msra.mxu0 0.0
        %2414 = vmatprep.subr.mxu0 0.0
        %2415 = vmatpush1.msra.mxu0 0.0
        %2416 = vmatprep.subr.mxu0 0.0
        %2417 = vmatpush1.msra.mxu0 0.0
        %2418 = vmatprep.subr.mxu0 0.0
        %2419 = vmatpush1.msra.mxu0 0.0
        %2420 = vmatprep.subr.mxu0 0.0
        %2421 = vmatpush1.msra.mxu0 0.0
        %2422 = vmatprep.subr.mxu0 0.0
        %2423 = vmatpush1.msra.mxu0 0.0
        %2424 = vmatprep.subr.mxu0 0.0
        %2425 = vmatpush1.msra.mxu0 0.0
        %2426 = vmatprep.subr.mxu0 0.0
        %2427 = vmatpush1.msra.mxu0 0.0
        %2428 = vmatprep.subr.mxu0 0.0
        %2429 = vmatpush1.msra.mxu0 0.0
        %2430 = vmatprep.subr.mxu0 0.0
        %2431 = vmatpush1.msra.mxu0 0.0
        %2432 = vmatprep.subr.mxu0 0.0
        %2433 = vmatpush1.msra.mxu0 0.0
        %2434 = vmatprep.subr.mxu0 0.0
        %2435 = vmatpush1.msra.mxu0 0.0
        %2436 = vmatprep.subr.mxu0 0.0
        %2437 = vmatpush1.msra.mxu0 0.0
        %2438 = vmatprep.subr.mxu0 0.0
        %2439 = vmatpush1.msra.mxu0 0.0
        %2440 = vmatprep.subr.mxu0 0.0
        %2441 = vmatpush1.msra.mxu0 0.0
        %2442 = vmatprep.subr.mxu0 0.0
        %2443 = vmatpush1.msra.mxu0 0.0
        %2444 = vmatprep.subr.mxu0 0.0
        %2445 = vmatpush1.msra.mxu0 0.0
        %2446 = vmatprep.subr.mxu0 0.0
        %2447 = vmatpush1.msra.mxu0 0.0
        %2448 = vmatprep.subr.mxu0 0.0
        %2449 = vmatpush1.msra.mxu0 0.0
        %2450 = vmatprep.mubr.f32.mxu0 0.0
        %2451 = vmatmul.mubr.f32.gmra.mrb[0].mxu0 %v2381
        %v2452 = vpop.f32.mrb[0].mxu0
        %v2453 = vadd.f32 %v2378, %v2452
        %v2454 = vpop.f32.mrb[0].mxu0
        %2455 = vmatprep.mubr.f32.mxu0 0.0
        %2456 = vmatmul.mubr.f32.gmra.mrb[0].mxu0 %v2384
        %v2457 = vpop.f32.mrb[0].mxu0
        %v2458 = vadd.f32 %v2378, %v2457
        %v2459 = vpop.f32.mrb[0].mxu0
        %2460 = vdwg.mxu0
        %v2462 = vsel %vm806, %v2364, 0
        %v2465 = vsel %vm806, %v2453, 0
        %v2468 = vsel %vm806, %v2458, 0
        %2470 = vmatprep.subr.mxu0 0.0
        %2471 = vmatpush1.xpose.msra.mxu0 %v2465
        %2472 = vmatprep.subr.mxu0 0.0
        %2473 = vmatpush1.xpose.msra.mxu0 %v2468
        %2474 = vmatprep.subr.mxu0 0.0
        %2475 = vmatpush1.xpose.msra.mxu0 0.0
        %2476 = vmatprep.subr.mxu0 0.0
        %2477 = vmatpush1.xpose.msra.mxu0 0.0
        %2478 = vmatprep.subr.mxu0 0.0
        %2479 = vmatpush1.xpose.msra.mxu0 0.0
        %2480 = vmatprep.subr.mxu0 0.0
        %2481 = vmatpush1.xpose.msra.mxu0 0.0
        %2482 = vmatprep.subr.mxu0 0.0
        %2483 = vmatpush1.xpose.msra.mxu0 0.0
        %2484 = vmatprep.subr.mxu0 0.0
        %2485 = vmatpush1.xpose.msra.mxu0 0.0
        %2486 = vmatprep.subr.mxu0 0.0
        %2487 = vmatpush1.xpose.msra.mxu0 0.0
        %2488 = vmatprep.subr.mxu0 0.0
        %2489 = vmatpush1.xpose.msra.mxu0 0.0
        %2490 = vmatprep.subr.mxu0 0.0
        %2491 = vmatpush1.xpose.msra.mxu0 0.0
        %2492 = vmatprep.subr.mxu0 0.0
        %2493 = vmatpush1.xpose.msra.mxu0 0.0
        %2494 = vmatprep.subr.mxu0 0.0
        %2495 = vmatpush1.xpose.msra.mxu0 0.0
        %2496 = vmatprep.subr.mxu0 0.0
        %2497 = vmatpush1.xpose.msra.mxu0 0.0
        %2498 = vmatprep.subr.mxu0 0.0
        %2499 = vmatpush1.xpose.msra.mxu0 0.0
        %2500 = vmatprep.subr.mxu0 0.0
        %2501 = vmatpush1.xpose.msra.mxu0 0.0
        %2502 = vmatprep.subr.mxu0 0.0
        %2503 = vmatpush1.xpose.msra.mxu0 0.0
        %2504 = vmatprep.subr.mxu0 0.0
        %2505 = vmatpush1.xpose.msra.mxu0 0.0
        %2506 = vmatprep.subr.mxu0 0.0
        %2507 = vmatpush1.xpose.msra.mxu0 0.0
        %2508 = vmatprep.subr.mxu0 0.0
        %2509 = vmatpush1.xpose.msra.mxu0 0.0
        %2510 = vmatprep.subr.mxu0 0.0
        %2511 = vmatpush1.xpose.msra.mxu0 0.0
        %2512 = vmatprep.subr.mxu0 0.0
        %2513 = vmatpush1.xpose.msra.mxu0 0.0
        %2514 = vmatprep.subr.mxu0 0.0
        %2515 = vmatpush1.xpose.msra.mxu0 0.0
        %2516 = vmatprep.subr.mxu0 0.0
        %2517 = vmatpush1.xpose.msra.mxu0 0.0
        %2518 = vmatprep.subr.mxu0 0.0
        %2519 = vmatpush1.xpose.msra.mxu0 0.0
        %2520 = vmatprep.subr.mxu0 0.0
        %2521 = vmatpush1.xpose.msra.mxu0 0.0
        %2522 = vmatprep.subr.mxu0 0.0
        %2523 = vmatpush1.xpose.msra.mxu0 0.0
        %2524 = vmatprep.subr.mxu0 0.0
        %2525 = vmatpush1.xpose.msra.mxu0 0.0
        %2526 = vmatprep.subr.mxu0 0.0
        %2527 = vmatpush1.xpose.msra.mxu0 0.0
        %2528 = vmatprep.subr.mxu0 0.0
        %2529 = vmatpush1.xpose.msra.mxu0 0.0
        %2530 = vmatprep.subr.mxu0 0.0
        %2531 = vmatpush1.xpose.msra.mxu0 0.0
        %2532 = vmatprep.subr.mxu0 0.0
        %2533 = vmatpush1.xpose.msra.mxu0 0.0
        %2534 = vmatprep.mubr.f32.mxu0 0.0
        %2535 = vmatmul.mubr.f32.gmra.mrb[0].mxu0 %v2462
        %v2536 = vpop.f32.mrb[0].mxu0
        %v2537 = vadd.f32 0.0, %v2536
        %v2538 = vpop.f32.mrb[0].mxu0
        %2539 = vdwg.mxu0
        %vm2540 = vcmask 130048
        %v2541 = vsel %vm2540, %v2537, -inf
        %2542 = vmax.xlane.f32.xlu0 %v2541
        %v2543 = vpop.xlane.xlu0 %2542
        %v2544 = vsub.f32 %v2537, %v2543
        %v2545 = vmul.f32 %v2544, 1.442695
        %v2546 = vpow.pop %v2545
        %v2547 = vsel %vm2540, %v2546, 0.0
        %2548 = vadd.xlane.f32.xlu0 %v2547
        %v2549 = vpop.xlane.xlu0 %2548
        %v2550 = vrcp.pop %v2549
        %v2551 = vmul.f32 %v2546, %v2550
        %v2552 = vld [vmem:[%s10] sm:$0xff]
        %v2553 = vld [vmem:[%s10 + $0x8] sm:$0xff]
        %v2554 = vld [vmem:[%s10 + $0x10] sm:$0xff]
        %v2555 = vld [vmem:[%s10 + $0x18] sm:$0xff]
        %v2557 = vsel %vm649, %v629, 0
        %v2560 = vsel %vm649, %v630, 0
        %2562 = vmatprep.subr.mxu0 0.0
        %2563 = vmatpush1.msra.mxu0 %v2552
        %2564 = vmatprep.subr.mxu0 0.0
        %2565 = vmatpush1.msra.mxu0 %v2553
        %2566 = vmatprep.subr.mxu0 0.0
        %2567 = vmatpush1.msra.mxu0 %v2554
        %2568 = vmatprep.subr.mxu0 0.0
        %2569 = vmatpush1.msra.mxu0 %v2555
        %2570 = vmatprep.subr.mxu0 0.0
        %2571 = vmatpush1.msra.mxu0 0.0
        %2572 = vmatprep.subr.mxu0 0.0
        %2573 = vmatpush1.msra.mxu0 0.0
        %2574 = vmatprep.subr.mxu0 0.0
        %2575 = vmatpush1.msra.mxu0 0.0
        %2576 = vmatprep.subr.mxu0 0.0
        %2577 = vmatpush1.msra.mxu0 0.0
        %2578 = vmatprep.subr.mxu0 0.0
        %2579 = vmatpush1.msra.mxu0 0.0
        %2580 = vmatprep.subr.mxu0 0.0
        %2581 = vmatpush1.msra.mxu0 0.0
        %2582 = vmatprep.subr.mxu0 0.0
        %2583 = vmatpush1.msra.mxu0 0.0
        %2584 = vmatprep.subr.mxu0 0.0
        %2585 = vmatpush1.msra.mxu0 0.0
        %2586 = vmatprep.subr.mxu0 0.0
        %2587 = vmatpush1.msra.mxu0 0.0
        %2588 = vmatprep.subr.mxu0 0.0
        %2589 = vmatpush1.msra.mxu0 0.0
        %2590 = vmatprep.subr.mxu0 0.0
        %2591 = vmatpush1.msra.mxu0 0.0
        %2592 = vmatprep.subr.mxu0 0.0
        %2593 = vmatpush1.msra.mxu0 0.0
        %2594 = vmatprep.subr.mxu0 0.0
        %2595 = vmatpush1.msra.mxu0 0.0
        %2596 = vmatprep.subr.mxu0 0.0
        %2597 = vmatpush1.msra.mxu0 0.0
        %2598 = vmatprep.subr.mxu0 0.0
        %2599 = vmatpush1.msra.mxu0 0.0
        %2600 = vmatprep.subr.mxu0 0.0
        %2601 = vmatpush1.msra.mxu0 0.0
        %2602 = vmatprep.subr.mxu0 0.0
        %2603 = vmatpush1.msra.mxu0 0.0
        %2604 = vmatprep.subr.mxu0 0.0
        %2605 = vmatpush1.msra.mxu0 0.0
        %2606 = vmatprep.subr.mxu0 0.0
        %2607 = vmatpush1.msra.mxu0 0.0
        %2608 = vmatprep.subr.mxu0 0.0
        %2609 = vmatpush1.msra.mxu0 0.0
        %2610 = vmatprep.subr.mxu0 0.0
        %2611 = vmatpush1.msra.mxu0 0.0
        %2612 = vmatprep.subr.mxu0 0.0
        %2613 = vmatpush1.msra.mxu0 0.0
        %2614 = vmatprep.subr.mxu0 0.0
        %2615 = vmatpush1.msra.mxu0 0.0
        %2616 = vmatprep.subr.mxu0 0.0
        %2617 = vmatpush1.msra.mxu0 0.0
        %2618 = vmatprep.subr.mxu0 0.0
        %2619 = vmatpush1.msra.mxu0 0.0
        %2620 = vmatprep.subr.mxu0 0.0
        %2621 = vmatpush1.msra.mxu0 0.0
        %2622 = vmatprep.subr.mxu0 0.0
        %2623 = vmatpush1.msra.mxu0 0.0
        %2624 = vmatprep.subr.mxu0 0.0
        %2625 = vmatpush1.msra.mxu0 0.0
        %2626 = vmatprep.mubr.f32.mxu0 0.0
        %2627 = vmatmul.mubr.f32.gmra.mrb[0].mxu0 %v2557
        %v2628 = vpop.f32.mrb[0].mxu0
        %v2629 = vadd.f32 0.0, %v2628
        %v2630 = vpop.f32.mrb[0].mxu0
        %2631 = vmatprep.mubr.f32.mxu0 0.0
        %2632 = vmatmul.mubr.f32.gmra.mrb[0].mxu0 %v2560
        %v2633 = vpop.f32.mrb[0].mxu0
        %v2634 = vadd.f32 0.0, %v2633
        %v2635 = vpop.f32.mrb[0].mxu0
        %2636 = vdwg.mxu0
        %s2637 = scalar_lea.vmem %s8, 32
        %v2638 = vld [vmem:[%s2637] sm:$0xff]
        %v2639 = vld [vmem:[%s2637 + $0x8] sm:$0xff]
        %v2640 = vld [vmem:[%s2637 + $0x10] sm:$0xff]
        %v2641 = vld [vmem:[%s2637 + $0x18] sm:$0xff]
        %s2642 = scalar_lea.vmem %s9, 1
        %v2643 = vld [vmem:[%s2642] sm:$0x1]
        %v2645 = vlaneseq
        %v2646 = vshrl.u32 %v2645, 7
        %v2647 = vsub.s32 0, %v2646
        %v2648 = vrot.slane %v2643, %v2647
        %2650 = vmatprep.subr.mxu0 0.0
        %2651 = vmatpush1.msra.mxu0 %v2638
        %2652 = vmatprep.subr.mxu0 0.0
        %2653 = vmatpush1.msra.mxu0 %v2639
        %2654 = vmatprep.subr.mxu0 0.0
        %2655 = vmatpush1.msra.mxu0 %v2640
        %2656 = vmatprep.subr.mxu0 0.0
        %2657 = vmatpush1.msra.mxu0 %v2641
        %2658 = vmatprep.subr.mxu0 0.0
        %2659 = vmatpush1.msra.mxu0 0.0
        %2660 = vmatprep.subr.mxu0 0.0
        %2661 = vmatpush1.msra.mxu0 0.0
        %2662 = vmatprep.subr.mxu0 0.0
        %2663 = vmatpush1.msra.mxu0 0.0
        %2664 = vmatprep.subr.mxu0 0.0
        %2665 = vmatpush1.msra.mxu0 0.0
        %2666 = vmatprep.subr.mxu0 0.0
        %2667 = vmatpush1.msra.mxu0 0.0
        %2668 = vmatprep.subr.mxu0 0.0
        %2669 = vmatpush1.msra.mxu0 0.0
        %2670 = vmatprep.subr.mxu0 0.0
        %2671 = vmatpush1.msra.mxu0 0.0
        %2672 = vmatprep.subr.mxu0 0.0
        %2673 = vmatpush1.msra.mxu0 0.0
        %2674 = vmatprep.subr.mxu0 0.0
        %2675 = vmatpush1.msra.mxu0 0.0
        %2676 = vmatprep.subr.mxu0 0.0
        %2677 = vmatpush1.msra.mxu0 0.0
        %2678 = vmatprep.subr.mxu0 0.0
        %2679 = vmatpush1.msra.mxu0 0.0
        %2680 = vmatprep.subr.mxu0 0.0
        %2681 = vmatpush1.msra.mxu0 0.0
        %2682 = vmatprep.subr.mxu0 0.0
        %2683 = vmatpush1.msra.mxu0 0.0
        %2684 = vmatprep.subr.mxu0 0.0
        %2685 = vmatpush1.msra.mxu0 0.0
        %2686 = vmatprep.subr.mxu0 0.0
        %2687 = vmatpush1.msra.mxu0 0.0
        %2688 = vmatprep.subr.mxu0 0.0
        %2689 = vmatpush1.msra.mxu0 0.0
        %2690 = vmatprep.subr.mxu0 0.0
        %2691 = vmatpush1.msra.mxu0 0.0
        %2692 = vmatprep.subr.mxu0 0.0
        %2693 = vmatpush1.msra.mxu0 0.0
        %2694 = vmatprep.subr.mxu0 0.0
        %2695 = vmatpush1.msra.mxu0 0.0
        %2696 = vmatprep.subr.mxu0 0.0
        %2697 = vmatpush1.msra.mxu0 0.0
        %2698 = vmatprep.subr.mxu0 0.0
        %2699 = vmatpush1.msra.mxu0 0.0
        %2700 = vmatprep.subr.mxu0 0.0
        %2701 = vmatpush1.msra.mxu0 0.0
        %2702 = vmatprep.subr.mxu0 0.0
        %2703 = vmatpush1.msra.mxu0 0.0
        %2704 = vmatprep.subr.mxu0 0.0
        %2705 = vmatpush1.msra.mxu0 0.0
        %2706 = vmatprep.subr.mxu0 0.0
        %2707 = vmatpush1.msra.mxu0 0.0
        %2708 = vmatprep.subr.mxu0 0.0
        %2709 = vmatpush1.msra.mxu0 0.0
        %2710 = vmatprep.subr.mxu0 0.0
        %2711 = vmatpush1.msra.mxu0 0.0
        %2712 = vmatprep.subr.mxu0 0.0
        %2713 = vmatpush1.msra.mxu0 0.0
        %2714 = vmatprep.mubr.f32.mxu0 0.0
        %2715 = vmatmul.mubr.f32.gmra.mrb[0].mxu0 %v2295
        %v2716 = vpop.f32.mrb[0].mxu0
        %v2717 = vadd.f32 %v2648, %v2716
        %v2718 = vpop.f32.mrb[0].mxu0
        %2719 = vdwg.mxu0
        %s2720 = scalar_lea.vmem %s8, 160
        %v2721 = vld [vmem:[%s2720] sm:$0xff]
        %v2722 = vld [vmem:[%s2720 + $0x8] sm:$0xff]
        %v2723 = vld [vmem:[%s2720 + $0x10] sm:$0xff]
        %v2724 = vld [vmem:[%s2720 + $0x18] sm:$0xff]
        %s2725 = scalar_lea.vmem %s9, 5
        %v2726 = vld [vmem:[%s2725] sm:$0x1]
        %v2728 = vlaneseq
        %v2729 = vshrl.u32 %v2728, 7
        %v2730 = vsub.s32 0, %v2729
        %v2731 = vrot.slane %v2726, %v2730
        %2733 = vmatprep.subr.mxu0 0.0
        %2734 = vmatpush1.msra.mxu0 %v2721
        %2735 = vmatprep.subr.mxu0 0.0
        %2736 = vmatpush1.msra.mxu0 %v2722
        %2737 = vmatprep.subr.mxu0 0.0
        %2738 = vmatpush1.msra.mxu0 %v2723
        %2739 = vmatprep.subr.mxu0 0.0
        %2740 = vmatpush1.msra.mxu0 %v2724
        %2741 = vmatprep.subr.mxu0 0.0
        %2742 = vmatpush1.msra.mxu0 0.0
        %2743 = vmatprep.subr.mxu0 0.0
        %2744 = vmatpush1.msra.mxu0 0.0
        %2745 = vmatprep.subr.mxu0 0.0
        %2746 = vmatpush1.msra.mxu0 0.0
        %2747 = vmatprep.subr.mxu0 0.0
        %2748 = vmatpush1.msra.mxu0 0.0
        %2749 = vmatprep.subr.mxu0 0.0
        %2750 = vmatpush1.msra.mxu0 0.0
        %2751 = vmatprep.subr.mxu0 0.0
        %2752 = vmatpush1.msra.mxu0 0.0
        %2753 = vmatprep.subr.mxu0 0.0
        %2754 = vmatpush1.msra.mxu0 0.0
        %2755 = vmatprep.subr.mxu0 0.0
        %2756 = vmatpush1.msra.mxu0 0.0
        %2757 = vmatprep.subr.mxu0 0.0
        %2758 = vmatpush1.msra.mxu0 0.0
        %2759 = vmatprep.subr.mxu0 0.0
        %2760 = vmatpush1.msra.mxu0 0.0
        %2761 = vmatprep.subr.mxu0 0.0
        %2762 = vmatpush1.msra.mxu0 0.0
        %2763 = vmatprep.subr.mxu0 0.0
        %2764 = vmatpush1.msra.mxu0 0.0
        %2765 = vmatprep.subr.mxu0 0.0
        %2766 = vmatpush1.msra.mxu0 0.0
        %2767 = vmatprep.subr.mxu0 0.0
        %2768 = vmatpush1.msra.mxu0 0.0
        %2769 = vmatprep.subr.mxu0 0.0
        %2770 = vmatpush1.msra.mxu0 0.0
        %2771 = vmatprep.subr.mxu0 0.0
        %2772 = vmatpush1.msra.mxu0 0.0
        %2773 = vmatprep.subr.mxu0 0.0
        %2774 = vmatpush1.msra.mxu0 0.0
        %2775 = vmatprep.subr.mxu0 0.0
        %2776 = vmatpush1.msra.mxu0 0.0
        %2777 = vmatprep.subr.mxu0 0.0
        %2778 = vmatpush1.msra.mxu0 0.0
        %2779 = vmatprep.subr.mxu0 0.0
        %2780 = vmatpush1.msra.mxu0 0.0
        %2781 = vmatprep.subr.mxu0 0.0
        %2782 = vmatpush1.msra.mxu0 0.0
        %2783 = vmatprep.subr.mxu0 0.0
        %2784 = vmatpush1.msra.mxu0 0.0
        %2785 = vmatprep.subr.mxu0 0.0
        %2786 = vmatpush1.msra.mxu0 0.0
        %2787 = vmatprep.subr.mxu0 0.0
        %2788 = vmatpush1.msra.mxu0 0.0
        %2789 = vmatprep.subr.mxu0 0.0
        %2790 = vmatpush1.msra.mxu0 0.0
        %2791 = vmatprep.subr.mxu0 0.0
        %2792 = vmatpush1.msra.mxu0 0.0
        %2793 = vmatprep.subr.mxu0 0.0
        %2794 = vmatpush1.msra.mxu0 0.0
        %2795 = vmatprep.subr.mxu0 0.0
        %2796 = vmatpush1.msra.mxu0 0.0
        %2797 = vmatprep.mubr.f32.mxu0 0.0
        %2798 = vmatmul.mubr.f32.gmra.mrb[0].mxu0 %v2381
        %v2799 = vpop.f32.mrb[0].mxu0
        %v2800 = vadd.f32 %v2731, %v2799
        %v2801 = vpop.f32.mrb[0].mxu0
        %2802 = vmatprep.mubr.f32.mxu0 0.0
        %2803 = vmatmul.mubr.f32.gmra.mrb[0].mxu0 %v2384
        %v2804 = vpop.f32.mrb[0].mxu0
        %v2805 = vadd.f32 %v2731, %v2804
        %v2806 = vpop.f32.mrb[0].mxu0
        %2807 = vdwg.mxu0
        %v2809 = vsel %vm806, %v2717, 0
        %v2812 = vsel %vm806, %v2800, 0
        %v2815 = vsel %vm806, %v2805, 0
        %2817 = vmatprep.subr.mxu0 0.0
        %2818 = vmatpush1.xpose.msra.mxu0 %v2812
        %2819 = vmatprep.subr.mxu0 0.0
        %2820 = vmatpush1.xpose.msra.mxu0 %v2815
        %2821 = vmatprep.subr.mxu0 0.0
        %2822 = vmatpush1.xpose.msra.mxu0 0.0
        %2823 = vmatprep.subr.mxu0 0.0
        %2824 = vmatpush1.xpose.msra.mxu0 0.0
        %2825 = vmatprep.subr.mxu0 0.0
        %2826 = vmatpush1.xpose.msra.mxu0 0.0
        %2827 = vmatprep.subr.mxu0 0.0
        %2828 = vmatpush1.xpose.msra.mxu0 0.0
        %2829 = vmatprep.subr.mxu0 0.0
        %2830 = vmatpush1.xpose.msra.mxu0 0.0
        %2831 = vmatprep.subr.mxu0 0.0
        %2832 = vmatpush1.xpose.msra.mxu0 0.0
        %2833 = vmatprep.subr.mxu0 0.0
        %2834 = vmatpush1.xpose.msra.mxu0 0.0
        %2835 = vmatprep.subr.mxu0 0.0
        %2836 = vmatpush1.xpose.msra.mxu0 0.0
        %2837 = vmatprep.subr.mxu0 0.0
        %2838 = vmatpush1.xpose.msra.mxu0 0.0
        %2839 = vmatprep.subr.mxu0 0.0
        %2840 = vmatpush1.xpose.msra.mxu0 0.0
        %2841 = vmatprep.subr.mxu0 0.0
        %2842 = vmatpush1.xpose.msra.mxu0 0.0
        %2843 = vmatprep.subr.mxu0 0.0
        %2844 = vmatpush1.xpose.msra.mxu0 0.0
        %2845 = vmatprep.subr.mxu0 0.0
        %2846 = vmatpush1.xpose.msra.mxu0 0.0
        %2847 = vmatprep.subr.mxu0 0.0
        %2848 = vmatpush1.xpose.msra.mxu0 0.0
        %2849 = vmatprep.subr.mxu0 0.0
        %2850 = vmatpush1.xpose.msra.mxu0 0.0
        %2851 = vmatprep.subr.mxu0 0.0
        %2852 = vmatpush1.xpose.msra.mxu0 0.0
        %2853 = vmatprep.subr.mxu0 0.0
        %2854 = vmatpush1.xpose.msra.mxu0 0.0
        %2855 = vmatprep.subr.mxu0 0.0
        %2856 = vmatpush1.xpose.msra.mxu0 0.0
        %2857 = vmatprep.subr.mxu0 0.0
        %2858 = vmatpush1.xpose.msra.mxu0 0.0
        %2859 = vmatprep.subr.mxu0 0.0
        %2860 = vmatpush1.xpose.msra.mxu0 0.0
        %2861 = vmatprep.subr.mxu0 0.0
        %2862 = vmatpush1.xpose.msra.mxu0 0.0
        %2863 = vmatprep.subr.mxu0 0.0
        %2864 = vmatpush1.xpose.msra.mxu0 0.0
        %2865 = vmatprep.subr.mxu0 0.0
        %2866 = vmatpush1.xpose.msra.mxu0 0.0
        %2867 = vmatprep.subr.mxu0 0.0
        %2868 = vmatpush1.xpose.msra.mxu0 0.0
        %2869 = vmatprep.subr.mxu0 0.0
        %2870 = vmatpush1.xpose.msra.mxu0 0.0
        %2871 = vmatprep.subr.mxu0 0.0
        %2872 = vmatpush1.xpose.msra.mxu0 0.0
        %2873 = vmatprep.subr.mxu0 0.0
        %2874 = vmatpush1.xpose.msra.mxu0 0.0
        %2875 = vmatprep.subr.mxu0 0.0
        %2876 = vmatpush1.xpose.msra.mxu0 0.0
        %2877 = vmatprep.subr.mxu0 0.0
        %2878 = vmatpush1.xpose.msra.mxu0 0.0
        %2879 = vmatprep.subr.mxu0 0.0
        %2880 = vmatpush1.xpose.msra.mxu0 0.0
        %2881 = vmatprep.mubr.f32.mxu0 0.0
        %2882 = vmatmul.mubr.f32.gmra.mrb[0].mxu0 %v2809
        %v2883 = vpop.f32.mrb[0].mxu0
        %v2884 = vadd.f32 0.0, %v2883
        %v2885 = vpop.f32.mrb[0].mxu0
        %2886 = vdwg.mxu0
        %v2887 = vsel %vm2540, %v2884, -inf
        %2888 = vmax.xlane.f32.xlu0 %v2887
        %v2889 = vpop.xlane.xlu0 %2888
        %v2890 = vsub.f32 %v2884, %v2889
        %v2891 = vmul.f32 %v2890, 1.442695
        %v2892 = vpow.pop %v2891
        %v2893 = vsel %vm2540, %v2892, 0.0
        %2894 = vadd.xlane.f32.xlu0 %v2893
        %v2895 = vpop.xlane.xlu0 %2894
        %v2896 = vrcp.pop %v2895
        %v2897 = vmul.f32 %v2892, %v2896
        %s2898 = scalar_lea.vmem %s10, 32
        %v2899 = vld [vmem:[%s2898] sm:$0xff]
        %v2900 = vld [vmem:[%s2898 + $0x8] sm:$0xff]
        %v2901 = vld [vmem:[%s2898 + $0x10] sm:$0xff]
        %v2902 = vld [vmem:[%s2898 + $0x18] sm:$0xff]
        %2903 = vmatprep.subr.mxu0 0.0
        %2904 = vmatpush1.msra.mxu0 %v2899
        %2905 = vmatprep.subr.mxu0 0.0
        %2906 = vmatpush1.msra.mxu0 %v2900
        %2907 = vmatprep.subr.mxu0 0.0
        %2908 = vmatpush1.msra.mxu0 %v2901
        %2909 = vmatprep.subr.mxu0 0.0
        %2910 = vmatpush1.msra.mxu0 %v2902
        %2911 = vmatprep.subr.mxu0 0.0
        %2912 = vmatpush1.msra.mxu0 0.0
        %2913 = vmatprep.subr.mxu0 0.0
        %2914 = vmatpush1.msra.mxu0 0.0
        %2915 = vmatprep.subr.mxu0 0.0
        %2916 = vmatpush1.msra.mxu0 0.0
        %2917 = vmatprep.subr.mxu0 0.0
        %2918 = vmatpush1.msra.mxu0 0.0
        %2919 = vmatprep.subr.mxu0 0.0
        %2920 = vmatpush1.msra.mxu0 0.0
        %2921 = vmatprep.subr.mxu0 0.0
        %2922 = vmatpush1.msra.mxu0 0.0
        %2923 = vmatprep.subr.mxu0 0.0
        %2924 = vmatpush1.msra.mxu0 0.0
        %2925 = vmatprep.subr.mxu0 0.0
        %2926 = vmatpush1.msra.mxu0 0.0
        %2927 = vmatprep.subr.mxu0 0.0
        %2928 = vmatpush1.msra.mxu0 0.0
        %2929 = vmatprep.subr.mxu0 0.0
        %2930 = vmatpush1.msra.mxu0 0.0
        %2931 = vmatprep.subr.mxu0 0.0
        %2932 = vmatpush1.msra.mxu0 0.0
        %2933 = vmatprep.subr.mxu0 0.0
        %2934 = vmatpush1.msra.mxu0 0.0
        %2935 = vmatprep.subr.mxu0 0.0
        %2936 = vmatpush1.msra.mxu0 0.0
        %2937 = vmatprep.subr.mxu0 0.0
        %2938 = vmatpush1.msra.mxu0 0.0
        %2939 = vmatprep.subr.mxu0 0.0
        %2940 = vmatpush1.msra.mxu0 0.0
        %2941 = vmatprep.subr.mxu0 0.0
        %2942 = vmatpush1.msra.mxu0 0.0
        %2943 = vmatprep.subr.mxu0 0.0
        %2944 = vmatpush1.msra.mxu0 0.0
        %2945 = vmatprep.subr.mxu0 0.0
        %2946 = vmatpush1.msra.mxu0 0.0
        %2947 = vmatprep.subr.mxu0 0.0
        %2948 = vmatpush1.msra.mxu0 0.0
        %2949 = vmatprep.subr.mxu0 0.0
        %2950 = vmatpush1.msra.mxu0 0.0
        %2951 = vmatprep.subr.mxu0 0.0
        %2952 = vmatpush1.msra.mxu0 0.0
        %2953 = vmatprep.subr.mxu0 0.0
        %2954 = vmatpush1.msra.mxu0 0.0
        %2955 = vmatprep.subr.mxu0 0.0
        %2956 = vmatpush1.msra.mxu0 0.0
        %2957 = vmatprep.subr.mxu0 0.0
        %2958 = vmatpush1.msra.mxu0 0.0
        %2959 = vmatprep.subr.mxu0 0.0
        %2960 = vmatpush1.msra.mxu0 0.0
        %2961 = vmatprep.subr.mxu0 0.0
        %2962 = vmatpush1.msra.mxu0 0.0
        %2963 = vmatprep.subr.mxu0 0.0
        %2964 = vmatpush1.msra.mxu0 0.0
        %2965 = vmatprep.subr.mxu0 0.0
        %2966 = vmatpush1.msra.mxu0 0.0
        %2967 = vmatprep.mubr.f32.mxu0 0.0
        %2968 = vmatmul.mubr.f32.gmra.mrb[0].mxu0 %v2557
        %v2969 = vpop.f32.mrb[0].mxu0
        %v2970 = vadd.f32 0.0, %v2969
        %v2971 = vpop.f32.mrb[0].mxu0
        %2972 = vmatprep.mubr.f32.mxu0 0.0
        %2973 = vmatmul.mubr.f32.gmra.mrb[0].mxu0 %v2560
        %v2974 = vpop.f32.mrb[0].mxu0
        %v2975 = vadd.f32 0.0, %v2974
        %v2976 = vpop.f32.mrb[0].mxu0
        %2977 = vdwg.mxu0
        %v2979 = vsel %vm2540, %v2897, 0
        %2981 = vmatprep.subr.mxu0 0.0
        %2982 = vmatpush1.msra.mxu0 %v2970
        %2983 = vmatprep.subr.mxu0 0.0
        %2984 = vmatpush1.msra.mxu0 %v2975
        %2985 = vmatprep.subr.mxu0 0.0
        %2986 = vmatpush1.msra.mxu0 0.0
        %2987 = vmatprep.subr.mxu0 0.0
        %2988 = vmatpush1.msra.mxu0 0.0
        %2989 = vmatprep.subr.mxu0 0.0
        %2990 = vmatpush1.msra.mxu0 0.0
        %2991 = vmatprep.subr.mxu0 0.0
        %2992 = vmatpush1.msra.mxu0 0.0
        %2993 = vmatprep.subr.mxu0 0.0
        %2994 = vmatpush1.msra.mxu0 0.0
        %2995 = vmatprep.subr.mxu0 0.0
        %2996 = vmatpush1.msra.mxu0 0.0
        %2997 = vmatprep.subr.mxu0 0.0
        %2998 = vmatpush1.msra.mxu0 0.0
        %2999 = vmatprep.subr.mxu0 0.0
        %3000 = vmatpush1.msra.mxu0 0.0
        %3001 = vmatprep.subr.mxu0 0.0
        %3002 = vmatpush1.msra.mxu0 0.0
        %3003 = vmatprep.subr.mxu0 0.0
        %3004 = vmatpush1.msra.mxu0 0.0
        %3005 = vmatprep.subr.mxu0 0.0
        %3006 = vmatpush1.msra.mxu0 0.0
        %3007 = vmatprep.subr.mxu0 0.0
        %3008 = vmatpush1.msra.mxu0 0.0
        %3009 = vmatprep.subr.mxu0 0.0
        %3010 = vmatpush1.msra.mxu0 0.0
        %3011 = vmatprep.subr.mxu0 0.0
        %3012 = vmatpush1.msra.mxu0 0.0
        %3013 = vmatprep.subr.mxu0 0.0
        %3014 = vmatpush1.msra.mxu0 0.0
        %3015 = vmatprep.subr.mxu0 0.0
        %3016 = vmatpush1.msra.mxu0 0.0
        %3017 = vmatprep.subr.mxu0 0.0
        %3018 = vmatpush1.msra.mxu0 0.0
        %3019 = vmatprep.subr.mxu0 0.0
        %3020 = vmatpush1.msra.mxu0 0.0
        %3021 = vmatprep.subr.mxu0 0.0
        %3022 = vmatpush1.msra.mxu0 0.0
        %3023 = vmatprep.subr.mxu0 0.0
        %3024 = vmatpush1.msra.mxu0 0.0
        %3025 = vmatprep.subr.mxu0 0.0
        %3026 = vmatpush1.msra.mxu0 0.0
        %3027 = vmatprep.subr.mxu0 0.0
        %3028 = vmatpush1.msra.mxu0 0.0
        %3029 = vmatprep.subr.mxu0 0.0
        %3030 = vmatpush1.msra.mxu0 0.0
        %3031 = vmatprep.subr.mxu0 0.0
        %3032 = vmatpush1.msra.mxu0 0.0
        %3033 = vmatprep.subr.mxu0 0.0
        %3034 = vmatpush1.msra.mxu0 0.0
        %3035 = vmatprep.subr.mxu0 0.0
        %3036 = vmatpush1.msra.mxu0 0.0
        %3037 = vmatprep.subr.mxu0 0.0
        %3038 = vmatpush1.msra.mxu0 0.0
        %3039 = vmatprep.subr.mxu0 0.0
        %3040 = vmatpush1.msra.mxu0 0.0
        %3041 = vmatprep.subr.mxu0 0.0
        %3042 = vmatpush1.msra.mxu0 0.0
        %3043 = vmatprep.subr.mxu0 0.0
        %3044 = vmatpush1.msra.mxu0 0.0
        %3045 = vmatprep.mubr.f32.mxu0 0.0
        %3046 = vmatmul.mubr.f32.gmra.mrb[0].mxu0 %v2979
        %v3047 = vpop.f32.mrb[0].mxu0
        %v3048 = vadd.f32 0.0, %v3047
        %v3049 = vpop.f32.mrb[0].mxu0
        %3050 = vdwg.mxu0
        %v3052 = vsel %vm2540, %v2551, 0
        %3054 = vmatprep.subr.mxu0 0.0
        %3055 = vmatpush1.msra.mxu0 %v2629
        %3056 = vmatprep.subr.mxu0 0.0
        %3057 = vmatpush1.msra.mxu0 %v2634
        %3058 = vmatprep.subr.mxu0 0.0
        %3059 = vmatpush1.msra.mxu0 0.0
        %3060 = vmatprep.subr.mxu0 0.0
        %3061 = vmatpush1.msra.mxu0 0.0
        %3062 = vmatprep.subr.mxu0 0.0
        %3063 = vmatpush1.msra.mxu0 0.0
        %3064 = vmatprep.subr.mxu0 0.0
        %3065 = vmatpush1.msra.mxu0 0.0
        %3066 = vmatprep.subr.mxu0 0.0
        %3067 = vmatpush1.msra.mxu0 0.0
        %3068 = vmatprep.subr.mxu0 0.0
        %3069 = vmatpush1.msra.mxu0 0.0
        %3070 = vmatprep.subr.mxu0 0.0
        %3071 = vmatpush1.msra.mxu0 0.0
        %3072 = vmatprep.subr.mxu0 0.0
        %3073 = vmatpush1.msra.mxu0 0.0
        %3074 = vmatprep.subr.mxu0 0.0
        %3075 = vmatpush1.msra.mxu0 0.0
        %3076 = vmatprep.subr.mxu0 0.0
        %3077 = vmatpush1.msra.mxu0 0.0
        %3078 = vmatprep.subr.mxu0 0.0
        %3079 = vmatpush1.msra.mxu0 0.0
        %3080 = vmatprep.subr.mxu0 0.0
        %3081 = vmatpush1.msra.mxu0 0.0
        %3082 = vmatprep.subr.mxu0 0.0
        %3083 = vmatpush1.msra.mxu0 0.0
        %3084 = vmatprep.subr.mxu0 0.0
        %3085 = vmatpush1.msra.mxu0 0.0
        %3086 = vmatprep.subr.mxu0 0.0
        %3087 = vmatpush1.msra.mxu0 0.0
        %3088 = vmatprep.subr.mxu0 0.0
        %3089 = vmatpush1.msra.mxu0 0.0
        %3090 = vmatprep.subr.mxu0 0.0
        %3091 = vmatpush1.msra.mxu0 0.0
        %3092 = vmatprep.subr.mxu0 0.0
        %3093 = vmatpush1.msra.mxu0 0.0
        %3094 = vmatprep.subr.mxu0 0.0
        %3095 = vmatpush1.msra.mxu0 0.0
        %3096 = vmatprep.subr.mxu0 0.0
        %3097 = vmatpush1.msra.mxu0 0.0
        %3098 = vmatprep.subr.mxu0 0.0
        %3099 = vmatpush1.msra.mxu0 0.0
        %3100 = vmatprep.subr.mxu0 0.0
        %3101 = vmatpush1.msra.mxu0 0.0
        %3102 = vmatprep.subr.mxu0 0.0
        %3103 = vmatpush1.msra.mxu0 0.0
        %3104 = vmatprep.subr.mxu0 0.0
        %3105 = vmatpush1.msra.mxu0 0.0
        %3106 = vmatprep.subr.mxu0 0.0
        %3107 = vmatpush1.msra.mxu0 0.0
        %3108 = vmatprep.subr.mxu0 0.0
        %3109 = vmatpush1.msra.mxu0 0.0
        %3110 = vmatprep.subr.mxu0 0.0
        %3111 = vmatpush1.msra.mxu0 0.0
        %3112 = vmatprep.subr.mxu0 0.0
        %3113 = vmatpush1.msra.mxu0 0.0
        %3114 = vmatprep.subr.mxu0 0.0
        %3115 = vmatpush1.msra.mxu0 0.0
        %3116 = vmatprep.subr.mxu0 0.0
        %3117 = vmatpush1.msra.mxu0 0.0
        %3118 = vmatprep.mubr.f32.mxu0 0.0
        %3119 = vmatmul.mubr.f32.gmra.mrb[0].mxu0 %v3052
        %v3120 = vpop.f32.mrb[0].mxu0
        %v3121 = vadd.f32 %v3048, %v3120
        %v3122 = vpop.f32.mrb[0].mxu0
        %3123 = vdwg.mxu0
        %s3124 = scalar_lea.vmem %s8, 64
        %v3125 = vld [vmem:[%s3124] sm:$0xff]
        %v3126 = vld [vmem:[%s3124 + $0x8] sm:$0xff]
        %v3127 = vld [vmem:[%s3124 + $0x10] sm:$0xff]
        %v3128 = vld [vmem:[%s3124 + $0x18] sm:$0xff]
        %s3129 = scalar_lea.vmem %s9, 2
        %v3130 = vld [vmem:[%s3129] sm:$0x1]
        %v3132 = vlaneseq
        %v3133 = vshrl.u32 %v3132, 7
        %v3134 = vsub.s32 0, %v3133
        %v3135 = vrot.slane %v3130, %v3134
        %3137 = vmatprep.subr.mxu0 0.0
        %3138 = vmatpush1.msra.mxu0 %v3125
        %3139 = vmatprep.subr.mxu0 0.0
        %3140 = vmatpush1.msra.mxu0 %v3126
        %3141 = vmatprep.subr.mxu0 0.0
        %3142 = vmatpush1.msra.mxu0 %v3127
        %3143 = vmatprep.subr.mxu0 0.0
        %3144 = vmatpush1.msra.mxu0 %v3128
        %3145 = vmatprep.subr.mxu0 0.0
        %3146 = vmatpush1.msra.mxu0 0.0
        %3147 = vmatprep.subr.mxu0 0.0
        %3148 = vmatpush1.msra.mxu0 0.0
        %3149 = vmatprep.subr.mxu0 0.0
        %3150 = vmatpush1.msra.mxu0 0.0
        %3151 = vmatprep.subr.mxu0 0.0
        %3152 = vmatpush1.msra.mxu0 0.0
        %3153 = vmatprep.subr.mxu0 0.0
        %3154 = vmatpush1.msra.mxu0 0.0
        %3155 = vmatprep.subr.mxu0 0.0
        %3156 = vmatpush1.msra.mxu0 0.0
        %3157 = vmatprep.subr.mxu0 0.0
        %3158 = vmatpush1.msra.mxu0 0.0
        %3159 = vmatprep.subr.mxu0 0.0
        %3160 = vmatpush1.msra.mxu0 0.0
        %3161 = vmatprep.subr.mxu0 0.0
        %3162 = vmatpush1.msra.mxu0 0.0
        %3163 = vmatprep.subr.mxu0 0.0
        %3164 = vmatpush1.msra.mxu0 0.0
        %3165 = vmatprep.subr.mxu0 0.0
        %3166 = vmatpush1.msra.mxu0 0.0
        %3167 = vmatprep.subr.mxu0 0.0
        %3168 = vmatpush1.msra.mxu0 0.0
        %3169 = vmatprep.subr.mxu0 0.0
        %3170 = vmatpush1.msra.mxu0 0.0
        %3171 = vmatprep.subr.mxu0 0.0
        %3172 = vmatpush1.msra.mxu0 0.0
        %3173 = vmatprep.subr.mxu0 0.0
        %3174 = vmatpush1.msra.mxu0 0.0
        %3175 = vmatprep.subr.mxu0 0.0
        %3176 = vmatpush1.msra.mxu0 0.0
        %3177 = vmatprep.subr.mxu0 0.0
        %3178 = vmatpush1.msra.mxu0 0.0
        %3179 = vmatprep.subr.mxu0 0.0
        %3180 = vmatpush1.msra.mxu0 0.0
        %3181 = vmatprep.subr.mxu0 0.0
        %3182 = vmatpush1.msra.mxu0 0.0
        %3183 = vmatprep.subr.mxu0 0.0
        %3184 = vmatpush1.msra.mxu0 0.0
        %3185 = vmatprep.subr.mxu0 0.0
        %3186 = vmatpush1.msra.mxu0 0.0
        %3187 = vmatprep.subr.mxu0 0.0
        %3188 = vmatpush1.msra.mxu0 0.0
        %3189 = vmatprep.subr.mxu0 0.0
        %3190 = vmatpush1.msra.mxu0 0.0
        %3191 = vmatprep.subr.mxu0 0.0
        %3192 = vmatpush1.msra.mxu0 0.0
        %3193 = vmatprep.subr.mxu0 0.0
        %3194 = vmatpush1.msra.mxu0 0.0
        %3195 = vmatprep.subr.mxu0 0.0
        %3196 = vmatpush1.msra.mxu0 0.0
        %3197 = vmatprep.subr.mxu0 0.0
        %3198 = vmatpush1.msra.mxu0 0.0
        %3199 = vmatprep.subr.mxu0 0.0
        %3200 = vmatpush1.msra.mxu0 0.0
        %3201 = vmatprep.mubr.f32.mxu0 0.0
        %3202 = vmatmul.mubr.f32.gmra.mrb[0].mxu0 %v2295
        %v3203 = vpop.f32.mrb[0].mxu0
        %v3204 = vadd.f32 %v3135, %v3203
        %v3205 = vpop.f32.mrb[0].mxu0
        %3206 = vdwg.mxu0
        %s3207 = scalar_lea.vmem %s8, 192
        %v3208 = vld [vmem:[%s3207] sm:$0xff]
        %v3209 = vld [vmem:[%s3207 + $0x8] sm:$0xff]
        %v3210 = vld [vmem:[%s3207 + $0x10] sm:$0xff]
        %v3211 = vld [vmem:[%s3207 + $0x18] sm:$0xff]
        %s3212 = scalar_lea.vmem %s9, 6
        %v3213 = vld [vmem:[%s3212] sm:$0x1]
        %v3215 = vlaneseq
        %v3216 = vshrl.u32 %v3215, 7
        %v3217 = vsub.s32 0, %v3216
        %v3218 = vrot.slane %v3213, %v3217
        %3220 = vmatprep.subr.mxu0 0.0
        %3221 = vmatpush1.msra.mxu0 %v3208
        %3222 = vmatprep.subr.mxu0 0.0
        %3223 = vmatpush1.msra.mxu0 %v3209
        %3224 = vmatprep.subr.mxu0 0.0
        %3225 = vmatpush1.msra.mxu0 %v3210
        %3226 = vmatprep.subr.mxu0 0.0
        %3227 = vmatpush1.msra.mxu0 %v3211
        %3228 = vmatprep.subr.mxu0 0.0
        %3229 = vmatpush1.msra.mxu0 0.0
        %3230 = vmatprep.subr.mxu0 0.0
        %3231 = vmatpush1.msra.mxu0 0.0
        %3232 = vmatprep.subr.mxu0 0.0
        %3233 = vmatpush1.msra.mxu0 0.0
        %3234 = vmatprep.subr.mxu0 0.0
        %3235 = vmatpush1.msra.mxu0 0.0
        %3236 = vmatprep.subr.mxu0 0.0
        %3237 = vmatpush1.msra.mxu0 0.0
        %3238 = vmatprep.subr.mxu0 0.0
        %3239 = vmatpush1.msra.mxu0 0.0
        %3240 = vmatprep.subr.mxu0 0.0
        %3241 = vmatpush1.msra.mxu0 0.0
        %3242 = vmatprep.subr.mxu0 0.0
        %3243 = vmatpush1.msra.mxu0 0.0
        %3244 = vmatprep.subr.mxu0 0.0
        %3245 = vmatpush1.msra.mxu0 0.0
        %3246 = vmatprep.subr.mxu0 0.0
        %3247 = vmatpush1.msra.mxu0 0.0
        %3248 = vmatprep.subr.mxu0 0.0
        %3249 = vmatpush1.msra.mxu0 0.0
        %3250 = vmatprep.subr.mxu0 0.0
        %3251 = vmatpush1.msra.mxu0 0.0
        %3252 = vmatprep.subr.mxu0 0.0
        %3253 = vmatpush1.msra.mxu0 0.0
        %3254 = vmatprep.subr.mxu0 0.0
        %3255 = vmatpush1.msra.mxu0 0.0
        %3256 = vmatprep.subr.mxu0 0.0
        %3257 = vmatpush1.msra.mxu0 0.0
        %3258 = vmatprep.subr.mxu0 0.0
        %3259 = vmatpush1.msra.mxu0 0.0
        %3260 = vmatprep.subr.mxu0 0.0
        %3261 = vmatpush1.msra.mxu0 0.0
        %3262 = vmatprep.subr.mxu0 0.0
        %3263 = vmatpush1.msra.mxu0 0.0
        %3264 = vmatprep.subr.mxu0 0.0
        %3265 = vmatpush1.msra.mxu0 0.0
        %3266 = vmatprep.subr.mxu0 0.0
        %3267 = vmatpush1.msra.mxu0 0.0
        %3268 = vmatprep.subr.mxu0 0.0
        %3269 = vmatpush1.msra.mxu0 0.0
        %3270 = vmatprep.subr.mxu0 0.0
        %3271 = vmatpush1.msra.mxu0 0.0
        %3272 = vmatprep.subr.mxu0 0.0
        %3273 = vmatpush1.msra.mxu0 0.0
        %3274 = vmatprep.subr.mxu0 0.0
        %3275 = vmatpush1.msra.mxu0 0.0
        %3276 = vmatprep.subr.mxu0 0.0
        %3277 = vmatpush1.msra.mxu0 0.0
        %3278 = vmatprep.subr.mxu0 0.0
        %3279 = vmatpush1.msra.mxu0 0.0
        %3280 = vmatprep.subr.mxu0 0.0
        %3281 = vmatpush1.msra.mxu0 0.0
        %3282 = vmatprep.subr.mxu0 0.0
        %3283 = vmatpush1.msra.mxu0 0.0
        %3284 = vmatprep.mubr.f32.mxu0 0.0
        %3285 = vmatmul.mubr.f32.gmra.mrb[0].mxu0 %v2381
        %v3286 = vpop.f32.mrb[0].mxu0
        %v3287 = vadd.f32 %v3218, %v3286
        %v3288 = vpop.f32.mrb[0].mxu0
        %3289 = vmatprep.mubr.f32.mxu0 0.0
        %3290 = vmatmul.mubr.f32.gmra.mrb[0].mxu0 %v2384
        %v3291 = vpop.f32.mrb[0].mxu0
        %v3292 = vadd.f32 %v3218, %v3291
        %v3293 = vpop.f32.mrb[0].mxu0
        %3294 = vdwg.mxu0
        %v3296 = vsel %vm806, %v3204, 0
        %v3299 = vsel %vm806, %v3287, 0
        %v3302 = vsel %vm806, %v3292, 0
        %3304 = vmatprep.subr.mxu0 0.0
        %3305 = vmatpush1.xpose.msra.mxu0 %v3299
        %3306 = vmatprep.subr.mxu0 0.0
        %3307 = vmatpush1.xpose.msra.mxu0 %v3302
        %3308 = vmatprep.subr.mxu0 0.0
        %3309 = vmatpush1.xpose.msra.mxu0 0.0
        %3310 = vmatprep.subr.mxu0 0.0
        %3311 = vmatpush1.xpose.msra.mxu0 0.0
        %3312 = vmatprep.subr.mxu0 0.0
        %3313 = vmatpush1.xpose.msra.mxu0 0.0
        %3314 = vmatprep.subr.mxu0 0.0
        %3315 = vmatpush1.xpose.msra.mxu0 0.0
        %3316 = vmatprep.subr.mxu0 0.0
        %3317 = vmatpush1.xpose.msra.mxu0 0.0
        %3318 = vmatprep.subr.mxu0 0.0
        %3319 = vmatpush1.xpose.msra.mxu0 0.0
        %3320 = vmatprep.subr.mxu0 0.0
        %3321 = vmatpush1.xpose.msra.mxu0 0.0
        %3322 = vmatprep.subr.mxu0 0.0
        %3323 = vmatpush1.xpose.msra.mxu0 0.0
        %3324 = vmatprep.subr.mxu0 0.0
        %3325 = vmatpush1.xpose.msra.mxu0 0.0
        %3326 = vmatprep.subr.mxu0 0.0
        %3327 = vmatpush1.xpose.msra.mxu0 0.0
        %3328 = vmatprep.subr.mxu0 0.0
        %3329 = vmatpush1.xpose.msra.mxu0 0.0
        %3330 = vmatprep.subr.mxu0 0.0
        %3331 = vmatpush1.xpose.msra.mxu0 0.0
        %3332 = vmatprep.subr.mxu0 0.0
        %3333 = vmatpush1.xpose.msra.mxu0 0.0
        %3334 = vmatprep.subr.mxu0 0.0
        %3335 = vmatpush1.xpose.msra.mxu0 0.0
        %3336 = vmatprep.subr.mxu0 0.0
        %3337 = vmatpush1.xpose.msra.mxu0 0.0
        %3338 = vmatprep.subr.mxu0 0.0
        %3339 = vmatpush1.xpose.msra.mxu0 0.0
        %3340 = vmatprep.subr.mxu0 0.0
        %3341 = vmatpush1.xpose.msra.mxu0 0.0
        %3342 = vmatprep.subr.mxu0 0.0
        %3343 = vmatpush1.xpose.msra.mxu0 0.0
        %3344 = vmatprep.subr.mxu0 0.0
        %3345 = vmatpush1.xpose.msra.mxu0 0.0
        %3346 = vmatprep.subr.mxu0 0.0
        %3347 = vmatpush1.xpose.msra.mxu0 0.0
        %3348 = vmatprep.subr.mxu0 0.0
        %3349 = vmatpush1.xpose.msra.mxu0 0.0
        %3350 = vmatprep.subr.mxu0 0.0
        %3351 = vmatpush1.xpose.msra.mxu0 0.0
        %3352 = vmatprep.subr.mxu0 0.0
        %3353 = vmatpush1.xpose.msra.mxu0 0.0
        %3354 = vmatprep.subr.mxu0 0.0
        %3355 = vmatpush1.xpose.msra.mxu0 0.0
        %3356 = vmatprep.subr.mxu0 0.0
        %3357 = vmatpush1.xpose.msra.mxu0 0.0
        %3358 = vmatprep.subr.mxu0 0.0
        %3359 = vmatpush1.xpose.msra.mxu0 0.0
        %3360 = vmatprep.subr.mxu0 0.0
        %3361 = vmatpush1.xpose.msra.mxu0 0.0
        %3362 = vmatprep.subr.mxu0 0.0
        %3363 = vmatpush1.xpose.msra.mxu0 0.0
        %3364 = vmatprep.subr.mxu0 0.0
        %3365 = vmatpush1.xpose.msra.mxu0 0.0
        %3366 = vmatprep.subr.mxu0 0.0
        %3367 = vmatpush1.xpose.msra.mxu0 0.0
        %3368 = vmatprep.mubr.f32.mxu0 0.0
        %3369 = vmatmul.mubr.f32.gmra.mrb[0].mxu0 %v3296
        %v3370 = vpop.f32.mrb[0].mxu0
        %v3371 = vadd.f32 0.0, %v3370
        %v3372 = vpop.f32.mrb[0].mxu0
        %3373 = vdwg.mxu0
        %v3374 = vsel %vm2540, %v3371, -inf
        %3375 = vmax.xlane.f32.xlu0 %v3374
        %v3376 = vpop.xlane.xlu0 %3375
        %v3377 = vsub.f32 %v3371, %v3376
        %v3378 = vmul.f32 %v3377, 1.442695
        %v3379 = vpow.pop %v3378
        %v3380 = vsel %vm2540, %v3379, 0.0
        %3381 = vadd.xlane.f32.xlu0 %v3380
        %v3382 = vpop.xlane.xlu0 %3381
        %v3383 = vrcp.pop %v3382
        %v3384 = vmul.f32 %v3379, %v3383
        %s3385 = scalar_lea.vmem %s10, 64
        %v3386 = vld [vmem:[%s3385] sm:$0xff]
        %v3387 = vld [vmem:[%s3385 + $0x8] sm:$0xff]
        %v3388 = vld [vmem:[%s3385 + $0x10] sm:$0xff]
        %v3389 = vld [vmem:[%s3385 + $0x18] sm:$0xff]
        %3390 = vmatprep.subr.mxu0 0.0
        %3391 = vmatpush1.msra.mxu0 %v3386
        %3392 = vmatprep.subr.mxu0 0.0
        %3393 = vmatpush1.msra.mxu0 %v3387
        %3394 = vmatprep.subr.mxu0 0.0
        %3395 = vmatpush1.msra.mxu0 %v3388
        %3396 = vmatprep.subr.mxu0 0.0
        %3397 = vmatpush1.msra.mxu0 %v3389
        %3398 = vmatprep.subr.mxu0 0.0
        %3399 = vmatpush1.msra.mxu0 0.0
        %3400 = vmatprep.subr.mxu0 0.0
        %3401 = vmatpush1.msra.mxu0 0.0
        %3402 = vmatprep.subr.mxu0 0.0
        %3403 = vmatpush1.msra.mxu0 0.0
        %3404 = vmatprep.subr.mxu0 0.0
        %3405 = vmatpush1.msra.mxu0 0.0
        %3406 = vmatprep.subr.mxu0 0.0
        %3407 = vmatpush1.msra.mxu0 0.0
        %3408 = vmatprep.subr.mxu0 0.0
        %3409 = vmatpush1.msra.mxu0 0.0
        %3410 = vmatprep.subr.mxu0 0.0
        %3411 = vmatpush1.msra.mxu0 0.0
        %3412 = vmatprep.subr.mxu0 0.0
        %3413 = vmatpush1.msra.mxu0 0.0
        %3414 = vmatprep.subr.mxu0 0.0
        %3415 = vmatpush1.msra.mxu0 0.0
        %3416 = vmatprep.subr.mxu0 0.0
        %3417 = vmatpush1.msra.mxu0 0.0
        %3418 = vmatprep.subr.mxu0 0.0
        %3419 = vmatpush1.msra.mxu0 0.0
        %3420 = vmatprep.subr.mxu0 0.0
        %3421 = vmatpush1.msra.mxu0 0.0
        %3422 = vmatprep.subr.mxu0 0.0
        %3423 = vmatpush1.msra.mxu0 0.0
        %3424 = vmatprep.subr.mxu0 0.0
        %3425 = vmatpush1.msra.mxu0 0.0
        %3426 = vmatprep.subr.mxu0 0.0
        %3427 = vmatpush1.msra.mxu0 0.0
        %3428 = vmatprep.subr.mxu0 0.0
        %3429 = vmatpush1.msra.mxu0 0.0
        %3430 = vmatprep.subr.mxu0 0.0
        %3431 = vmatpush1.msra.mxu0 0.0
        %3432 = vmatprep.subr.mxu0 0.0
        %3433 = vmatpush1.msra.mxu0 0.0
        %3434 = vmatprep.subr.mxu0 0.0
        %3435 = vmatpush1.msra.mxu0 0.0
        %3436 = vmatprep.subr.mxu0 0.0
        %3437 = vmatpush1.msra.mxu0 0.0
        %3438 = vmatprep.subr.mxu0 0.0
        %3439 = vmatpush1.msra.mxu0 0.0
        %3440 = vmatprep.subr.mxu0 0.0
        %3441 = vmatpush1.msra.mxu0 0.0
        %3442 = vmatprep.subr.mxu0 0.0
        %3443 = vmatpush1.msra.mxu0 0.0
        %3444 = vmatprep.subr.mxu0 0.0
        %3445 = vmatpush1.msra.mxu0 0.0
        %3446 = vmatprep.subr.mxu0 0.0
        %3447 = vmatpush1.msra.mxu0 0.0
        %3448 = vmatprep.subr.mxu0 0.0
        %3449 = vmatpush1.msra.mxu0 0.0
        %3450 = vmatprep.subr.mxu0 0.0
        %3451 = vmatpush1.msra.mxu0 0.0
        %3452 = vmatprep.subr.mxu0 0.0
        %3453 = vmatpush1.msra.mxu0 0.0
        %3454 = vmatprep.mubr.f32.mxu0 0.0
        %3455 = vmatmul.mubr.f32.gmra.mrb[0].mxu0 %v2557
        %v3456 = vpop.f32.mrb[0].mxu0
        %v3457 = vadd.f32 0.0, %v3456
        %v3458 = vpop.f32.mrb[0].mxu0
        %3459 = vmatprep.mubr.f32.mxu0 0.0
        %3460 = vmatmul.mubr.f32.gmra.mrb[0].mxu0 %v2560
        %v3461 = vpop.f32.mrb[0].mxu0
        %v3462 = vadd.f32 0.0, %v3461
        %v3463 = vpop.f32.mrb[0].mxu0
        %3464 = vdwg.mxu0
        %v3466 = vsel %vm2540, %v3384, 0
        %3468 = vmatprep.subr.mxu0 0.0
        %3469 = vmatpush1.msra.mxu0 %v3457
        %3470 = vmatprep.subr.mxu0 0.0
        %3471 = vmatpush1.msra.mxu0 %v3462
        %3472 = vmatprep.subr.mxu0 0.0
        %3473 = vmatpush1.msra.mxu0 0.0
        %3474 = vmatprep.subr.mxu0 0.0
        %3475 = vmatpush1.msra.mxu0 0.0
        %3476 = vmatprep.subr.mxu0 0.0
        %3477 = vmatpush1.msra.mxu0 0.0
        %3478 = vmatprep.subr.mxu0 0.0
        %3479 = vmatpush1.msra.mxu0 0.0
        %3480 = vmatprep.subr.mxu0 0.0
        %3481 = vmatpush1.msra.mxu0 0.0
        %3482 = vmatprep.subr.mxu0 0.0
        %3483 = vmatpush1.msra.mxu0 0.0
        %3484 = vmatprep.subr.mxu0 0.0
        %3485 = vmatpush1.msra.mxu0 0.0
        %3486 = vmatprep.subr.mxu0 0.0
        %3487 = vmatpush1.msra.mxu0 0.0
        %3488 = vmatprep.subr.mxu0 0.0
        %3489 = vmatpush1.msra.mxu0 0.0
        %3490 = vmatprep.subr.mxu0 0.0
        %3491 = vmatpush1.msra.mxu0 0.0
        %3492 = vmatprep.subr.mxu0 0.0
        %3493 = vmatpush1.msra.mxu0 0.0
        %3494 = vmatprep.subr.mxu0 0.0
        %3495 = vmatpush1.msra.mxu0 0.0
        %3496 = vmatprep.subr.mxu0 0.0
        %3497 = vmatpush1.msra.mxu0 0.0
        %3498 = vmatprep.subr.mxu0 0.0
        %3499 = vmatpush1.msra.mxu0 0.0
        %3500 = vmatprep.subr.mxu0 0.0
        %3501 = vmatpush1.msra.mxu0 0.0
        %3502 = vmatprep.subr.mxu0 0.0
        %3503 = vmatpush1.msra.mxu0 0.0
        %3504 = vmatprep.subr.mxu0 0.0
        %3505 = vmatpush1.msra.mxu0 0.0
        %3506 = vmatprep.subr.mxu0 0.0
        %3507 = vmatpush1.msra.mxu0 0.0
        %3508 = vmatprep.subr.mxu0 0.0
        %3509 = vmatpush1.msra.mxu0 0.0
        %3510 = vmatprep.subr.mxu0 0.0
        %3511 = vmatpush1.msra.mxu0 0.0
        %3512 = vmatprep.subr.mxu0 0.0
        %3513 = vmatpush1.msra.mxu0 0.0
        %3514 = vmatprep.subr.mxu0 0.0
        %3515 = vmatpush1.msra.mxu0 0.0
        %3516 = vmatprep.subr.mxu0 0.0
        %3517 = vmatpush1.msra.mxu0 0.0
        %3518 = vmatprep.subr.mxu0 0.0
        %3519 = vmatpush1.msra.mxu0 0.0
        %3520 = vmatprep.subr.mxu0 0.0
        %3521 = vmatpush1.msra.mxu0 0.0
        %3522 = vmatprep.subr.mxu0 0.0
        %3523 = vmatpush1.msra.mxu0 0.0
        %3524 = vmatprep.subr.mxu0 0.0
        %3525 = vmatpush1.msra.mxu0 0.0
        %3526 = vmatprep.subr.mxu0 0.0
        %3527 = vmatpush1.msra.mxu0 0.0
        %3528 = vmatprep.subr.mxu0 0.0
        %3529 = vmatpush1.msra.mxu0 0.0
        %3530 = vmatprep.subr.mxu0 0.0
        %3531 = vmatpush1.msra.mxu0 0.0
        %3532 = vmatprep.mubr.f32.mxu0 0.0
        %3533 = vmatmul.mubr.f32.gmra.mrb[0].mxu0 %v3466
        %v3534 = vpop.f32.mrb[0].mxu0
        %v3535 = vadd.f32 0.0, %v3534
        %v3536 = vpop.f32.mrb[0].mxu0
        %3537 = vdwg.mxu0
        %v3538 = vadd.f32 %v3121, %v3535
        %s3539 = scalar_lea.vmem %s8, 96
        %v3540 = vld [vmem:[%s3539] sm:$0xff]
        %v3541 = vld [vmem:[%s3539 + $0x8] sm:$0xff]
        %v3542 = vld [vmem:[%s3539 + $0x10] sm:$0xff]
        %v3543 = vld [vmem:[%s3539 + $0x18] sm:$0xff]
        %s3544 = scalar_lea.vmem %s9, 3
        %v3545 = vld [vmem:[%s3544] sm:$0x1]
        %v3547 = vlaneseq
        %v3548 = vshrl.u32 %v3547, 7
        %v3549 = vsub.s32 0, %v3548
        %v3550 = vrot.slane %v3545, %v3549
        %3552 = vmatprep.subr.mxu0 0.0
        %3553 = vmatpush1.msra.mxu0 %v3540
        %3554 = vmatprep.subr.mxu0 0.0
        %3555 = vmatpush1.msra.mxu0 %v3541
        %3556 = vmatprep.subr.mxu0 0.0
        %3557 = vmatpush1.msra.mxu0 %v3542
        %3558 = vmatprep.subr.mxu0 0.0
        %3559 = vmatpush1.msra.mxu0 %v3543
        %3560 = vmatprep.subr.mxu0 0.0
        %3561 = vmatpush1.msra.mxu0 0.0
        %3562 = vmatprep.subr.mxu0 0.0
        %3563 = vmatpush1.msra.mxu0 0.0
        %3564 = vmatprep.subr.mxu0 0.0
        %3565 = vmatpush1.msra.mxu0 0.0
        %3566 = vmatprep.subr.mxu0 0.0
        %3567 = vmatpush1.msra.mxu0 0.0
        %3568 = vmatprep.subr.mxu0 0.0
        %3569 = vmatpush1.msra.mxu0 0.0
        %3570 = vmatprep.subr.mxu0 0.0
        %3571 = vmatpush1.msra.mxu0 0.0
        %3572 = vmatprep.subr.mxu0 0.0
        %3573 = vmatpush1.msra.mxu0 0.0
        %3574 = vmatprep.subr.mxu0 0.0
        %3575 = vmatpush1.msra.mxu0 0.0
        %3576 = vmatprep.subr.mxu0 0.0
        %3577 = vmatpush1.msra.mxu0 0.0
        %3578 = vmatprep.subr.mxu0 0.0
        %3579 = vmatpush1.msra.mxu0 0.0
        %3580 = vmatprep.subr.mxu0 0.0
        %3581 = vmatpush1.msra.mxu0 0.0
        %3582 = vmatprep.subr.mxu0 0.0
        %3583 = vmatpush1.msra.mxu0 0.0
        %3584 = vmatprep.subr.mxu0 0.0
        %3585 = vmatpush1.msra.mxu0 0.0
        %3586 = vmatprep.subr.mxu0 0.0
        %3587 = vmatpush1.msra.mxu0 0.0
        %3588 = vmatprep.subr.mxu0 0.0
        %3589 = vmatpush1.msra.mxu0 0.0
        %3590 = vmatprep.subr.mxu0 0.0
        %3591 = vmatpush1.msra.mxu0 0.0
        %3592 = vmatprep.subr.mxu0 0.0
        %3593 = vmatpush1.msra.mxu0 0.0
        %3594 = vmatprep.subr.mxu0 0.0
        %3595 = vmatpush1.msra.mxu0 0.0
        %3596 = vmatprep.subr.mxu0 0.0
        %3597 = vmatpush1.msra.mxu0 0.0
        %3598 = vmatprep.subr.mxu0 0.0
        %3599 = vmatpush1.msra.mxu0 0.0
        %3600 = vmatprep.subr.mxu0 0.0
        %3601 = vmatpush1.msra.mxu0 0.0
        %3602 = vmatprep.subr.mxu0 0.0
        %3603 = vmatpush1.msra.mxu0 0.0
        %3604 = vmatprep.subr.mxu0 0.0
        %3605 = vmatpush1.msra.mxu0 0.0
        %3606 = vmatprep.subr.mxu0 0.0
        %3607 = vmatpush1.msra.mxu0 0.0
        %3608 = vmatprep.subr.mxu0 0.0
        %3609 = vmatpush1.msra.mxu0 0.0
        %3610 = vmatprep.subr.mxu0 0.0
        %3611 = vmatpush1.msra.mxu0 0.0
        %3612 = vmatprep.subr.mxu0 0.0
        %3613 = vmatpush1.msra.mxu0 0.0
        %3614 = vmatprep.subr.mxu0 0.0
        %3615 = vmatpush1.msra.mxu0 0.0
        %3616 = vmatprep.mubr.f32.mxu0 0.0
        %3617 = vmatmul.mubr.f32.gmra.mrb[0].mxu0 %v2295
        %v3618 = vpop.f32.mrb[0].mxu0
        %v3619 = vadd.f32 %v3550, %v3618
        %v3620 = vpop.f32.mrb[0].mxu0
        %3621 = vdwg.mxu0
        %s3622 = scalar_lea.vmem %s8, 224
        %v3623 = vld [vmem:[%s3622] sm:$0xff]
        %v3624 = vld [vmem:[%s3622 + $0x8] sm:$0xff]
        %v3625 = vld [vmem:[%s3622 + $0x10] sm:$0xff]
        %v3626 = vld [vmem:[%s3622 + $0x18] sm:$0xff]
        %s3627 = scalar_lea.vmem %s9, 7
        %v3628 = vld [vmem:[%s3627] sm:$0x1]
        %v3630 = vlaneseq
        %v3631 = vshrl.u32 %v3630, 7
        %v3632 = vsub.s32 0, %v3631
        %v3633 = vrot.slane %v3628, %v3632
        %3635 = vmatprep.subr.mxu0 0.0
        %3636 = vmatpush1.msra.mxu0 %v3623
        %3637 = vmatprep.subr.mxu0 0.0
        %3638 = vmatpush1.msra.mxu0 %v3624
        %3639 = vmatprep.subr.mxu0 0.0
        %3640 = vmatpush1.msra.mxu0 %v3625
        %3641 = vmatprep.subr.mxu0 0.0
        %3642 = vmatpush1.msra.mxu0 %v3626
        %3643 = vmatprep.subr.mxu0 0.0
        %3644 = vmatpush1.msra.mxu0 0.0
        %3645 = vmatprep.subr.mxu0 0.0
        %3646 = vmatpush1.msra.mxu0 0.0
        %3647 = vmatprep.subr.mxu0 0.0
        %3648 = vmatpush1.msra.mxu0 0.0
        %3649 = vmatprep.subr.mxu0 0.0
        %3650 = vmatpush1.msra.mxu0 0.0
        %3651 = vmatprep.subr.mxu0 0.0
        %3652 = vmatpush1.msra.mxu0 0.0
        %3653 = vmatprep.subr.mxu0 0.0
        %3654 = vmatpush1.msra.mxu0 0.0
        %3655 = vmatprep.subr.mxu0 0.0
        %3656 = vmatpush1.msra.mxu0 0.0
        %3657 = vmatprep.subr.mxu0 0.0
        %3658 = vmatpush1.msra.mxu0 0.0
        %3659 = vmatprep.subr.mxu0 0.0
        %3660 = vmatpush1.msra.mxu0 0.0
        %3661 = vmatprep.subr.mxu0 0.0
        %3662 = vmatpush1.msra.mxu0 0.0
        %3663 = vmatprep.subr.mxu0 0.0
        %3664 = vmatpush1.msra.mxu0 0.0
        %3665 = vmatprep.subr.mxu0 0.0
        %3666 = vmatpush1.msra.mxu0 0.0
        %3667 = vmatprep.subr.mxu0 0.0
        %3668 = vmatpush1.msra.mxu0 0.0
        %3669 = vmatprep.subr.mxu0 0.0
        %3670 = vmatpush1.msra.mxu0 0.0
        %3671 = vmatprep.subr.mxu0 0.0
        %3672 = vmatpush1.msra.mxu0 0.0
        %3673 = vmatprep.subr.mxu0 0.0
        %3674 = vmatpush1.msra.mxu0 0.0
        %3675 = vmatprep.subr.mxu0 0.0
        %3676 = vmatpush1.msra.mxu0 0.0
        %3677 = vmatprep.subr.mxu0 0.0
        %3678 = vmatpush1.msra.mxu0 0.0
        %3679 = vmatprep.subr.mxu0 0.0
        %3680 = vmatpush1.msra.mxu0 0.0
        %3681 = vmatprep.subr.mxu0 0.0
        %3682 = vmatpush1.msra.mxu0 0.0
        %3683 = vmatprep.subr.mxu0 0.0
        %3684 = vmatpush1.msra.mxu0 0.0
        %3685 = vmatprep.subr.mxu0 0.0
        %3686 = vmatpush1.msra.mxu0 0.0
        %3687 = vmatprep.subr.mxu0 0.0
        %3688 = vmatpush1.msra.mxu0 0.0
        %3689 = vmatprep.subr.mxu0 0.0
        %3690 = vmatpush1.msra.mxu0 0.0
        %3691 = vmatprep.subr.mxu0 0.0
        %3692 = vmatpush1.msra.mxu0 0.0
        %3693 = vmatprep.subr.mxu0 0.0
        %3694 = vmatpush1.msra.mxu0 0.0
        %3695 = vmatprep.subr.mxu0 0.0
        %3696 = vmatpush1.msra.mxu0 0.0
        %3697 = vmatprep.subr.mxu0 0.0
        %3698 = vmatpush1.msra.mxu0 0.0
        %3699 = vmatprep.mubr.f32.mxu0 0.0
        %3700 = vmatmul.mubr.f32.gmra.mrb[0].mxu0 %v2381
        %v3701 = vpop.f32.mrb[0].mxu0
        %v3702 = vadd.f32 %v3633, %v3701
        %v3703 = vpop.f32.mrb[0].mxu0
        %3704 = vmatprep.mubr.f32.mxu0 0.0
        %3705 = vmatmul.mubr.f32.gmra.mrb[0].mxu0 %v2384
        %v3706 = vpop.f32.mrb[0].mxu0
        %v3707 = vadd.f32 %v3633, %v3706
        %v3708 = vpop.f32.mrb[0].mxu0
        %3709 = vdwg.mxu0
        %v3711 = vsel %vm806, %v3619, 0
        %v3714 = vsel %vm806, %v3702, 0
        %v3717 = vsel %vm806, %v3707, 0
        %3719 = vmatprep.subr.mxu0 0.0
        %3720 = vmatpush1.xpose.msra.mxu0 %v3714
        %3721 = vmatprep.subr.mxu0 0.0
        %3722 = vmatpush1.xpose.msra.mxu0 %v3717
        %3723 = vmatprep.subr.mxu0 0.0
        %3724 = vmatpush1.xpose.msra.mxu0 0.0
        %3725 = vmatprep.subr.mxu0 0.0
        %3726 = vmatpush1.xpose.msra.mxu0 0.0
        %3727 = vmatprep.subr.mxu0 0.0
        %3728 = vmatpush1.xpose.msra.mxu0 0.0
        %3729 = vmatprep.subr.mxu0 0.0
        %3730 = vmatpush1.xpose.msra.mxu0 0.0
        %3731 = vmatprep.subr.mxu0 0.0
        %3732 = vmatpush1.xpose.msra.mxu0 0.0
        %3733 = vmatprep.subr.mxu0 0.0
        %3734 = vmatpush1.xpose.msra.mxu0 0.0
        %3735 = vmatprep.subr.mxu0 0.0
        %3736 = vmatpush1.xpose.msra.mxu0 0.0
        %3737 = vmatprep.subr.mxu0 0.0
        %3738 = vmatpush1.xpose.msra.mxu0 0.0
        %3739 = vmatprep.subr.mxu0 0.0
        %3740 = vmatpush1.xpose.msra.mxu0 0.0
        %3741 = vmatprep.subr.mxu0 0.0
        %3742 = vmatpush1.xpose.msra.mxu0 0.0
        %3743 = vmatprep.subr.mxu0 0.0
        %3744 = vmatpush1.xpose.msra.mxu0 0.0
        %3745 = vmatprep.subr.mxu0 0.0
        %3746 = vmatpush1.xpose.msra.mxu0 0.0
        %3747 = vmatprep.subr.mxu0 0.0
        %3748 = vmatpush1.xpose.msra.mxu0 0.0
        %3749 = vmatprep.subr.mxu0 0.0
        %3750 = vmatpush1.xpose.msra.mxu0 0.0
        %3751 = vmatprep.subr.mxu0 0.0
        %3752 = vmatpush1.xpose.msra.mxu0 0.0
        %3753 = vmatprep.subr.mxu0 0.0
        %3754 = vmatpush1.xpose.msra.mxu0 0.0
        %3755 = vmatprep.subr.mxu0 0.0
        %3756 = vmatpush1.xpose.msra.mxu0 0.0
        %3757 = vmatprep.subr.mxu0 0.0
        %3758 = vmatpush1.xpose.msra.mxu0 0.0
        %3759 = vmatprep.subr.mxu0 0.0
        %3760 = vmatpush1.xpose.msra.mxu0 0.0
        %3761 = vmatprep.subr.mxu0 0.0
        %3762 = vmatpush1.xpose.msra.mxu0 0.0
        %3763 = vmatprep.subr.mxu0 0.0
        %3764 = vmatpush1.xpose.msra.mxu0 0.0
        %3765 = vmatprep.subr.mxu0 0.0
        %3766 = vmatpush1.xpose.msra.mxu0 0.0
        %3767 = vmatprep.subr.mxu0 0.0
        %3768 = vmatpush1.xpose.msra.mxu0 0.0
        %3769 = vmatprep.subr.mxu0 0.0
        %3770 = vmatpush1.xpose.msra.mxu0 0.0
        %3771 = vmatprep.subr.mxu0 0.0
        %3772 = vmatpush1.xpose.msra.mxu0 0.0
        %3773 = vmatprep.subr.mxu0 0.0
        %3774 = vmatpush1.xpose.msra.mxu0 0.0
        %3775 = vmatprep.subr.mxu0 0.0
        %3776 = vmatpush1.xpose.msra.mxu0 0.0
        %3777 = vmatprep.subr.mxu0 0.0
        %3778 = vmatpush1.xpose.msra.mxu0 0.0
        %3779 = vmatprep.subr.mxu0 0.0
        %3780 = vmatpush1.xpose.msra.mxu0 0.0
        %3781 = vmatprep.subr.mxu0 0.0
        %3782 = vmatpush1.xpose.msra.mxu0 0.0
        %3783 = vmatprep.mubr.f32.mxu0 0.0
        %3784 = vmatmul.mubr.f32.gmra.mrb[0].mxu0 %v3711
        %v3785 = vpop.f32.mrb[0].mxu0
        %v3786 = vadd.f32 0.0, %v3785
        %v3787 = vpop.f32.mrb[0].mxu0
        %3788 = vdwg.mxu0
        %v3789 = vsel %vm2540, %v3786, -inf
        %3790 = vmax.xlane.f32.xlu0 %v3789
        %v3791 = vpop.xlane.xlu0 %3790
        %v3792 = vsub.f32 %v3786, %v3791
        %v3793 = vmul.f32 %v3792, 1.442695
        %v3794 = vpow.pop %v3793
        %v3795 = vsel %vm2540, %v3794, 0.0
        %3796 = vadd.xlane.f32.xlu0 %v3795
        %v3797 = vpop.xlane.xlu0 %3796
        %v3798 = vrcp.pop %v3797
        %v3799 = vmul.f32 %v3794, %v3798
        %s3800 = scalar_lea.vmem %s10, 96
        %v3801 = vld [vmem:[%s3800] sm:$0xff]
        %v3802 = vld [vmem:[%s3800 + $0x8] sm:$0xff]
        %v3803 = vld [vmem:[%s3800 + $0x10] sm:$0xff]
        %v3804 = vld [vmem:[%s3800 + $0x18] sm:$0xff]
        %3805 = vmatprep.subr.mxu0 0.0
        %3806 = vmatpush1.msra.mxu0 %v3801
        %3807 = vmatprep.subr.mxu0 0.0
        %3808 = vmatpush1.msra.mxu0 %v3802
        %3809 = vmatprep.subr.mxu0 0.0
        %3810 = vmatpush1.msra.mxu0 %v3803
        %3811 = vmatprep.subr.mxu0 0.0
        %3812 = vmatpush1.msra.mxu0 %v3804
        %3813 = vmatprep.subr.mxu0 0.0
        %3814 = vmatpush1.msra.mxu0 0.0
        %3815 = vmatprep.subr.mxu0 0.0
        %3816 = vmatpush1.msra.mxu0 0.0
        %3817 = vmatprep.subr.mxu0 0.0
        %3818 = vmatpush1.msra.mxu0 0.0
        %3819 = vmatprep.subr.mxu0 0.0
        %3820 = vmatpush1.msra.mxu0 0.0
        %3821 = vmatprep.subr.mxu0 0.0
        %3822 = vmatpush1.msra.mxu0 0.0
        %3823 = vmatprep.subr.mxu0 0.0
        %3824 = vmatpush1.msra.mxu0 0.0
        %3825 = vmatprep.subr.mxu0 0.0
        %3826 = vmatpush1.msra.mxu0 0.0
        %3827 = vmatprep.subr.mxu0 0.0
        %3828 = vmatpush1.msra.mxu0 0.0
        %3829 = vmatprep.subr.mxu0 0.0
        %3830 = vmatpush1.msra.mxu0 0.0
        %3831 = vmatprep.subr.mxu0 0.0
        %3832 = vmatpush1.msra.mxu0 0.0
        %3833 = vmatprep.subr.mxu0 0.0
        %3834 = vmatpush1.msra.mxu0 0.0
        %3835 = vmatprep.subr.mxu0 0.0
        %3836 = vmatpush1.msra.mxu0 0.0
        %3837 = vmatprep.subr.mxu0 0.0
        %3838 = vmatpush1.msra.mxu0 0.0
        %3839 = vmatprep.subr.mxu0 0.0
        %3840 = vmatpush1.msra.mxu0 0.0
        %3841 = vmatprep.subr.mxu0 0.0
        %3842 = vmatpush1.msra.mxu0 0.0
        %3843 = vmatprep.subr.mxu0 0.0
        %3844 = vmatpush1.msra.mxu0 0.0
        %3845 = vmatprep.subr.mxu0 0.0
        %3846 = vmatpush1.msra.mxu0 0.0
        %3847 = vmatprep.subr.mxu0 0.0
        %3848 = vmatpush1.msra.mxu0 0.0
        %3849 = vmatprep.subr.mxu0 0.0
        %3850 = vmatpush1.msra.mxu0 0.0
        %3851 = vmatprep.subr.mxu0 0.0
        %3852 = vmatpush1.msra.mxu0 0.0
        %3853 = vmatprep.subr.mxu0 0.0
        %3854 = vmatpush1.msra.mxu0 0.0
        %3855 = vmatprep.subr.mxu0 0.0
        %3856 = vmatpush1.msra.mxu0 0.0
        %3857 = vmatprep.subr.mxu0 0.0
        %3858 = vmatpush1.msra.mxu0 0.0
        %3859 = vmatprep.subr.mxu0 0.0
        %3860 = vmatpush1.msra.mxu0 0.0
        %3861 = vmatprep.subr.mxu0 0.0
        %3862 = vmatpush1.msra.mxu0 0.0
        %3863 = vmatprep.subr.mxu0 0.0
        %3864 = vmatpush1.msra.mxu0 0.0
        %3865 = vmatprep.subr.mxu0 0.0
        %3866 = vmatpush1.msra.mxu0 0.0
        %3867 = vmatprep.subr.mxu0 0.0
        %3868 = vmatpush1.msra.mxu0 0.0
        %3869 = vmatprep.mubr.f32.mxu0 0.0
        %3870 = vmatmul.mubr.f32.gmra.mrb[0].mxu0 %v2557
        %v3871 = vpop.f32.mrb[0].mxu0
        %v3872 = vadd.f32 0.0, %v3871
        %v3873 = vpop.f32.mrb[0].mxu0
        %3874 = vmatprep.mubr.f32.mxu0 0.0
        %3875 = vmatmul.mubr.f32.gmra.mrb[0].mxu0 %v2560
        %v3876 = vpop.f32.mrb[0].mxu0
        %v3877 = vadd.f32 0.0, %v3876
        %v3878 = vpop.f32.mrb[0].mxu0
        %3879 = vdwg.mxu0
        %v3881 = vsel %vm2540, %v3799, 0
        %3883 = vmatprep.subr.mxu0 0.0
        %3884 = vmatpush1.msra.mxu0 %v3872
        %3885 = vmatprep.subr.mxu0 0.0
        %3886 = vmatpush1.msra.mxu0 %v3877
        %3887 = vmatprep.subr.mxu0 0.0
        %3888 = vmatpush1.msra.mxu0 0.0
        %3889 = vmatprep.subr.mxu0 0.0
        %3890 = vmatpush1.msra.mxu0 0.0
        %3891 = vmatprep.subr.mxu0 0.0
        %3892 = vmatpush1.msra.mxu0 0.0
        %3893 = vmatprep.subr.mxu0 0.0
        %3894 = vmatpush1.msra.mxu0 0.0
        %3895 = vmatprep.subr.mxu0 0.0
        %3896 = vmatpush1.msra.mxu0 0.0
        %3897 = vmatprep.subr.mxu0 0.0
        %3898 = vmatpush1.msra.mxu0 0.0
        %3899 = vmatprep.subr.mxu0 0.0
        %3900 = vmatpush1.msra.mxu0 0.0
        %3901 = vmatprep.subr.mxu0 0.0
        %3902 = vmatpush1.msra.mxu0 0.0
        %3903 = vmatprep.subr.mxu0 0.0
        %3904 = vmatpush1.msra.mxu0 0.0
        %3905 = vmatprep.subr.mxu0 0.0
        %3906 = vmatpush1.msra.mxu0 0.0
        %3907 = vmatprep.subr.mxu0 0.0
        %3908 = vmatpush1.msra.mxu0 0.0
        %3909 = vmatprep.subr.mxu0 0.0
        %3910 = vmatpush1.msra.mxu0 0.0
        %3911 = vmatprep.subr.mxu0 0.0
        %3912 = vmatpush1.msra.mxu0 0.0
        %3913 = vmatprep.subr.mxu0 0.0
        %3914 = vmatpush1.msra.mxu0 0.0
        %3915 = vmatprep.subr.mxu0 0.0
        %3916 = vmatpush1.msra.mxu0 0.0
        %3917 = vmatprep.subr.mxu0 0.0
        %3918 = vmatpush1.msra.mxu0 0.0
        %3919 = vmatprep.subr.mxu0 0.0
        %3920 = vmatpush1.msra.mxu0 0.0
        %3921 = vmatprep.subr.mxu0 0.0
        %3922 = vmatpush1.msra.mxu0 0.0
        %3923 = vmatprep.subr.mxu0 0.0
        %3924 = vmatpush1.msra.mxu0 0.0
        %3925 = vmatprep.subr.mxu0 0.0
        %3926 = vmatpush1.msra.mxu0 0.0
        %3927 = vmatprep.subr.mxu0 0.0
        %3928 = vmatpush1.msra.mxu0 0.0
        %3929 = vmatprep.subr.mxu0 0.0
        %3930 = vmatpush1.msra.mxu0 0.0
        %3931 = vmatprep.subr.mxu0 0.0
        %3932 = vmatpush1.msra.mxu0 0.0
        %3933 = vmatprep.subr.mxu0 0.0
        %3934 = vmatpush1.msra.mxu0 0.0
        %3935 = vmatprep.subr.mxu0 0.0
        %3936 = vmatpush1.msra.mxu0 0.0
        %3937 = vmatprep.subr.mxu0 0.0
        %3938 = vmatpush1.msra.mxu0 0.0
        %3939 = vmatprep.subr.mxu0 0.0
        %3940 = vmatpush1.msra.mxu0 0.0
        %3941 = vmatprep.subr.mxu0 0.0
        %3942 = vmatpush1.msra.mxu0 0.0
        %3943 = vmatprep.subr.mxu0 0.0
        %3944 = vmatpush1.msra.mxu0 0.0
        %3945 = vmatprep.subr.mxu0 0.0
        %3946 = vmatpush1.msra.mxu0 0.0
        %3947 = vmatprep.mubr.f32.mxu0 0.0
        %3948 = vmatmul.mubr.f32.gmra.mrb[0].mxu0 %v3881
        %v3949 = vpop.f32.mrb[0].mxu0
        %v3950 = vadd.f32 0.0, %v3949
        %v3951 = vpop.f32.mrb[0].mxu0
        %3952 = vdwg.mxu0
        %v3953 = vadd.f32 %v3538, %v3950
        %v3954 = vld [vmem:[%s11] sm:$0x1]
        %v3956 = vlaneseq
        %v3957 = vshrl.u32 %v3956, 7
        %v3958 = vsub.s32 0, %v3957
        %v3959 = vrot.slane %v3954, %v3958
        %v3961 = vadd.f32 %v3953, %v3959
        %v3962 = vadd.f32 %v2281, %v3961
        %v3963 = vsel %vm649, %v3962, 0.0
        %3964 = vadd.xlane.f32.xlu0 %v3963
        %v3965 = vpop.xlane.xlu0 %3964
        %v3966 = vmul.f32 %v3965, %v2261
        %v3967 = vsub.f32 %v3962, %v3966
        %v3968 = vmul.f32 %v3967, %v3967
        %v3969 = vsel %vm649, %v3968, 0.0
        %3970 = vadd.xlane.f32.xlu0 %v3969
        %v3971 = vpop.xlane.xlu0 %3970
        %v3972 = vmul.f32 %v3971, %v2261
        %v3973 = vadd.f32 %v3972, 1e-05
        %v3974 = vrsqrt.pop %v3973
        %v3975 = vmul.f32 %v3967, %v3974
        %v3976 = vlaneseq
        %v3977 = vshrl.u32 %v3976, 7
        %v3978 = vsub.s32 2, %v3977
        %v3979 = vrot.slane %v636, %v3978
        %v3980 = vmul.f32 %v3975, %v3979
        %v3981 = vlaneseq
        %v3982 = vshrl.u32 %v3981, 7
        %v3983 = vsub.s32 3, %v3982
        %v3984 = vrot.slane %v636, %v3983
        %v3985 = vadd.f32 %v3980, %v3984
        %v3986 = vld [vmem:[%s12] sm:$0xff]
        %v3987 = vld [vmem:[%s12 + $0x8] sm:$0xff]
        %v3988 = vld [vmem:[%s12 + $0x10] sm:$0xff]
        %v3989 = vld [vmem:[%s12 + $0x18] sm:$0xff]
        %v3990 = vld [vmem:[%s13] sm:$0x1]
        %v3992 = vlaneseq
        %v3993 = vshrl.u32 %v3992, 7
        %v3994 = vsub.s32 0, %v3993
        %v3995 = vrot.slane %v3990, %v3994
        %v3998 = vsel %vm649, %v3985, 0
        %4000 = vmatprep.subr.mxu0 0.0
        %4001 = vmatpush1.msra.mxu0 %v3986
        %4002 = vmatprep.subr.mxu0 0.0
        %4003 = vmatpush1.msra.mxu0 %v3987
        %4004 = vmatprep.subr.mxu0 0.0
        %4005 = vmatpush1.msra.mxu0 %v3988
        %4006 = vmatprep.subr.mxu0 0.0
        %4007 = vmatpush1.msra.mxu0 %v3989
        %4008 = vmatprep.subr.mxu0 0.0
        %4009 = vmatpush1.msra.mxu0 0.0
        %4010 = vmatprep.subr.mxu0 0.0
        %4011 = vmatpush1.msra.mxu0 0.0
        %4012 = vmatprep.subr.mxu0 0.0
        %4013 = vmatpush1.msra.mxu0 0.0
        %4014 = vmatprep.subr.mxu0 0.0
        %4015 = vmatpush1.msra.mxu0 0.0
        %4016 = vmatprep.subr.mxu0 0.0
        %4017 = vmatpush1.msra.mxu0 0.0
        %4018 = vmatprep.subr.mxu0 0.0
        %4019 = vmatpush1.msra.mxu0 0.0
        %4020 = vmatprep.subr.mxu0 0.0
        %4021 = vmatpush1.msra.mxu0 0.0
        %4022 = vmatprep.subr.mxu0 0.0
        %4023 = vmatpush1.msra.mxu0 0.0
        %4024 = vmatprep.subr.mxu0 0.0
        %4025 = vmatpush1.msra.mxu0 0.0
        %4026 = vmatprep.subr.mxu0 0.0
        %4027 = vmatpush1.msra.mxu0 0.0
        %4028 = vmatprep.subr.mxu0 0.0
        %4029 = vmatpush1.msra.mxu0 0.0
        %4030 = vmatprep.subr.mxu0 0.0
        %4031 = vmatpush1.msra.mxu0 0.0
        %4032 = vmatprep.subr.mxu0 0.0
        %4033 = vmatpush1.msra.mxu0 0.0
        %4034 = vmatprep.subr.mxu0 0.0
        %4035 = vmatpush1.msra.mxu0 0.0
        %4036 = vmatprep.subr.mxu0 0.0
        %4037 = vmatpush1.msra.mxu0 0.0
        %4038 = vmatprep.subr.mxu0 0.0
        %4039 = vmatpush1.msra.mxu0 0.0
        %4040 = vmatprep.subr.mxu0 0.0
        %4041 = vmatpush1.msra.mxu0 0.0
        %4042 = vmatprep.subr.mxu0 0.0
        %4043 = vmatpush1.msra.mxu0 0.0
        %4044 = vmatprep.subr.mxu0 0.0
        %4045 = vmatpush1.msra.mxu0 0.0
        %4046 = vmatprep.subr.mxu0 0.0
        %4047 = vmatpush1.msra.mxu0 0.0
        %4048 = vmatprep.subr.mxu0 0.0
        %4049 = vmatpush1.msra.mxu0 0.0
        %4050 = vmatprep.subr.mxu0 0.0
        %4051 = vmatpush1.msra.mxu0 0.0
        %4052 = vmatprep.subr.mxu0 0.0
        %4053 = vmatpush1.msra.mxu0 0.0
        %4054 = vmatprep.subr.mxu0 0.0
        %4055 = vmatpush1.msra.mxu0 0.0
        %4056 = vmatprep.subr.mxu0 0.0
        %4057 = vmatpush1.msra.mxu0 0.0
        %4058 = vmatprep.subr.mxu0 0.0
        %4059 = vmatpush1.msra.mxu0 0.0
        %4060 = vmatprep.subr.mxu0 0.0
        %4061 = vmatpush1.msra.mxu0 0.0
        %4062 = vmatprep.subr.mxu0 0.0
        %4063 = vmatpush1.msra.mxu0 0.0
        %4064 = vmatprep.mubr.f32.mxu0 0.0
        %4065 = vmatmul.mubr.f32.gmra.mrb[0].mxu0 %v3998
        %v4066 = vpop.f32.mrb[0].mxu0
        %v4067 = vadd.f32 %v3995, %v4066
        %v4068 = vpop.f32.mrb[0].mxu0
        %4069 = vdwg.mxu0
        %v4070 = vmax.f32 %v4067, 0.0
        %v4071 = vld [vmem:[%s14] sm:$0xff]
        %v4072 = vld [vmem:[%s14 + $0x8] sm:$0xff]
        %v4073 = vld [vmem:[%s14 + $0x10] sm:$0xff]
        %v4074 = vld [vmem:[%s14 + $0x18] sm:$0xff]
        %v4075 = vld [vmem:[%s14 + $0x20] sm:$0xff]
        %v4076 = vld [vmem:[%s14 + $0x28] sm:$0xff]
        %v4077 = vld [vmem:[%s14 + $0x30] sm:$0xff]
        %v4078 = vld [vmem:[%s14 + $0x38] sm:$0xff]
        %v4079 = vld [vmem:[%s15] sm:$0x1]
        %v4081 = vlaneseq
        %v4082 = vshrl.u32 %v4081, 7
        %v4083 = vsub.s32 0, %v4082
        %v4084 = vrot.slane %v4079, %v4083
        %vm4086 = vcmask 523264
        %v4088 = vsel %vm4086, %v4070, 0
        %4090 = vmatprep.subr.mxu0 0.0
        %4091 = vmatpush1.msra.mxu0 %v4071
        %4092 = vmatprep.subr.mxu0 0.0
        %4093 = vmatpush1.msra.mxu0 %v4072
        %4094 = vmatprep.subr.mxu0 0.0
        %4095 = vmatpush1.msra.mxu0 %v4073
        %4096 = vmatprep.subr.mxu0 0.0
        %4097 = vmatpush1.msra.mxu0 %v4074
        %4098 = vmatprep.subr.mxu0 0.0
        %4099 = vmatpush1.msra.mxu0 %v4075
        %4100 = vmatprep.subr.mxu0 0.0
        %4101 = vmatpush1.msra.mxu0 %v4076
        %4102 = vmatprep.subr.mxu0 0.0
        %4103 = vmatpush1.msra.mxu0 %v4077
        %4104 = vmatprep.subr.mxu0 0.0
        %4105 = vmatpush1.msra.mxu0 %v4078
        %4106 = vmatprep.subr.mxu0 0.0
        %4107 = vmatpush1.msra.mxu0 0.0
        %4108 = vmatprep.subr.mxu0 0.0
        %4109 = vmatpush1.msra.mxu0 0.0
        %4110 = vmatprep.subr.mxu0 0.0
        %4111 = vmatpush1.msra.mxu0 0.0
        %4112 = vmatprep.subr.mxu0 0.0
        %4113 = vmatpush1.msra.mxu0 0.0
        %4114 = vmatprep.subr.mxu0 0.0
        %4115 = vmatpush1.msra.mxu0 0.0
        %4116 = vmatprep.subr.mxu0 0.0
        %4117 = vmatpush1.msra.mxu0 0.0
        %4118 = vmatprep.subr.mxu0 0.0
        %4119 = vmatpush1.msra.mxu0 0.0
        %4120 = vmatprep.subr.mxu0 0.0
        %4121 = vmatpush1.msra.mxu0 0.0
        %4122 = vmatprep.subr.mxu0 0.0
        %4123 = vmatpush1.msra.mxu0 0.0
        %4124 = vmatprep.subr.mxu0 0.0
        %4125 = vmatpush1.msra.mxu0 0.0
        %4126 = vmatprep.subr.mxu0 0.0
        %4127 = vmatpush1.msra.mxu0 0.0
        %4128 = vmatprep.subr.mxu0 0.0
        %4129 = vmatpush1.msra.mxu0 0.0
        %4130 = vmatprep.subr.mxu0 0.0
        %4131 = vmatpush1.msra.mxu0 0.0
        %4132 = vmatprep.subr.mxu0 0.0
        %4133 = vmatpush1.msra.mxu0 0.0
        %4134 = vmatprep.subr.mxu0 0.0
        %4135 = vmatpush1.msra.mxu0 0.0
        %4136 = vmatprep.subr.mxu0 0.0
        %4137 = vmatpush1.msra.mxu0 0.0
        %4138 = vmatprep.subr.mxu0 0.0
        %4139 = vmatpush1.msra.mxu0 0.0
        %4140 = vmatprep.subr.mxu0 0.0
        %4141 = vmatpush1.msra.mxu0 0.0
        %4142 = vmatprep.subr.mxu0 0.0
        %4143 = vmatpush1.msra.mxu0 0.0
        %4144 = vmatprep.subr.mxu0 0.0
        %4145 = vmatpush1.msra.mxu0 0.0
        %4146 = vmatprep.subr.mxu0 0.0
        %4147 = vmatpush1.msra.mxu0 0.0
        %4148 = vmatprep.subr.mxu0 0.0
        %4149 = vmatpush1.msra.mxu0 0.0
        %4150 = vmatprep.subr.mxu0 0.0
        %4151 = vmatpush1.msra.mxu0 0.0
        %4152 = vmatprep.subr.mxu0 0.0
        %4153 = vmatpush1.msra.mxu0 0.0
        %4154 = vmatprep.mubr.f32.mxu0 0.0
        %4155 = vmatmul.mubr.f32.gmra.mrb[0].mxu0 %v4088
        %v4156 = vpop.f32.mrb[0].mxu0
        %v4157 = vadd.f32 %v4084, %v4156
        %v4158 = vpop.f32.mrb[0].mxu0
        %4159 = vdwg.mxu0
        %v4160 = vadd.f32 %v3985, %v4157
        %v4161 = vsel %vm649, %v4160, 0.0
        %4162 = vadd.xlane.f32.xlu0 %v4161
        %v4163 = vpop.xlane.xlu0 %4162
        %v4164 = vmul.f32 %v4163, %v2261
        %v4165 = vsub.f32 %v4160, %v4164
        %v4166 = vmul.f32 %v4165, %v4165
        %v4167 = vsel %vm649, %v4166, 0.0
        %4168 = vadd.xlane.f32.xlu0 %v4167
        %v4169 = vpop.xlane.xlu0 %4168
        %v4170 = vmul.f32 %v4169, %v2261
        %v4171 = vadd.f32 %v4170, 1e-05
        %v4172 = vrsqrt.pop %v4171
        %v4173 = vmul.f32 %v4165, %v4172
        %v4174 = vlaneseq
        %v4175 = vshrl.u32 %v4174, 7
        %v4176 = vsub.s32 4, %v4175
        %v4177 = vrot.slane %v636, %v4176
        %v4178 = vmul.f32 %v4173, %v4177
        %v4179 = vlaneseq
        %v4180 = vshrl.u32 %v4179, 7
        %v4181 = vsub.s32 5, %v4180
        %v4182 = vrot.slane %v636, %v4181
        %v4183 = vadd.f32 %v4178, %v4182
        %s4184 = scalar_lea.vmem %s16, 8
        %v4185 = vld [vmem:[%s4184] sm:$0x3f]
        %v4186 = vadd.f32 %v4183, %v631
        %s4187 = scalar_lea.vmem %s4, 256
        %v4188 = vld [vmem:[%s4187] sm:$0xff]
        %v4189 = vld [vmem:[%s4187 + $0x8] sm:$0xff]
        %v4190 = vld [vmem:[%s4187 + $0x10] sm:$0xff]
        %v4191 = vld [vmem:[%s4187 + $0x18] sm:$0xff]
        %s4192 = scalar_lea.vmem %s5, 8
        %v4193 = vld [vmem:[%s4192] sm:$0x1]
        %v4195 = vlaneseq
        %v4196 = vshrl.u32 %v4195, 7
        %v4197 = vsub.s32 0, %v4196
        %v4198 = vrot.slane %v4193, %v4197
        %v4201 = vsel %vm649, %v4186, 0
        %4203 = vmatprep.subr.mxu0 0.0
        %4204 = vmatpush1.msra.mxu0 %v4188
        %4205 = vmatprep.subr.mxu0 0.0
        %4206 = vmatpush1.msra.mxu0 %v4189
        %4207 = vmatprep.subr.mxu0 0.0
        %4208 = vmatpush1.msra.mxu0 %v4190
        %4209 = vmatprep.subr.mxu0 0.0
        %4210 = vmatpush1.msra.mxu0 %v4191
        %4211 = vmatprep.subr.mxu0 0.0
        %4212 = vmatpush1.msra.mxu0 0.0
        %4213 = vmatprep.subr.mxu0 0.0
        %4214 = vmatpush1.msra.mxu0 0.0
        %4215 = vmatprep.subr.mxu0 0.0
        %4216 = vmatpush1.msra.mxu0 0.0
        %4217 = vmatprep.subr.mxu0 0.0
        %4218 = vmatpush1.msra.mxu0 0.0
        %4219 = vmatprep.subr.mxu0 0.0
        %4220 = vmatpush1.msra.mxu0 0.0
        %4221 = vmatprep.subr.mxu0 0.0
        %4222 = vmatpush1.msra.mxu0 0.0
        %4223 = vmatprep.subr.mxu0 0.0
        %4224 = vmatpush1.msra.mxu0 0.0
        %4225 = vmatprep.subr.mxu0 0.0
        %4226 = vmatpush1.msra.mxu0 0.0
        %4227 = vmatprep.subr.mxu0 0.0
        %4228 = vmatpush1.msra.mxu0 0.0
        %4229 = vmatprep.subr.mxu0 0.0
        %4230 = vmatpush1.msra.mxu0 0.0
        %4231 = vmatprep.subr.mxu0 0.0
        %4232 = vmatpush1.msra.mxu0 0.0
        %4233 = vmatprep.subr.mxu0 0.0
        %4234 = vmatpush1.msra.mxu0 0.0
        %4235 = vmatprep.subr.mxu0 0.0
        %4236 = vmatpush1.msra.mxu0 0.0
        %4237 = vmatprep.subr.mxu0 0.0
        %4238 = vmatpush1.msra.mxu0 0.0
        %4239 = vmatprep.subr.mxu0 0.0
        %4240 = vmatpush1.msra.mxu0 0.0
        %4241 = vmatprep.subr.mxu0 0.0
        %4242 = vmatpush1.msra.mxu0 0.0
        %4243 = vmatprep.subr.mxu0 0.0
        %4244 = vmatpush1.msra.mxu0 0.0
        %4245 = vmatprep.subr.mxu0 0.0
        %4246 = vmatpush1.msra.mxu0 0.0
        %4247 = vmatprep.subr.mxu0 0.0
        %4248 = vmatpush1.msra.mxu0 0.0
        %4249 = vmatprep.subr.mxu0 0.0
        %4250 = vmatpush1.msra.mxu0 0.0
        %4251 = vmatprep.subr.mxu0 0.0
        %4252 = vmatpush1.msra.mxu0 0.0
        %4253 = vmatprep.subr.mxu0 0.0
        %4254 = vmatpush1.msra.mxu0 0.0
        %4255 = vmatprep.subr.mxu0 0.0
        %4256 = vmatpush1.msra.mxu0 0.0
        %4257 = vmatprep.subr.mxu0 0.0
        %4258 = vmatpush1.msra.mxu0 0.0
        %4259 = vmatprep.subr.mxu0 0.0
        %4260 = vmatpush1.msra.mxu0 0.0
        %4261 = vmatprep.subr.mxu0 0.0
        %4262 = vmatpush1.msra.mxu0 0.0
        %4263 = vmatprep.subr.mxu0 0.0
        %4264 = vmatpush1.msra.mxu0 0.0
        %4265 = vmatprep.subr.mxu0 0.0
        %4266 = vmatpush1.msra.mxu0 0.0
        %4267 = vmatprep.mubr.f32.mxu0 0.0
        %4268 = vmatmul.mubr.f32.gmra.mrb[0].mxu0 %v4201
        %v4269 = vpop.f32.mrb[0].mxu0
        %v4270 = vadd.f32 %v4198, %v4269
        %v4271 = vpop.f32.mrb[0].mxu0
        %4272 = vdwg.mxu0
        %s4273 = scalar_lea.vmem %s4, 384
        %v4274 = vld [vmem:[%s4273] sm:$0xff]
        %v4275 = vld [vmem:[%s4273 + $0x8] sm:$0xff]
        %v4276 = vld [vmem:[%s4273 + $0x10] sm:$0xff]
        %v4277 = vld [vmem:[%s4273 + $0x18] sm:$0xff]
        %s4278 = scalar_lea.vmem %s5, 12
        %v4279 = vld [vmem:[%s4278] sm:$0x1]
        %v4281 = vlaneseq
        %v4282 = vshrl.u32 %v4281, 7
        %v4283 = vsub.s32 0, %v4282
        %v4284 = vrot.slane %v4279, %v4283
        %4286 = vmatprep.subr.mxu0 0.0
        %4287 = vmatpush1.msra.mxu0 %v4274
        %4288 = vmatprep.subr.mxu0 0.0
        %4289 = vmatpush1.msra.mxu0 %v4275
        %4290 = vmatprep.subr.mxu0 0.0
        %4291 = vmatpush1.msra.mxu0 %v4276
        %4292 = vmatprep.subr.mxu0 0.0
        %4293 = vmatpush1.msra.mxu0 %v4277
        %4294 = vmatprep.subr.mxu0 0.0
        %4295 = vmatpush1.msra.mxu0 0.0
        %4296 = vmatprep.subr.mxu0 0.0
        %4297 = vmatpush1.msra.mxu0 0.0
        %4298 = vmatprep.subr.mxu0 0.0
        %4299 = vmatpush1.msra.mxu0 0.0
        %4300 = vmatprep.subr.mxu0 0.0
        %4301 = vmatpush1.msra.mxu0 0.0
        %4302 = vmatprep.subr.mxu0 0.0
        %4303 = vmatpush1.msra.mxu0 0.0
        %4304 = vmatprep.subr.mxu0 0.0
        %4305 = vmatpush1.msra.mxu0 0.0
        %4306 = vmatprep.subr.mxu0 0.0
        %4307 = vmatpush1.msra.mxu0 0.0
        %4308 = vmatprep.subr.mxu0 0.0
        %4309 = vmatpush1.msra.mxu0 0.0
        %4310 = vmatprep.subr.mxu0 0.0
        %4311 = vmatpush1.msra.mxu0 0.0
        %4312 = vmatprep.subr.mxu0 0.0
        %4313 = vmatpush1.msra.mxu0 0.0
        %4314 = vmatprep.subr.mxu0 0.0
        %4315 = vmatpush1.msra.mxu0 0.0
        %4316 = vmatprep.subr.mxu0 0.0
        %4317 = vmatpush1.msra.mxu0 0.0
        %4318 = vmatprep.subr.mxu0 0.0
        %4319 = vmatpush1.msra.mxu0 0.0
        %4320 = vmatprep.subr.mxu0 0.0
        %4321 = vmatpush1.msra.mxu0 0.0
        %4322 = vmatprep.subr.mxu0 0.0
        %4323 = vmatpush1.msra.mxu0 0.0
        %4324 = vmatprep.subr.mxu0 0.0
        %4325 = vmatpush1.msra.mxu0 0.0
        %4326 = vmatprep.subr.mxu0 0.0
        %4327 = vmatpush1.msra.mxu0 0.0
        %4328 = vmatprep.subr.mxu0 0.0
        %4329 = vmatpush1.msra.mxu0 0.0
        %4330 = vmatprep.subr.mxu0 0.0
        %4331 = vmatpush1.msra.mxu0 0.0
        %4332 = vmatprep.subr.mxu0 0.0
        %4333 = vmatpush1.msra.mxu0 0.0
        %4334 = vmatprep.subr.mxu0 0.0
        %4335 = vmatpush1.msra.mxu0 0.0
        %4336 = vmatprep.subr.mxu0 0.0
        %4337 = vmatpush1.msra.mxu0 0.0
        %4338 = vmatprep.subr.mxu0 0.0
        %4339 = vmatpush1.msra.mxu0 0.0
        %4340 = vmatprep.subr.mxu0 0.0
        %4341 = vmatpush1.msra.mxu0 0.0
        %4342 = vmatprep.subr.mxu0 0.0
        %4343 = vmatpush1.msra.mxu0 0.0
        %4344 = vmatprep.subr.mxu0 0.0
        %4345 = vmatpush1.msra.mxu0 0.0
        %4346 = vmatprep.subr.mxu0 0.0
        %4347 = vmatpush1.msra.mxu0 0.0
        %4348 = vmatprep.subr.mxu0 0.0
        %4349 = vmatpush1.msra.mxu0 0.0
        %4350 = vmatprep.mubr.f32.mxu0 0.0
        %4351 = vmatmul.mubr.f32.gmra.mrb[0].mxu0 %v4201
        %v4352 = vpop.f32.mrb[0].mxu0
        %v4353 = vadd.f32 %v4284, %v4352
        %v4354 = vpop.f32.mrb[0].mxu0
        %4355 = vdwg.mxu0
        %v4357 = vsel %vm806, %v4270, 0
        %v4360 = vsel %vm806, %v4353, 0
        %4362 = vmatprep.subr.mxu0 0.0
        %4363 = vmatpush1.xpose.msra.mxu0 %v4360
        %4364 = vmatprep.subr.mxu0 0.0
        %4365 = vmatpush1.xpose.msra.mxu0 0.0
        %4366 = vmatprep.subr.mxu0 0.0
        %4367 = vmatpush1.xpose.msra.mxu0 0.0
        %4368 = vmatprep.subr.mxu0 0.0
        %4369 = vmatpush1.xpose.msra.mxu0 0.0
        %4370 = vmatprep.subr.mxu0 0.0
        %4371 = vmatpush1.xpose.msra.mxu0 0.0
        %4372 = vmatprep.subr.mxu0 0.0
        %4373 = vmatpush1.xpose.msra.mxu0 0.0
        %4374 = vmatprep.subr.mxu0 0.0
        %4375 = vmatpush1.xpose.msra.mxu0 0.0
        %4376 = vmatprep.subr.mxu0 0.0
        %4377 = vmatpush1.xpose.msra.mxu0 0.0
        %4378 = vmatprep.subr.mxu0 0.0
        %4379 = vmatpush1.xpose.msra.mxu0 0.0
        %4380 = vmatprep.subr.mxu0 0.0
        %4381 = vmatpush1.xpose.msra.mxu0 0.0
        %4382 = vmatprep.subr.mxu0 0.0
        %4383 = vmatpush1.xpose.msra.mxu0 0.0
        %4384 = vmatprep.subr.mxu0 0.0
        %4385 = vmatpush1.xpose.msra.mxu0 0.0
        %4386 = vmatprep.subr.mxu0 0.0
        %4387 = vmatpush1.xpose.msra.mxu0 0.0
        %4388 = vmatprep.subr.mxu0 0.0
        %4389 = vmatpush1.xpose.msra.mxu0 0.0
        %4390 = vmatprep.subr.mxu0 0.0
        %4391 = vmatpush1.xpose.msra.mxu0 0.0
        %4392 = vmatprep.subr.mxu0 0.0
        %4393 = vmatpush1.xpose.msra.mxu0 0.0
        %4394 = vmatprep.subr.mxu0 0.0
        %4395 = vmatpush1.xpose.msra.mxu0 0.0
        %4396 = vmatprep.subr.mxu0 0.0
        %4397 = vmatpush1.xpose.msra.mxu0 0.0
        %4398 = vmatprep.subr.mxu0 0.0
        %4399 = vmatpush1.xpose.msra.mxu0 0.0
        %4400 = vmatprep.subr.mxu0 0.0
        %4401 = vmatpush1.xpose.msra.mxu0 0.0
        %4402 = vmatprep.subr.mxu0 0.0
        %4403 = vmatpush1.xpose.msra.mxu0 0.0
        %4404 = vmatprep.subr.mxu0 0.0
        %4405 = vmatpush1.xpose.msra.mxu0 0.0
        %4406 = vmatprep.subr.mxu0 0.0
        %4407 = vmatpush1.xpose.msra.mxu0 0.0
        %4408 = vmatprep.subr.mxu0 0.0
        %4409 = vmatpush1.xpose.msra.mxu0 0.0
        %4410 = vmatprep.subr.mxu0 0.0
        %4411 = vmatpush1.xpose.msra.mxu0 0.0
        %4412 = vmatprep.subr.mxu0 0.0
        %4413 = vmatpush1.xpose.msra.mxu0 0.0
        %4414 = vmatprep.subr.mxu0 0.0
        %4415 = vmatpush1.xpose.msra.mxu0 0.0
        %4416 = vmatprep.subr.mxu0 0.0
        %4417 = vmatpush1.xpose.msra.mxu0 0.0
        %4418 = vmatprep.subr.mxu0 0.0
        %4419 = vmatpush1.xpose.msra.mxu0 0.0
        %4420 = vmatprep.subr.mxu0 0.0
        %4421 = vmatpush1.xpose.msra.mxu0 0.0
        %4422 = vmatprep.subr.mxu0 0.0
        %4423 = vmatpush1.xpose.msra.mxu0 0.0
        %4424 = vmatprep.subr.mxu0 0.0
        %4425 = vmatpush1.xpose.msra.mxu0 0.0
        %4426 = vmatprep.mubr.f32.mxu0 0.0
        %4427 = vmatmul.mubr.f32.gmra.mrb[0].mxu0 %v4357
        %v4428 = vpop.f32.mrb[0].mxu0
        %v4429 = vadd.f32 0.0, %v4428
        %v4430 = vpop.f32.mrb[0].mxu0
        %4431 = vdwg.mxu0
        %v4432 = vsel %vm806, %v4429, -inf
        %4433 = vmax.xlane.f32.xlu0 %v4432
        %v4434 = vpop.xlane.xlu0 %4433
        %v4435 = vsub.f32 %v4429, %v4434
        %v4436 = vmul.f32 %v4435, 1.442695
        %v4437 = vpow.pop %v4436
        %v4438 = vsel %vm806, %v4437, 0.0
        %4439 = vadd.xlane.f32.xlu0 %v4438
        %v4440 = vpop.xlane.xlu0 %4439
        %v4441 = vrcp.pop %v4440
        %v4442 = vmul.f32 %v4437, %v4441
        %s4443 = scalar_lea.vmem %s6, 128
        %v4444 = vld [vmem:[%s4443] sm:$0xff]
        %v4445 = vld [vmem:[%s4443 + $0x8] sm:$0xff]
        %v4446 = vld [vmem:[%s4443 + $0x10] sm:$0xff]
        %v4447 = vld [vmem:[%s4443 + $0x18] sm:$0xff]
        %v4449 = vsel %vm649, %v4183, 0
        %4451 = vmatprep.subr.mxu0 0.0
        %4452 = vmatpush1.msra.mxu0 %v4444
        %4453 = vmatprep.subr.mxu0 0.0
        %4454 = vmatpush1.msra.mxu0 %v4445
        %4455 = vmatprep.subr.mxu0 0.0
        %4456 = vmatpush1.msra.mxu0 %v4446
        %4457 = vmatprep.subr.mxu0 0.0
        %4458 = vmatpush1.msra.mxu0 %v4447
        %4459 = vmatprep.subr.mxu0 0.0
        %4460 = vmatpush1.msra.mxu0 0.0
        %4461 = vmatprep.subr.mxu0 0.0
        %4462 = vmatpush1.msra.mxu0 0.0
        %4463 = vmatprep.subr.mxu0 0.0
        %4464 = vmatpush1.msra.mxu0 0.0
        %4465 = vmatprep.subr.mxu0 0.0
        %4466 = vmatpush1.msra.mxu0 0.0
        %4467 = vmatprep.subr.mxu0 0.0
        %4468 = vmatpush1.msra.mxu0 0.0
        %4469 = vmatprep.subr.mxu0 0.0
        %4470 = vmatpush1.msra.mxu0 0.0
        %4471 = vmatprep.subr.mxu0 0.0
        %4472 = vmatpush1.msra.mxu0 0.0
        %4473 = vmatprep.subr.mxu0 0.0
        %4474 = vmatpush1.msra.mxu0 0.0
        %4475 = vmatprep.subr.mxu0 0.0
        %4476 = vmatpush1.msra.mxu0 0.0
        %4477 = vmatprep.subr.mxu0 0.0
        %4478 = vmatpush1.msra.mxu0 0.0
        %4479 = vmatprep.subr.mxu0 0.0
        %4480 = vmatpush1.msra.mxu0 0.0
        %4481 = vmatprep.subr.mxu0 0.0
        %4482 = vmatpush1.msra.mxu0 0.0
        %4483 = vmatprep.subr.mxu0 0.0
        %4484 = vmatpush1.msra.mxu0 0.0
        %4485 = vmatprep.subr.mxu0 0.0
        %4486 = vmatpush1.msra.mxu0 0.0
        %4487 = vmatprep.subr.mxu0 0.0
        %4488 = vmatpush1.msra.mxu0 0.0
        %4489 = vmatprep.subr.mxu0 0.0
        %4490 = vmatpush1.msra.mxu0 0.0
        %4491 = vmatprep.subr.mxu0 0.0
        %4492 = vmatpush1.msra.mxu0 0.0
        %4493 = vmatprep.subr.mxu0 0.0
        %4494 = vmatpush1.msra.mxu0 0.0
        %4495 = vmatprep.subr.mxu0 0.0
        %4496 = vmatpush1.msra.mxu0 0.0
        %4497 = vmatprep.subr.mxu0 0.0
        %4498 = vmatpush1.msra.mxu0 0.0
        %4499 = vmatprep.subr.mxu0 0.0
        %4500 = vmatpush1.msra.mxu0 0.0
        %4501 = vmatprep.subr.mxu0 0.0
        %4502 = vmatpush1.msra.mxu0 0.0
        %4503 = vmatprep.subr.mxu0 0.0
        %4504 = vmatpush1.msra.mxu0 0.0
        %4505 = vmatprep.subr.mxu0 0.0
        %4506 = vmatpush1.msra.mxu0 0.0
        %4507 = vmatprep.subr.mxu0 0.0
        %4508 = vmatpush1.msra.mxu0 0.0
        %4509 = vmatprep.subr.mxu0 0.0
        %4510 = vmatpush1.msra.mxu0 0.0
        %4511 = vmatprep.subr.mxu0 0.0
        %4512 = vmatpush1.msra.mxu0 0.0
        %4513 = vmatprep.subr.mxu0 0.0
        %4514 = vmatpush1.msra.mxu0 0.0
        %4515 = vmatprep.mubr.f32.mxu0 0.0
        %4516 = vmatmul.mubr.f32.gmra.mrb[0].mxu0 %v4449
        %v4517 = vpop.f32.mrb[0].mxu0
        %v4518 = vadd.f32 0.0, %v4517
        %v4519 = vpop.f32.mrb[0].mxu0
        %4520 = vdwg.mxu0
        %s4521 = scalar_lea.vmem %s4, 288
        %v4522 = vld [vmem:[%s4521] sm:$0xff]
        %v4523 = vld [vmem:[%s4521 + $0x8] sm:$0xff]
        %v4524 = vld [vmem:[%s4521 + $0x10] sm:$0xff]
        %v4525 = vld [vmem:[%s4521 + $0x18] sm:$0xff]
        %s4526 = scalar_lea.vmem %s5, 9
        %v4527 = vld [vmem:[%s4526] sm:$0x1]
        %v4529 = vlaneseq
        %v4530 = vshrl.u32 %v4529, 7
        %v4531 = vsub.s32 0, %v4530
        %v4532 = vrot.slane %v4527, %v4531
        %4534 = vmatprep.subr.mxu0 0.0
        %4535 = vmatpush1.msra.mxu0 %v4522
        %4536 = vmatprep.subr.mxu0 0.0
        %4537 = vmatpush1.msra.mxu0 %v4523
        %4538 = vmatprep.subr.mxu0 0.0
        %4539 = vmatpush1.msra.mxu0 %v4524
        %4540 = vmatprep.subr.mxu0 0.0
        %4541 = vmatpush1.msra.mxu0 %v4525
        %4542 = vmatprep.subr.mxu0 0.0
        %4543 = vmatpush1.msra.mxu0 0.0
        %4544 = vmatprep.subr.mxu0 0.0
        %4545 = vmatpush1.msra.mxu0 0.0
        %4546 = vmatprep.subr.mxu0 0.0
        %4547 = vmatpush1.msra.mxu0 0.0
        %4548 = vmatprep.subr.mxu0 0.0
        %4549 = vmatpush1.msra.mxu0 0.0
        %4550 = vmatprep.subr.mxu0 0.0
        %4551 = vmatpush1.msra.mxu0 0.0
        %4552 = vmatprep.subr.mxu0 0.0
        %4553 = vmatpush1.msra.mxu0 0.0
        %4554 = vmatprep.subr.mxu0 0.0
        %4555 = vmatpush1.msra.mxu0 0.0
        %4556 = vmatprep.subr.mxu0 0.0
        %4557 = vmatpush1.msra.mxu0 0.0
        %4558 = vmatprep.subr.mxu0 0.0
        %4559 = vmatpush1.msra.mxu0 0.0
        %4560 = vmatprep.subr.mxu0 0.0
        %4561 = vmatpush1.msra.mxu0 0.0
        %4562 = vmatprep.subr.mxu0 0.0
        %4563 = vmatpush1.msra.mxu0 0.0
        %4564 = vmatprep.subr.mxu0 0.0
        %4565 = vmatpush1.msra.mxu0 0.0
        %4566 = vmatprep.subr.mxu0 0.0
        %4567 = vmatpush1.msra.mxu0 0.0
        %4568 = vmatprep.subr.mxu0 0.0
        %4569 = vmatpush1.msra.mxu0 0.0
        %4570 = vmatprep.subr.mxu0 0.0
        %4571 = vmatpush1.msra.mxu0 0.0
        %4572 = vmatprep.subr.mxu0 0.0
        %4573 = vmatpush1.msra.mxu0 0.0
        %4574 = vmatprep.subr.mxu0 0.0
        %4575 = vmatpush1.msra.mxu0 0.0
        %4576 = vmatprep.subr.mxu0 0.0
        %4577 = vmatpush1.msra.mxu0 0.0
        %4578 = vmatprep.subr.mxu0 0.0
        %4579 = vmatpush1.msra.mxu0 0.0
        %4580 = vmatprep.subr.mxu0 0.0
        %4581 = vmatpush1.msra.mxu0 0.0
        %4582 = vmatprep.subr.mxu0 0.0
        %4583 = vmatpush1.msra.mxu0 0.0
        %4584 = vmatprep.subr.mxu0 0.0
        %4585 = vmatpush1.msra.mxu0 0.0
        %4586 = vmatprep.subr.mxu0 0.0
        %4587 = vmatpush1.msra.mxu0 0.0
        %4588 = vmatprep.subr.mxu0 0.0
        %4589 = vmatpush1.msra.mxu0 0.0
        %4590 = vmatprep.subr.mxu0 0.0
        %4591 = vmatpush1.msra.mxu0 0.0
        %4592 = vmatprep.subr.mxu0 0.0
        %4593 = vmatpush1.msra.mxu0 0.0
        %4594 = vmatprep.subr.mxu0 0.0
        %4595 = vmatpush1.msra.mxu0 0.0
        %4596 = vmatprep.subr.mxu0 0.0
        %4597 = vmatpush1.msra.mxu0 0.0
        %4598 = vmatprep.mubr.f32.mxu0 0.0
        %4599 = vmatmul.mubr.f32.gmra.mrb[0].mxu0 %v4201
        %v4600 = vpop.f32.mrb[0].mxu0
        %v4601 = vadd.f32 %v4532, %v4600
        %v4602 = vpop.f32.mrb[0].mxu0
        %4603 = vdwg.mxu0
        %s4604 = scalar_lea.vmem %s4, 416
        %v4605 = vld [vmem:[%s4604] sm:$0xff]
        %v4606 = vld [vmem:[%s4604 + $0x8] sm:$0xff]
        %v4607 = vld [vmem:[%s4604 + $0x10] sm:$0xff]
        %v4608 = vld [vmem:[%s4604 + $0x18] sm:$0xff]
        %s4609 = scalar_lea.vmem %s5, 13
        %v4610 = vld [vmem:[%s4609] sm:$0x1]
        %v4612 = vlaneseq
        %v4613 = vshrl.u32 %v4612, 7
        %v4614 = vsub.s32 0, %v4613
        %v4615 = vrot.slane %v4610, %v4614
        %4617 = vmatprep.subr.mxu0 0.0
        %4618 = vmatpush1.msra.mxu0 %v4605
        %4619 = vmatprep.subr.mxu0 0.0
        %4620 = vmatpush1.msra.mxu0 %v4606
        %4621 = vmatprep.subr.mxu0 0.0
        %4622 = vmatpush1.msra.mxu0 %v4607
        %4623 = vmatprep.subr.mxu0 0.0
        %4624 = vmatpush1.msra.mxu0 %v4608
        %4625 = vmatprep.subr.mxu0 0.0
        %4626 = vmatpush1.msra.mxu0 0.0
        %4627 = vmatprep.subr.mxu0 0.0
        %4628 = vmatpush1.msra.mxu0 0.0
        %4629 = vmatprep.subr.mxu0 0.0
        %4630 = vmatpush1.msra.mxu0 0.0
        %4631 = vmatprep.subr.mxu0 0.0
        %4632 = vmatpush1.msra.mxu0 0.0
        %4633 = vmatprep.subr.mxu0 0.0
        %4634 = vmatpush1.msra.mxu0 0.0
        %4635 = vmatprep.subr.mxu0 0.0
        %4636 = vmatpush1.msra.mxu0 0.0
        %4637 = vmatprep.subr.mxu0 0.0
        %4638 = vmatpush1.msra.mxu0 0.0
        %4639 = vmatprep.subr.mxu0 0.0
        %4640 = vmatpush1.msra.mxu0 0.0
        %4641 = vmatprep.subr.mxu0 0.0
        %4642 = vmatpush1.msra.mxu0 0.0
        %4643 = vmatprep.subr.mxu0 0.0
        %4644 = vmatpush1.msra.mxu0 0.0
        %4645 = vmatprep.subr.mxu0 0.0
        %4646 = vmatpush1.msra.mxu0 0.0
        %4647 = vmatprep.subr.mxu0 0.0
        %4648 = vmatpush1.msra.mxu0 0.0
        %4649 = vmatprep.subr.mxu0 0.0
        %4650 = vmatpush1.msra.mxu0 0.0
        %4651 = vmatprep.subr.mxu0 0.0
        %4652 = vmatpush1.msra.mxu0 0.0
        %4653 = vmatprep.subr.mxu0 0.0
        %4654 = vmatpush1.msra.mxu0 0.0
        %4655 = vmatprep.subr.mxu0 0.0
        %4656 = vmatpush1.msra.mxu0 0.0
        %4657 = vmatprep.subr.mxu0 0.0
        %4658 = vmatpush1.msra.mxu0 0.0
        %4659 = vmatprep.subr.mxu0 0.0
        %4660 = vmatpush1.msra.mxu0 0.0
        %4661 = vmatprep.subr.mxu0 0.0
        %4662 = vmatpush1.msra.mxu0 0.0
        %4663 = vmatprep.subr.mxu0 0.0
        %4664 = vmatpush1.msra.mxu0 0.0
        %4665 = vmatprep.subr.mxu0 0.0
        %4666 = vmatpush1.msra.mxu0 0.0
        %4667 = vmatprep.subr.mxu0 0.0
        %4668 = vmatpush1.msra.mxu0 0.0
        %4669 = vmatprep.subr.mxu0 0.0
        %4670 = vmatpush1.msra.mxu0 0.0
        %4671 = vmatprep.subr.mxu0 0.0
        %4672 = vmatpush1.msra.mxu0 0.0
        %4673 = vmatprep.subr.mxu0 0.0
        %4674 = vmatpush1.msra.mxu0 0.0
        %4675 = vmatprep.subr.mxu0 0.0
        %4676 = vmatpush1.msra.mxu0 0.0
        %4677 = vmatprep.subr.mxu0 0.0
        %4678 = vmatpush1.msra.mxu0 0.0
        %4679 = vmatprep.subr.mxu0 0.0
        %4680 = vmatpush1.msra.mxu0 0.0
        %4681 = vmatprep.mubr.f32.mxu0 0.0
        %4682 = vmatmul.mubr.f32.gmra.mrb[0].mxu0 %v4201
        %v4683 = vpop.f32.mrb[0].mxu0
        %v4684 = vadd.f32 %v4615, %v4683
        %v4685 = vpop.f32.mrb[0].mxu0
        %4686 = vdwg.mxu0
        %v4688 = vsel %vm806, %v4601, 0
        %v4691 = vsel %vm806, %v4684, 0
        %4693 = vmatprep.subr.mxu0 0.0
        %4694 = vmatpush1.xpose.msra.mxu0 %v4691
        %4695 = vmatprep.subr.mxu0 0.0
        %4696 = vmatpush1.xpose.msra.mxu0 0.0
        %4697 = vmatprep.subr.mxu0 0.0
        %4698 = vmatpush1.xpose.msra.mxu0 0.0
        %4699 = vmatprep.subr.mxu0 0.0
        %4700 = vmatpush1.xpose.msra.mxu0 0.0
        %4701 = vmatprep.subr.mxu0 0.0
        %4702 = vmatpush1.xpose.msra.mxu0 0.0
        %4703 = vmatprep.subr.mxu0 0.0
        %4704 = vmatpush1.xpose.msra.mxu0 0.0
        %4705 = vmatprep.subr.mxu0 0.0
        %4706 = vmatpush1.xpose.msra.mxu0 0.0
        %4707 = vmatprep.subr.mxu0 0.0
        %4708 = vmatpush1.xpose.msra.mxu0 0.0
        %4709 = vmatprep.subr.mxu0 0.0
        %4710 = vmatpush1.xpose.msra.mxu0 0.0
        %4711 = vmatprep.subr.mxu0 0.0
        %4712 = vmatpush1.xpose.msra.mxu0 0.0
        %4713 = vmatprep.subr.mxu0 0.0
        %4714 = vmatpush1.xpose.msra.mxu0 0.0
        %4715 = vmatprep.subr.mxu0 0.0
        %4716 = vmatpush1.xpose.msra.mxu0 0.0
        %4717 = vmatprep.subr.mxu0 0.0
        %4718 = vmatpush1.xpose.msra.mxu0 0.0
        %4719 = vmatprep.subr.mxu0 0.0
        %4720 = vmatpush1.xpose.msra.mxu0 0.0
        %4721 = vmatprep.subr.mxu0 0.0
        %4722 = vmatpush1.xpose.msra.mxu0 0.0
        %4723 = vmatprep.subr.mxu0 0.0
        %4724 = vmatpush1.xpose.msra.mxu0 0.0
        %4725 = vmatprep.subr.mxu0 0.0
        %4726 = vmatpush1.xpose.msra.mxu0 0.0
        %4727 = vmatprep.subr.mxu0 0.0
        %4728 = vmatpush1.xpose.msra.mxu0 0.0
        %4729 = vmatprep.subr.mxu0 0.0
        %4730 = vmatpush1.xpose.msra.mxu0 0.0
        %4731 = vmatprep.subr.mxu0 0.0
        %4732 = vmatpush1.xpose.msra.mxu0 0.0
        %4733 = vmatprep.subr.mxu0 0.0
        %4734 = vmatpush1.xpose.msra.mxu0 0.0
        %4735 = vmatprep.subr.mxu0 0.0
        %4736 = vmatpush1.xpose.msra.mxu0 0.0
        %4737 = vmatprep.subr.mxu0 0.0
        %4738 = vmatpush1.xpose.msra.mxu0 0.0
        %4739 = vmatprep.subr.mxu0 0.0
        %4740 = vmatpush1.xpose.msra.mxu0 0.0
        %4741 = vmatprep.subr.mxu0 0.0
        %4742 = vmatpush1.xpose.msra.mxu0 0.0
        %4743 = vmatprep.subr.mxu0 0.0
        %4744 = vmatpush1.xpose.msra.mxu0 0.0
        %4745 = vmatprep.subr.mxu0 0.0
        %4746 = vmatpush1.xpose.msra.mxu0 0.0
        %4747 = vmatprep.subr.mxu0 0.0
        %4748 = vmatpush1.xpose.msra.mxu0 0.0
        %4749 = vmatprep.subr.mxu0 0.0
        %4750 = vmatpush1.xpose.msra.mxu0 0.0
        %4751 = vmatprep.subr.mxu0 0.0
        %4752 = vmatpush1.xpose.msra.mxu0 0.0
        %4753 = vmatprep.subr.mxu0 0.0
        %4754 = vmatpush1.xpose.msra.mxu0 0.0
        %4755 = vmatprep.subr.mxu0 0.0
        %4756 = vmatpush1.xpose.msra.mxu0 0.0
        %4757 = vmatprep.mubr.f32.mxu0 0.0
        %4758 = vmatmul.mubr.f32.gmra.mrb[0].mxu0 %v4688
        %v4759 = vpop.f32.mrb[0].mxu0
        %v4760 = vadd.f32 0.0, %v4759
        %v4761 = vpop.f32.mrb[0].mxu0
        %4762 = vdwg.mxu0
        %v4763 = vsel %vm806, %v4760, -inf
        %4764 = vmax.xlane.f32.xlu0 %v4763
        %v4765 = vpop.xlane.xlu0 %4764
        %v4766 = vsub.f32 %v4760, %v4765
        %v4767 = vmul.f32 %v4766, 1.442695
        %v4768 = vpow.pop %v4767
        %v4769 = vsel %vm806, %v4768, 0.0
        %4770 = vadd.xlane.f32.xlu0 %v4769
        %v4771 = vpop.xlane.xlu0 %4770
        %v4772 = vrcp.pop %v4771
        %v4773 = vmul.f32 %v4768, %v4772
        %s4774 = scalar_lea.vmem %s6, 160
        %v4775 = vld [vmem:[%s4774] sm:$0xff]
        %v4776 = vld [vmem:[%s4774 + $0x8] sm:$0xff]
        %v4777 = vld [vmem:[%s4774 + $0x10] sm:$0xff]
        %v4778 = vld [vmem:[%s4774 + $0x18] sm:$0xff]
        %4779 = vmatprep.subr.mxu0 0.0
        %4780 = vmatpush1.msra.mxu0 %v4775
        %4781 = vmatprep.subr.mxu0 0.0
        %4782 = vmatpush1.msra.mxu0 %v4776
        %4783 = vmatprep.subr.mxu0 0.0
        %4784 = vmatpush1.msra.mxu0 %v4777
        %4785 = vmatprep.subr.mxu0 0.0
        %4786 = vmatpush1.msra.mxu0 %v4778
        %4787 = vmatprep.subr.mxu0 0.0
        %4788 = vmatpush1.msra.mxu0 0.0
        %4789 = vmatprep.subr.mxu0 0.0
        %4790 = vmatpush1.msra.mxu0 0.0
        %4791 = vmatprep.subr.mxu0 0.0
        %4792 = vmatpush1.msra.mxu0 0.0
        %4793 = vmatprep.subr.mxu0 0.0
        %4794 = vmatpush1.msra.mxu0 0.0
        %4795 = vmatprep.subr.mxu0 0.0
        %4796 = vmatpush1.msra.mxu0 0.0
        %4797 = vmatprep.subr.mxu0 0.0
        %4798 = vmatpush1.msra.mxu0 0.0
        %4799 = vmatprep.subr.mxu0 0.0
        %4800 = vmatpush1.msra.mxu0 0.0
        %4801 = vmatprep.subr.mxu0 0.0
        %4802 = vmatpush1.msra.mxu0 0.0
        %4803 = vmatprep.subr.mxu0 0.0
        %4804 = vmatpush1.msra.mxu0 0.0
        %4805 = vmatprep.subr.mxu0 0.0
        %4806 = vmatpush1.msra.mxu0 0.0
        %4807 = vmatprep.subr.mxu0 0.0
        %4808 = vmatpush1.msra.mxu0 0.0
        %4809 = vmatprep.subr.mxu0 0.0
        %4810 = vmatpush1.msra.mxu0 0.0
        %4811 = vmatprep.subr.mxu0 0.0
        %4812 = vmatpush1.msra.mxu0 0.0
        %4813 = vmatprep.subr.mxu0 0.0
        %4814 = vmatpush1.msra.mxu0 0.0
        %4815 = vmatprep.subr.mxu0 0.0
        %4816 = vmatpush1.msra.mxu0 0.0
        %4817 = vmatprep.subr.mxu0 0.0
        %4818 = vmatpush1.msra.mxu0 0.0
        %4819 = vmatprep.subr.mxu0 0.0
        %4820 = vmatpush1.msra.mxu0 0.0
        %4821 = vmatprep.subr.mxu0 0.0
        %4822 = vmatpush1.msra.mxu0 0.0
        %4823 = vmatprep.subr.mxu0 0.0
        %4824 = vmatpush1.msra.mxu0 0.0
        %4825 = vmatprep.subr.mxu0 0.0
        %4826 = vmatpush1.msra.mxu0 0.0
        %4827 = vmatprep.subr.mxu0 0.0
        %4828 = vmatpush1.msra.mxu0 0.0
        %4829 = vmatprep.subr.mxu0 0.0
        %4830 = vmatpush1.msra.mxu0 0.0
        %4831 = vmatprep.subr.mxu0 0.0
        %4832 = vmatpush1.msra.mxu0 0.0
        %4833 = vmatprep.subr.mxu0 0.0
        %4834 = vmatpush1.msra.mxu0 0.0
        %4835 = vmatprep.subr.mxu0 0.0
        %4836 = vmatpush1.msra.mxu0 0.0
        %4837 = vmatprep.subr.mxu0 0.0
        %4838 = vmatpush1.msra.mxu0 0.0
        %4839 = vmatprep.subr.mxu0 0.0
        %4840 = vmatpush1.msra.mxu0 0.0
        %4841 = vmatprep.subr.mxu0 0.0
        %4842 = vmatpush1.msra.mxu0 0.0
        %4843 = vmatprep.mubr.f32.mxu0 0.0
        %4844 = vmatmul.mubr.f32.gmra.mrb[0].mxu0 %v4449
        %v4845 = vpop.f32.mrb[0].mxu0
        %v4846 = vadd.f32 0.0, %v4845
        %v4847 = vpop.f32.mrb[0].mxu0
        %4848 = vdwg.mxu0
        %v4850 = vsel %vm806, %v4773, 0
        %4852 = vmatprep.subr.mxu0 0.0
        %4853 = vmatpush1.msra.mxu0 %v4846
        %4854 = vmatprep.subr.mxu0 0.0
        %4855 = vmatpush1.msra.mxu0 0.0
        %4856 = vmatprep.subr.mxu0 0.0
        %4857 = vmatpush1.msra.mxu0 0.0
        %4858 = vmatprep.subr.mxu0 0.0
        %4859 = vmatpush1.msra.mxu0 0.0
        %4860 = vmatprep.subr.mxu0 0.0
        %4861 = vmatpush1.msra.mxu0 0.0
        %4862 = vmatprep.subr.mxu0 0.0
        %4863 = vmatpush1.msra.mxu0 0.0
        %4864 = vmatprep.subr.mxu0 0.0
        %4865 = vmatpush1.msra.mxu0 0.0
        %4866 = vmatprep.subr.mxu0 0.0
        %4867 = vmatpush1.msra.mxu0 0.0
        %4868 = vmatprep.subr.mxu0 0.0
        %4869 = vmatpush1.msra.mxu0 0.0
        %4870 = vmatprep.subr.mxu0 0.0
        %4871 = vmatpush1.msra.mxu0 0.0
        %4872 = vmatprep.subr.mxu0 0.0
        %4873 = vmatpush1.msra.mxu0 0.0
        %4874 = vmatprep.subr.mxu0 0.0
        %4875 = vmatpush1.msra.mxu0 0.0
        %4876 = vmatprep.subr.mxu0 0.0
        %4877 = vmatpush1.msra.mxu0 0.0
        %4878 = vmatprep.subr.mxu0 0.0
        %4879 = vmatpush1.msra.mxu0 0.0
        %4880 = vmatprep.subr.mxu0 0.0
        %4881 = vmatpush1.msra.mxu0 0.0
        %4882 = vmatprep.subr.mxu0 0.0
        %4883 = vmatpush1.msra.mxu0 0.0
        %4884 = vmatprep.subr.mxu0 0.0
        %4885 = vmatpush1.msra.mxu0 0.0
        %4886 = vmatprep.subr.mxu0 0.0
        %4887 = vmatpush1.msra.mxu0 0.0
        %4888 = vmatprep.subr.mxu0 0.0
        %4889 = vmatpush1.msra.mxu0 0.0
        %4890 = vmatprep.subr.mxu0 0.0
        %4891 = vmatpush1.msra.mxu0 0.0
        %4892 = vmatprep.subr.mxu0 0.0
        %4893 = vmatpush1.msra.mxu0 0.0
        %4894 = vmatprep.subr.mxu0 0.0
        %4895 = vmatpush1.msra.mxu0 0.0
        %4896 = vmatprep.subr.mxu0 0.0
        %4897 = vmatpush1.msra.mxu0 0.0
        %4898 = vmatprep.subr.mxu0 0.0
        %4899 = vmatpush1.msra.mxu0 0.0
        %4900 = vmatprep.subr.mxu0 0.0
        %4901 = vmatpush1.msra.mxu0 0.0
        %4902 = vmatprep.subr.mxu0 0.0
        %4903 = vmatpush1.msra.mxu0 0.0
        %4904 = vmatprep.subr.mxu0 0.0
        %4905 = vmatpush1.msra.mxu0 0.0
        %4906 = vmatprep.subr.mxu0 0.0
        %4907 = vmatpush1.msra.mxu0 0.0
        %4908 = vmatprep.subr.mxu0 0.0
        %4909 = vmatpush1.msra.mxu0 0.0
        %4910 = vmatprep.subr.mxu0 0.0
        %4911 = vmatpush1.msra.mxu0 0.0
        %4912 = vmatprep.subr.mxu0 0.0
        %4913 = vmatpush1.msra.mxu0 0.0
        %4914 = vmatprep.subr.mxu0 0.0
        %4915 = vmatpush1.msra.mxu0 0.0
        %4916 = vmatprep.mubr.f32.mxu0 0.0
        %4917 = vmatmul.mubr.f32.gmra.mrb[0].mxu0 %v4850
        %v4918 = vpop.f32.mrb[0].mxu0
        %v4919 = vadd.f32 0.0, %v4918
        %v4920 = vpop.f32.mrb[0].mxu0
        %4921 = vdwg.mxu0
        %v4923 = vsel %vm806, %v4442, 0
        %4925 = vmatprep.subr.mxu0 0.0
        %4926 = vmatpush1.msra.mxu0 %v4518
        %4927 = vmatprep.subr.mxu0 0.0
        %4928 = vmatpush1.msra.mxu0 0.0
        %4929 = vmatprep.subr.mxu0 0.0
        %4930 = vmatpush1.msra.mxu0 0.0
        %4931 = vmatprep.subr.mxu0 0.0
        %4932 = vmatpush1.msra.mxu0 0.0
        %4933 = vmatprep.subr.mxu0 0.0
        %4934 = vmatpush1.msra.mxu0 0.0
        %4935 = vmatprep.subr.mxu0 0.0
        %4936 = vmatpush1.msra.mxu0 0.0
        %4937 = vmatprep.subr.mxu0 0.0
        %4938 = vmatpush1.msra.mxu0 0.0
        %4939 = vmatprep.subr.mxu0 0.0
        %4940 = vmatpush1.msra.mxu0 0.0
        %4941 = vmatprep.subr.mxu0 0.0
        %4942 = vmatpush1.msra.mxu0 0.0
        %4943 = vmatprep.subr.mxu0 0.0
        %4944 = vmatpush1.msra.mxu0 0.0
        %4945 = vmatprep.subr.mxu0 0.0
        %4946 = vmatpush1.msra.mxu0 0.0
        %4947 = vmatprep.subr.mxu0 0.0
        %4948 = vmatpush1.msra.mxu0 0.0
        %4949 = vmatprep.subr.mxu0 0.0
        %4950 = vmatpush1.msra.mxu0 0.0
        %4951 = vmatprep.subr.mxu0 0.0
        %4952 = vmatpush1.msra.mxu0 0.0
        %4953 = vmatprep.subr.mxu0 0.0
        %4954 = vmatpush1.msra.mxu0 0.0
        %4955 = vmatprep.subr.mxu0 0.0
        %4956 = vmatpush1.msra.mxu0 0.0
        %4957 = vmatprep.subr.mxu0 0.0
        %4958 = vmatpush1.msra.mxu0 0.0
        %4959 = vmatprep.subr.mxu0 0.0
        %4960 = vmatpush1.msra.mxu0 0.0
        %4961 = vmatprep.subr.mxu0 0.0
        %4962 = vmatpush1.msra.mxu0 0.0
        %4963 = vmatprep.subr.mxu0 0.0
        %4964 = vmatpush1.msra.mxu0 0.0
        %4965 = vmatprep.subr.mxu0 0.0
        %4966 = vmatpush1.msra.mxu0 0.0
        %4967 = vmatprep.subr.mxu0 0.0
        %4968 = vmatpush1.msra.mxu0 0.0
        %4969 = vmatprep.subr.mxu0 0.0
        %4970 = vmatpush1.msra.mxu0 0.0
        %4971 = vmatprep.subr.mxu0 0.0
        %4972 = vmatpush1.msra.mxu0 0.0
        %4973 = vmatprep.subr.mxu0 0.0
        %4974 = vmatpush1.msra.mxu0 0.0
        %4975 = vmatprep.subr.mxu0 0.0
        %4976 = vmatpush1.msra.mxu0 0.0
        %4977 = vmatprep.subr.mxu0 0.0
        %4978 = vmatpush1.msra.mxu0 0.0
        %4979 = vmatprep.subr.mxu0 0.0
        %4980 = vmatpush1.msra.mxu0 0.0
        %4981 = vmatprep.subr.mxu0 0.0
        %4982 = vmatpush1.msra.mxu0 0.0
        %4983 = vmatprep.subr.mxu0 0.0
        %4984 = vmatpush1.msra.mxu0 0.0
        %4985 = vmatprep.subr.mxu0 0.0
        %4986 = vmatpush1.msra.mxu0 0.0
        %4987 = vmatprep.subr.mxu0 0.0
        %4988 = vmatpush1.msra.mxu0 0.0
        %4989 = vmatprep.mubr.f32.mxu0 0.0
        %4990 = vmatmul.mubr.f32.gmra.mrb[0].mxu0 %v4923
        %v4991 = vpop.f32.mrb[0].mxu0
        %v4992 = vadd.f32 %v4919, %v4991
        %v4993 = vpop.f32.mrb[0].mxu0
        %4994 = vdwg.mxu0
        %s4995 = scalar_lea.vmem %s4, 320
        %v4996 = vld [vmem:[%s4995] sm:$0xff]
        %v4997 = vld [vmem:[%s4995 + $0x8] sm:$0xff]
        %v4998 = vld [vmem:[%s4995 + $0x10] sm:$0xff]
        %v4999 = vld [vmem:[%s4995 + $0x18] sm:$0xff]
        %s5000 = scalar_lea.vmem %s5, 10
        %v5001 = vld [vmem:[%s5000] sm:$0x1]
        %v5003 = vlaneseq
        %v5004 = vshrl.u32 %v5003, 7
        %v5005 = vsub.s32 0, %v5004
        %v5006 = vrot.slane %v5001, %v5005
        %5008 = vmatprep.subr.mxu0 0.0
        %5009 = vmatpush1.msra.mxu0 %v4996
        %5010 = vmatprep.subr.mxu0 0.0
        %5011 = vmatpush1.msra.mxu0 %v4997
        %5012 = vmatprep.subr.mxu0 0.0
        %5013 = vmatpush1.msra.mxu0 %v4998
        %5014 = vmatprep.subr.mxu0 0.0
        %5015 = vmatpush1.msra.mxu0 %v4999
        %5016 = vmatprep.subr.mxu0 0.0
        %5017 = vmatpush1.msra.mxu0 0.0
        %5018 = vmatprep.subr.mxu0 0.0
        %5019 = vmatpush1.msra.mxu0 0.0
        %5020 = vmatprep.subr.mxu0 0.0
        %5021 = vmatpush1.msra.mxu0 0.0
        %5022 = vmatprep.subr.mxu0 0.0
        %5023 = vmatpush1.msra.mxu0 0.0
        %5024 = vmatprep.subr.mxu0 0.0
        %5025 = vmatpush1.msra.mxu0 0.0
        %5026 = vmatprep.subr.mxu0 0.0
        %5027 = vmatpush1.msra.mxu0 0.0
        %5028 = vmatprep.subr.mxu0 0.0
        %5029 = vmatpush1.msra.mxu0 0.0
        %5030 = vmatprep.subr.mxu0 0.0
        %5031 = vmatpush1.msra.mxu0 0.0
        %5032 = vmatprep.subr.mxu0 0.0
        %5033 = vmatpush1.msra.mxu0 0.0
        %5034 = vmatprep.subr.mxu0 0.0
        %5035 = vmatpush1.msra.mxu0 0.0
        %5036 = vmatprep.subr.mxu0 0.0
        %5037 = vmatpush1.msra.mxu0 0.0
        %5038 = vmatprep.subr.mxu0 0.0
        %5039 = vmatpush1.msra.mxu0 0.0
        %5040 = vmatprep.subr.mxu0 0.0
        %5041 = vmatpush1.msra.mxu0 0.0
        %5042 = vmatprep.subr.mxu0 0.0
        %5043 = vmatpush1.msra.mxu0 0.0
        %5044 = vmatprep.subr.mxu0 0.0
        %5045 = vmatpush1.msra.mxu0 0.0
        %5046 = vmatprep.subr.mxu0 0.0
        %5047 = vmatpush1.msra.mxu0 0.0
        %5048 = vmatprep.subr.mxu0 0.0
        %5049 = vmatpush1.msra.mxu0 0.0
        %5050 = vmatprep.subr.mxu0 0.0
        %5051 = vmatpush1.msra.mxu0 0.0
        %5052 = vmatprep.subr.mxu0 0.0
        %5053 = vmatpush1.msra.mxu0 0.0
        %5054 = vmatprep.subr.mxu0 0.0
        %5055 = vmatpush1.msra.mxu0 0.0
        %5056 = vmatprep.subr.mxu0 0.0
        %5057 = vmatpush1.msra.mxu0 0.0
        %5058 = vmatprep.subr.mxu0 0.0
        %5059 = vmatpush1.msra.mxu0 0.0
        %5060 = vmatprep.subr.mxu0 0.0
        %5061 = vmatpush1.msra.mxu0 0.0
        %5062 = vmatprep.subr.mxu0 0.0
        %5063 = vmatpush1.msra.mxu0 0.0
        %5064 = vmatprep.subr.mxu0 0.0
        %5065 = vmatpush1.msra.mxu0 0.0
        %5066 = vmatprep.subr.mxu0 0.0
        %5067 = vmatpush1.msra.mxu0 0.0
        %5068 = vmatprep.subr.mxu0 0.0
        %5069 = vmatpush1.msra.mxu0 0.0
        %5070 = vmatprep.subr.mxu0 0.0
        %5071 = vmatpush1.msra.mxu0 0.0
        %5072 = vmatprep.mubr.f32.mxu0 0.0
        %5073 = vmatmul.mubr.f32.gmra.mrb[0].mxu0 %v4201
        %v5074 = vpop.f32.mrb[0].mxu0
        %v5075 = vadd.f32 %v5006, %v5074
        %v5076 = vpop.f32.mrb[0].mxu0
        %5077 = vdwg.mxu0
        %s5078 = scalar_lea.vmem %s4, 448
        %v5079 = vld [vmem:[%s5078] sm:$0xff]
        %v5080 = vld [vmem:[%s5078 + $0x8] sm:$0xff]
        %v5081 = vld [vmem:[%s5078 + $0x10] sm:$0xff]
        %v5082 = vld [vmem:[%s5078 + $0x18] sm:$0xff]
        %s5083 = scalar_lea.vmem %s5, 14
        %v5084 = vld [vmem:[%s5083] sm:$0x1]
        %v5086 = vlaneseq
        %v5087 = vshrl.u32 %v5086, 7
        %v5088 = vsub.s32 0, %v5087
        %v5089 = vrot.slane %v5084, %v5088
        %5091 = vmatprep.subr.mxu0 0.0
        %5092 = vmatpush1.msra.mxu0 %v5079
        %5093 = vmatprep.subr.mxu0 0.0
        %5094 = vmatpush1.msra.mxu0 %v5080
        %5095 = vmatprep.subr.mxu0 0.0
        %5096 = vmatpush1.msra.mxu0 %v5081
        %5097 = vmatprep.subr.mxu0 0.0
        %5098 = vmatpush1.msra.mxu0 %v5082
        %5099 = vmatprep.subr.mxu0 0.0
        %5100 = vmatpush1.msra.mxu0 0.0
        %5101 = vmatprep.subr.mxu0 0.0
        %5102 = vmatpush1.msra.mxu0 0.0
        %5103 = vmatprep.subr.mxu0 0.0
        %5104 = vmatpush1.msra.mxu0 0.0
        %5105 = vmatprep.subr.mxu0 0.0
        %5106 = vmatpush1.msra.mxu0 0.0
        %5107 = vmatprep.subr.mxu0 0.0
        %5108 = vmatpush1.msra.mxu0 0.0
        %5109 = vmatprep.subr.mxu0 0.0
        %5110 = vmatpush1.msra.mxu0 0.0
        %5111 = vmatprep.subr.mxu0 0.0
        %5112 = vmatpush1.msra.mxu0 0.0
        %5113 = vmatprep.subr.mxu0 0.0
        %5114 = vmatpush1.msra.mxu0 0.0
        %5115 = vmatprep.subr.mxu0 0.0
        %5116 = vmatpush1.msra.mxu0 0.0
        %5117 = vmatprep.subr.mxu0 0.0
        %5118 = vmatpush1.msra.mxu0 0.0
        %5119 = vmatprep.subr.mxu0 0.0
        %5120 = vmatpush1.msra.mxu0 0.0
        %5121 = vmatprep.subr.mxu0 0.0
        %5122 = vmatpush1.msra.mxu0 0.0
        %5123 = vmatprep.subr.mxu0 0.0
        %5124 = vmatpush1.msra.mxu0 0.0
        %5125 = vmatprep.subr.mxu0 0.0
        %5126 = vmatpush1.msra.mxu0 0.0
        %5127 = vmatprep.subr.mxu0 0.0
        %5128 = vmatpush1.msra.mxu0 0.0
        %5129 = vmatprep.subr.mxu0 0.0
        %5130 = vmatpush1.msra.mxu0 0.0
        %5131 = vmatprep.subr.mxu0 0.0
        %5132 = vmatpush1.msra.mxu0 0.0
        %5133 = vmatprep.subr.mxu0 0.0
        %5134 = vmatpush1.msra.mxu0 0.0
        %5135 = vmatprep.subr.mxu0 0.0
        %5136 = vmatpush1.msra.mxu0 0.0
        %5137 = vmatprep.subr.mxu0 0.0
        %5138 = vmatpush1.msra.mxu0 0.0
        %5139 = vmatprep.subr.mxu0 0.0
        %5140 = vmatpush1.msra.mxu0 0.0
        %5141 = vmatprep.subr.mxu0 0.0
        %5142 = vmatpush1.msra.mxu0 0.0
        %5143 = vmatprep.subr.mxu0 0.0
        %5144 = vmatpush1.msra.mxu0 0.0
        %5145 = vmatprep.subr.mxu0 0.0
        %5146 = vmatpush1.msra.mxu0 0.0
        %5147 = vmatprep.subr.mxu0 0.0
        %5148 = vmatpush1.msra.mxu0 0.0
        %5149 = vmatprep.subr.mxu0 0.0
        %5150 = vmatpush1.msra.mxu0 0.0
        %5151 = vmatprep.subr.mxu0 0.0
        %5152 = vmatpush1.msra.mxu0 0.0
        %5153 = vmatprep.subr.mxu0 0.0
        %5154 = vmatpush1.msra.mxu0 0.0
        %5155 = vmatprep.mubr.f32.mxu0 0.0
        %5156 = vmatmul.mubr.f32.gmra.mrb[0].mxu0 %v4201
        %v5157 = vpop.f32.mrb[0].mxu0
        %v5158 = vadd.f32 %v5089, %v5157
        %v5159 = vpop.f32.mrb[0].mxu0
        %5160 = vdwg.mxu0
        %v5162 = vsel %vm806, %v5075, 0
        %v5165 = vsel %vm806, %v5158, 0
        %5167 = vmatprep.subr.mxu0 0.0
        %5168 = vmatpush1.xpose.msra.mxu0 %v5165
        %5169 = vmatprep.subr.mxu0 0.0
        %5170 = vmatpush1.xpose.msra.mxu0 0.0
        %5171 = vmatprep.subr.mxu0 0.0
        %5172 = vmatpush1.xpose.msra.mxu0 0.0
        %5173 = vmatprep.subr.mxu0 0.0
        %5174 = vmatpush1.xpose.msra.mxu0 0.0
        %5175 = vmatprep.subr.mxu0 0.0
        %5176 = vmatpush1.xpose.msra.mxu0 0.0
        %5177 = vmatprep.subr.mxu0 0.0
        %5178 = vmatpush1.xpose.msra.mxu0 0.0
        %5179 = vmatprep.subr.mxu0 0.0
        %5180 = vmatpush1.xpose.msra.mxu0 0.0
        %5181 = vmatprep.subr.mxu0 0.0
        %5182 = vmatpush1.xpose.msra.mxu0 0.0
        %5183 = vmatprep.subr.mxu0 0.0
        %5184 = vmatpush1.xpose.msra.mxu0 0.0
        %5185 = vmatprep.subr.mxu0 0.0
        %5186 = vmatpush1.xpose.msra.mxu0 0.0
        %5187 = vmatprep.subr.mxu0 0.0
        %5188 = vmatpush1.xpose.msra.mxu0 0.0
        %5189 = vmatprep.subr.mxu0 0.0
        %5190 = vmatpush1.xpose.msra.mxu0 0.0
        %5191 = vmatprep.subr.mxu0 0.0
        %5192 = vmatpush1.xpose.msra.mxu0 0.0
        %5193 = vmatprep.subr.mxu0 0.0
        %5194 = vmatpush1.xpose.msra.mxu0 0.0
        %5195 = vmatprep.subr.mxu0 0.0
        %5196 = vmatpush1.xpose.msra.mxu0 0.0
        %5197 = vmatprep.subr.mxu0 0.0
        %5198 = vmatpush1.xpose.msra.mxu0 0.0
        %5199 = vmatprep.subr.mxu0 0.0
        %5200 = vmatpush1.xpose.msra.mxu0 0.0
        %5201 = vmatprep.subr.mxu0 0.0
        %5202 = vmatpush1.xpose.msra.mxu0 0.0
        %5203 = vmatprep.subr.mxu0 0.0
        %5204 = vmatpush1.xpose.msra.mxu0 0.0
        %5205 = vmatprep.subr.mxu0 0.0
        %5206 = vmatpush1.xpose.msra.mxu0 0.0
        %5207 = vmatprep.subr.mxu0 0.0
        %5208 = vmatpush1.xpose.msra.mxu0 0.0
        %5209 = vmatprep.subr.mxu0 0.0
        %5210 = vmatpush1.xpose.msra.mxu0 0.0
        %5211 = vmatprep.subr.mxu0 0.0
        %5212 = vmatpush1.xpose.msra.mxu0 0.0
        %5213 = vmatprep.subr.mxu0 0.0
        %5214 = vmatpush1.xpose.msra.mxu0 0.0
        %5215 = vmatprep.subr.mxu0 0.0
        %5216 = vmatpush1.xpose.msra.mxu0 0.0
        %5217 = vmatprep.subr.mxu0 0.0
        %5218 = vmatpush1.xpose.msra.mxu0 0.0
        %5219 = vmatprep.subr.mxu0 0.0
        %5220 = vmatpush1.xpose.msra.mxu0 0.0
        %5221 = vmatprep.subr.mxu0 0.0
        %5222 = vmatpush1.xpose.msra.mxu0 0.0
        %5223 = vmatprep.subr.mxu0 0.0
        %5224 = vmatpush1.xpose.msra.mxu0 0.0
        %5225 = vmatprep.subr.mxu0 0.0
        %5226 = vmatpush1.xpose.msra.mxu0 0.0
        %5227 = vmatprep.subr.mxu0 0.0
        %5228 = vmatpush1.xpose.msra.mxu0 0.0
        %5229 = vmatprep.subr.mxu0 0.0
        %5230 = vmatpush1.xpose.msra.mxu0 0.0
        %5231 = vmatprep.mubr.f32.mxu0 0.0
        %5232 = vmatmul.mubr.f32.gmra.mrb[0].mxu0 %v5162
        %v5233 = vpop.f32.mrb[0].mxu0
        %v5234 = vadd.f32 0.0, %v5233
        %v5235 = vpop.f32.mrb[0].mxu0
        %5236 = vdwg.mxu0
        %v5237 = vsel %vm806, %v5234, -inf
        %5238 = vmax.xlane.f32.xlu0 %v5237
        %v5239 = vpop.xlane.xlu0 %5238
        %v5240 = vsub.f32 %v5234, %v5239
        %v5241 = vmul.f32 %v5240, 1.442695
        %v5242 = vpow.pop %v5241
        %v5243 = vsel %vm806, %v5242, 0.0
        %5244 = vadd.xlane.f32.xlu0 %v5243
        %v5245 = vpop.xlane.xlu0 %5244
        %v5246 = vrcp.pop %v5245
        %v5247 = vmul.f32 %v5242, %v5246
        %s5248 = scalar_lea.vmem %s6, 192
        %v5249 = vld [vmem:[%s5248] sm:$0xff]
        %v5250 = vld [vmem:[%s5248 + $0x8] sm:$0xff]
        %v5251 = vld [vmem:[%s5248 + $0x10] sm:$0xff]
        %v5252 = vld [vmem:[%s5248 + $0x18] sm:$0xff]
        %5253 = vmatprep.subr.mxu0 0.0
        %5254 = vmatpush1.msra.mxu0 %v5249
        %5255 = vmatprep.subr.mxu0 0.0
        %5256 = vmatpush1.msra.mxu0 %v5250
        %5257 = vmatprep.subr.mxu0 0.0
        %5258 = vmatpush1.msra.mxu0 %v5251
        %5259 = vmatprep.subr.mxu0 0.0
        %5260 = vmatpush1.msra.mxu0 %v5252
        %5261 = vmatprep.subr.mxu0 0.0
        %5262 = vmatpush1.msra.mxu0 0.0
        %5263 = vmatprep.subr.mxu0 0.0
        %5264 = vmatpush1.msra.mxu0 0.0
        %5265 = vmatprep.subr.mxu0 0.0
        %5266 = vmatpush1.msra.mxu0 0.0
        %5267 = vmatprep.subr.mxu0 0.0
        %5268 = vmatpush1.msra.mxu0 0.0
        %5269 = vmatprep.subr.mxu0 0.0
        %5270 = vmatpush1.msra.mxu0 0.0
        %5271 = vmatprep.subr.mxu0 0.0
        %5272 = vmatpush1.msra.mxu0 0.0
        %5273 = vmatprep.subr.mxu0 0.0
        %5274 = vmatpush1.msra.mxu0 0.0
        %5275 = vmatprep.subr.mxu0 0.0
        %5276 = vmatpush1.msra.mxu0 0.0
        %5277 = vmatprep.subr.mxu0 0.0
        %5278 = vmatpush1.msra.mxu0 0.0
        %5279 = vmatprep.subr.mxu0 0.0
        %5280 = vmatpush1.msra.mxu0 0.0
        %5281 = vmatprep.subr.mxu0 0.0
        %5282 = vmatpush1.msra.mxu0 0.0
        %5283 = vmatprep.subr.mxu0 0.0
        %5284 = vmatpush1.msra.mxu0 0.0
        %5285 = vmatprep.subr.mxu0 0.0
        %5286 = vmatpush1.msra.mxu0 0.0
        %5287 = vmatprep.subr.mxu0 0.0
        %5288 = vmatpush1.msra.mxu0 0.0
        %5289 = vmatprep.subr.mxu0 0.0
        %5290 = vmatpush1.msra.mxu0 0.0
        %5291 = vmatprep.subr.mxu0 0.0
        %5292 = vmatpush1.msra.mxu0 0.0
        %5293 = vmatprep.subr.mxu0 0.0
        %5294 = vmatpush1.msra.mxu0 0.0
        %5295 = vmatprep.subr.mxu0 0.0
        %5296 = vmatpush1.msra.mxu0 0.0
        %5297 = vmatprep.subr.mxu0 0.0
        %5298 = vmatpush1.msra.mxu0 0.0
        %5299 = vmatprep.subr.mxu0 0.0
        %5300 = vmatpush1.msra.mxu0 0.0
        %5301 = vmatprep.subr.mxu0 0.0
        %5302 = vmatpush1.msra.mxu0 0.0
        %5303 = vmatprep.subr.mxu0 0.0
        %5304 = vmatpush1.msra.mxu0 0.0
        %5305 = vmatprep.subr.mxu0 0.0
        %5306 = vmatpush1.msra.mxu0 0.0
        %5307 = vmatprep.subr.mxu0 0.0
        %5308 = vmatpush1.msra.mxu0 0.0
        %5309 = vmatprep.subr.mxu0 0.0
        %5310 = vmatpush1.msra.mxu0 0.0
        %5311 = vmatprep.subr.mxu0 0.0
        %5312 = vmatpush1.msra.mxu0 0.0
        %5313 = vmatprep.subr.mxu0 0.0
        %5314 = vmatpush1.msra.mxu0 0.0
        %5315 = vmatprep.subr.mxu0 0.0
        %5316 = vmatpush1.msra.mxu0 0.0
        %5317 = vmatprep.mubr.f32.mxu0 0.0
        %5318 = vmatmul.mubr.f32.gmra.mrb[0].mxu0 %v4449
        %v5319 = vpop.f32.mrb[0].mxu0
        %v5320 = vadd.f32 0.0, %v5319
        %v5321 = vpop.f32.mrb[0].mxu0
        %5322 = vdwg.mxu0
        %v5324 = vsel %vm806, %v5247, 0
        %5326 = vmatprep.subr.mxu0 0.0
        %5327 = vmatpush1.msra.mxu0 %v5320
        %5328 = vmatprep.subr.mxu0 0.0
        %5329 = vmatpush1.msra.mxu0 0.0
        %5330 = vmatprep.subr.mxu0 0.0
        %5331 = vmatpush1.msra.mxu0 0.0
        %5332 = vmatprep.subr.mxu0 0.0
        %5333 = vmatpush1.msra.mxu0 0.0
        %5334 = vmatprep.subr.mxu0 0.0
        %5335 = vmatpush1.msra.mxu0 0.0
        %5336 = vmatprep.subr.mxu0 0.0
        %5337 = vmatpush1.msra.mxu0 0.0
        %5338 = vmatprep.subr.mxu0 0.0
        %5339 = vmatpush1.msra.mxu0 0.0
        %5340 = vmatprep.subr.mxu0 0.0
        %5341 = vmatpush1.msra.mxu0 0.0
        %5342 = vmatprep.subr.mxu0 0.0
        %5343 = vmatpush1.msra.mxu0 0.0
        %5344 = vmatprep.subr.mxu0 0.0
        %5345 = vmatpush1.msra.mxu0 0.0
        %5346 = vmatprep.subr.mxu0 0.0
        %5347 = vmatpush1.msra.mxu0 0.0
        %5348 = vmatprep.subr.mxu0 0.0
        %5349 = vmatpush1.msra.mxu0 0.0
        %5350 = vmatprep.subr.mxu0 0.0
        %5351 = vmatpush1.msra.mxu0 0.0
        %5352 = vmatprep.subr.mxu0 0.0
        %5353 = vmatpush1.msra.mxu0 0.0
        %5354 = vmatprep.subr.mxu0 0.0
        %5355 = vmatpush1.msra.mxu0 0.0
        %5356 = vmatprep.subr.mxu0 0.0
        %5357 = vmatpush1.msra.mxu0 0.0
        %5358 = vmatprep.subr.mxu0 0.0
        %5359 = vmatpush1.msra.mxu0 0.0
        %5360 = vmatprep.subr.mxu0 0.0
        %5361 = vmatpush1.msra.mxu0 0.0
        %5362 = vmatprep.subr.mxu0 0.0
        %5363 = vmatpush1.msra.mxu0 0.0
        %5364 = vmatprep.subr.mxu0 0.0
        %5365 = vmatpush1.msra.mxu0 0.0
        %5366 = vmatprep.subr.mxu0 0.0
        %5367 = vmatpush1.msra.mxu0 0.0
        %5368 = vmatprep.subr.mxu0 0.0
        %5369 = vmatpush1.msra.mxu0 0.0
        %5370 = vmatprep.subr.mxu0 0.0
        %5371 = vmatpush1.msra.mxu0 0.0
        %5372 = vmatprep.subr.mxu0 0.0
        %5373 = vmatpush1.msra.mxu0 0.0
        %5374 = vmatprep.subr.mxu0 0.0
        %5375 = vmatpush1.msra.mxu0 0.0
        %5376 = vmatprep.subr.mxu0 0.0
        %5377 = vmatpush1.msra.mxu0 0.0
        %5378 = vmatprep.subr.mxu0 0.0
        %5379 = vmatpush1.msra.mxu0 0.0
        %5380 = vmatprep.subr.mxu0 0.0
        %5381 = vmatpush1.msra.mxu0 0.0
        %5382 = vmatprep.subr.mxu0 0.0
        %5383 = vmatpush1.msra.mxu0 0.0
        %5384 = vmatprep.subr.mxu0 0.0
        %5385 = vmatpush1.msra.mxu0 0.0
        %5386 = vmatprep.subr.mxu0 0.0
        %5387 = vmatpush1.msra.mxu0 0.0
        %5388 = vmatprep.subr.mxu0 0.0
        %5389 = vmatpush1.msra.mxu0 0.0
        %5390 = vmatprep.mubr.f32.mxu0 0.0
        %5391 = vmatmul.mubr.f32.gmra.mrb[0].mxu0 %v5324
        %v5392 = vpop.f32.mrb[0].mxu0
        %v5393 = vadd.f32 0.0, %v5392
        %v5394 = vpop.f32.mrb[0].mxu0
        %5395 = vdwg.mxu0
        %v5396 = vadd.f32 %v4992, %v5393
        %s5397 = scalar_lea.vmem %s4, 352
        %v5398 = vld [vmem:[%s5397] sm:$0xff]
        %v5399 = vld [vmem:[%s5397 + $0x8] sm:$0xff]
        %v5400 = vld [vmem:[%s5397 + $0x10] sm:$0xff]
        %v5401 = vld [vmem:[%s5397 + $0x18] sm:$0xff]
        %s5402 = scalar_lea.vmem %s5, 11
        %v5403 = vld [vmem:[%s5402] sm:$0x1]
        %v5405 = vlaneseq
        %v5406 = vshrl.u32 %v5405, 7
        %v5407 = vsub.s32 0, %v5406
        %v5408 = vrot.slane %v5403, %v5407
        %5410 = vmatprep.subr.mxu0 0.0
        %5411 = vmatpush1.msra.mxu0 %v5398
        %5412 = vmatprep.subr.mxu0 0.0
        %5413 = vmatpush1.msra.mxu0 %v5399
        %5414 = vmatprep.subr.mxu0 0.0
        %5415 = vmatpush1.msra.mxu0 %v5400
        %5416 = vmatprep.subr.mxu0 0.0
        %5417 = vmatpush1.msra.mxu0 %v5401
        %5418 = vmatprep.subr.mxu0 0.0
        %5419 = vmatpush1.msra.mxu0 0.0
        %5420 = vmatprep.subr.mxu0 0.0
        %5421 = vmatpush1.msra.mxu0 0.0
        %5422 = vmatprep.subr.mxu0 0.0
        %5423 = vmatpush1.msra.mxu0 0.0
        %5424 = vmatprep.subr.mxu0 0.0
        %5425 = vmatpush1.msra.mxu0 0.0
        %5426 = vmatprep.subr.mxu0 0.0
        %5427 = vmatpush1.msra.mxu0 0.0
        %5428 = vmatprep.subr.mxu0 0.0
        %5429 = vmatpush1.msra.mxu0 0.0
        %5430 = vmatprep.subr.mxu0 0.0
        %5431 = vmatpush1.msra.mxu0 0.0
        %5432 = vmatprep.subr.mxu0 0.0
        %5433 = vmatpush1.msra.mxu0 0.0
        %5434 = vmatprep.subr.mxu0 0.0
        %5435 = vmatpush1.msra.mxu0 0.0
        %5436 = vmatprep.subr.mxu0 0.0
        %5437 = vmatpush1.msra.mxu0 0.0
        %5438 = vmatprep.subr.mxu0 0.0
        %5439 = vmatpush1.msra.mxu0 0.0
        %5440 = vmatprep.subr.mxu0 0.0
        %5441 = vmatpush1.msra.mxu0 0.0
        %5442 = vmatprep.subr.mxu0 0.0
        %5443 = vmatpush1.msra.mxu0 0.0
        %5444 = vmatprep.subr.mxu0 0.0
        %5445 = vmatpush1.msra.mxu0 0.0
        %5446 = vmatprep.subr.mxu0 0.0
        %5447 = vmatpush1.msra.mxu0 0.0
        %5448 = vmatprep.subr.mxu0 0.0
        %5449 = vmatpush1.msra.mxu0 0.0
        %5450 = vmatprep.subr.mxu0 0.0
        %5451 = vmatpush1.msra.mxu0 0.0
        %5452 = vmatprep.subr.mxu0 0.0
        %5453 = vmatpush1.msra.mxu0 0.0
        %5454 = vmatprep.subr.mxu0 0.0
        %5455 = vmatpush1.msra.mxu0 0.0
        %5456 = vmatprep.subr.mxu0 0.0
        %5457 = vmatpush1.msra.mxu0 0.0
        %5458 = vmatprep.subr.mxu0 0.0
        %5459 = vmatpush1.msra.mxu0 0.0
        %5460 = vmatprep.subr.mxu0 0.0
        %5461 = vmatpush1.msra.mxu0 0.0
        %5462 = vmatprep.subr.mxu0 0.0
        %5463 = vmatpush1.msra.mxu0 0.0
        %5464 = vmatprep.subr.mxu0 0.0
        %5465 = vmatpush1.msra.mxu0 0.0
        %5466 = vmatprep.subr.mxu0 0.0
        %5467 = vmatpush1.msra.mxu0 0.0
        %5468 = vmatprep.subr.mxu0 0.0
        %5469 = vmatpush1.msra.mxu0 0.0
        %5470 = vmatprep.subr.mxu0 0.0
        %5471 = vmatpush1.msra.mxu0 0.0
        %5472 = vmatprep.subr.mxu0 0.0
        %5473 = vmatpush1.msra.mxu0 0.0
        %5474 = vmatprep.mubr.f32.mxu0 0.0
        %5475 = vmatmul.mubr.f32.gmra.mrb[0].mxu0 %v4201
        %v5476 = vpop.f32.mrb[0].mxu0
        %v5477 = vadd.f32 %v5408, %v5476
        %v5478 = vpop.f32.mrb[0].mxu0
        %5479 = vdwg.mxu0
        %s5480 = scalar_lea.vmem %s4, 480
        %v5481 = vld [vmem:[%s5480] sm:$0xff]
        %v5482 = vld [vmem:[%s5480 + $0x8] sm:$0xff]
        %v5483 = vld [vmem:[%s5480 + $0x10] sm:$0xff]
        %v5484 = vld [vmem:[%s5480 + $0x18] sm:$0xff]
        %s5485 = scalar_lea.vmem %s5, 15
        %v5486 = vld [vmem:[%s5485] sm:$0x1]
        %v5488 = vlaneseq
        %v5489 = vshrl.u32 %v5488, 7
        %v5490 = vsub.s32 0, %v5489
        %v5491 = vrot.slane %v5486, %v5490
        %5493 = vmatprep.subr.mxu0 0.0
        %5494 = vmatpush1.msra.mxu0 %v5481
        %5495 = vmatprep.subr.mxu0 0.0
        %5496 = vmatpush1.msra.mxu0 %v5482
        %5497 = vmatprep.subr.mxu0 0.0
        %5498 = vmatpush1.msra.mxu0 %v5483
        %5499 = vmatprep.subr.mxu0 0.0
        %5500 = vmatpush1.msra.mxu0 %v5484
        %5501 = vmatprep.subr.mxu0 0.0
        %5502 = vmatpush1.msra.mxu0 0.0
        %5503 = vmatprep.subr.mxu0 0.0
        %5504 = vmatpush1.msra.mxu0 0.0
        %5505 = vmatprep.subr.mxu0 0.0
        %5506 = vmatpush1.msra.mxu0 0.0
        %5507 = vmatprep.subr.mxu0 0.0
        %5508 = vmatpush1.msra.mxu0 0.0
        %5509 = vmatprep.subr.mxu0 0.0
        %5510 = vmatpush1.msra.mxu0 0.0
        %5511 = vmatprep.subr.mxu0 0.0
        %5512 = vmatpush1.msra.mxu0 0.0
        %5513 = vmatprep.subr.mxu0 0.0
        %5514 = vmatpush1.msra.mxu0 0.0
        %5515 = vmatprep.subr.mxu0 0.0
        %5516 = vmatpush1.msra.mxu0 0.0
        %5517 = vmatprep.subr.mxu0 0.0
        %5518 = vmatpush1.msra.mxu0 0.0
        %5519 = vmatprep.subr.mxu0 0.0
        %5520 = vmatpush1.msra.mxu0 0.0
        %5521 = vmatprep.subr.mxu0 0.0
        %5522 = vmatpush1.msra.mxu0 0.0
        %5523 = vmatprep.subr.mxu0 0.0
        %5524 = vmatpush1.msra.mxu0 0.0
        %5525 = vmatprep.subr.mxu0 0.0
        %5526 = vmatpush1.msra.mxu0 0.0
        %5527 = vmatprep.subr.mxu0 0.0
        %5528 = vmatpush1.msra.mxu0 0.0
        %5529 = vmatprep.subr.mxu0 0.0
        %5530 = vmatpush1.msra.mxu0 0.0
        %5531 = vmatprep.subr.mxu0 0.0
        %5532 = vmatpush1.msra.mxu0 0.0
        %5533 = vmatprep.subr.mxu0 0.0
        %5534 = vmatpush1.msra.mxu0 0.0
        %5535 = vmatprep.subr.mxu0 0.0
        %5536 = vmatpush1.msra.mxu0 0.0
        %5537 = vmatprep.subr.mxu0 0.0
        %5538 = vmatpush1.msra.mxu0 0.0
        %5539 = vmatprep.subr.mxu0 0.0
        %5540 = vmatpush1.msra.mxu0 0.0
        %5541 = vmatprep.subr.mxu0 0.0
        %5542 = vmatpush1.msra.mxu0 0.0
        %5543 = vmatprep.subr.mxu0 0.0
        %5544 = vmatpush1.msra.mxu0 0.0
        %5545 = vmatprep.subr.mxu0 0.0
        %5546 = vmatpush1.msra.mxu0 0.0
        %5547 = vmatprep.subr.mxu0 0.0
        %5548 = vmatpush1.msra.mxu0 0.0
        %5549 = vmatprep.subr.mxu0 0.0
        %5550 = vmatpush1.msra.mxu0 0.0
        %5551 = vmatprep.subr.mxu0 0.0
        %5552 = vmatpush1.msra.mxu0 0.0
        %5553 = vmatprep.subr.mxu0 0.0
        %5554 = vmatpush1.msra.mxu0 0.0
        %5555 = vmatprep.subr.mxu0 0.0
        %5556 = vmatpush1.msra.mxu0 0.0
        %5557 = vmatprep.mubr.f32.mxu0 0.0
        %5558 = vmatmul.mubr.f32.gmra.mrb[0].mxu0 %v4201
        %v5559 = vpop.f32.mrb[0].mxu0
        %v5560 = vadd.f32 %v5491, %v5559
        %v5561 = vpop.f32.mrb[0].mxu0
        %5562 = vdwg.mxu0
        %v5564 = vsel %vm806, %v5477, 0
        %v5567 = vsel %vm806, %v5560, 0
        %5569 = vmatprep.subr.mxu0 0.0
        %5570 = vmatpush1.xpose.msra.mxu0 %v5567
        %5571 = vmatprep.subr.mxu0 0.0
        %5572 = vmatpush1.xpose.msra.mxu0 0.0
        %5573 = vmatprep.subr.mxu0 0.0
        %5574 = vmatpush1.xpose.msra.mxu0 0.0
        %5575 = vmatprep.subr.mxu0 0.0
        %5576 = vmatpush1.xpose.msra.mxu0 0.0
        %5577 = vmatprep.subr.mxu0 0.0
        %5578 = vmatpush1.xpose.msra.mxu0 0.0
        %5579 = vmatprep.subr.mxu0 0.0
        %5580 = vmatpush1.xpose.msra.mxu0 0.0
        %5581 = vmatprep.subr.mxu0 0.0
        %5582 = vmatpush1.xpose.msra.mxu0 0.0
        %5583 = vmatprep.subr.mxu0 0.0
        %5584 = vmatpush1.xpose.msra.mxu0 0.0
        %5585 = vmatprep.subr.mxu0 0.0
        %5586 = vmatpush1.xpose.msra.mxu0 0.0
        %5587 = vmatprep.subr.mxu0 0.0
        %5588 = vmatpush1.xpose.msra.mxu0 0.0
        %5589 = vmatprep.subr.mxu0 0.0
        %5590 = vmatpush1.xpose.msra.mxu0 0.0
        %5591 = vmatprep.subr.mxu0 0.0
        %5592 = vmatpush1.xpose.msra.mxu0 0.0
        %5593 = vmatprep.subr.mxu0 0.0
        %5594 = vmatpush1.xpose.msra.mxu0 0.0
        %5595 = vmatprep.subr.mxu0 0.0
        %5596 = vmatpush1.xpose.msra.mxu0 0.0
        %5597 = vmatprep.subr.mxu0 0.0
        %5598 = vmatpush1.xpose.msra.mxu0 0.0
        %5599 = vmatprep.subr.mxu0 0.0
        %5600 = vmatpush1.xpose.msra.mxu0 0.0
        %5601 = vmatprep.subr.mxu0 0.0
        %5602 = vmatpush1.xpose.msra.mxu0 0.0
        %5603 = vmatprep.subr.mxu0 0.0
        %5604 = vmatpush1.xpose.msra.mxu0 0.0
        %5605 = vmatprep.subr.mxu0 0.0
        %5606 = vmatpush1.xpose.msra.mxu0 0.0
        %5607 = vmatprep.subr.mxu0 0.0
        %5608 = vmatpush1.xpose.msra.mxu0 0.0
        %5609 = vmatprep.subr.mxu0 0.0
        %5610 = vmatpush1.xpose.msra.mxu0 0.0
        %5611 = vmatprep.subr.mxu0 0.0
        %5612 = vmatpush1.xpose.msra.mxu0 0.0
        %5613 = vmatprep.subr.mxu0 0.0
        %5614 = vmatpush1.xpose.msra.mxu0 0.0
        %5615 = vmatprep.subr.mxu0 0.0
        %5616 = vmatpush1.xpose.msra.mxu0 0.0
        %5617 = vmatprep.subr.mxu0 0.0
        %5618 = vmatpush1.xpose.msra.mxu0 0.0
        %5619 = vmatprep.subr.mxu0 0.0
        %5620 = vmatpush1.xpose.msra.mxu0 0.0
        %5621 = vmatprep.subr.mxu0 0.0
        %5622 = vmatpush1.xpose.msra.mxu0 0.0
        %5623 = vmatprep.subr.mxu0 0.0
        %5624 = vmatpush1.xpose.msra.mxu0 0.0
        %5625 = vmatprep.subr.mxu0 0.0
        %5626 = vmatpush1.xpose.msra.mxu0 0.0
        %5627 = vmatprep.subr.mxu0 0.0
        %5628 = vmatpush1.xpose.msra.mxu0 0.0
        %5629 = vmatprep.subr.mxu0 0.0
        %5630 = vmatpush1.xpose.msra.mxu0 0.0
        %5631 = vmatprep.subr.mxu0 0.0
        %5632 = vmatpush1.xpose.msra.mxu0 0.0
        %5633 = vmatprep.mubr.f32.mxu0 0.0
        %5634 = vmatmul.mubr.f32.gmra.mrb[0].mxu0 %v5564
        %v5635 = vpop.f32.mrb[0].mxu0
        %v5636 = vadd.f32 0.0, %v5635
        %v5637 = vpop.f32.mrb[0].mxu0
        %5638 = vdwg.mxu0
        %v5639 = vsel %vm806, %v5636, -inf
        %5640 = vmax.xlane.f32.xlu0 %v5639
        %v5641 = vpop.xlane.xlu0 %5640
        %v5642 = vsub.f32 %v5636, %v5641
        %v5643 = vmul.f32 %v5642, 1.442695
        %v5644 = vpow.pop %v5643
        %v5645 = vsel %vm806, %v5644, 0.0
        %5646 = vadd.xlane.f32.xlu0 %v5645
        %v5647 = vpop.xlane.xlu0 %5646
        %v5648 = vrcp.pop %v5647
        %v5649 = vmul.f32 %v5644, %v5648
        %s5650 = scalar_lea.vmem %s6, 224
        %v5651 = vld [vmem:[%s5650] sm:$0xff]
        %v5652 = vld [vmem:[%s5650 + $0x8] sm:$0xff]
        %v5653 = vld [vmem:[%s5650 + $0x10] sm:$0xff]
        %v5654 = vld [vmem:[%s5650 + $0x18] sm:$0xff]
        %5655 = vmatprep.subr.mxu0 0.0
        %5656 = vmatpush1.msra.mxu0 %v5651
        %5657 = vmatprep.subr.mxu0 0.0
        %5658 = vmatpush1.msra.mxu0 %v5652
        %5659 = vmatprep.subr.mxu0 0.0
        %5660 = vmatpush1.msra.mxu0 %v5653
        %5661 = vmatprep.subr.mxu0 0.0
        %5662 = vmatpush1.msra.mxu0 %v5654
        %5663 = vmatprep.subr.mxu0 0.0
        %5664 = vmatpush1.msra.mxu0 0.0
        %5665 = vmatprep.subr.mxu0 0.0
        %5666 = vmatpush1.msra.mxu0 0.0
        %5667 = vmatprep.subr.mxu0 0.0
        %5668 = vmatpush1.msra.mxu0 0.0
        %5669 = vmatprep.subr.mxu0 0.0
        %5670 = vmatpush1.msra.mxu0 0.0
        %5671 = vmatprep.subr.mxu0 0.0
        %5672 = vmatpush1.msra.mxu0 0.0
        %5673 = vmatprep.subr.mxu0 0.0
        %5674 = vmatpush1.msra.mxu0 0.0
        %5675 = vmatprep.subr.mxu0 0.0
        %5676 = vmatpush1.msra.mxu0 0.0
        %5677 = vmatprep.subr.mxu0 0.0
        %5678 = vmatpush1.msra.mxu0 0.0
        %5679 = vmatprep.subr.mxu0 0.0
        %5680 = vmatpush1.msra.mxu0 0.0
        %5681 = vmatprep.subr.mxu0 0.0
        %5682 = vmatpush1.msra.mxu0 0.0
        %5683 = vmatprep.subr.mxu0 0.0
        %5684 = vmatpush1.msra.mxu0 0.0
        %5685 = vmatprep.subr.mxu0 0.0
        %5686 = vmatpush1.msra.mxu0 0.0
        %5687 = vmatprep.subr.mxu0 0.0
        %5688 = vmatpush1.msra.mxu0 0.0
        %5689 = vmatprep.subr.mxu0 0.0
        %5690 = vmatpush1.msra.mxu0 0.0
        %5691 = vmatprep.subr.mxu0 0.0
        %5692 = vmatpush1.msra.mxu0 0.0
        %5693 = vmatprep.subr.mxu0 0.0
        %5694 = vmatpush1.msra.mxu0 0.0
        %5695 = vmatprep.subr.mxu0 0.0
        %5696 = vmatpush1.msra.mxu0 0.0
        %5697 = vmatprep.subr.mxu0 0.0
        %5698 = vmatpush1.msra.mxu0 0.0
        %5699 = vmatprep.subr.mxu0 0.0
        %5700 = vmatpush1.msra.mxu0 0.0
        %5701 = vmatprep.subr.mxu0 0.0
        %5702 = vmatpush1.msra.mxu0 0.0
        %5703 = vmatprep.subr.mxu0 0.0
        %5704 = vmatpush1.msra.mxu0 0.0
        %5705 = vmatprep.subr.mxu0 0.0
        %5706 = vmatpush1.msra.mxu0 0.0
        %5707 = vmatprep.subr.mxu0 0.0
        %5708 = vmatpush1.msra.mxu0 0.0
        %5709 = vmatprep.subr.mxu0 0.0
        %5710 = vmatpush1.msra.mxu0 0.0
        %5711 = vmatprep.subr.mxu0 0.0
        %5712 = vmatpush1.msra.mxu0 0.0
        %5713 = vmatprep.subr.mxu0 0.0
        %5714 = vmatpush1.msra.mxu0 0.0
        %5715 = vmatprep.subr.mxu0 0.0
        %5716 = vmatpush1.msra.mxu0 0.0
        %5717 = vmatprep.subr.mxu0 0.0
        %5718 = vmatpush1.msra.mxu0 0.0
        %5719 = vmatprep.mubr.f32.mxu0 0.0
        %5720 = vmatmul.mubr.f32.gmra.mrb[0].mxu0 %v4449
        %v5721 = vpop.f32.mrb[0].mxu0
        %v5722 = vadd.f32 0.0, %v5721
        %v5723 = vpop.f32.mrb[0].mxu0
        %5724 = vdwg.mxu0
        %v5726 = vsel %vm806, %v5649, 0
        %5728 = vmatprep.subr.mxu0 0.0
        %5729 = vmatpush1.msra.mxu0 %v5722
        %5730 = vmatprep.subr.mxu0 0.0
        %5731 = vmatpush1.msra.mxu0 0.0
        %5732 = vmatprep.subr.mxu0 0.0
        %5733 = vmatpush1.msra.mxu0 0.0
        %5734 = vmatprep.subr.mxu0 0.0
        %5735 = vmatpush1.msra.mxu0 0.0
        %5736 = vmatprep.subr.mxu0 0.0
        %5737 = vmatpush1.msra.mxu0 0.0
        %5738 = vmatprep.subr.mxu0 0.0
        %5739 = vmatpush1.msra.mxu0 0.0
        %5740 = vmatprep.subr.mxu0 0.0
        %5741 = vmatpush1.msra.mxu0 0.0
        %5742 = vmatprep.subr.mxu0 0.0
        %5743 = vmatpush1.msra.mxu0 0.0
        %5744 = vmatprep.subr.mxu0 0.0
        %5745 = vmatpush1.msra.mxu0 0.0
        %5746 = vmatprep.subr.mxu0 0.0
        %5747 = vmatpush1.msra.mxu0 0.0
        %5748 = vmatprep.subr.mxu0 0.0
        %5749 = vmatpush1.msra.mxu0 0.0
        %5750 = vmatprep.subr.mxu0 0.0
        %5751 = vmatpush1.msra.mxu0 0.0
        %5752 = vmatprep.subr.mxu0 0.0
        %5753 = vmatpush1.msra.mxu0 0.0
        %5754 = vmatprep.subr.mxu0 0.0
        %5755 = vmatpush1.msra.mxu0 0.0
        %5756 = vmatprep.subr.mxu0 0.0
        %5757 = vmatpush1.msra.mxu0 0.0
        %5758 = vmatprep.subr.mxu0 0.0
        %5759 = vmatpush1.msra.mxu0 0.0
        %5760 = vmatprep.subr.mxu0 0.0
        %5761 = vmatpush1.msra.mxu0 0.0
        %5762 = vmatprep.subr.mxu0 0.0
        %5763 = vmatpush1.msra.mxu0 0.0
        %5764 = vmatprep.subr.mxu0 0.0
        %5765 = vmatpush1.msra.mxu0 0.0
        %5766 = vmatprep.subr.mxu0 0.0
        %5767 = vmatpush1.msra.mxu0 0.0
        %5768 = vmatprep.subr.mxu0 0.0
        %5769 = vmatpush1.msra.mxu0 0.0
        %5770 = vmatprep.subr.mxu0 0.0
        %5771 = vmatpush1.msra.mxu0 0.0
        %5772 = vmatprep.subr.mxu0 0.0
        %5773 = vmatpush1.msra.mxu0 0.0
        %5774 = vmatprep.subr.mxu0 0.0
        %5775 = vmatpush1.msra.mxu0 0.0
        %5776 = vmatprep.subr.mxu0 0.0
        %5777 = vmatpush1.msra.mxu0 0.0
        %5778 = vmatprep.subr.mxu0 0.0
        %5779 = vmatpush1.msra.mxu0 0.0
        %5780 = vmatprep.subr.mxu0 0.0
        %5781 = vmatpush1.msra.mxu0 0.0
        %5782 = vmatprep.subr.mxu0 0.0
        %5783 = vmatpush1.msra.mxu0 0.0
        %5784 = vmatprep.subr.mxu0 0.0
        %5785 = vmatpush1.msra.mxu0 0.0
        %5786 = vmatprep.subr.mxu0 0.0
        %5787 = vmatpush1.msra.mxu0 0.0
        %5788 = vmatprep.subr.mxu0 0.0
        %5789 = vmatpush1.msra.mxu0 0.0
        %5790 = vmatprep.subr.mxu0 0.0
        %5791 = vmatpush1.msra.mxu0 0.0
        %5792 = vmatprep.mubr.f32.mxu0 0.0
        %5793 = vmatmul.mubr.f32.gmra.mrb[0].mxu0 %v5726
        %v5794 = vpop.f32.mrb[0].mxu0
        %v5795 = vadd.f32 0.0, %v5794
        %v5796 = vpop.f32.mrb[0].mxu0
        %5797 = vdwg.mxu0
        %v5798 = vadd.f32 %v5396, %v5795
        %s5799 = scalar_lea.vmem %s7, 1
        %v5800 = vld [vmem:[%s5799] sm:$0x1]
        %v5802 = vlaneseq
        %v5803 = vshrl.u32 %v5802, 7
        %v5804 = vsub.s32 0, %v5803
        %v5805 = vrot.slane %v5800, %v5804
        %v5807 = vadd.f32 %v5798, %v5805
        %v5808 = vadd.f32 %v4183, %v5807
        %v5809 = vsel %vm649, %v5808, 0.0
        %5810 = vadd.xlane.f32.xlu0 %v5809
        %v5811 = vpop.xlane.xlu0 %5810
        %v5812 = vmul.f32 %v5811, %v2261
        %v5813 = vsub.f32 %v5808, %v5812
        %v5814 = vmul.f32 %v5813, %v5813
        %v5815 = vsel %vm649, %v5814, 0.0
        %5816 = vadd.xlane.f32.xlu0 %v5815
        %v5817 = vpop.xlane.xlu0 %5816
        %v5818 = vmul.f32 %v5817, %v2261
        %v5819 = vadd.f32 %v5818, 1e-05
        %v5820 = vrsqrt.pop %v5819
        %v5821 = vmul.f32 %v5813, %v5820
        %v5822 = vlaneseq
        %v5823 = vshrl.u32 %v5822, 7
        %v5824 = vsub.s32 0, %v5823
        %v5825 = vrot.slane %v4185, %v5824
        %v5826 = vmul.f32 %v5821, %v5825
        %v5827 = vlaneseq
        %v5828 = vshrl.u32 %v5827, 7
        %v5829 = vsub.s32 1, %v5828
        %v5830 = vrot.slane %v4185, %v5829
        %v5831 = vadd.f32 %v5826, %v5830
        %v5832 = vadd.f32 %v5831, %v631
        %s5833 = scalar_lea.vmem %s8, 256
        %v5834 = vld [vmem:[%s5833] sm:$0xff]
        %v5835 = vld [vmem:[%s5833 + $0x8] sm:$0xff]
        %v5836 = vld [vmem:[%s5833 + $0x10] sm:$0xff]
        %v5837 = vld [vmem:[%s5833 + $0x18] sm:$0xff]
        %s5838 = scalar_lea.vmem %s9, 8
        %v5839 = vld [vmem:[%s5838] sm:$0x1]
        %v5841 = vlaneseq
        %v5842 = vshrl.u32 %v5841, 7
        %v5843 = vsub.s32 0, %v5842
        %v5844 = vrot.slane %v5839, %v5843
        %v5847 = vsel %vm649, %v5832, 0
        %5849 = vmatprep.subr.mxu0 0.0
        %5850 = vmatpush1.msra.mxu0 %v5834
        %5851 = vmatprep.subr.mxu0 0.0
        %5852 = vmatpush1.msra.mxu0 %v5835
        %5853 = vmatprep.subr.mxu0 0.0
        %5854 = vmatpush1.msra.mxu0 %v5836
        %5855 = vmatprep.subr.mxu0 0.0
        %5856 = vmatpush1.msra.mxu0 %v5837
        %5857 = vmatprep.subr.mxu0 0.0
        %5858 = vmatpush1.msra.mxu0 0.0
        %5859 = vmatprep.subr.mxu0 0.0
        %5860 = vmatpush1.msra.mxu0 0.0
        %5861 = vmatprep.subr.mxu0 0.0
        %5862 = vmatpush1.msra.mxu0 0.0
        %5863 = vmatprep.subr.mxu0 0.0
        %5864 = vmatpush1.msra.mxu0 0.0
        %5865 = vmatprep.subr.mxu0 0.0
        %5866 = vmatpush1.msra.mxu0 0.0
        %5867 = vmatprep.subr.mxu0 0.0
        %5868 = vmatpush1.msra.mxu0 0.0
        %5869 = vmatprep.subr.mxu0 0.0
        %5870 = vmatpush1.msra.mxu0 0.0
        %5871 = vmatprep.subr.mxu0 0.0
        %5872 = vmatpush1.msra.mxu0 0.0
        %5873 = vmatprep.subr.mxu0 0.0
        %5874 = vmatpush1.msra.mxu0 0.0
        %5875 = vmatprep.subr.mxu0 0.0
        %5876 = vmatpush1.msra.mxu0 0.0
        %5877 = vmatprep.subr.mxu0 0.0
        %5878 = vmatpush1.msra.mxu0 0.0
        %5879 = vmatprep.subr.mxu0 0.0
        %5880 = vmatpush1.msra.mxu0 0.0
        %5881 = vmatprep.subr.mxu0 0.0
        %5882 = vmatpush1.msra.mxu0 0.0
        %5883 = vmatprep.subr.mxu0 0.0
        %5884 = vmatpush1.msra.mxu0 0.0
        %5885 = vmatprep.subr.mxu0 0.0
        %5886 = vmatpush1.msra.mxu0 0.0
        %5887 = vmatprep.subr.mxu0 0.0
        %5888 = vmatpush1.msra.mxu0 0.0
        %5889 = vmatprep.subr.mxu0 0.0
        %5890 = vmatpush1.msra.mxu0 0.0
        %5891 = vmatprep.subr.mxu0 0.0
        %5892 = vmatpush1.msra.mxu0 0.0
        %5893 = vmatprep.subr.mxu0 0.0
        %5894 = vmatpush1.msra.mxu0 0.0
        %5895 = vmatprep.subr.mxu0 0.0
        %5896 = vmatpush1.msra.mxu0 0.0
        %5897 = vmatprep.subr.mxu0 0.0
        %5898 = vmatpush1.msra.mxu0 0.0
        %5899 = vmatprep.subr.mxu0 0.0
        %5900 = vmatpush1.msra.mxu0 0.0
        %5901 = vmatprep.subr.mxu0 0.0
        %5902 = vmatpush1.msra.mxu0 0.0
        %5903 = vmatprep.subr.mxu0 0.0
        %5904 = vmatpush1.msra.mxu0 0.0
        %5905 = vmatprep.subr.mxu0 0.0
        %5906 = vmatpush1.msra.mxu0 0.0
        %5907 = vmatprep.subr.mxu0 0.0
        %5908 = vmatpush1.msra.mxu0 0.0
        %5909 = vmatprep.subr.mxu0 0.0
        %5910 = vmatpush1.msra.mxu0 0.0
        %5911 = vmatprep.subr.mxu0 0.0
        %5912 = vmatpush1.msra.mxu0 0.0
        %5913 = vmatprep.mubr.f32.mxu0 0.0
        %5914 = vmatmul.mubr.f32.gmra.mrb[0].mxu0 %v5847
        %v5915 = vpop.f32.mrb[0].mxu0
        %v5916 = vadd.f32 %v5844, %v5915
        %v5917 = vpop.f32.mrb[0].mxu0
        %5918 = vdwg.mxu0
        %s5919 = scalar_lea.vmem %s8, 384
        %v5920 = vld [vmem:[%s5919] sm:$0xff]
        %v5921 = vld [vmem:[%s5919 + $0x8] sm:$0xff]
        %v5922 = vld [vmem:[%s5919 + $0x10] sm:$0xff]
        %v5923 = vld [vmem:[%s5919 + $0x18] sm:$0xff]
        %s5924 = scalar_lea.vmem %s9, 12
        %v5925 = vld [vmem:[%s5924] sm:$0x1]
        %v5927 = vlaneseq
        %v5928 = vshrl.u32 %v5927, 7
        %v5929 = vsub.s32 0, %v5928
        %v5930 = vrot.slane %v5925, %v5929
        %5932 = vmatprep.subr.mxu0 0.0
        %5933 = vmatpush1.msra.mxu0 %v5920
        %5934 = vmatprep.subr.mxu0 0.0
        %5935 = vmatpush1.msra.mxu0 %v5921
        %5936 = vmatprep.subr.mxu0 0.0
        %5937 = vmatpush1.msra.mxu0 %v5922
        %5938 = vmatprep.subr.mxu0 0.0
        %5939 = vmatpush1.msra.mxu0 %v5923
        %5940 = vmatprep.subr.mxu0 0.0
        %5941 = vmatpush1.msra.mxu0 0.0
        %5942 = vmatprep.subr.mxu0 0.0
        %5943 = vmatpush1.msra.mxu0 0.0
        %5944 = vmatprep.subr.mxu0 0.0
        %5945 = vmatpush1.msra.mxu0 0.0
        %5946 = vmatprep.subr.mxu0 0.0
        %5947 = vmatpush1.msra.mxu0 0.0
        %5948 = vmatprep.subr.mxu0 0.0
        %5949 = vmatpush1.msra.mxu0 0.0
        %5950 = vmatprep.subr.mxu0 0.0
        %5951 = vmatpush1.msra.mxu0 0.0
        %5952 = vmatprep.subr.mxu0 0.0
        %5953 = vmatpush1.msra.mxu0 0.0
        %5954 = vmatprep.subr.mxu0 0.0
        %5955 = vmatpush1.msra.mxu0 0.0
        %5956 = vmatprep.subr.mxu0 0.0
        %5957 = vmatpush1.msra.mxu0 0.0
        %5958 = vmatprep.subr.mxu0 0.0
        %5959 = vmatpush1.msra.mxu0 0.0
        %5960 = vmatprep.subr.mxu0 0.0
        %5961 = vmatpush1.msra.mxu0 0.0
        %5962 = vmatprep.subr.mxu0 0.0
        %5963 = vmatpush1.msra.mxu0 0.0
        %5964 = vmatprep.subr.mxu0 0.0
        %5965 = vmatpush1.msra.mxu0 0.0
        %5966 = vmatprep.subr.mxu0 0.0
        %5967 = vmatpush1.msra.mxu0 0.0
        %5968 = vmatprep.subr.mxu0 0.0
        %5969 = vmatpush1.msra.mxu0 0.0
        %5970 = vmatprep.subr.mxu0 0.0
        %5971 = vmatpush1.msra.mxu0 0.0
        %5972 = vmatprep.subr.mxu0 0.0
        %5973 = vmatpush1.msra.mxu0 0.0
        %5974 = vmatprep.subr.mxu0 0.0
        %5975 = vmatpush1.msra.mxu0 0.0
        %5976 = vmatprep.subr.mxu0 0.0
        %5977 = vmatpush1.msra.mxu0 0.0
        %5978 = vmatprep.subr.mxu0 0.0
        %5979 = vmatpush1.msra.mxu0 0.0
        %5980 = vmatprep.subr.mxu0 0.0
        %5981 = vmatpush1.msra.mxu0 0.0
        %5982 = vmatprep.subr.mxu0 0.0
        %5983 = vmatpush1.msra.mxu0 0.0
        %5984 = vmatprep.subr.mxu0 0.0
        %5985 = vmatpush1.msra.mxu0 0.0
        %5986 = vmatprep.subr.mxu0 0.0
        %5987 = vmatpush1.msra.mxu0 0.0
        %5988 = vmatprep.subr.mxu0 0.0
        %5989 = vmatpush1.msra.mxu0 0.0
        %5990 = vmatprep.subr.mxu0 0.0
        %5991 = vmatpush1.msra.mxu0 0.0
        %5992 = vmatprep.subr.mxu0 0.0
        %5993 = vmatpush1.msra.mxu0 0.0
        %5994 = vmatprep.subr.mxu0 0.0
        %5995 = vmatpush1.msra.mxu0 0.0
        %5996 = vmatprep.mubr.f32.mxu0 0.0
        %5997 = vmatmul.mubr.f32.gmra.mrb[0].mxu0 %v2381
        %v5998 = vpop.f32.mrb[0].mxu0
        %v5999 = vadd.f32 %v5930, %v5998
        %v6000 = vpop.f32.mrb[0].mxu0
        %6001 = vmatprep.mubr.f32.mxu0 0.0
        %6002 = vmatmul.mubr.f32.gmra.mrb[0].mxu0 %v2384
        %v6003 = vpop.f32.mrb[0].mxu0
        %v6004 = vadd.f32 %v5930, %v6003
        %v6005 = vpop.f32.mrb[0].mxu0
        %6006 = vdwg.mxu0
        %v6008 = vsel %vm806, %v5916, 0
        %v6011 = vsel %vm806, %v5999, 0
        %v6014 = vsel %vm806, %v6004, 0
        %6016 = vmatprep.subr.mxu0 0.0
        %6017 = vmatpush1.xpose.msra.mxu0 %v6011
        %6018 = vmatprep.subr.mxu0 0.0
        %6019 = vmatpush1.xpose.msra.mxu0 %v6014
        %6020 = vmatprep.subr.mxu0 0.0
        %6021 = vmatpush1.xpose.msra.mxu0 0.0
        %6022 = vmatprep.subr.mxu0 0.0
        %6023 = vmatpush1.xpose.msra.mxu0 0.0
        %6024 = vmatprep.subr.mxu0 0.0
        %6025 = vmatpush1.xpose.msra.mxu0 0.0
        %6026 = vmatprep.subr.mxu0 0.0
        %6027 = vmatpush1.xpose.msra.mxu0 0.0
        %6028 = vmatprep.subr.mxu0 0.0
        %6029 = vmatpush1.xpose.msra.mxu0 0.0
        %6030 = vmatprep.subr.mxu0 0.0
        %6031 = vmatpush1.xpose.msra.mxu0 0.0
        %6032 = vmatprep.subr.mxu0 0.0
        %6033 = vmatpush1.xpose.msra.mxu0 0.0
        %6034 = vmatprep.subr.mxu0 0.0
        %6035 = vmatpush1.xpose.msra.mxu0 0.0
        %6036 = vmatprep.subr.mxu0 0.0
        %6037 = vmatpush1.xpose.msra.mxu0 0.0
        %6038 = vmatprep.subr.mxu0 0.0
        %6039 = vmatpush1.xpose.msra.mxu0 0.0
        %6040 = vmatprep.subr.mxu0 0.0
        %6041 = vmatpush1.xpose.msra.mxu0 0.0
        %6042 = vmatprep.subr.mxu0 0.0
        %6043 = vmatpush1.xpose.msra.mxu0 0.0
        %6044 = vmatprep.subr.mxu0 0.0
        %6045 = vmatpush1.xpose.msra.mxu0 0.0
        %6046 = vmatprep.subr.mxu0 0.0
        %6047 = vmatpush1.xpose.msra.mxu0 0.0
        %6048 = vmatprep.subr.mxu0 0.0
        %6049 = vmatpush1.xpose.msra.mxu0 0.0
        %6050 = vmatprep.subr.mxu0 0.0
        %6051 = vmatpush1.xpose.msra.mxu0 0.0
        %6052 = vmatprep.subr.mxu0 0.0
        %6053 = vmatpush1.xpose.msra.mxu0 0.0
        %6054 = vmatprep.subr.mxu0 0.0
        %6055 = vmatpush1.xpose.msra.mxu0 0.0
        %6056 = vmatprep.subr.mxu0 0.0
        %6057 = vmatpush1.xpose.msra.mxu0 0.0
        %6058 = vmatprep.subr.mxu0 0.0
        %6059 = vmatpush1.xpose.msra.mxu0 0.0
        %6060 = vmatprep.subr.mxu0 0.0
        %6061 = vmatpush1.xpose.msra.mxu0 0.0
        %6062 = vmatprep.subr.mxu0 0.0
        %6063 = vmatpush1.xpose.msra.mxu0 0.0
        %6064 = vmatprep.subr.mxu0 0.0
        %6065 = vmatpush1.xpose.msra.mxu0 0.0
        %6066 = vmatprep.subr.mxu0 0.0
        %6067 = vmatpush1.xpose.msra.mxu0 0.0
        %6068 = vmatprep.subr.mxu0 0.0
        %6069 = vmatpush1.xpose.msra.mxu0 0.0
        %6070 = vmatprep.subr.mxu0 0.0
        %6071 = vmatpush1.xpose.msra.mxu0 0.0
        %6072 = vmatprep.subr.mxu0 0.0
        %6073 = vmatpush1.xpose.msra.mxu0 0.0
        %6074 = vmatprep.subr.mxu0 0.0
        %6075 = vmatpush1.xpose.msra.mxu0 0.0
        %6076 = vmatprep.subr.mxu0 0.0
        %6077 = vmatpush1.xpose.msra.mxu0 0.0
        %6078 = vmatprep.subr.mxu0 0.0
        %6079 = vmatpush1.xpose.msra.mxu0 0.0
        %6080 = vmatprep.mubr.f32.mxu0 0.0
        %6081 = vmatmul.mubr.f32.gmra.mrb[0].mxu0 %v6008
        %v6082 = vpop.f32.mrb[0].mxu0
        %v6083 = vadd.f32 0.0, %v6082
        %v6084 = vpop.f32.mrb[0].mxu0
        %6085 = vdwg.mxu0
        %v6086 = vsel %vm2540, %v6083, -inf
        %6087 = vmax.xlane.f32.xlu0 %v6086
        %v6088 = vpop.xlane.xlu0 %6087
        %v6089 = vsub.f32 %v6083, %v6088
        %v6090 = vmul.f32 %v6089, 1.442695
        %v6091 = vpow.pop %v6090
        %v6092 = vsel %vm2540, %v6091, 0.0
        %6093 = vadd.xlane.f32.xlu0 %v6092
        %v6094 = vpop.xlane.xlu0 %6093
        %v6095 = vrcp.pop %v6094
        %v6096 = vmul.f32 %v6091, %v6095
        %s6097 = scalar_lea.vmem %s10, 128
        %v6098 = vld [vmem:[%s6097] sm:$0xff]
        %v6099 = vld [vmem:[%s6097 + $0x8] sm:$0xff]
        %v6100 = vld [vmem:[%s6097 + $0x10] sm:$0xff]
        %v6101 = vld [vmem:[%s6097 + $0x18] sm:$0xff]
        %6102 = vmatprep.subr.mxu0 0.0
        %6103 = vmatpush1.msra.mxu0 %v6098
        %6104 = vmatprep.subr.mxu0 0.0
        %6105 = vmatpush1.msra.mxu0 %v6099
        %6106 = vmatprep.subr.mxu0 0.0
        %6107 = vmatpush1.msra.mxu0 %v6100
        %6108 = vmatprep.subr.mxu0 0.0
        %6109 = vmatpush1.msra.mxu0 %v6101
        %6110 = vmatprep.subr.mxu0 0.0
        %6111 = vmatpush1.msra.mxu0 0.0
        %6112 = vmatprep.subr.mxu0 0.0
        %6113 = vmatpush1.msra.mxu0 0.0
        %6114 = vmatprep.subr.mxu0 0.0
        %6115 = vmatpush1.msra.mxu0 0.0
        %6116 = vmatprep.subr.mxu0 0.0
        %6117 = vmatpush1.msra.mxu0 0.0
        %6118 = vmatprep.subr.mxu0 0.0
        %6119 = vmatpush1.msra.mxu0 0.0
        %6120 = vmatprep.subr.mxu0 0.0
        %6121 = vmatpush1.msra.mxu0 0.0
        %6122 = vmatprep.subr.mxu0 0.0
        %6123 = vmatpush1.msra.mxu0 0.0
        %6124 = vmatprep.subr.mxu0 0.0
        %6125 = vmatpush1.msra.mxu0 0.0
        %6126 = vmatprep.subr.mxu0 0.0
        %6127 = vmatpush1.msra.mxu0 0.0
        %6128 = vmatprep.subr.mxu0 0.0
        %6129 = vmatpush1.msra.mxu0 0.0
        %6130 = vmatprep.subr.mxu0 0.0
        %6131 = vmatpush1.msra.mxu0 0.0
        %6132 = vmatprep.subr.mxu0 0.0
        %6133 = vmatpush1.msra.mxu0 0.0
        %6134 = vmatprep.subr.mxu0 0.0
        %6135 = vmatpush1.msra.mxu0 0.0
        %6136 = vmatprep.subr.mxu0 0.0
        %6137 = vmatpush1.msra.mxu0 0.0
        %6138 = vmatprep.subr.mxu0 0.0
        %6139 = vmatpush1.msra.mxu0 0.0
        %6140 = vmatprep.subr.mxu0 0.0
        %6141 = vmatpush1.msra.mxu0 0.0
        %6142 = vmatprep.subr.mxu0 0.0
        %6143 = vmatpush1.msra.mxu0 0.0
        %6144 = vmatprep.subr.mxu0 0.0
        %6145 = vmatpush1.msra.mxu0 0.0
        %6146 = vmatprep.subr.mxu0 0.0
        %6147 = vmatpush1.msra.mxu0 0.0
        %6148 = vmatprep.subr.mxu0 0.0
        %6149 = vmatpush1.msra.mxu0 0.0
        %6150 = vmatprep.subr.mxu0 0.0
        %6151 = vmatpush1.msra.mxu0 0.0
        %6152 = vmatprep.subr.mxu0 0.0
        %6153 = vmatpush1.msra.mxu0 0.0
        %6154 = vmatprep.subr.mxu0 0.0
        %6155 = vmatpush1.msra.mxu0 0.0
        %6156 = vmatprep.subr.mxu0 0.0
        %6157 = vmatpush1.msra.mxu0 0.0
        %6158 = vmatprep.subr.mxu0 0.0
        %6159 = vmatpush1.msra.mxu0 0.0
        %6160 = vmatprep.subr.mxu0 0.0
        %6161 = vmatpush1.msra.mxu0 0.0
        %6162 = vmatprep.subr.mxu0 0.0
        %6163 = vmatpush1.msra.mxu0 0.0
        %6164 = vmatprep.subr.mxu0 0.0
        %6165 = vmatpush1.msra.mxu0 0.0
        %6166 = vmatprep.mubr.f32.mxu0 0.0
        %6167 = vmatmul.mubr.f32.gmra.mrb[0].mxu0 %v2557
        %v6168 = vpop.f32.mrb[0].mxu0
        %v6169 = vadd.f32 0.0, %v6168
        %v6170 = vpop.f32.mrb[0].mxu0
        %6171 = vmatprep.mubr.f32.mxu0 0.0
        %6172 = vmatmul.mubr.f32.gmra.mrb[0].mxu0 %v2560
        %v6173 = vpop.f32.mrb[0].mxu0
        %v6174 = vadd.f32 0.0, %v6173
        %v6175 = vpop.f32.mrb[0].mxu0
        %6176 = vdwg.mxu0
        %s6177 = scalar_lea.vmem %s8, 288
        %v6178 = vld [vmem:[%s6177] sm:$0xff]
        %v6179 = vld [vmem:[%s6177 + $0x8] sm:$0xff]
        %v6180 = vld [vmem:[%s6177 + $0x10] sm:$0xff]
        %v6181 = vld [vmem:[%s6177 + $0x18] sm:$0xff]
        %s6182 = scalar_lea.vmem %s9, 9
        %v6183 = vld [vmem:[%s6182] sm:$0x1]
        %v6185 = vlaneseq
        %v6186 = vshrl.u32 %v6185, 7
        %v6187 = vsub.s32 0, %v6186
        %v6188 = vrot.slane %v6183, %v6187
        %6190 = vmatprep.subr.mxu0 0.0
        %6191 = vmatpush1.msra.mxu0 %v6178
        %6192 = vmatprep.subr.mxu0 0.0
        %6193 = vmatpush1.msra.mxu0 %v6179
        %6194 = vmatprep.subr.mxu0 0.0
        %6195 = vmatpush1.msra.mxu0 %v6180
        %6196 = vmatprep.subr.mxu0 0.0
        %6197 = vmatpush1.msra.mxu0 %v6181
        %6198 = vmatprep.subr.mxu0 0.0
        %6199 = vmatpush1.msra.mxu0 0.0
        %6200 = vmatprep.subr.mxu0 0.0
        %6201 = vmatpush1.msra.mxu0 0.0
        %6202 = vmatprep.subr.mxu0 0.0
        %6203 = vmatpush1.msra.mxu0 0.0
        %6204 = vmatprep.subr.mxu0 0.0
        %6205 = vmatpush1.msra.mxu0 0.0
        %6206 = vmatprep.subr.mxu0 0.0
        %6207 = vmatpush1.msra.mxu0 0.0
        %6208 = vmatprep.subr.mxu0 0.0
        %6209 = vmatpush1.msra.mxu0 0.0
        %6210 = vmatprep.subr.mxu0 0.0
        %6211 = vmatpush1.msra.mxu0 0.0
        %6212 = vmatprep.subr.mxu0 0.0
        %6213 = vmatpush1.msra.mxu0 0.0
        %6214 = vmatprep.subr.mxu0 0.0
        %6215 = vmatpush1.msra.mxu0 0.0
        %6216 = vmatprep.subr.mxu0 0.0
        %6217 = vmatpush1.msra.mxu0 0.0
        %6218 = vmatprep.subr.mxu0 0.0
        %6219 = vmatpush1.msra.mxu0 0.0
        %6220 = vmatprep.subr.mxu0 0.0
        %6221 = vmatpush1.msra.mxu0 0.0
        %6222 = vmatprep.subr.mxu0 0.0
        %6223 = vmatpush1.msra.mxu0 0.0
        %6224 = vmatprep.subr.mxu0 0.0
        %6225 = vmatpush1.msra.mxu0 0.0
        %6226 = vmatprep.subr.mxu0 0.0
        %6227 = vmatpush1.msra.mxu0 0.0
        %6228 = vmatprep.subr.mxu0 0.0
        %6229 = vmatpush1.msra.mxu0 0.0
        %6230 = vmatprep.subr.mxu0 0.0
        %6231 = vmatpush1.msra.mxu0 0.0
        %6232 = vmatprep.subr.mxu0 0.0
        %6233 = vmatpush1.msra.mxu0 0.0
        %6234 = vmatprep.subr.mxu0 0.0
        %6235 = vmatpush1.msra.mxu0 0.0
        %6236 = vmatprep.subr.mxu0 0.0
        %6237 = vmatpush1.msra.mxu0 0.0
        %6238 = vmatprep.subr.mxu0 0.0
        %6239 = vmatpush1.msra.mxu0 0.0
        %6240 = vmatprep.subr.mxu0 0.0
        %6241 = vmatpush1.msra.mxu0 0.0
        %6242 = vmatprep.subr.mxu0 0.0
        %6243 = vmatpush1.msra.mxu0 0.0
        %6244 = vmatprep.subr.mxu0 0.0
        %6245 = vmatpush1.msra.mxu0 0.0
        %6246 = vmatprep.subr.mxu0 0.0
        %6247 = vmatpush1.msra.mxu0 0.0
        %6248 = vmatprep.subr.mxu0 0.0
        %6249 = vmatpush1.msra.mxu0 0.0
        %6250 = vmatprep.subr.mxu0 0.0
        %6251 = vmatpush1.msra.mxu0 0.0
        %6252 = vmatprep.subr.mxu0 0.0
        %6253 = vmatpush1.msra.mxu0 0.0
        %6254 = vmatprep.mubr.f32.mxu0 0.0
        %6255 = vmatmul.mubr.f32.gmra.mrb[0].mxu0 %v5847
        %v6256 = vpop.f32.mrb[0].mxu0
        %v6257 = vadd.f32 %v6188, %v6256
        %v6258 = vpop.f32.mrb[0].mxu0
        %6259 = vdwg.mxu0
        %s6260 = scalar_lea.vmem %s8, 416
        %v6261 = vld [vmem:[%s6260] sm:$0xff]
        %v6262 = vld [vmem:[%s6260 + $0x8] sm:$0xff]
        %v6263 = vld [vmem:[%s6260 + $0x10] sm:$0xff]
        %v6264 = vld [vmem:[%s6260 + $0x18] sm:$0xff]
        %s6265 = scalar_lea.vmem %s9, 13
        %v6266 = vld [vmem:[%s6265] sm:$0x1]
        %v6268 = vlaneseq
        %v6269 = vshrl.u32 %v6268, 7
        %v6270 = vsub.s32 0, %v6269
        %v6271 = vrot.slane %v6266, %v6270
        %6273 = vmatprep.subr.mxu0 0.0
        %6274 = vmatpush1.msra.mxu0 %v6261
        %6275 = vmatprep.subr.mxu0 0.0
        %6276 = vmatpush1.msra.mxu0 %v6262
        %6277 = vmatprep.subr.mxu0 0.0
        %6278 = vmatpush1.msra.mxu0 %v6263
        %6279 = vmatprep.subr.mxu0 0.0
        %6280 = vmatpush1.msra.mxu0 %v6264
        %6281 = vmatprep.subr.mxu0 0.0
        %6282 = vmatpush1.msra.mxu0 0.0
        %6283 = vmatprep.subr.mxu0 0.0
        %6284 = vmatpush1.msra.mxu0 0.0
        %6285 = vmatprep.subr.mxu0 0.0
        %6286 = vmatpush1.msra.mxu0 0.0
        %6287 = vmatprep.subr.mxu0 0.0
        %6288 = vmatpush1.msra.mxu0 0.0
        %6289 = vmatprep.subr.mxu0 0.0
        %6290 = vmatpush1.msra.mxu0 0.0
        %6291 = vmatprep.subr.mxu0 0.0
        %6292 = vmatpush1.msra.mxu0 0.0
        %6293 = vmatprep.subr.mxu0 0.0
        %6294 = vmatpush1.msra.mxu0 0.0
        %6295 = vmatprep.subr.mxu0 0.0
        %6296 = vmatpush1.msra.mxu0 0.0
        %6297 = vmatprep.subr.mxu0 0.0
        %6298 = vmatpush1.msra.mxu0 0.0
        %6299 = vmatprep.subr.mxu0 0.0
        %6300 = vmatpush1.msra.mxu0 0.0
        %6301 = vmatprep.subr.mxu0 0.0
        %6302 = vmatpush1.msra.mxu0 0.0
        %6303 = vmatprep.subr.mxu0 0.0
        %6304 = vmatpush1.msra.mxu0 0.0
        %6305 = vmatprep.subr.mxu0 0.0
        %6306 = vmatpush1.msra.mxu0 0.0
        %6307 = vmatprep.subr.mxu0 0.0
        %6308 = vmatpush1.msra.mxu0 0.0
        %6309 = vmatprep.subr.mxu0 0.0
        %6310 = vmatpush1.msra.mxu0 0.0
        %6311 = vmatprep.subr.mxu0 0.0
        %6312 = vmatpush1.msra.mxu0 0.0
        %6313 = vmatprep.subr.mxu0 0.0
        %6314 = vmatpush1.msra.mxu0 0.0
        %6315 = vmatprep.subr.mxu0 0.0
        %6316 = vmatpush1.msra.mxu0 0.0
        %6317 = vmatprep.subr.mxu0 0.0
        %6318 = vmatpush1.msra.mxu0 0.0
        %6319 = vmatprep.subr.mxu0 0.0
        %6320 = vmatpush1.msra.mxu0 0.0
        %6321 = vmatprep.subr.mxu0 0.0
        %6322 = vmatpush1.msra.mxu0 0.0
        %6323 = vmatprep.subr.mxu0 0.0
        %6324 = vmatpush1.msra.mxu0 0.0
        %6325 = vmatprep.subr.mxu0 0.0
        %6326 = vmatpush1.msra.mxu0 0.0
        %6327 = vmatprep.subr.mxu0 0.0
        %6328 = vmatpush1.msra.mxu0 0.0
        %6329 = vmatprep.subr.mxu0 0.0
        %6330 = vmatpush1.msra.mxu0 0.0
        %6331 = vmatprep.subr.mxu0 0.0
        %6332 = vmatpush1.msra.mxu0 0.0
        %6333 = vmatprep.subr.mxu0 0.0
        %6334 = vmatpush1.msra.mxu0 0.0
        %6335 = vmatprep.subr.mxu0 0.0
        %6336 = vmatpush1.msra.mxu0 0.0
        %6337 = vmatprep.mubr.f32.mxu0 0.0
        %6338 = vmatmul.mubr.f32.gmra.mrb[0].mxu0 %v2381
        %v6339 = vpop.f32.mrb[0].mxu0
        %v6340 = vadd.f32 %v6271, %v6339
        %v6341 = vpop.f32.mrb[0].mxu0
        %6342 = vmatprep.mubr.f32.mxu0 0.0
        %6343 = vmatmul.mubr.f32.gmra.mrb[0].mxu0 %v2384
        %v6344 = vpop.f32.mrb[0].mxu0
        %v6345 = vadd.f32 %v6271, %v6344
        %v6346 = vpop.f32.mrb[0].mxu0
        %6347 = vdwg.mxu0
        %v6349 = vsel %vm806, %v6257, 0
        %v6352 = vsel %vm806, %v6340, 0
        %v6355 = vsel %vm806, %v6345, 0
        %6357 = vmatprep.subr.mxu0 0.0
        %6358 = vmatpush1.xpose.msra.mxu0 %v6352
        %6359 = vmatprep.subr.mxu0 0.0
        %6360 = vmatpush1.xpose.msra.mxu0 %v6355
        %6361 = vmatprep.subr.mxu0 0.0
        %6362 = vmatpush1.xpose.msra.mxu0 0.0
        %6363 = vmatprep.subr.mxu0 0.0
        %6364 = vmatpush1.xpose.msra.mxu0 0.0
        %6365 = vmatprep.subr.mxu0 0.0
        %6366 = vmatpush1.xpose.msra.mxu0 0.0
        %6367 = vmatprep.subr.mxu0 0.0
        %6368 = vmatpush1.xpose.msra.mxu0 0.0
        %6369 = vmatprep.subr.mxu0 0.0
        %6370 = vmatpush1.xpose.msra.mxu0 0.0
        %6371 = vmatprep.subr.mxu0 0.0
        %6372 = vmatpush1.xpose.msra.mxu0 0.0
        %6373 = vmatprep.subr.mxu0 0.0
        %6374 = vmatpush1.xpose.msra.mxu0 0.0
        %6375 = vmatprep.subr.mxu0 0.0
        %6376 = vmatpush1.xpose.msra.mxu0 0.0
        %6377 = vmatprep.subr.mxu0 0.0
        %6378 = vmatpush1.xpose.msra.mxu0 0.0
        %6379 = vmatprep.subr.mxu0 0.0
        %6380 = vmatpush1.xpose.msra.mxu0 0.0
        %6381 = vmatprep.subr.mxu0 0.0
        %6382 = vmatpush1.xpose.msra.mxu0 0.0
        %6383 = vmatprep.subr.mxu0 0.0
        %6384 = vmatpush1.xpose.msra.mxu0 0.0
        %6385 = vmatprep.subr.mxu0 0.0
        %6386 = vmatpush1.xpose.msra.mxu0 0.0
        %6387 = vmatprep.subr.mxu0 0.0
        %6388 = vmatpush1.xpose.msra.mxu0 0.0
        %6389 = vmatprep.subr.mxu0 0.0
        %6390 = vmatpush1.xpose.msra.mxu0 0.0
        %6391 = vmatprep.subr.mxu0 0.0
        %6392 = vmatpush1.xpose.msra.mxu0 0.0
        %6393 = vmatprep.subr.mxu0 0.0
        %6394 = vmatpush1.xpose.msra.mxu0 0.0
        %6395 = vmatprep.subr.mxu0 0.0
        %6396 = vmatpush1.xpose.msra.mxu0 0.0
        %6397 = vmatprep.subr.mxu0 0.0
        %6398 = vmatpush1.xpose.msra.mxu0 0.0
        %6399 = vmatprep.subr.mxu0 0.0
        %6400 = vmatpush1.xpose.msra.mxu0 0.0
        %6401 = vmatprep.subr.mxu0 0.0
        %6402 = vmatpush1.xpose.msra.mxu0 0.0
        %6403 = vmatprep.subr.mxu0 0.0
        %6404 = vmatpush1.xpose.msra.mxu0 0.0
        %6405 = vmatprep.subr.mxu0 0.0
        %6406 = vmatpush1.xpose.msra.mxu0 0.0
        %6407 = vmatprep.subr.mxu0 0.0
        %6408 = vmatpush1.xpose.msra.mxu0 0.0
        %6409 = vmatprep.subr.mxu0 0.0
        %6410 = vmatpush1.xpose.msra.mxu0 0.0
        %6411 = vmatprep.subr.mxu0 0.0
        %6412 = vmatpush1.xpose.msra.mxu0 0.0
        %6413 = vmatprep.subr.mxu0 0.0
        %6414 = vmatpush1.xpose.msra.mxu0 0.0
        %6415 = vmatprep.subr.mxu0 0.0
        %6416 = vmatpush1.xpose.msra.mxu0 0.0
        %6417 = vmatprep.subr.mxu0 0.0
        %6418 = vmatpush1.xpose.msra.mxu0 0.0
        %6419 = vmatprep.subr.mxu0 0.0
        %6420 = vmatpush1.xpose.msra.mxu0 0.0
        %6421 = vmatprep.mubr.f32.mxu0 0.0
        %6422 = vmatmul.mubr.f32.gmra.mrb[0].mxu0 %v6349
        %v6423 = vpop.f32.mrb[0].mxu0
        %v6424 = vadd.f32 0.0, %v6423
        %v6425 = vpop.f32.mrb[0].mxu0
        %6426 = vdwg.mxu0
        %v6427 = vsel %vm2540, %v6424, -inf
        %6428 = vmax.xlane.f32.xlu0 %v6427
        %v6429 = vpop.xlane.xlu0 %6428
        %v6430 = vsub.f32 %v6424, %v6429
        %v6431 = vmul.f32 %v6430, 1.442695
        %v6432 = vpow.pop %v6431
        %v6433 = vsel %vm2540, %v6432, 0.0
        %6434 = vadd.xlane.f32.xlu0 %v6433
        %v6435 = vpop.xlane.xlu0 %6434
        %v6436 = vrcp.pop %v6435
        %v6437 = vmul.f32 %v6432, %v6436
        %s6438 = scalar_lea.vmem %s10, 160
        %v6439 = vld [vmem:[%s6438] sm:$0xff]
        %v6440 = vld [vmem:[%s6438 + $0x8] sm:$0xff]
        %v6441 = vld [vmem:[%s6438 + $0x10] sm:$0xff]
        %v6442 = vld [vmem:[%s6438 + $0x18] sm:$0xff]
        %6443 = vmatprep.subr.mxu0 0.0
        %6444 = vmatpush1.msra.mxu0 %v6439
        %6445 = vmatprep.subr.mxu0 0.0
        %6446 = vmatpush1.msra.mxu0 %v6440
        %6447 = vmatprep.subr.mxu0 0.0
        %6448 = vmatpush1.msra.mxu0 %v6441
        %6449 = vmatprep.subr.mxu0 0.0
        %6450 = vmatpush1.msra.mxu0 %v6442
        %6451 = vmatprep.subr.mxu0 0.0
        %6452 = vmatpush1.msra.mxu0 0.0
        %6453 = vmatprep.subr.mxu0 0.0
        %6454 = vmatpush1.msra.mxu0 0.0
        %6455 = vmatprep.subr.mxu0 0.0
        %6456 = vmatpush1.msra.mxu0 0.0
        %6457 = vmatprep.subr.mxu0 0.0
        %6458 = vmatpush1.msra.mxu0 0.0
        %6459 = vmatprep.subr.mxu0 0.0
        %6460 = vmatpush1.msra.mxu0 0.0
        %6461 = vmatprep.subr.mxu0 0.0
        %6462 = vmatpush1.msra.mxu0 0.0
        %6463 = vmatprep.subr.mxu0 0.0
        %6464 = vmatpush1.msra.mxu0 0.0
        %6465 = vmatprep.subr.mxu0 0.0
        %6466 = vmatpush1.msra.mxu0 0.0
        %6467 = vmatprep.subr.mxu0 0.0
        %6468 = vmatpush1.msra.mxu0 0.0
        %6469 = vmatprep.subr.mxu0 0.0
        %6470 = vmatpush1.msra.mxu0 0.0
        %6471 = vmatprep.subr.mxu0 0.0
        %6472 = vmatpush1.msra.mxu0 0.0
        %6473 = vmatprep.subr.mxu0 0.0
        %6474 = vmatpush1.msra.mxu0 0.0
        %6475 = vmatprep.subr.mxu0 0.0
        %6476 = vmatpush1.msra.mxu0 0.0
        %6477 = vmatprep.subr.mxu0 0.0
        %6478 = vmatpush1.msra.mxu0 0.0
        %6479 = vmatprep.subr.mxu0 0.0
        %6480 = vmatpush1.msra.mxu0 0.0
        %6481 = vmatprep.subr.mxu0 0.0
        %6482 = vmatpush1.msra.mxu0 0.0
        %6483 = vmatprep.subr.mxu0 0.0
        %6484 = vmatpush1.msra.mxu0 0.0
        %6485 = vmatprep.subr.mxu0 0.0
        %6486 = vmatpush1.msra.mxu0 0.0
        %6487 = vmatprep.subr.mxu0 0.0
        %6488 = vmatpush1.msra.mxu0 0.0
        %6489 = vmatprep.subr.mxu0 0.0
        %6490 = vmatpush1.msra.mxu0 0.0
        %6491 = vmatprep.subr.mxu0 0.0
        %6492 = vmatpush1.msra.mxu0 0.0
        %6493 = vmatprep.subr.mxu0 0.0
        %6494 = vmatpush1.msra.mxu0 0.0
        %6495 = vmatprep.subr.mxu0 0.0
        %6496 = vmatpush1.msra.mxu0 0.0
        %6497 = vmatprep.subr.mxu0 0.0
        %6498 = vmatpush1.msra.mxu0 0.0
        %6499 = vmatprep.subr.mxu0 0.0
        %6500 = vmatpush1.msra.mxu0 0.0
        %6501 = vmatprep.subr.mxu0 0.0
        %6502 = vmatpush1.msra.mxu0 0.0
        %6503 = vmatprep.subr.mxu0 0.0
        %6504 = vmatpush1.msra.mxu0 0.0
        %6505 = vmatprep.subr.mxu0 0.0
        %6506 = vmatpush1.msra.mxu0 0.0
        %6507 = vmatprep.mubr.f32.mxu0 0.0
        %6508 = vmatmul.mubr.f32.gmra.mrb[0].mxu0 %v2557
        %v6509 = vpop.f32.mrb[0].mxu0
        %v6510 = vadd.f32 0.0, %v6509
        %v6511 = vpop.f32.mrb[0].mxu0
        %6512 = vmatprep.mubr.f32.mxu0 0.0
        %6513 = vmatmul.mubr.f32.gmra.mrb[0].mxu0 %v2560
        %v6514 = vpop.f32.mrb[0].mxu0
        %v6515 = vadd.f32 0.0, %v6514
        %v6516 = vpop.f32.mrb[0].mxu0
        %6517 = vdwg.mxu0
        %v6519 = vsel %vm2540, %v6437, 0
        %6521 = vmatprep.subr.mxu0 0.0
        %6522 = vmatpush1.msra.mxu0 %v6510
        %6523 = vmatprep.subr.mxu0 0.0
        %6524 = vmatpush1.msra.mxu0 %v6515
        %6525 = vmatprep.subr.mxu0 0.0
        %6526 = vmatpush1.msra.mxu0 0.0
        %6527 = vmatprep.subr.mxu0 0.0
        %6528 = vmatpush1.msra.mxu0 0.0
        %6529 = vmatprep.subr.mxu0 0.0
        %6530 = vmatpush1.msra.mxu0 0.0
        %6531 = vmatprep.subr.mxu0 0.0
        %6532 = vmatpush1.msra.mxu0 0.0
        %6533 = vmatprep.subr.mxu0 0.0
        %6534 = vmatpush1.msra.mxu0 0.0
        %6535 = vmatprep.subr.mxu0 0.0
        %6536 = vmatpush1.msra.mxu0 0.0
        %6537 = vmatprep.subr.mxu0 0.0
        %6538 = vmatpush1.msra.mxu0 0.0
        %6539 = vmatprep.subr.mxu0 0.0
        %6540 = vmatpush1.msra.mxu0 0.0
        %6541 = vmatprep.subr.mxu0 0.0
        %6542 = vmatpush1.msra.mxu0 0.0
        %6543 = vmatprep.subr.mxu0 0.0
        %6544 = vmatpush1.msra.mxu0 0.0
        %6545 = vmatprep.subr.mxu0 0.0
        %6546 = vmatpush1.msra.mxu0 0.0
        %6547 = vmatprep.subr.mxu0 0.0
        %6548 = vmatpush1.msra.mxu0 0.0
        %6549 = vmatprep.subr.mxu0 0.0
        %6550 = vmatpush1.msra.mxu0 0.0
        %6551 = vmatprep.subr.mxu0 0.0
        %6552 = vmatpush1.msra.mxu0 0.0
        %6553 = vmatprep.subr.mxu0 0.0
        %6554 = vmatpush1.msra.mxu0 0.0
        %6555 = vmatprep.subr.mxu0 0.0
        %6556 = vmatpush1.msra.mxu0 0.0
        %6557 = vmatprep.subr.mxu0 0.0
        %6558 = vmatpush1.msra.mxu0 0.0
        %6559 = vmatprep.subr.mxu0 0.0
        %6560 = vmatpush1.msra.mxu0 0.0
        %6561 = vmatprep.subr.mxu0 0.0
        %6562 = vmatpush1.msra.mxu0 0.0
        %6563 = vmatprep.subr.mxu0 0.0
        %6564 = vmatpush1.msra.mxu0 0.0
        %6565 = vmatprep.subr.mxu0 0.0
        %6566 = vmatpush1.msra.mxu0 0.0
        %6567 = vmatprep.subr.mxu0 0.0
        %6568 = vmatpush1.msra.mxu0 0.0
        %6569 = vmatprep.subr.mxu0 0.0
        %6570 = vmatpush1.msra.mxu0 0.0
        %6571 = vmatprep.subr.mxu0 0.0
        %6572 = vmatpush1.msra.mxu0 0.0
        %6573 = vmatprep.subr.mxu0 0.0
        %6574 = vmatpush1.msra.mxu0 0.0
        %6575 = vmatprep.subr.mxu0 0.0
        %6576 = vmatpush1.msra.mxu0 0.0
        %6577 = vmatprep.subr.mxu0 0.0
        %6578 = vmatpush1.msra.mxu0 0.0
        %6579 = vmatprep.subr.mxu0 0.0
        %6580 = vmatpush1.msra.mxu0 0.0
        %6581 = vmatprep.subr.mxu0 0.0
        %6582 = vmatpush1.msra.mxu0 0.0
        %6583 = vmatprep.subr.mxu0 0.0
        %6584 = vmatpush1.msra.mxu0 0.0
        %6585 = vmatprep.mubr.f32.mxu0 0.0
        %6586 = vmatmul.mubr.f32.gmra.mrb[0].mxu0 %v6519
        %v6587 = vpop.f32.mrb[0].mxu0
        %v6588 = vadd.f32 0.0, %v6587
        %v6589 = vpop.f32.mrb[0].mxu0
        %6590 = vdwg.mxu0
        %v6592 = vsel %vm2540, %v6096, 0
        %6594 = vmatprep.subr.mxu0 0.0
        %6595 = vmatpush1.msra.mxu0 %v6169
        %6596 = vmatprep.subr.mxu0 0.0
        %6597 = vmatpush1.msra.mxu0 %v6174
        %6598 = vmatprep.subr.mxu0 0.0
        %6599 = vmatpush1.msra.mxu0 0.0
        %6600 = vmatprep.subr.mxu0 0.0
        %6601 = vmatpush1.msra.mxu0 0.0
        %6602 = vmatprep.subr.mxu0 0.0
        %6603 = vmatpush1.msra.mxu0 0.0
        %6604 = vmatprep.subr.mxu0 0.0
        %6605 = vmatpush1.msra.mxu0 0.0
        %6606 = vmatprep.subr.mxu0 0.0
        %6607 = vmatpush1.msra.mxu0 0.0
        %6608 = vmatprep.subr.mxu0 0.0
        %6609 = vmatpush1.msra.mxu0 0.0
        %6610 = vmatprep.subr.mxu0 0.0
        %6611 = vmatpush1.msra.mxu0 0.0
        %6612 = vmatprep.subr.mxu0 0.0
        %6613 = vmatpush1.msra.mxu0 0.0
        %6614 = vmatprep.subr.mxu0 0.0
        %6615 = vmatpush1.msra.mxu0 0.0
        %6616 = vmatprep.subr.mxu0 0.0
        %6617 = vmatpush1.msra.mxu0 0.0
        %6618 = vmatprep.subr.mxu0 0.0
        %6619 = vmatpush1.msra.mxu0 0.0
        %6620 = vmatprep.subr.mxu0 0.0
        %6621 = vmatpush1.msra.mxu0 0.0
        %6622 = vmatprep.subr.mxu0 0.0
        %6623 = vmatpush1.msra.mxu0 0.0
        %6624 = vmatprep.subr.mxu0 0.0
        %6625 = vmatpush1.msra.mxu0 0.0
        %6626 = vmatprep.subr.mxu0 0.0
        %6627 = vmatpush1.msra.mxu0 0.0
        %6628 = vmatprep.subr.mxu0 0.0
        %6629 = vmatpush1.msra.mxu0 0.0
        %6630 = vmatprep.subr.mxu0 0.0
        %6631 = vmatpush1.msra.mxu0 0.0
        %6632 = vmatprep.subr.mxu0 0.0
        %6633 = vmatpush1.msra.mxu0 0.0
        %6634 = vmatprep.subr.mxu0 0.0
        %6635 = vmatpush1.msra.mxu0 0.0
        %6636 = vmatprep.subr.mxu0 0.0
        %6637 = vmatpush1.msra.mxu0 0.0
        %6638 = vmatprep.subr.mxu0 0.0
        %6639 = vmatpush1.msra.mxu0 0.0
        %6640 = vmatprep.subr.mxu0 0.0
        %6641 = vmatpush1.msra.mxu0 0.0
        %6642 = vmatprep.subr.mxu0 0.0
        %6643 = vmatpush1.msra.mxu0 0.0
        %6644 = vmatprep.subr.mxu0 0.0
        %6645 = vmatpush1.msra.mxu0 0.0
        %6646 = vmatprep.subr.mxu0 0.0
        %6647 = vmatpush1.msra.mxu0 0.0
        %6648 = vmatprep.subr.mxu0 0.0
        %6649 = vmatpush1.msra.mxu0 0.0
        %6650 = vmatprep.subr.mxu0 0.0
        %6651 = vmatpush1.msra.mxu0 0.0
        %6652 = vmatprep.subr.mxu0 0.0
        %6653 = vmatpush1.msra.mxu0 0.0
        %6654 = vmatprep.subr.mxu0 0.0
        %6655 = vmatpush1.msra.mxu0 0.0
        %6656 = vmatprep.subr.mxu0 0.0
        %6657 = vmatpush1.msra.mxu0 0.0
        %6658 = vmatprep.mubr.f32.mxu0 0.0
        %6659 = vmatmul.mubr.f32.gmra.mrb[0].mxu0 %v6592
        %v6660 = vpop.f32.mrb[0].mxu0
        %v6661 = vadd.f32 %v6588, %v6660
        %v6662 = vpop.f32.mrb[0].mxu0
        %6663 = vdwg.mxu0
        %s6664 = scalar_lea.vmem %s8, 320
        %v6665 = vld [vmem:[%s6664] sm:$0xff]
        %v6666 = vld [vmem:[%s6664 + $0x8] sm:$0xff]
        %v6667 = vld [vmem:[%s6664 + $0x10] sm:$0xff]
        %v6668 = vld [vmem:[%s6664 + $0x18] sm:$0xff]
        %s6669 = scalar_lea.vmem %s9, 10
        %v6670 = vld [vmem:[%s6669] sm:$0x1]
        %v6672 = vlaneseq
        %v6673 = vshrl.u32 %v6672, 7
        %v6674 = vsub.s32 0, %v6673
        %v6675 = vrot.slane %v6670, %v6674
        %6677 = vmatprep.subr.mxu0 0.0
        %6678 = vmatpush1.msra.mxu0 %v6665
        %6679 = vmatprep.subr.mxu0 0.0
        %6680 = vmatpush1.msra.mxu0 %v6666
        %6681 = vmatprep.subr.mxu0 0.0
        %6682 = vmatpush1.msra.mxu0 %v6667
        %6683 = vmatprep.subr.mxu0 0.0
        %6684 = vmatpush1.msra.mxu0 %v6668
        %6685 = vmatprep.subr.mxu0 0.0
        %6686 = vmatpush1.msra.mxu0 0.0
        %6687 = vmatprep.subr.mxu0 0.0
        %6688 = vmatpush1.msra.mxu0 0.0
        %6689 = vmatprep.subr.mxu0 0.0
        %6690 = vmatpush1.msra.mxu0 0.0
        %6691 = vmatprep.subr.mxu0 0.0
        %6692 = vmatpush1.msra.mxu0 0.0
        %6693 = vmatprep.subr.mxu0 0.0
        %6694 = vmatpush1.msra.mxu0 0.0
        %6695 = vmatprep.subr.mxu0 0.0
        %6696 = vmatpush1.msra.mxu0 0.0
        %6697 = vmatprep.subr.mxu0 0.0
        %6698 = vmatpush1.msra.mxu0 0.0
        %6699 = vmatprep.subr.mxu0 0.0
        %6700 = vmatpush1.msra.mxu0 0.0
        %6701 = vmatprep.subr.mxu0 0.0
        %6702 = vmatpush1.msra.mxu0 0.0
        %6703 = vmatprep.subr.mxu0 0.0
        %6704 = vmatpush1.msra.mxu0 0.0
        %6705 = vmatprep.subr.mxu0 0.0
        %6706 = vmatpush1.msra.mxu0 0.0
        %6707 = vmatprep.subr.mxu0 0.0
        %6708 = vmatpush1.msra.mxu0 0.0
        %6709 = vmatprep.subr.mxu0 0.0
        %6710 = vmatpush1.msra.mxu0 0.0
        %6711 = vmatprep.subr.mxu0 0.0
        %6712 = vmatpush1.msra.mxu0 0.0
        %6713 = vmatprep.subr.mxu0 0.0
        %6714 = vmatpush1.msra.mxu0 0.0
        %6715 = vmatprep.subr.mxu0 0.0
        %6716 = vmatpush1.msra.mxu0 0.0
        %6717 = vmatprep.subr.mxu0 0.0
        %6718 = vmatpush1.msra.mxu0 0.0
        %6719 = vmatprep.subr.mxu0 0.0
        %6720 = vmatpush1.msra.mxu0 0.0
        %6721 = vmatprep.subr.mxu0 0.0
        %6722 = vmatpush1.msra.mxu0 0.0
        %6723 = vmatprep.subr.mxu0 0.0
        %6724 = vmatpush1.msra.mxu0 0.0
        %6725 = vmatprep.subr.mxu0 0.0
        %6726 = vmatpush1.msra.mxu0 0.0
        %6727 = vmatprep.subr.mxu0 0.0
        %6728 = vmatpush1.msra.mxu0 0.0
        %6729 = vmatprep.subr.mxu0 0.0
        %6730 = vmatpush1.msra.mxu0 0.0
        %6731 = vmatprep.subr.mxu0 0.0
        %6732 = vmatpush1.msra.mxu0 0.0
        %6733 = vmatprep.subr.mxu0 0.0
        %6734 = vmatpush1.msra.mxu0 0.0
        %6735 = vmatprep.subr.mxu0 0.0
        %6736 = vmatpush1.msra.mxu0 0.0
        %6737 = vmatprep.subr.mxu0 0.0
        %6738 = vmatpush1.msra.mxu0 0.0
        %6739 = vmatprep.subr.mxu0 0.0
        %6740 = vmatpush1.msra.mxu0 0.0
        %6741 = vmatprep.mubr.f32.mxu0 0.0
        %6742 = vmatmul.mubr.f32.gmra.mrb[0].mxu0 %v5847
        %v6743 = vpop.f32.mrb[0].mxu0
        %v6744 = vadd.f32 %v6675, %v6743
        %v6745 = vpop.f32.mrb[0].mxu0
        %6746 = vdwg.mxu0
        %s6747 = scalar_lea.vmem %s8, 448
        %v6748 = vld [vmem:[%s6747] sm:$0xff]
        %v6749 = vld [vmem:[%s6747 + $0x8] sm:$0xff]
        %v6750 = vld [vmem:[%s6747 + $0x10] sm:$0xff]
        %v6751 = vld [vmem:[%s6747 + $0x18] sm:$0xff]
        %s6752 = scalar_lea.vmem %s9, 14
        %v6753 = vld [vmem:[%s6752] sm:$0x1]
        %v6755 = vlaneseq
        %v6756 = vshrl.u32 %v6755, 7
        %v6757 = vsub.s32 0, %v6756
        %v6758 = vrot.slane %v6753, %v6757
        %6760 = vmatprep.subr.mxu0 0.0
        %6761 = vmatpush1.msra.mxu0 %v6748
        %6762 = vmatprep.subr.mxu0 0.0
        %6763 = vmatpush1.msra.mxu0 %v6749
        %6764 = vmatprep.subr.mxu0 0.0
        %6765 = vmatpush1.msra.mxu0 %v6750
        %6766 = vmatprep.subr.mxu0 0.0
        %6767 = vmatpush1.msra.mxu0 %v6751
        %6768 = vmatprep.subr.mxu0 0.0
        %6769 = vmatpush1.msra.mxu0 0.0
        %6770 = vmatprep.subr.mxu0 0.0
        %6771 = vmatpush1.msra.mxu0 0.0
        %6772 = vmatprep.subr.mxu0 0.0
        %6773 = vmatpush1.msra.mxu0 0.0
        %6774 = vmatprep.subr.mxu0 0.0
        %6775 = vmatpush1.msra.mxu0 0.0
        %6776 = vmatprep.subr.mxu0 0.0
        %6777 = vmatpush1.msra.mxu0 0.0
        %6778 = vmatprep.subr.mxu0 0.0
        %6779 = vmatpush1.msra.mxu0 0.0
        %6780 = vmatprep.subr.mxu0 0.0
        %6781 = vmatpush1.msra.mxu0 0.0
        %6782 = vmatprep.subr.mxu0 0.0
        %6783 = vmatpush1.msra.mxu0 0.0
        %6784 = vmatprep.subr.mxu0 0.0
        %6785 = vmatpush1.msra.mxu0 0.0
        %6786 = vmatprep.subr.mxu0 0.0
        %6787 = vmatpush1.msra.mxu0 0.0
        %6788 = vmatprep.subr.mxu0 0.0
        %6789 = vmatpush1.msra.mxu0 0.0
        %6790 = vmatprep.subr.mxu0 0.0
        %6791 = vmatpush1.msra.mxu0 0.0
        %6792 = vmatprep.subr.mxu0 0.0
        %6793 = vmatpush1.msra.mxu0 0.0
        %6794 = vmatprep.subr.mxu0 0.0
        %6795 = vmatpush1.msra.mxu0 0.0
        %6796 = vmatprep.subr.mxu0 0.0
        %6797 = vmatpush1.msra.mxu0 0.0
        %6798 = vmatprep.subr.mxu0 0.0
        %6799 = vmatpush1.msra.mxu0 0.0
        %6800 = vmatprep.subr.mxu0 0.0
        %6801 = vmatpush1.msra.mxu0 0.0
        %6802 = vmatprep.subr.mxu0 0.0
        %6803 = vmatpush1.msra.mxu0 0.0
        %6804 = vmatprep.subr.mxu0 0.0
        %6805 = vmatpush1.msra.mxu0 0.0
        %6806 = vmatprep.subr.mxu0 0.0
        %6807 = vmatpush1.msra.mxu0 0.0
        %6808 = vmatprep.subr.mxu0 0.0
        %6809 = vmatpush1.msra.mxu0 0.0
        %6810 = vmatprep.subr.mxu0 0.0
        %6811 = vmatpush1.msra.mxu0 0.0
        %6812 = vmatprep.subr.mxu0 0.0
        %6813 = vmatpush1.msra.mxu0 0.0
        %6814 = vmatprep.subr.mxu0 0.0
        %6815 = vmatpush1.msra.mxu0 0.0
        %6816 = vmatprep.subr.mxu0 0.0
        %6817 = vmatpush1.msra.mxu0 0.0
        %6818 = vmatprep.subr.mxu0 0.0
        %6819 = vmatpush1.msra.mxu0 0.0
        %6820 = vmatprep.subr.mxu0 0.0
        %6821 = vmatpush1.msra.mxu0 0.0
        %6822 = vmatprep.subr.mxu0 0.0
        %6823 = vmatpush1.msra.mxu0 0.0
        %6824 = vmatprep.mubr.f32.mxu0 0.0
        %6825 = vmatmul.mubr.f32.gmra.mrb[0].mxu0 %v2381
        %v6826 = vpop.f32.mrb[0].mxu0
        %v6827 = vadd.f32 %v6758, %v6826
        %v6828 = vpop.f32.mrb[0].mxu0
        %6829 = vmatprep.mubr.f32.mxu0 0.0
        %6830 = vmatmul.mubr.f32.gmra.mrb[0].mxu0 %v2384
        %v6831 = vpop.f32.mrb[0].mxu0
        %v6832 = vadd.f32 %v6758, %v6831
        %v6833 = vpop.f32.mrb[0].mxu0
        %6834 = vdwg.mxu0
        %v6836 = vsel %vm806, %v6744, 0
        %v6839 = vsel %vm806, %v6827, 0
        %v6842 = vsel %vm806, %v6832, 0
        %6844 = vmatprep.subr.mxu0 0.0
        %6845 = vmatpush1.xpose.msra.mxu0 %v6839
        %6846 = vmatprep.subr.mxu0 0.0
        %6847 = vmatpush1.xpose.msra.mxu0 %v6842
        %6848 = vmatprep.subr.mxu0 0.0
        %6849 = vmatpush1.xpose.msra.mxu0 0.0
        %6850 = vmatprep.subr.mxu0 0.0
        %6851 = vmatpush1.xpose.msra.mxu0 0.0
        %6852 = vmatprep.subr.mxu0 0.0
        %6853 = vmatpush1.xpose.msra.mxu0 0.0
        %6854 = vmatprep.subr.mxu0 0.0
        %6855 = vmatpush1.xpose.msra.mxu0 0.0
        %6856 = vmatprep.subr.mxu0 0.0
        %6857 = vmatpush1.xpose.msra.mxu0 0.0
        %6858 = vmatprep.subr.mxu0 0.0
        %6859 = vmatpush1.xpose.msra.mxu0 0.0
        %6860 = vmatprep.subr.mxu0 0.0
        %6861 = vmatpush1.xpose.msra.mxu0 0.0
        %6862 = vmatprep.subr.mxu0 0.0
        %6863 = vmatpush1.xpose.msra.mxu0 0.0
        %6864 = vmatprep.subr.mxu0 0.0
        %6865 = vmatpush1.xpose.msra.mxu0 0.0
        %6866 = vmatprep.subr.mxu0 0.0
        %6867 = vmatpush1.xpose.msra.mxu0 0.0
        %6868 = vmatprep.subr.mxu0 0.0
        %6869 = vmatpush1.xpose.msra.mxu0 0.0
        %6870 = vmatprep.subr.mxu0 0.0
        %6871 = vmatpush1.xpose.msra.mxu0 0.0
        %6872 = vmatprep.subr.mxu0 0.0
        %6873 = vmatpush1.xpose.msra.mxu0 0.0
        %6874 = vmatprep.subr.mxu0 0.0
        %6875 = vmatpush1.xpose.msra.mxu0 0.0
        %6876 = vmatprep.subr.mxu0 0.0
        %6877 = vmatpush1.xpose.msra.mxu0 0.0
        %6878 = vmatprep.subr.mxu0 0.0
        %6879 = vmatpush1.xpose.msra.mxu0 0.0
        %6880 = vmatprep.subr.mxu0 0.0
        %6881 = vmatpush1.xpose.msra.mxu0 0.0
        %6882 = vmatprep.subr.mxu0 0.0
        %6883 = vmatpush1.xpose.msra.mxu0 0.0
        %6884 = vmatprep.subr.mxu0 0.0
        %6885 = vmatpush1.xpose.msra.mxu0 0.0
        %6886 = vmatprep.subr.mxu0 0.0
        %6887 = vmatpush1.xpose.msra.mxu0 0.0
        %6888 = vmatprep.subr.mxu0 0.0
        %6889 = vmatpush1.xpose.msra.mxu0 0.0
        %6890 = vmatprep.subr.mxu0 0.0
        %6891 = vmatpush1.xpose.msra.mxu0 0.0
        %6892 = vmatprep.subr.mxu0 0.0
        %6893 = vmatpush1.xpose.msra.mxu0 0.0
        %6894 = vmatprep.subr.mxu0 0.0
        %6895 = vmatpush1.xpose.msra.mxu0 0.0
        %6896 = vmatprep.subr.mxu0 0.0
        %6897 = vmatpush1.xpose.msra.mxu0 0.0
        %6898 = vmatprep.subr.mxu0 0.0
        %6899 = vmatpush1.xpose.msra.mxu0 0.0
        %6900 = vmatprep.subr.mxu0 0.0
        %6901 = vmatpush1.xpose.msra.mxu0 0.0
        %6902 = vmatprep.subr.mxu0 0.0
        %6903 = vmatpush1.xpose.msra.mxu0 0.0
        %6904 = vmatprep.subr.mxu0 0.0
        %6905 = vmatpush1.xpose.msra.mxu0 0.0
        %6906 = vmatprep.subr.mxu0 0.0
        %6907 = vmatpush1.xpose.msra.mxu0 0.0
        %6908 = vmatprep.mubr.f32.mxu0 0.0
        %6909 = vmatmul.mubr.f32.gmra.mrb[0].mxu0 %v6836
        %v6910 = vpop.f32.mrb[0].mxu0
        %v6911 = vadd.f32 0.0, %v6910
        %v6912 = vpop.f32.mrb[0].mxu0
        %6913 = vdwg.mxu0
        %v6914 = vsel %vm2540, %v6911, -inf
        %6915 = vmax.xlane.f32.xlu0 %v6914
        %v6916 = vpop.xlane.xlu0 %6915
        %v6917 = vsub.f32 %v6911, %v6916
        %v6918 = vmul.f32 %v6917, 1.442695
        %v6919 = vpow.pop %v6918
        %v6920 = vsel %vm2540, %v6919, 0.0
        %6921 = vadd.xlane.f32.xlu0 %v6920
        %v6922 = vpop.xlane.xlu0 %6921
        %v6923 = vrcp.pop %v6922
        %v6924 = vmul.f32 %v6919, %v6923
        %s6925 = scalar_lea.vmem %s10, 192
        %v6926 = vld [vmem:[%s6925] sm:$0xff]
        %v6927 = vld [vmem:[%s6925 + $0x8] sm:$0xff]
        %v6928 = vld [vmem:[%s6925 + $0x10] sm:$0xff]
        %v6929 = vld [vmem:[%s6925 + $0x18] sm:$0xff]
        %6930 = vmatprep.subr.mxu0 0.0
        %6931 = vmatpush1.msra.mxu0 %v6926
        %6932 = vmatprep.subr.mxu0 0.0
        %6933 = vmatpush1.msra.mxu0 %v6927
        %6934 = vmatprep.subr.mxu0 0.0
        %6935 = vmatpush1.msra.mxu0 %v6928
        %6936 = vmatprep.subr.mxu0 0.0
        %6937 = vmatpush1.msra.mxu0 %v6929
        %6938 = vmatprep.subr.mxu0 0.0
        %6939 = vmatpush1.msra.mxu0 0.0
        %6940 = vmatprep.subr.mxu0 0.0
        %6941 = vmatpush1.msra.mxu0 0.0
        %6942 = vmatprep.subr.mxu0 0.0
        %6943 = vmatpush1.msra.mxu0 0.0
        %6944 = vmatprep.subr.mxu0 0.0
        %6945 = vmatpush1.msra.mxu0 0.0
        %6946 = vmatprep.subr.mxu0 0.0
        %6947 = vmatpush1.msra.mxu0 0.0
        %6948 = vmatprep.subr.mxu0 0.0
        %6949 = vmatpush1.msra.mxu0 0.0
        %6950 = vmatprep.subr.mxu0 0.0
        %6951 = vmatpush1.msra.mxu0 0.0
        %6952 = vmatprep.subr.mxu0 0.0
        %6953 = vmatpush1.msra.mxu0 0.0
        %6954 = vmatprep.subr.mxu0 0.0
        %6955 = vmatpush1.msra.mxu0 0.0
        %6956 = vmatprep.subr.mxu0 0.0
        %6957 = vmatpush1.msra.mxu0 0.0
        %6958 = vmatprep.subr.mxu0 0.0
        %6959 = vmatpush1.msra.mxu0 0.0
        %6960 = vmatprep.subr.mxu0 0.0
        %6961 = vmatpush1.msra.mxu0 0.0
        %6962 = vmatprep.subr.mxu0 0.0
        %6963 = vmatpush1.msra.mxu0 0.0
        %6964 = vmatprep.subr.mxu0 0.0
        %6965 = vmatpush1.msra.mxu0 0.0
        %6966 = vmatprep.subr.mxu0 0.0
        %6967 = vmatpush1.msra.mxu0 0.0
        %6968 = vmatprep.subr.mxu0 0.0
        %6969 = vmatpush1.msra.mxu0 0.0
        %6970 = vmatprep.subr.mxu0 0.0
        %6971 = vmatpush1.msra.mxu0 0.0
        %6972 = vmatprep.subr.mxu0 0.0
        %6973 = vmatpush1.msra.mxu0 0.0
        %6974 = vmatprep.subr.mxu0 0.0
        %6975 = vmatpush1.msra.mxu0 0.0
        %6976 = vmatprep.subr.mxu0 0.0
        %6977 = vmatpush1.msra.mxu0 0.0
        %6978 = vmatprep.subr.mxu0 0.0
        %6979 = vmatpush1.msra.mxu0 0.0
        %6980 = vmatprep.subr.mxu0 0.0
        %6981 = vmatpush1.msra.mxu0 0.0
        %6982 = vmatprep.subr.mxu0 0.0
        %6983 = vmatpush1.msra.mxu0 0.0
        %6984 = vmatprep.subr.mxu0 0.0
        %6985 = vmatpush1.msra.mxu0 0.0
        %6986 = vmatprep.subr.mxu0 0.0
        %6987 = vmatpush1.msra.mxu0 0.0
        %6988 = vmatprep.subr.mxu0 0.0
        %6989 = vmatpush1.msra.mxu0 0.0
        %6990 = vmatprep.subr.mxu0 0.0
        %6991 = vmatpush1.msra.mxu0 0.0
        %6992 = vmatprep.subr.mxu0 0.0
        %6993 = vmatpush1.msra.mxu0 0.0
        %6994 = vmatprep.mubr.f32.mxu0 0.0
        %6995 = vmatmul.mubr.f32.gmra.mrb[0].mxu0 %v2557
        %v6996 = vpop.f32.mrb[0].mxu0
        %v6997 = vadd.f32 0.0, %v6996
        %v6998 = vpop.f32.mrb[0].mxu0
        %6999 = vmatprep.mubr.f32.mxu0 0.0
        %7000 = vmatmul.mubr.f32.gmra.mrb[0].mxu0 %v2560
        %v7001 = vpop.f32.mrb[0].mxu0
        %v7002 = vadd.f32 0.0, %v7001
        %v7003 = vpop.f32.mrb[0].mxu0
        %7004 = vdwg.mxu0
        %v7006 = vsel %vm2540, %v6924, 0
        %7008 = vmatprep.subr.mxu0 0.0
        %7009 = vmatpush1.msra.mxu0 %v6997
        %7010 = vmatprep.subr.mxu0 0.0
        %7011 = vmatpush1.msra.mxu0 %v7002
        %7012 = vmatprep.subr.mxu0 0.0
        %7013 = vmatpush1.msra.mxu0 0.0
        %7014 = vmatprep.subr.mxu0 0.0
        %7015 = vmatpush1.msra.mxu0 0.0
        %7016 = vmatprep.subr.mxu0 0.0
        %7017 = vmatpush1.msra.mxu0 0.0
        %7018 = vmatprep.subr.mxu0 0.0
        %7019 = vmatpush1.msra.mxu0 0.0
        %7020 = vmatprep.subr.mxu0 0.0
        %7021 = vmatpush1.msra.mxu0 0.0
        %7022 = vmatprep.subr.mxu0 0.0
        %7023 = vmatpush1.msra.mxu0 0.0
        %7024 = vmatprep.subr.mxu0 0.0
        %7025 = vmatpush1.msra.mxu0 0.0
        %7026 = vmatprep.subr.mxu0 0.0
        %7027 = vmatpush1.msra.mxu0 0.0
        %7028 = vmatprep.subr.mxu0 0.0
        %7029 = vmatpush1.msra.mxu0 0.0
        %7030 = vmatprep.subr.mxu0 0.0
        %7031 = vmatpush1.msra.mxu0 0.0
        %7032 = vmatprep.subr.mxu0 0.0
        %7033 = vmatpush1.msra.mxu0 0.0
        %7034 = vmatprep.subr.mxu0 0.0
        %7035 = vmatpush1.msra.mxu0 0.0
        %7036 = vmatprep.subr.mxu0 0.0
        %7037 = vmatpush1.msra.mxu0 0.0
        %7038 = vmatprep.subr.mxu0 0.0
        %7039 = vmatpush1.msra.mxu0 0.0
        %7040 = vmatprep.subr.mxu0 0.0
        %7041 = vmatpush1.msra.mxu0 0.0
        %7042 = vmatprep.subr.mxu0 0.0
        %7043 = vmatpush1.msra.mxu0 0.0
        %7044 = vmatprep.subr.mxu0 0.0
        %7045 = vmatpush1.msra.mxu0 0.0
        %7046 = vmatprep.subr.mxu0 0.0
        %7047 = vmatpush1.msra.mxu0 0.0
        %7048 = vmatprep.subr.mxu0 0.0
        %7049 = vmatpush1.msra.mxu0 0.0
        %7050 = vmatprep.subr.mxu0 0.0
        %7051 = vmatpush1.msra.mxu0 0.0
        %7052 = vmatprep.subr.mxu0 0.0
        %7053 = vmatpush1.msra.mxu0 0.0
        %7054 = vmatprep.subr.mxu0 0.0
        %7055 = vmatpush1.msra.mxu0 0.0
        %7056 = vmatprep.subr.mxu0 0.0
        %7057 = vmatpush1.msra.mxu0 0.0
        %7058 = vmatprep.subr.mxu0 0.0
        %7059 = vmatpush1.msra.mxu0 0.0
        %7060 = vmatprep.subr.mxu0 0.0
        %7061 = vmatpush1.msra.mxu0 0.0
        %7062 = vmatprep.subr.mxu0 0.0
        %7063 = vmatpush1.msra.mxu0 0.0
        %7064 = vmatprep.subr.mxu0 0.0
        %7065 = vmatpush1.msra.mxu0 0.0
        %7066 = vmatprep.subr.mxu0 0.0
        %7067 = vmatpush1.msra.mxu0 0.0
        %7068 = vmatprep.subr.mxu0 0.0
        %7069 = vmatpush1.msra.mxu0 0.0
        %7070 = vmatprep.subr.mxu0 0.0
        %7071 = vmatpush1.msra.mxu0 0.0
        %7072 = vmatprep.mubr.f32.mxu0 0.0
        %7073 = vmatmul.mubr.f32.gmra.mrb[0].mxu0 %v7006
        %v7074 = vpop.f32.mrb[0].mxu0
        %v7075 = vadd.f32 0.0, %v7074
        %v7076 = vpop.f32.mrb[0].mxu0
        %7077 = vdwg.mxu0
        %v7078 = vadd.f32 %v6661, %v7075
        %s7079 = scalar_lea.vmem %s8, 352
        %v7080 = vld [vmem:[%s7079] sm:$0xff]
        %v7081 = vld [vmem:[%s7079 + $0x8] sm:$0xff]
        %v7082 = vld [vmem:[%s7079 + $0x10] sm:$0xff]
        %v7083 = vld [vmem:[%s7079 + $0x18] sm:$0xff]
        %s7084 = scalar_lea.vmem %s9, 11
        %v7085 = vld [vmem:[%s7084] sm:$0x1]
        %v7087 = vlaneseq
        %v7088 = vshrl.u32 %v7087, 7
        %v7089 = vsub.s32 0, %v7088
        %v7090 = vrot.slane %v7085, %v7089
        %7092 = vmatprep.subr.mxu0 0.0
        %7093 = vmatpush1.msra.mxu0 %v7080
        %7094 = vmatprep.subr.mxu0 0.0
        %7095 = vmatpush1.msra.mxu0 %v7081
        %7096 = vmatprep.subr.mxu0 0.0
        %7097 = vmatpush1.msra.mxu0 %v7082
        %7098 = vmatprep.subr.mxu0 0.0
        %7099 = vmatpush1.msra.mxu0 %v7083
        %7100 = vmatprep.subr.mxu0 0.0
        %7101 = vmatpush1.msra.mxu0 0.0
        %7102 = vmatprep.subr.mxu0 0.0
        %7103 = vmatpush1.msra.mxu0 0.0
        %7104 = vmatprep.subr.mxu0 0.0
        %7105 = vmatpush1.msra.mxu0 0.0
        %7106 = vmatprep.subr.mxu0 0.0
        %7107 = vmatpush1.msra.mxu0 0.0
        %7108 = vmatprep.subr.mxu0 0.0
        %7109 = vmatpush1.msra.mxu0 0.0
        %7110 = vmatprep.subr.mxu0 0.0
        %7111 = vmatpush1.msra.mxu0 0.0
        %7112 = vmatprep.subr.mxu0 0.0
        %7113 = vmatpush1.msra.mxu0 0.0
        %7114 = vmatprep.subr.mxu0 0.0
        %7115 = vmatpush1.msra.mxu0 0.0
        %7116 = vmatprep.subr.mxu0 0.0
        %7117 = vmatpush1.msra.mxu0 0.0
        %7118 = vmatprep.subr.mxu0 0.0
        %7119 = vmatpush1.msra.mxu0 0.0
        %7120 = vmatprep.subr.mxu0 0.0
        %7121 = vmatpush1.msra.mxu0 0.0
        %7122 = vmatprep.subr.mxu0 0.0
        %7123 = vmatpush1.msra.mxu0 0.0
        %7124 = vmatprep.subr.mxu0 0.0
        %7125 = vmatpush1.msra.mxu0 0.0
        %7126 = vmatprep.subr.mxu0 0.0
        %7127 = vmatpush1.msra.mxu0 0.0
        %7128 = vmatprep.subr.mxu0 0.0
        %7129 = vmatpush1.msra.mxu0 0.0
        %7130 = vmatprep.subr.mxu0 0.0
        %7131 = vmatpush1.msra.mxu0 0.0
        %7132 = vmatprep.subr.mxu0 0.0
        %7133 = vmatpush1.msra.mxu0 0.0
        %7134 = vmatprep.subr.mxu0 0.0
        %7135 = vmatpush1.msra.mxu0 0.0
        %7136 = vmatprep.subr.mxu0 0.0
        %7137 = vmatpush1.msra.mxu0 0.0
        %7138 = vmatprep.subr.mxu0 0.0
        %7139 = vmatpush1.msra.mxu0 0.0
        %7140 = vmatprep.subr.mxu0 0.0
        %7141 = vmatpush1.msra.mxu0 0.0
        %7142 = vmatprep.subr.mxu0 0.0
        %7143 = vmatpush1.msra.mxu0 0.0
        %7144 = vmatprep.subr.mxu0 0.0
        %7145 = vmatpush1.msra.mxu0 0.0
        %7146 = vmatprep.subr.mxu0 0.0
        %7147 = vmatpush1.msra.mxu0 0.0
        %7148 = vmatprep.subr.mxu0 0.0
        %7149 = vmatpush1.msra.mxu0 0.0
        %7150 = vmatprep.subr.mxu0 0.0
        %7151 = vmatpush1.msra.mxu0 0.0
        %7152 = vmatprep.subr.mxu0 0.0
        %7153 = vmatpush1.msra.mxu0 0.0
        %7154 = vmatprep.subr.mxu0 0.0
        %7155 = vmatpush1.msra.mxu0 0.0
        %7156 = vmatprep.mubr.f32.mxu0 0.0
        %7157 = vmatmul.mubr.f32.gmra.mrb[0].mxu0 %v5847
        %v7158 = vpop.f32.mrb[0].mxu0
        %v7159 = vadd.f32 %v7090, %v7158
        %v7160 = vpop.f32.mrb[0].mxu0
        %7161 = vdwg.mxu0
        %s7162 = scalar_lea.vmem %s8, 480
        %v7163 = vld [vmem:[%s7162] sm:$0xff]
        %v7164 = vld [vmem:[%s7162 + $0x8] sm:$0xff]
        %v7165 = vld [vmem:[%s7162 + $0x10] sm:$0xff]
        %v7166 = vld [vmem:[%s7162 + $0x18] sm:$0xff]
        %s7167 = scalar_lea.vmem %s9, 15
        %v7168 = vld [vmem:[%s7167] sm:$0x1]
        %v7170 = vlaneseq
        %v7171 = vshrl.u32 %v7170, 7
        %v7172 = vsub.s32 0, %v7171
        %v7173 = vrot.slane %v7168, %v7172
        %7175 = vmatprep.subr.mxu0 0.0
        %7176 = vmatpush1.msra.mxu0 %v7163
        %7177 = vmatprep.subr.mxu0 0.0
        %7178 = vmatpush1.msra.mxu0 %v7164
        %7179 = vmatprep.subr.mxu0 0.0
        %7180 = vmatpush1.msra.mxu0 %v7165
        %7181 = vmatprep.subr.mxu0 0.0
        %7182 = vmatpush1.msra.mxu0 %v7166
        %7183 = vmatprep.subr.mxu0 0.0
        %7184 = vmatpush1.msra.mxu0 0.0
        %7185 = vmatprep.subr.mxu0 0.0
        %7186 = vmatpush1.msra.mxu0 0.0
        %7187 = vmatprep.subr.mxu0 0.0
        %7188 = vmatpush1.msra.mxu0 0.0
        %7189 = vmatprep.subr.mxu0 0.0
        %7190 = vmatpush1.msra.mxu0 0.0
        %7191 = vmatprep.subr.mxu0 0.0
        %7192 = vmatpush1.msra.mxu0 0.0
        %7193 = vmatprep.subr.mxu0 0.0
        %7194 = vmatpush1.msra.mxu0 0.0
        %7195 = vmatprep.subr.mxu0 0.0
        %7196 = vmatpush1.msra.mxu0 0.0
        %7197 = vmatprep.subr.mxu0 0.0
        %7198 = vmatpush1.msra.mxu0 0.0
        %7199 = vmatprep.subr.mxu0 0.0
        %7200 = vmatpush1.msra.mxu0 0.0
        %7201 = vmatprep.subr.mxu0 0.0
        %7202 = vmatpush1.msra.mxu0 0.0
        %7203 = vmatprep.subr.mxu0 0.0
        %7204 = vmatpush1.msra.mxu0 0.0
        %7205 = vmatprep.subr.mxu0 0.0
        %7206 = vmatpush1.msra.mxu0 0.0
        %7207 = vmatprep.subr.mxu0 0.0
        %7208 = vmatpush1.msra.mxu0 0.0
        %7209 = vmatprep.subr.mxu0 0.0
        %7210 = vmatpush1.msra.mxu0 0.0
        %7211 = vmatprep.subr.mxu0 0.0
        %7212 = vmatpush1.msra.mxu0 0.0
        %7213 = vmatprep.subr.mxu0 0.0
        %7214 = vmatpush1.msra.mxu0 0.0
        %7215 = vmatprep.subr.mxu0 0.0
        %7216 = vmatpush1.msra.mxu0 0.0
        %7217 = vmatprep.subr.mxu0 0.0
        %7218 = vmatpush1.msra.mxu0 0.0
        %7219 = vmatprep.subr.mxu0 0.0
        %7220 = vmatpush1.msra.mxu0 0.0
        %7221 = vmatprep.subr.mxu0 0.0
        %7222 = vmatpush1.msra.mxu0 0.0
        %7223 = vmatprep.subr.mxu0 0.0
        %7224 = vmatpush1.msra.mxu0 0.0
        %7225 = vmatprep.subr.mxu0 0.0
        %7226 = vmatpush1.msra.mxu0 0.0
        %7227 = vmatprep.subr.mxu0 0.0
        %7228 = vmatpush1.msra.mxu0 0.0
        %7229 = vmatprep.subr.mxu0 0.0
        %7230 = vmatpush1.msra.mxu0 0.0
        %7231 = vmatprep.subr.mxu0 0.0
        %7232 = vmatpush1.msra.mxu0 0.0
        %7233 = vmatprep.subr.mxu0 0.0
        %7234 = vmatpush1.msra.mxu0 0.0
        %7235 = vmatprep.subr.mxu0 0.0
        %7236 = vmatpush1.msra.mxu0 0.0
        %7237 = vmatprep.subr.mxu0 0.0
        %7238 = vmatpush1.msra.mxu0 0.0
        %7239 = vmatprep.mubr.f32.mxu0 0.0
        %7240 = vmatmul.mubr.f32.gmra.mrb[0].mxu0 %v2381
        %v7241 = vpop.f32.mrb[0].mxu0
        %v7242 = vadd.f32 %v7173, %v7241
        %v7243 = vpop.f32.mrb[0].mxu0
        %7244 = vmatprep.mubr.f32.mxu0 0.0
        %7245 = vmatmul.mubr.f32.gmra.mrb[0].mxu0 %v2384
        %v7246 = vpop.f32.mrb[0].mxu0
        %v7247 = vadd.f32 %v7173, %v7246
        %v7248 = vpop.f32.mrb[0].mxu0
        %7249 = vdwg.mxu0
        %v7251 = vsel %vm806, %v7159, 0
        %v7254 = vsel %vm806, %v7242, 0
        %v7257 = vsel %vm806, %v7247, 0
        %7259 = vmatprep.subr.mxu0 0.0
        %7260 = vmatpush1.xpose.msra.mxu0 %v7254
        %7261 = vmatprep.subr.mxu0 0.0
        %7262 = vmatpush1.xpose.msra.mxu0 %v7257
        %7263 = vmatprep.subr.mxu0 0.0
        %7264 = vmatpush1.xpose.msra.mxu0 0.0
        %7265 = vmatprep.subr.mxu0 0.0
        %7266 = vmatpush1.xpose.msra.mxu0 0.0
        %7267 = vmatprep.subr.mxu0 0.0
        %7268 = vmatpush1.xpose.msra.mxu0 0.0
        %7269 = vmatprep.subr.mxu0 0.0
        %7270 = vmatpush1.xpose.msra.mxu0 0.0
        %7271 = vmatprep.subr.mxu0 0.0
        %7272 = vmatpush1.xpose.msra.mxu0 0.0
        %7273 = vmatprep.subr.mxu0 0.0
        %7274 = vmatpush1.xpose.msra.mxu0 0.0
        %7275 = vmatprep.subr.mxu0 0.0
        %7276 = vmatpush1.xpose.msra.mxu0 0.0
        %7277 = vmatprep.subr.mxu0 0.0
        %7278 = vmatpush1.xpose.msra.mxu0 0.0
        %7279 = vmatprep.subr.mxu0 0.0
        %7280 = vmatpush1.xpose.msra.mxu0 0.0
        %7281 = vmatprep.subr.mxu0 0.0
        %7282 = vmatpush1.xpose.msra.mxu0 0.0
        %7283 = vmatprep.subr.mxu0 0.0
        %7284 = vmatpush1.xpose.msra.mxu0 0.0
        %7285 = vmatprep.subr.mxu0 0.0
        %7286 = vmatpush1.xpose.msra.mxu0 0.0
        %7287 = vmatprep.subr.mxu0 0.0
        %7288 = vmatpush1.xpose.msra.mxu0 0.0
        %7289 = vmatprep.subr.mxu0 0.0
        %7290 = vmatpush1.xpose.msra.mxu0 0.0
        %7291 = vmatprep.subr.mxu0 0.0
        %7292 = vmatpush1.xpose.msra.mxu0 0.0
        %7293 = vmatprep.subr.mxu0 0.0
        %7294 = vmatpush1.xpose.msra.mxu0 0.0
        %7295 = vmatprep.subr.mxu0 0.0
        %7296 = vmatpush1.xpose.msra.mxu0 0.0
        %7297 = vmatprep.subr.mxu0 0.0
        %7298 = vmatpush1.xpose.msra.mxu0 0.0
        %7299 = vmatprep.subr.mxu0 0.0
        %7300 = vmatpush1.xpose.msra.mxu0 0.0
        %7301 = vmatprep.subr.mxu0 0.0
        %7302 = vmatpush1.xpose.msra.mxu0 0.0
        %7303 = vmatprep.subr.mxu0 0.0
        %7304 = vmatpush1.xpose.msra.mxu0 0.0
        %7305 = vmatprep.subr.mxu0 0.0
        %7306 = vmatpush1.xpose.msra.mxu0 0.0
        %7307 = vmatprep.subr.mxu0 0.0
        %7308 = vmatpush1.xpose.msra.mxu0 0.0
        %7309 = vmatprep.subr.mxu0 0.0
        %7310 = vmatpush1.xpose.msra.mxu0 0.0
        %7311 = vmatprep.subr.mxu0 0.0
        %7312 = vmatpush1.xpose.msra.mxu0 0.0
        %7313 = vmatprep.subr.mxu0 0.0
        %7314 = vmatpush1.xpose.msra.mxu0 0.0
        %7315 = vmatprep.subr.mxu0 0.0
        %7316 = vmatpush1.xpose.msra.mxu0 0.0
        %7317 = vmatprep.subr.mxu0 0.0
        %7318 = vmatpush1.xpose.msra.mxu0 0.0
        %7319 = vmatprep.subr.mxu0 0.0
        %7320 = vmatpush1.xpose.msra.mxu0 0.0
        %7321 = vmatprep.subr.mxu0 0.0
        %7322 = vmatpush1.xpose.msra.mxu0 0.0
        %7323 = vmatprep.mubr.f32.mxu0 0.0
        %7324 = vmatmul.mubr.f32.gmra.mrb[0].mxu0 %v7251
        %v7325 = vpop.f32.mrb[0].mxu0
        %v7326 = vadd.f32 0.0, %v7325
        %v7327 = vpop.f32.mrb[0].mxu0
        %7328 = vdwg.mxu0
        %v7329 = vsel %vm2540, %v7326, -inf
        %7330 = vmax.xlane.f32.xlu0 %v7329
        %v7331 = vpop.xlane.xlu0 %7330
        %v7332 = vsub.f32 %v7326, %v7331
        %v7333 = vmul.f32 %v7332, 1.442695
        %v7334 = vpow.pop %v7333
        %v7335 = vsel %vm2540, %v7334, 0.0
        %7336 = vadd.xlane.f32.xlu0 %v7335
        %v7337 = vpop.xlane.xlu0 %7336
        %v7338 = vrcp.pop %v7337
        %v7339 = vmul.f32 %v7334, %v7338
        %s7340 = scalar_lea.vmem %s10, 224
        %v7341 = vld [vmem:[%s7340] sm:$0xff]
        %v7342 = vld [vmem:[%s7340 + $0x8] sm:$0xff]
        %v7343 = vld [vmem:[%s7340 + $0x10] sm:$0xff]
        %v7344 = vld [vmem:[%s7340 + $0x18] sm:$0xff]
        %7345 = vmatprep.subr.mxu0 0.0
        %7346 = vmatpush1.msra.mxu0 %v7341
        %7347 = vmatprep.subr.mxu0 0.0
        %7348 = vmatpush1.msra.mxu0 %v7342
        %7349 = vmatprep.subr.mxu0 0.0
        %7350 = vmatpush1.msra.mxu0 %v7343
        %7351 = vmatprep.subr.mxu0 0.0
        %7352 = vmatpush1.msra.mxu0 %v7344
        %7353 = vmatprep.subr.mxu0 0.0
        %7354 = vmatpush1.msra.mxu0 0.0
        %7355 = vmatprep.subr.mxu0 0.0
        %7356 = vmatpush1.msra.mxu0 0.0
        %7357 = vmatprep.subr.mxu0 0.0
        %7358 = vmatpush1.msra.mxu0 0.0
        %7359 = vmatprep.subr.mxu0 0.0
        %7360 = vmatpush1.msra.mxu0 0.0
        %7361 = vmatprep.subr.mxu0 0.0
        %7362 = vmatpush1.msra.mxu0 0.0
        %7363 = vmatprep.subr.mxu0 0.0
        %7364 = vmatpush1.msra.mxu0 0.0
        %7365 = vmatprep.subr.mxu0 0.0
        %7366 = vmatpush1.msra.mxu0 0.0
        %7367 = vmatprep.subr.mxu0 0.0
        %7368 = vmatpush1.msra.mxu0 0.0
        %7369 = vmatprep.subr.mxu0 0.0
        %7370 = vmatpush1.msra.mxu0 0.0
        %7371 = vmatprep.subr.mxu0 0.0
        %7372 = vmatpush1.msra.mxu0 0.0
        %7373 = vmatprep.subr.mxu0 0.0
        %7374 = vmatpush1.msra.mxu0 0.0
        %7375 = vmatprep.subr.mxu0 0.0
        %7376 = vmatpush1.msra.mxu0 0.0
        %7377 = vmatprep.subr.mxu0 0.0
        %7378 = vmatpush1.msra.mxu0 0.0
        %7379 = vmatprep.subr.mxu0 0.0
        %7380 = vmatpush1.msra.mxu0 0.0
        %7381 = vmatprep.subr.mxu0 0.0
        %7382 = vmatpush1.msra.mxu0 0.0
        %7383 = vmatprep.subr.mxu0 0.0
        %7384 = vmatpush1.msra.mxu0 0.0
        %7385 = vmatprep.subr.mxu0 0.0
        %7386 = vmatpush1.msra.mxu0 0.0
        %7387 = vmatprep.subr.mxu0 0.0
        %7388 = vmatpush1.msra.mxu0 0.0
        %7389 = vmatprep.subr.mxu0 0.0
        %7390 = vmatpush1.msra.mxu0 0.0
        %7391 = vmatprep.subr.mxu0 0.0
        %7392 = vmatpush1.msra.mxu0 0.0
        %7393 = vmatprep.subr.mxu0 0.0
        %7394 = vmatpush1.msra.mxu0 0.0
        %7395 = vmatprep.subr.mxu0 0.0
        %7396 = vmatpush1.msra.mxu0 0.0
        %7397 = vmatprep.subr.mxu0 0.0
        %7398 = vmatpush1.msra.mxu0 0.0
        %7399 = vmatprep.subr.mxu0 0.0
        %7400 = vmatpush1.msra.mxu0 0.0
        %7401 = vmatprep.subr.mxu0 0.0
        %7402 = vmatpush1.msra.mxu0 0.0
        %7403 = vmatprep.subr.mxu0 0.0
        %7404 = vmatpush1.msra.mxu0 0.0
        %7405 = vmatprep.subr.mxu0 0.0
        %7406 = vmatpush1.msra.mxu0 0.0
        %7407 = vmatprep.subr.mxu0 0.0
        %7408 = vmatpush1.msra.mxu0 0.0
        %7409 = vmatprep.mubr.f32.mxu0 0.0
        %7410 = vmatmul.mubr.f32.gmra.mrb[0].mxu0 %v2557
        %v7411 = vpop.f32.mrb[0].mxu0
        %v7412 = vadd.f32 0.0, %v7411
        %v7413 = vpop.f32.mrb[0].mxu0
        %7414 = vmatprep.mubr.f32.mxu0 0.0
        %7415 = vmatmul.mubr.f32.gmra.mrb[0].mxu0 %v2560
        %v7416 = vpop.f32.mrb[0].mxu0
        %v7417 = vadd.f32 0.0, %v7416
        %v7418 = vpop.f32.mrb[0].mxu0
        %7419 = vdwg.mxu0
        %v7421 = vsel %vm2540, %v7339, 0
        %7423 = vmatprep.subr.mxu0 0.0
        %7424 = vmatpush1.msra.mxu0 %v7412
        %7425 = vmatprep.subr.mxu0 0.0
        %7426 = vmatpush1.msra.mxu0 %v7417
        %7427 = vmatprep.subr.mxu0 0.0
        %7428 = vmatpush1.msra.mxu0 0.0
        %7429 = vmatprep.subr.mxu0 0.0
        %7430 = vmatpush1.msra.mxu0 0.0
        %7431 = vmatprep.subr.mxu0 0.0
        %7432 = vmatpush1.msra.mxu0 0.0
        %7433 = vmatprep.subr.mxu0 0.0
        %7434 = vmatpush1.msra.mxu0 0.0
        %7435 = vmatprep.subr.mxu0 0.0
        %7436 = vmatpush1.msra.mxu0 0.0
        %7437 = vmatprep.subr.mxu0 0.0
        %7438 = vmatpush1.msra.mxu0 0.0
        %7439 = vmatprep.subr.mxu0 0.0
        %7440 = vmatpush1.msra.mxu0 0.0
        %7441 = vmatprep.subr.mxu0 0.0
        %7442 = vmatpush1.msra.mxu0 0.0
        %7443 = vmatprep.subr.mxu0 0.0
        %7444 = vmatpush1.msra.mxu0 0.0
        %7445 = vmatprep.subr.mxu0 0.0
        %7446 = vmatpush1.msra.mxu0 0.0
        %7447 = vmatprep.subr.mxu0 0.0
        %7448 = vmatpush1.msra.mxu0 0.0
        %7449 = vmatprep.subr.mxu0 0.0
        %7450 = vmatpush1.msra.mxu0 0.0
        %7451 = vmatprep.subr.mxu0 0.0
        %7452 = vmatpush1.msra.mxu0 0.0
        %7453 = vmatprep.subr.mxu0 0.0
        %7454 = vmatpush1.msra.mxu0 0.0
        %7455 = vmatprep.subr.mxu0 0.0
        %7456 = vmatpush1.msra.mxu0 0.0
        %7457 = vmatprep.subr.mxu0 0.0
        %7458 = vmatpush1.msra.mxu0 0.0
        %7459 = vmatprep.subr.mxu0 0.0
        %7460 = vmatpush1.msra.mxu0 0.0
        %7461 = vmatprep.subr.mxu0 0.0
        %7462 = vmatpush1.msra.mxu0 0.0
        %7463 = vmatprep.subr.mxu0 0.0
        %7464 = vmatpush1.msra.mxu0 0.0
        %7465 = vmatprep.subr.mxu0 0.0
        %7466 = vmatpush1.msra.mxu0 0.0
        %7467 = vmatprep.subr.mxu0 0.0
        %7468 = vmatpush1.msra.mxu0 0.0
        %7469 = vmatprep.subr.mxu0 0.0
        %7470 = vmatpush1.msra.mxu0 0.0
        %7471 = vmatprep.subr.mxu0 0.0
        %7472 = vmatpush1.msra.mxu0 0.0
        %7473 = vmatprep.subr.mxu0 0.0
        %7474 = vmatpush1.msra.mxu0 0.0
        %7475 = vmatprep.subr.mxu0 0.0
        %7476 = vmatpush1.msra.mxu0 0.0
        %7477 = vmatprep.subr.mxu0 0.0
        %7478 = vmatpush1.msra.mxu0 0.0
        %7479 = vmatprep.subr.mxu0 0.0
        %7480 = vmatpush1.msra.mxu0 0.0
        %7481 = vmatprep.subr.mxu0 0.0
        %7482 = vmatpush1.msra.mxu0 0.0
        %7483 = vmatprep.subr.mxu0 0.0
        %7484 = vmatpush1.msra.mxu0 0.0
        %7485 = vmatprep.subr.mxu0 0.0
        %7486 = vmatpush1.msra.mxu0 0.0
        %7487 = vmatprep.mubr.f32.mxu0 0.0
        %7488 = vmatmul.mubr.f32.gmra.mrb[0].mxu0 %v7421
        %v7489 = vpop.f32.mrb[0].mxu0
        %v7490 = vadd.f32 0.0, %v7489
        %v7491 = vpop.f32.mrb[0].mxu0
        %7492 = vdwg.mxu0
        %v7493 = vadd.f32 %v7078, %v7490
        %s7494 = scalar_lea.vmem %s11, 1
        %v7495 = vld [vmem:[%s7494] sm:$0x1]
        %v7497 = vlaneseq
        %v7498 = vshrl.u32 %v7497, 7
        %v7499 = vsub.s32 0, %v7498
        %v7500 = vrot.slane %v7495, %v7499
        %v7502 = vadd.f32 %v7493, %v7500
        %v7503 = vadd.f32 %v5831, %v7502
        %v7504 = vsel %vm649, %v7503, 0.0
        %7505 = vadd.xlane.f32.xlu0 %v7504
        %v7506 = vpop.xlane.xlu0 %7505
        %v7507 = vmul.f32 %v7506, %v2261
        %v7508 = vsub.f32 %v7503, %v7507
        %v7509 = vmul.f32 %v7508, %v7508
        %v7510 = vsel %vm649, %v7509, 0.0
        %7511 = vadd.xlane.f32.xlu0 %v7510
        %v7512 = vpop.xlane.xlu0 %7511
        %v7513 = vmul.f32 %v7512, %v2261
        %v7514 = vadd.f32 %v7513, 1e-05
        %v7515 = vrsqrt.pop %v7514
        %v7516 = vmul.f32 %v7508, %v7515
        %v7517 = vlaneseq
        %v7518 = vshrl.u32 %v7517, 7
        %v7519 = vsub.s32 2, %v7518
        %v7520 = vrot.slane %v4185, %v7519
        %v7521 = vmul.f32 %v7516, %v7520
        %v7522 = vlaneseq
        %v7523 = vshrl.u32 %v7522, 7
        %v7524 = vsub.s32 3, %v7523
        %v7525 = vrot.slane %v4185, %v7524
        %v7526 = vadd.f32 %v7521, %v7525
        %s7527 = scalar_lea.vmem %s12, 32
        %v7528 = vld [vmem:[%s7527] sm:$0xff]
        %v7529 = vld [vmem:[%s7527 + $0x8] sm:$0xff]
        %v7530 = vld [vmem:[%s7527 + $0x10] sm:$0xff]
        %v7531 = vld [vmem:[%s7527 + $0x18] sm:$0xff]
        %s7532 = scalar_lea.vmem %s13, 1
        %v7533 = vld [vmem:[%s7532] sm:$0x1]
        %v7535 = vlaneseq
        %v7536 = vshrl.u32 %v7535, 7
        %v7537 = vsub.s32 0, %v7536
        %v7538 = vrot.slane %v7533, %v7537
        %v7541 = vsel %vm649, %v7526, 0
        %7543 = vmatprep.subr.mxu0 0.0
        %7544 = vmatpush1.msra.mxu0 %v7528
        %7545 = vmatprep.subr.mxu0 0.0
        %7546 = vmatpush1.msra.mxu0 %v7529
        %7547 = vmatprep.subr.mxu0 0.0
        %7548 = vmatpush1.msra.mxu0 %v7530
        %7549 = vmatprep.subr.mxu0 0.0
        %7550 = vmatpush1.msra.mxu0 %v7531
        %7551 = vmatprep.subr.mxu0 0.0
        %7552 = vmatpush1.msra.mxu0 0.0
        %7553 = vmatprep.subr.mxu0 0.0
        %7554 = vmatpush1.msra.mxu0 0.0
        %7555 = vmatprep.subr.mxu0 0.0
        %7556 = vmatpush1.msra.mxu0 0.0
        %7557 = vmatprep.subr.mxu0 0.0
        %7558 = vmatpush1.msra.mxu0 0.0
        %7559 = vmatprep.subr.mxu0 0.0
        %7560 = vmatpush1.msra.mxu0 0.0
        %7561 = vmatprep.subr.mxu0 0.0
        %7562 = vmatpush1.msra.mxu0 0.0
        %7563 = vmatprep.subr.mxu0 0.0
        %7564 = vmatpush1.msra.mxu0 0.0
        %7565 = vmatprep.subr.mxu0 0.0
        %7566 = vmatpush1.msra.mxu0 0.0
        %7567 = vmatprep.subr.mxu0 0.0
        %7568 = vmatpush1.msra.mxu0 0.0
        %7569 = vmatprep.subr.mxu0 0.0
        %7570 = vmatpush1.msra.mxu0 0.0
        %7571 = vmatprep.subr.mxu0 0.0
        %7572 = vmatpush1.msra.mxu0 0.0
        %7573 = vmatprep.subr.mxu0 0.0
        %7574 = vmatpush1.msra.mxu0 0.0
        %7575 = vmatprep.subr.mxu0 0.0
        %7576 = vmatpush1.msra.mxu0 0.0
        %7577 = vmatprep.subr.mxu0 0.0
        %7578 = vmatpush1.msra.mxu0 0.0
        %7579 = vmatprep.subr.mxu0 0.0
        %7580 = vmatpush1.msra.mxu0 0.0
        %7581 = vmatprep.subr.mxu0 0.0
        %7582 = vmatpush1.msra.mxu0 0.0
        %7583 = vmatprep.subr.mxu0 0.0
        %7584 = vmatpush1.msra.mxu0 0.0
        %7585 = vmatprep.subr.mxu0 0.0
        %7586 = vmatpush1.msra.mxu0 0.0
        %7587 = vmatprep.subr.mxu0 0.0
        %7588 = vmatpush1.msra.mxu0 0.0
        %7589 = vmatprep.subr.mxu0 0.0
        %7590 = vmatpush1.msra.mxu0 0.0
        %7591 = vmatprep.subr.mxu0 0.0
        %7592 = vmatpush1.msra.mxu0 0.0
        %7593 = vmatprep.subr.mxu0 0.0
        %7594 = vmatpush1.msra.mxu0 0.0
        %7595 = vmatprep.subr.mxu0 0.0
        %7596 = vmatpush1.msra.mxu0 0.0
        %7597 = vmatprep.subr.mxu0 0.0
        %7598 = vmatpush1.msra.mxu0 0.0
        %7599 = vmatprep.subr.mxu0 0.0
        %7600 = vmatpush1.msra.mxu0 0.0
        %7601 = vmatprep.subr.mxu0 0.0
        %7602 = vmatpush1.msra.mxu0 0.0
        %7603 = vmatprep.subr.mxu0 0.0
        %7604 = vmatpush1.msra.mxu0 0.0
        %7605 = vmatprep.subr.mxu0 0.0
        %7606 = vmatpush1.msra.mxu0 0.0
        %7607 = vmatprep.mubr.f32.mxu0 0.0
        %7608 = vmatmul.mubr.f32.gmra.mrb[0].mxu0 %v7541
        %v7609 = vpop.f32.mrb[0].mxu0
        %v7610 = vadd.f32 %v7538, %v7609
        %v7611 = vpop.f32.mrb[0].mxu0
        %7612 = vdwg.mxu0
        %v7613 = vmax.f32 %v7610, 0.0
        %s7614 = scalar_lea.vmem %s14, 64
        %v7615 = vld [vmem:[%s7614] sm:$0xff]
        %v7616 = vld [vmem:[%s7614 + $0x8] sm:$0xff]
        %v7617 = vld [vmem:[%s7614 + $0x10] sm:$0xff]
        %v7618 = vld [vmem:[%s7614 + $0x18] sm:$0xff]
        %v7619 = vld [vmem:[%s7614 + $0x20] sm:$0xff]
        %v7620 = vld [vmem:[%s7614 + $0x28] sm:$0xff]
        %v7621 = vld [vmem:[%s7614 + $0x30] sm:$0xff]
        %v7622 = vld [vmem:[%s7614 + $0x38] sm:$0xff]
        %s7623 = scalar_lea.vmem %s15, 1
        %v7624 = vld [vmem:[%s7623] sm:$0x1]
        %v7626 = vlaneseq
        %v7627 = vshrl.u32 %v7626, 7
        %v7628 = vsub.s32 0, %v7627
        %v7629 = vrot.slane %v7624, %v7628
        %v7632 = vsel %vm4086, %v7613, 0
        %7634 = vmatprep.subr.mxu0 0.0
        %7635 = vmatpush1.msra.mxu0 %v7615
        %7636 = vmatprep.subr.mxu0 0.0
        %7637 = vmatpush1.msra.mxu0 %v7616
        %7638 = vmatprep.subr.mxu0 0.0
        %7639 = vmatpush1.msra.mxu0 %v7617
        %7640 = vmatprep.subr.mxu0 0.0
        %7641 = vmatpush1.msra.mxu0 %v7618
        %7642 = vmatprep.subr.mxu0 0.0
        %7643 = vmatpush1.msra.mxu0 %v7619
        %7644 = vmatprep.subr.mxu0 0.0
        %7645 = vmatpush1.msra.mxu0 %v7620
        %7646 = vmatprep.subr.mxu0 0.0
        %7647 = vmatpush1.msra.mxu0 %v7621
        %7648 = vmatprep.subr.mxu0 0.0
        %7649 = vmatpush1.msra.mxu0 %v7622
        %7650 = vmatprep.subr.mxu0 0.0
        %7651 = vmatpush1.msra.mxu0 0.0
        %7652 = vmatprep.subr.mxu0 0.0
        %7653 = vmatpush1.msra.mxu0 0.0
        %7654 = vmatprep.subr.mxu0 0.0
        %7655 = vmatpush1.msra.mxu0 0.0
        %7656 = vmatprep.subr.mxu0 0.0
        %7657 = vmatpush1.msra.mxu0 0.0
        %7658 = vmatprep.subr.mxu0 0.0
        %7659 = vmatpush1.msra.mxu0 0.0
        %7660 = vmatprep.subr.mxu0 0.0
        %7661 = vmatpush1.msra.mxu0 0.0
        %7662 = vmatprep.subr.mxu0 0.0
        %7663 = vmatpush1.msra.mxu0 0.0
        %7664 = vmatprep.subr.mxu0 0.0
        %7665 = vmatpush1.msra.mxu0 0.0
        %7666 = vmatprep.subr.mxu0 0.0
        %7667 = vmatpush1.msra.mxu0 0.0
        %7668 = vmatprep.subr.mxu0 0.0
        %7669 = vmatpush1.msra.mxu0 0.0
        %7670 = vmatprep.subr.mxu0 0.0
        %7671 = vmatpush1.msra.mxu0 0.0
        %7672 = vmatprep.subr.mxu0 0.0
        %7673 = vmatpush1.msra.mxu0 0.0
        %7674 = vmatprep.subr.mxu0 0.0
        %7675 = vmatpush1.msra.mxu0 0.0
        %7676 = vmatprep.subr.mxu0 0.0
        %7677 = vmatpush1.msra.mxu0 0.0
        %7678 = vmatprep.subr.mxu0 0.0
        %7679 = vmatpush1.msra.mxu0 0.0
        %7680 = vmatprep.subr.mxu0 0.0
        %7681 = vmatpush1.msra.mxu0 0.0
        %7682 = vmatprep.subr.mxu0 0.0
        %7683 = vmatpush1.msra.mxu0 0.0
        %7684 = vmatprep.subr.mxu0 0.0
        %7685 = vmatpush1.msra.mxu0 0.0
        %7686 = vmatprep.subr.mxu0 0.0
        %7687 = vmatpush1.msra.mxu0 0.0
        %7688 = vmatprep.subr.mxu0 0.0
        %7689 = vmatpush1.msra.mxu0 0.0
        %7690 = vmatprep.subr.mxu0 0.0
        %7691 = vmatpush1.msra.mxu0 0.0
        %7692 = vmatprep.subr.mxu0 0.0
        %7693 = vmatpush1.msra.mxu0 0.0
        %7694 = vmatprep.subr.mxu0 0.0
        %7695 = vmatpush1.msra.mxu0 0.0
        %7696 = vmatprep.subr.mxu0 0.0
        %7697 = vmatpush1.msra.mxu0 0.0
        %7698 = vmatprep.mubr.f32.mxu0 0.0
        %7699 = vmatmul.mubr.f32.gmra.mrb[0].mxu0 %v7632
        %v7700 = vpop.f32.mrb[0].mxu0
        %v7701 = vadd.f32 %v7629, %v7700
        %v7702 = vpop.f32.mrb[0].mxu0
        %7703 = vdwg.mxu0
        %v7704 = vadd.f32 %v7526, %v7701
        %v7705 = vsel %vm649, %v7704, 0.0
        %7706 = vadd.xlane.f32.xlu0 %v7705
        %v7707 = vpop.xlane.xlu0 %7706
        %v7708 = vmul.f32 %v7707, %v2261
        %v7709 = vsub.f32 %v7704, %v7708
        %v7710 = vmul.f32 %v7709, %v7709
        %v7711 = vsel %vm649, %v7710, 0.0
        %7712 = vadd.xlane.f32.xlu0 %v7711
        %v7713 = vpop.xlane.xlu0 %7712
        %v7714 = vmul.f32 %v7713, %v2261
        %v7715 = vadd.f32 %v7714, 1e-05
        %v7716 = vrsqrt.pop %v7715
        %v7717 = vmul.f32 %v7709, %v7716
        %v7718 = vlaneseq
        %v7719 = vshrl.u32 %v7718, 7
        %v7720 = vsub.s32 4, %v7719
        %v7721 = vrot.slane %v4185, %v7720
        %v7722 = vmul.f32 %v7717, %v7721
        %v7723 = vlaneseq
        %v7724 = vshrl.u32 %v7723, 7
        %v7725 = vsub.s32 5, %v7724
        %v7726 = vrot.slane %v4185, %v7725
        %v7727 = vadd.f32 %v7722, %v7726
        %v7728 = vld [vmem:[%s17] sm:$0x3]
        %v7729 = vsel %vm649, %v7727, 0.0
        %7730 = vadd.xlane.f32.xlu0 %v7729
        %v7731 = vpop.xlane.xlu0 %7730
        %v7732 = vmul.f32 %v7731, %v2261
        %v7733 = vsub.f32 %v7727, %v7732
        %v7734 = vmul.f32 %v7733, %v7733
        %v7735 = vsel %vm649, %v7734, 0.0
        %7736 = vadd.xlane.f32.xlu0 %v7735
        %v7737 = vpop.xlane.xlu0 %7736
        %v7738 = vmul.f32 %v7737, %v2261
        %v7739 = vadd.f32 %v7738, 1e-05
        %v7740 = vrsqrt.pop %v7739
        %v7741 = vmul.f32 %v7733, %v7740
        %v7742 = vlaneseq
        %v7743 = vshrl.u32 %v7742, 7
        %v7744 = vsub.s32 0, %v7743
        %v7745 = vrot.slane %v7728, %v7744
        %v7746 = vmul.f32 %v7741, %v7745
        %v7747 = vlaneseq
        %v7748 = vshrl.u32 %v7747, 7
        %v7749 = vsub.s32 1, %v7748
        %v7750 = vrot.slane %v7728, %v7749
        %v7751 = vadd.f32 %v7746, %v7750
        %7752 = vst.msk [vmem:[%s609] sm:$0xff] %vm649, %v7751
        %s7753 = sand.u32 %s438, 1
        %s7754 = scalar_lea.sflag [#allocation3], %s7753
        %s7755 = sand.u32 %s438, 1
        %s7756 = smul.addr %s7755, 8
        %s7757 = scalar_lea.vmem [#allocation2], %s7756
        // Predicated region
        $region93: #{tpu_custom_call.1} parent=91 // pred_check
          %p7758 = pneg %p448
        $region94: #{tpu_custom_call.1} parent=91 // pred_check_branch
          %7760 = sbr.rel (%p7758) target = $region96
        $region95: #{tpu_custom_call.1} parent=91 // pred_region
          %s7762 = ssub.s32 128, 128
          %7763 = vsyncadd %s7754, %s7762
          %s7764 = smul.addr %s32, 128
          %s7765 = scalar_lea.hbm %s18, %s7764
          %s7767 = sshll.u32 %s7757, 4
          %s7768 = int_to_ptr.vmem [resolvable:$true] %s7767
          %7770 = dma.vmem_to_hbm [thread:$0]  %s7768, 128, %s7765, %s7754
        $region96: #{tpu_custom_call.1} parent=91 // pred_fallthru
          _
      $region92: #{tpu_custom_call.1} parent=5 // pred_fallthru
        _
      %p7771 = scmp.le.s32.totalorder 2, %s27
      // Predicated region
      $region97: #{tpu_custom_call.1} parent=5 // pred_check
        %p7772 = pneg %p7771
      $region98: #{tpu_custom_call.1} parent=5 // pred_check_branch
        %7774 = sbr.rel (%p7772) target = $region100
      $region99: #{tpu_custom_call.1} parent=5 // pred_region
        %s7775 = ssub.s32 %s27, 2
        // Predicated region
        $region101: #{tpu_custom_call.1} parent=99 // pred_check
          %p7776 = pneg %p454
        $region102: #{tpu_custom_call.1} parent=99 // pred_check_branch
          %7778 = sbr.rel (%p7776) target = $region104
        $region103: #{tpu_custom_call.1} parent=99 // pred_region
          %s7779 = sand.u32 %s439, 1
          %s7780 = scalar_lea.sflag [#allocation3], %s7779
          %s7781 = sand.u32 %s439, 1
          %s7782 = smul.addr %s7781, 8
          %s7783 = scalar_lea.vmem [#allocation2], %s7782
          %7784 = dma.done %s7780, 128
        $region104: #{tpu_custom_call.1} parent=99 // pred_fallthru
          _
      $region100: #{tpu_custom_call.1} parent=5 // pred_fallthru
        _
    $region6: #{tpu_custom_call.1} parent=1 // loop_footer
      %s31 = sadd.s32 1, %s27
    $region7: #{tpu_custom_call.1} parent=1 // loop_footer_branch
      %26 = sbr.rel target = $region3
    $region8: #{tpu_custom_call.1} parent=1 // loop_exit
      _
    %7785 = vsyncpa [#allocation3], 1
    %s7786 = scalar_lea.sflag [#allocation3], 1
    %7787 = vsyncpa %s7786, 1

</llo_original>
